<compile_context>
chip_gen: v7x
topology: tpu7x:2x2x1
jax: 0.10.0
libtpu: 0.0.40
codegen_flags: <defaults>
</compile_context>

<pallas_src>
import jax
import jax.numpy as jnp
from jax import lax
from jax.experimental import pallas as pl
from jax.experimental.pallas import tpu as pltpu

D_INPUT = 3
D_VIEWDIRS = 3
N_LAYERS = 8
D_FILTER = 256
D_HALF = D_FILTER // 2
SKIP = (4,)
D_PACK = 8        # packed input width: x in cols 0-2, viewdirs in cols 3-5
OUT_PAD = 128     # padded output width; real output is cols [0:4] = (r, g, b, alpha)
TILE = 512        # rows of points per grid step


def nerf_mlp_kernel(xin_ref,
                    w0_ref, b0_ref,
                    wmid_ref, bmid_ref,
                    w5x_ref,
                    wa_ref,
                    wrgb_ref, brgb_ref,
                    wbrh_ref, wbrv_ref, bbr_ref,
                    wout_ref, bout_ref,
                    o_ref):
    f32 = jnp.float32
    bf16 = jnp.bfloat16
    xin = xin_ref[...]                                   # (TILE, 8) bf16: [x | vd | 0 0]

    # layer 0: (packed 8 -> 256) + relu; bf16 MXU, f32 accumulation.
    h = jnp.maximum(
        jnp.dot(xin, w0_ref[...], preferred_element_type=f32) + b0_ref[...], 0.0)
    hb = h.astype(bf16)

    # layers 1..7; the skip concat after layer 4 is folded into layer 5's matmul.
    for j in range(N_LAYERS - 1):                        # layer i = j + 1
        pre = jnp.dot(hb, wmid_ref[j], preferred_element_type=f32) + bmid_ref[j]
        if (j + 1) == SKIP[0] + 1:
            pre = pre + jnp.dot(xin, w5x_ref[...], preferred_element_type=f32)
        h = jnp.maximum(pre, 0.0)
        hb = h.astype(bf16)

    # alpha head (single live output column): VPU multiply + lane reduction,
    # keeping it off the MXU (the saturating unit).  Its bias is folded into
    # bout_ref at column 3.
    alpha = jnp.sum(h * wa_ref[...], axis=-1, keepdims=True)          # (TILE, 1) f32

    # rgb branch
    rgb_h = jnp.dot(hb, wrgb_ref[...], preferred_element_type=f32) + brgb_ref[...]
    hbr = jnp.maximum(
        jnp.dot(rgb_h.astype(bf16), wbrh_ref[...], preferred_element_type=f32)
        + jnp.dot(xin, wbrv_ref[...], preferred_element_type=f32)
        + bbr_ref[...], 0.0)
    rgb_term = (jnp.dot(hbr.astype(bf16), wout_ref[...], preferred_element_type=f32)
                + bout_ref[...])                                      # (TILE, OUT_PAD)

    # Route alpha into output column 3 (cols 0-2 = rgb, cols 4.. stay zero).
    col = lax.broadcasted_iota(jnp.int32, rgb_term.shape, 1)
    out = rgb_term + jnp.where(col == 3, alpha, 0.0)
    o_ref[...] = out.astype(o_ref.dtype)


def init_params(key):
    """Deterministic synthetic parameters (logical, un-padded, f32)."""
    ks = jax.random.split(key, 16)
    s = 0.05
    return {
        "w0":   jax.random.normal(ks[0], (D_INPUT, D_FILTER), jnp.float32) * s,
        "b0":   jax.random.normal(ks[1], (D_FILTER,), jnp.float32) * s,
        # layers 1..7 (256->256 part); layer 5's extra 3 input rows live in w5x
        "wmid": jax.random.normal(ks[2], (N_LAYERS - 1, D_FILTER, D_FILTER), jnp.float32) * s,
        "bmid": jax.random.normal(ks[3], (N_LAYERS - 1, D_FILTER), jnp.float32) * s,
        "w5x":  jax.random.normal(ks[4], (D_INPUT, D_FILTER), jnp.float32) * s,
        "wa":   jax.random.normal(ks[5], (D_FILTER, 1), jnp.float32) * s,
        "ba":   jax.random.normal(ks[6], (1,), jnp.float32) * s,
        "wrgb": jax.random.normal(ks[7], (D_FILTER, D_FILTER), jnp.float32) * s,
        "brgb": jax.random.normal(ks[8], (D_FILTER,), jnp.float32) * s,
        "wbrh": jax.random.normal(ks[9], (D_FILTER, D_HALF), jnp.float32) * s,
        "wbrv": jax.random.normal(ks[10], (D_VIEWDIRS, D_HALF), jnp.float32) * s,
        "bbr":  jax.random.normal(ks[11], (D_HALF,), jnp.float32) * s,
        "wout": jax.random.normal(ks[12], (D_HALF, 3), jnp.float32) * s,
        "bout": jax.random.normal(ks[13], (3,), jnp.float32) * s,
    }


def pad_params(p):
    """Pack/pad weights once: bf16 matmul weights, f32 biases (zero-padding = exact)."""
    f32, bf16 = jnp.float32, jnp.bfloat16
    # x lives in packed-input cols 0-2, viewdirs in cols 3-5.
    w0p = jnp.zeros((D_PACK, D_FILTER), f32).at[:D_INPUT].set(p["w0"]).astype(bf16)
    w5xp = jnp.zeros((D_PACK, D_FILTER), f32).at[:D_INPUT].set(p["w5x"]).astype(bf16)
    wbrvp = (jnp.zeros((D_PACK, D_HALF), f32)
             .at[D_INPUT:D_INPUT + D_VIEWDIRS].set(p["wbrv"]).astype(bf16))
    wap = p["wa"][:, 0].reshape(1, D_FILTER)                 # f32 row, VPU reduction
    woutp = jnp.zeros((D_HALF, OUT_PAD), f32).at[:, :3].set(p["wout"]).astype(bf16)
    boutp = (jnp.zeros((1, OUT_PAD), f32)
             .at[0, :3].set(p["bout"])
             .at[0, 3].set(p["ba"][0]))                      # alpha bias in column 3
    return [
        w0p, p["b0"].reshape(1, D_FILTER),
        p["wmid"].astype(bf16), p["bmid"].reshape(N_LAYERS - 1, 1, D_FILTER),
        w5xp,
        wap,
        p["wrgb"].astype(bf16), p["brgb"].reshape(1, D_FILTER),
        p["wbrh"].astype(bf16), wbrvp, p["bbr"].reshape(1, D_HALF),
        woutp, boutp,
    ]


@jax.jit
def nerf_mlp_forward(x, viewdirs, weights):
    N = x.shape[0]
    n_pad = ((N + TILE - 1) // TILE) * TILE
    xin = (jnp.zeros((n_pad, D_PACK), jnp.float32)
           .at[:N, 0:D_INPUT].set(x)
           .at[:N, D_INPUT:D_INPUT + D_VIEWDIRS].set(viewdirs)
           .astype(jnp.bfloat16))

    def full_spec(a):
        return pl.BlockSpec(a.shape, lambda i, n=a.ndim: (0,) * n)

    in_specs = ([pl.BlockSpec((TILE, D_PACK), lambda i: (i, 0))]
                + [full_spec(w) for w in weights])
    out_specs = pl.BlockSpec((TILE, OUT_PAD), lambda i: (i, 0))

    out = pl.pallas_call(
        nerf_mlp_kernel,
        out_shape=jax.ShapeDtypeStruct((n_pad, OUT_PAD), jnp.bfloat16),
        grid_spec=pltpu.PrefetchScalarGridSpec(
            num_scalar_prefetch=0,
            grid=(n_pad // TILE,),
            in_specs=in_specs,
            out_specs=out_specs,
        ),
        compiler_params=pltpu.CompilerParams(dimension_semantics=("parallel",)),
    )(xin, *weights)
    return out[:N, :4].astype(jnp.float32)   # columns: (r, g, b, alpha)


def ref_forward(x, viewdirs, p):
    """Pure-JAX f32 reference replicating the PyTorch forward exactly."""
    x_input = x
    h = jax.nn.relu(x @ p["w0"] + p["b0"])
    for j in range(N_LAYERS - 1):
        i = j + 1
        pre = h @ p["wmid"][j] + p["bmid"][j]
        if i == SKIP[0] + 1:           # layer right after the skip concat
            pre = pre + x_input @ p["w5x"]
        h = jax.nn.relu(pre)
    alpha = h @ p["wa"] + p["ba"]                                  # (N, 1)
    rgb_h = h @ p["wrgb"] + p["brgb"]
    hb = jax.nn.relu(rgb_h @ p["wbrh"] + viewdirs @ p["wbrv"] + p["bbr"])
    rgb = hb @ p["wout"] + p["bout"]                               # (N, 3)
    return jnp.concatenate([rgb, alpha], axis=-1)


if __name__ == "__main__":
    key = jax.random.PRNGKey(0)
    k_x, k_vd, k_p = jax.random.split(key, 3)

    N = 1024                           # 2 grid steps at TILE=512 (feeds both v7x TCs)
    x = jax.random.normal(k_x, (N, D_INPUT), jnp.float32)
    viewdirs = jax.random.normal(k_vd, (N, D_VIEWDIRS), jnp.float32)
    params = init_params(k_p)
    weights = pad_params(params)       # pad/cast once, outside the forward

    out = jax.block_until_ready(nerf_mlp_forward(x, viewdirs, weights))
    ref = jax.block_until_ready(ref_forward(x, viewdirs, params))

    assert out.shape == (N, 4), out.shape
    # bf16 matmuls with f32 accumulation vs f32 reference.
    assert jnp.allclose(out, ref, atol=2e-2, rtol=2e-2), (
        float(jnp.max(jnp.abs(out - ref))))
    print("KERNEL_OK")
</pallas_src>

<mosaic_0001>
module attributes {stable_mosaic.version = 11 : i64} {
  func.func @nerf_mlp_kernel(%arg0: i32, %arg1: memref<512x8xbf16, #tpu.memory_space<vmem>>, %arg2: memref<8x256xbf16, #tpu.memory_space<vmem>>, %arg3: memref<1x256xf32, #tpu.memory_space<vmem>>, %arg4: memref<7x256x256xbf16, #tpu.memory_space<vmem>>, %arg5: memref<7x1x256xf32, #tpu.memory_space<vmem>>, %arg6: memref<8x256xbf16, #tpu.memory_space<vmem>>, %arg7: memref<1x256xf32, #tpu.memory_space<vmem>>, %arg8: memref<256x256xbf16, #tpu.memory_space<vmem>>, %arg9: memref<1x256xf32, #tpu.memory_space<vmem>>, %arg10: memref<256x128xbf16, #tpu.memory_space<vmem>>, %arg11: memref<8x128xbf16, #tpu.memory_space<vmem>>, %arg12: memref<1x128xf32, #tpu.memory_space<vmem>>, %arg13: memref<128x128xbf16, #tpu.memory_space<vmem>>, %arg14: memref<1x128xf32, #tpu.memory_space<vmem>>, %arg15: memref<512x128xbf16, #tpu.memory_space<vmem>>) attributes {dimension_semantics = [#tpu.dimension_semantics<parallel>], iteration_bounds = array<i64: 2>, scalar_prefetch = 0 : i64, scratch_operands = 0 : i64, tpu.core_type = #tpu.core_type<tc>, window_params = [{transform_indices = @transform_0, window_bounds = array<i64: 512, 8>}, {pipeline_mode = #tpu.pipeline_mode<synchronous>, transform_indices = @transform_1, window_bounds = array<i64: 8, 256>}, {pipeline_mode = #tpu.pipeline_mode<synchronous>, transform_indices = @transform_2, window_bounds = array<i64: 1, 256>}, {pipeline_mode = #tpu.pipeline_mode<synchronous>, transform_indices = @transform_3, window_bounds = array<i64: 7, 256, 256>}, {pipeline_mode = #tpu.pipeline_mode<synchronous>, transform_indices = @transform_4, window_bounds = array<i64: 7, 1, 256>}, {pipeline_mode = #tpu.pipeline_mode<synchronous>, transform_indices = @transform_5, window_bounds = array<i64: 8, 256>}, {pipeline_mode = #tpu.pipeline_mode<synchronous>, transform_indices = @transform_6, window_bounds = array<i64: 1, 256>}, {pipeline_mode = #tpu.pipeline_mode<synchronous>, transform_indices = @transform_7, window_bounds = array<i64: 256, 256>}, {pipeline_mode = #tpu.pipeline_mode<synchronous>, transform_indices = @transform_8, window_bounds = array<i64: 1, 256>}, {pipeline_mode = #tpu.pipeline_mode<synchronous>, transform_indices = @transform_9, window_bounds = array<i64: 256, 128>}, {pipeline_mode = #tpu.pipeline_mode<synchronous>, transform_indices = @transform_10, window_bounds = array<i64: 8, 128>}, {pipeline_mode = #tpu.pipeline_mode<synchronous>, transform_indices = @transform_11, window_bounds = array<i64: 1, 128>}, {pipeline_mode = #tpu.pipeline_mode<synchronous>, transform_indices = @transform_12, window_bounds = array<i64: 128, 128>}, {pipeline_mode = #tpu.pipeline_mode<synchronous>, transform_indices = @transform_13, window_bounds = array<i64: 1, 128>}, {transform_indices = @transform_14, window_bounds = array<i64: 512, 128>}]} {
    %c0 = arith.constant 0 : index
    %c0_0 = arith.constant 0 : index
    %0 = vector.load %arg1[%c0, %c0_0] : memref<512x8xbf16, #tpu.memory_space<vmem>>, vector<512x8xbf16>
    %c0_1 = arith.constant 0 : index
    %c0_2 = arith.constant 0 : index
    %1 = vector.load %arg2[%c0_1, %c0_2] : memref<8x256xbf16, #tpu.memory_space<vmem>>, vector<8x256xbf16>
    %cst = arith.constant dense<0.000000e+00> : vector<512x256xf32>
    %2 = tpu.matmul %0, %1, %cst {dimension_numbers = #tpu.dot_dimension_numbers<[1], [0], [0], [1], [0, 0, 1, 1], [], []>} : vector<512x8xbf16>, vector<8x256xbf16>, vector<512x256xf32> -> vector<512x256xf32>
    %c0_3 = arith.constant 0 : index
    %c0_4 = arith.constant 0 : index
    %3 = vector.load %arg3[%c0_3, %c0_4] : memref<1x256xf32, #tpu.memory_space<vmem>>, vector<1x256xf32>
    %4 = vector.broadcast %3 : vector<1x256xf32> to vector<512x256xf32>
    %5 = arith.addf %2, %4 : vector<512x256xf32>
    %cst_5 = arith.constant 0.000000e+00 : f32
    %6 = vector.broadcast %cst_5 : f32 to vector<512x256xf32>
    %7 = arith.maximumf %5, %6 : vector<512x256xf32>
    %8 = arith.truncf %7 : vector<512x256xf32> to vector<512x256xbf16>
    %c0_6 = arith.constant 0 : index
    %c0_7 = arith.constant 0 : index
    %c0_8 = arith.constant 0 : index
    %9 = vector.load %arg4[%c0_6, %c0_7, %c0_8] : memref<7x256x256xbf16, #tpu.memory_space<vmem>>, vector<1x256x256xbf16>
    %10 = vector.shape_cast %9 : vector<1x256x256xbf16> to vector<256x256xbf16>
    %cst_9 = arith.constant dense<0.000000e+00> : vector<512x256xf32>
    %11 = tpu.matmul %8, %10, %cst_9 {dimension_numbers = #tpu.dot_dimension_numbers<[1], [0], [0], [1], [0, 0, 1, 1], [], []>} : vector<512x256xbf16>, vector<256x256xbf16>, vector<512x256xf32> -> vector<512x256xf32>
    %c0_10 = arith.constant 0 : index
    %c0_11 = arith.constant 0 : index
    %c0_12 = arith.constant 0 : index
    %12 = vector.load %arg5[%c0_10, %c0_11, %c0_12] : memref<7x1x256xf32, #tpu.memory_space<vmem>>, vector<1x1x256xf32>
    %13 = vector.shape_cast %12 : vector<1x1x256xf32> to vector<1x256xf32>
    %14 = vector.broadcast %13 : vector<1x256xf32> to vector<512x256xf32>
    %15 = arith.addf %11, %14 : vector<512x256xf32>
    %cst_13 = arith.constant 0.000000e+00 : f32
    %16 = vector.broadcast %cst_13 : f32 to vector<512x256xf32>
    %17 = arith.maximumf %15, %16 : vector<512x256xf32>
    %18 = arith.truncf %17 : vector<512x256xf32> to vector<512x256xbf16>
    %c1 = arith.constant 1 : index
    %c0_14 = arith.constant 0 : index
    %c0_15 = arith.constant 0 : index
    %19 = vector.load %arg4[%c1, %c0_14, %c0_15] : memref<7x256x256xbf16, #tpu.memory_space<vmem>>, vector<1x256x256xbf16>
    %20 = vector.shape_cast %19 : vector<1x256x256xbf16> to vector<256x256xbf16>
    %cst_16 = arith.constant dense<0.000000e+00> : vector<512x256xf32>
    %21 = tpu.matmul %18, %20, %cst_16 {dimension_numbers = #tpu.dot_dimension_numbers<[1], [0], [0], [1], [0, 0, 1, 1], [], []>} : vector<512x256xbf16>, vector<256x256xbf16>, vector<512x256xf32> -> vector<512x256xf32>
    %c1_17 = arith.constant 1 : index
    %c0_18 = arith.constant 0 : index
    %c0_19 = arith.constant 0 : index
    %22 = vector.load %arg5[%c1_17, %c0_18, %c0_19] : memref<7x1x256xf32, #tpu.memory_space<vmem>>, vector<1x1x256xf32>
    %23 = vector.shape_cast %22 : vector<1x1x256xf32> to vector<1x256xf32>
    %24 = vector.broadcast %23 : vector<1x256xf32> to vector<512x256xf32>
    %25 = arith.addf %21, %24 : vector<512x256xf32>
    %cst_20 = arith.constant 0.000000e+00 : f32
    %26 = vector.broadcast %cst_20 : f32 to vector<512x256xf32>
    %27 = arith.maximumf %25, %26 : vector<512x256xf32>
    %28 = arith.truncf %27 : vector<512x256xf32> to vector<512x256xbf16>
    %c2 = arith.constant 2 : index
    %c0_21 = arith.constant 0 : index
    %c0_22 = arith.constant 0 : index
    %29 = vector.load %arg4[%c2, %c0_21, %c0_22] : memref<7x256x256xbf16, #tpu.memory_space<vmem>>, vector<1x256x256xbf16>
    %30 = vector.shape_cast %29 : vector<1x256x256xbf16> to vector<256x256xbf16>
    %cst_23 = arith.constant dense<0.000000e+00> : vector<512x256xf32>
    %31 = tpu.matmul %28, %30, %cst_23 {dimension_numbers = #tpu.dot_dimension_numbers<[1], [0], [0], [1], [0, 0, 1, 1], [], []>} : vector<512x256xbf16>, vector<256x256xbf16>, vector<512x256xf32> -> vector<512x256xf32>
    %c2_24 = arith.constant 2 : index
    %c0_25 = arith.constant 0 : index
    %c0_26 = arith.constant 0 : index
    %32 = vector.load %arg5[%c2_24, %c0_25, %c0_26] : memref<7x1x256xf32, #tpu.memory_space<vmem>>, vector<1x1x256xf32>
    %33 = vector.shape_cast %32 : vector<1x1x256xf32> to vector<1x256xf32>
    %34 = vector.broadcast %33 : vector<1x256xf32> to vector<512x256xf32>
    %35 = arith.addf %31, %34 : vector<512x256xf32>
    %cst_27 = arith.constant 0.000000e+00 : f32
    %36 = vector.broadcast %cst_27 : f32 to vector<512x256xf32>
    %37 = arith.maximumf %35, %36 : vector<512x256xf32>
    %38 = arith.truncf %37 : vector<512x256xf32> to vector<512x256xbf16>
    %c3 = arith.constant 3 : index
    %c0_28 = arith.constant 0 : index
    %c0_29 = arith.constant 0 : index
    %39 = vector.load %arg4[%c3, %c0_28, %c0_29] : memref<7x256x256xbf16, #tpu.memory_space<vmem>>, vector<1x256x256xbf16>
    %40 = vector.shape_cast %39 : vector<1x256x256xbf16> to vector<256x256xbf16>
    %cst_30 = arith.constant dense<0.000000e+00> : vector<512x256xf32>
    %41 = tpu.matmul %38, %40, %cst_30 {dimension_numbers = #tpu.dot_dimension_numbers<[1], [0], [0], [1], [0, 0, 1, 1], [], []>} : vector<512x256xbf16>, vector<256x256xbf16>, vector<512x256xf32> -> vector<512x256xf32>
    %c3_31 = arith.constant 3 : index
    %c0_32 = arith.constant 0 : index
    %c0_33 = arith.constant 0 : index
    %42 = vector.load %arg5[%c3_31, %c0_32, %c0_33] : memref<7x1x256xf32, #tpu.memory_space<vmem>>, vector<1x1x256xf32>
    %43 = vector.shape_cast %42 : vector<1x1x256xf32> to vector<1x256xf32>
    %44 = vector.broadcast %43 : vector<1x256xf32> to vector<512x256xf32>
    %45 = arith.addf %41, %44 : vector<512x256xf32>
    %cst_34 = arith.constant 0.000000e+00 : f32
    %46 = vector.broadcast %cst_34 : f32 to vector<512x256xf32>
    %47 = arith.maximumf %45, %46 : vector<512x256xf32>
    %48 = arith.truncf %47 : vector<512x256xf32> to vector<512x256xbf16>
    %c4 = arith.constant 4 : index
    %c0_35 = arith.constant 0 : index
    %c0_36 = arith.constant 0 : index
    %49 = vector.load %arg4[%c4, %c0_35, %c0_36] : memref<7x256x256xbf16, #tpu.memory_space<vmem>>, vector<1x256x256xbf16>
    %50 = vector.shape_cast %49 : vector<1x256x256xbf16> to vector<256x256xbf16>
    %cst_37 = arith.constant dense<0.000000e+00> : vector<512x256xf32>
    %51 = tpu.matmul %48, %50, %cst_37 {dimension_numbers = #tpu.dot_dimension_numbers<[1], [0], [0], [1], [0, 0, 1, 1], [], []>} : vector<512x256xbf16>, vector<256x256xbf16>, vector<512x256xf32> -> vector<512x256xf32>
    %c4_38 = arith.constant 4 : index
    %c0_39 = arith.constant 0 : index
    %c0_40 = arith.constant 0 : index
    %52 = vector.load %arg5[%c4_38, %c0_39, %c0_40] : memref<7x1x256xf32, #tpu.memory_space<vmem>>, vector<1x1x256xf32>
    %53 = vector.shape_cast %52 : vector<1x1x256xf32> to vector<1x256xf32>
    %54 = vector.broadcast %53 : vector<1x256xf32> to vector<512x256xf32>
    %55 = arith.addf %51, %54 : vector<512x256xf32>
    %c0_41 = arith.constant 0 : index
    %c0_42 = arith.constant 0 : index
    %56 = vector.load %arg6[%c0_41, %c0_42] : memref<8x256xbf16, #tpu.memory_space<vmem>>, vector<8x256xbf16>
    %cst_43 = arith.constant dense<0.000000e+00> : vector<512x256xf32>
    %57 = tpu.matmul %0, %56, %cst_43 {dimension_numbers = #tpu.dot_dimension_numbers<[1], [0], [0], [1], [0, 0, 1, 1], [], []>} : vector<512x8xbf16>, vector<8x256xbf16>, vector<512x256xf32> -> vector<512x256xf32>
    %58 = arith.addf %55, %57 : vector<512x256xf32>
    %cst_44 = arith.constant 0.000000e+00 : f32
    %59 = vector.broadcast %cst_44 : f32 to vector<512x256xf32>
    %60 = arith.maximumf %58, %59 : vector<512x256xf32>
    %61 = arith.truncf %60 : vector<512x256xf32> to vector<512x256xbf16>
    %c5 = arith.constant 5 : index
    %c0_45 = arith.constant 0 : index
    %c0_46 = arith.constant 0 : index
    %62 = vector.load %arg4[%c5, %c0_45, %c0_46] : memref<7x256x256xbf16, #tpu.memory_space<vmem>>, vector<1x256x256xbf16>
    %63 = vector.shape_cast %62 : vector<1x256x256xbf16> to vector<256x256xbf16>
    %cst_47 = arith.constant dense<0.000000e+00> : vector<512x256xf32>
    %64 = tpu.matmul %61, %63, %cst_47 {dimension_numbers = #tpu.dot_dimension_numbers<[1], [0], [0], [1], [0, 0, 1, 1], [], []>} : vector<512x256xbf16>, vector<256x256xbf16>, vector<512x256xf32> -> vector<512x256xf32>
    %c5_48 = arith.constant 5 : index
    %c0_49 = arith.constant 0 : index
    %c0_50 = arith.constant 0 : index
    %65 = vector.load %arg5[%c5_48, %c0_49, %c0_50] : memref<7x1x256xf32, #tpu.memory_space<vmem>>, vector<1x1x256xf32>
    %66 = vector.shape_cast %65 : vector<1x1x256xf32> to vector<1x256xf32>
    %67 = vector.broadcast %66 : vector<1x256xf32> to vector<512x256xf32>
    %68 = arith.addf %64, %67 : vector<512x256xf32>
    %cst_51 = arith.constant 0.000000e+00 : f32
    %69 = vector.broadcast %cst_51 : f32 to vector<512x256xf32>
    %70 = arith.maximumf %68, %69 : vector<512x256xf32>
    %71 = arith.truncf %70 : vector<512x256xf32> to vector<512x256xbf16>
    %c6 = arith.constant 6 : index
    %c0_52 = arith.constant 0 : index
    %c0_53 = arith.constant 0 : index
    %72 = vector.load %arg4[%c6, %c0_52, %c0_53] : memref<7x256x256xbf16, #tpu.memory_space<vmem>>, vector<1x256x256xbf16>
    %73 = vector.shape_cast %72 : vector<1x256x256xbf16> to vector<256x256xbf16>
    %cst_54 = arith.constant dense<0.000000e+00> : vector<512x256xf32>
    %74 = tpu.matmul %71, %73, %cst_54 {dimension_numbers = #tpu.dot_dimension_numbers<[1], [0], [0], [1], [0, 0, 1, 1], [], []>} : vector<512x256xbf16>, vector<256x256xbf16>, vector<512x256xf32> -> vector<512x256xf32>
    %c6_55 = arith.constant 6 : index
    %c0_56 = arith.constant 0 : index
    %c0_57 = arith.constant 0 : index
    %75 = vector.load %arg5[%c6_55, %c0_56, %c0_57] : memref<7x1x256xf32, #tpu.memory_space<vmem>>, vector<1x1x256xf32>
    %76 = vector.shape_cast %75 : vector<1x1x256xf32> to vector<1x256xf32>
    %77 = vector.broadcast %76 : vector<1x256xf32> to vector<512x256xf32>
    %78 = arith.addf %74, %77 : vector<512x256xf32>
    %cst_58 = arith.constant 0.000000e+00 : f32
    %79 = vector.broadcast %cst_58 : f32 to vector<512x256xf32>
    %80 = arith.maximumf %78, %79 : vector<512x256xf32>
    %81 = arith.truncf %80 : vector<512x256xf32> to vector<512x256xbf16>
    %c0_59 = arith.constant 0 : index
    %c0_60 = arith.constant 0 : index
    %82 = vector.load %arg7[%c0_59, %c0_60] : memref<1x256xf32, #tpu.memory_space<vmem>>, vector<1x256xf32>
    %83 = vector.broadcast %82 : vector<1x256xf32> to vector<512x256xf32>
    %84 = arith.mulf %80, %83 : vector<512x256xf32>
    %cst_61 = arith.constant dense<0.000000e+00> : vector<512xf32>
    %85 = vector.multi_reduction <add>, %84, %cst_61 [1] : vector<512x256xf32> to vector<512xf32>
    %86 = vector.shape_cast %85 : vector<512xf32> to vector<512x1xf32>
    %c0_62 = arith.constant 0 : index
    %c0_63 = arith.constant 0 : index
    %87 = vector.load %arg8[%c0_62, %c0_63] : memref<256x256xbf16, #tpu.memory_space<vmem>>, vector<256x256xbf16>
    %cst_64 = arith.constant dense<0.000000e+00> : vector<512x256xf32>
    %88 = tpu.matmul %81, %87, %cst_64 {dimension_numbers = #tpu.dot_dimension_numbers<[1], [0], [0], [1], [0, 0, 1, 1], [], []>} : vector<512x256xbf16>, vector<256x256xbf16>, vector<512x256xf32> -> vector<512x256xf32>
    %c0_65 = arith.constant 0 : index
    %c0_66 = arith.constant 0 : index
    %89 = vector.load %arg9[%c0_65, %c0_66] : memref<1x256xf32, #tpu.memory_space<vmem>>, vector<1x256xf32>
    %90 = vector.broadcast %89 : vector<1x256xf32> to vector<512x256xf32>
    %91 = arith.addf %88, %90 : vector<512x256xf32>
    %92 = arith.truncf %91 : vector<512x256xf32> to vector<512x256xbf16>
    %c0_67 = arith.constant 0 : index
    %c0_68 = arith.constant 0 : index
    %93 = vector.load %arg10[%c0_67, %c0_68] : memref<256x128xbf16, #tpu.memory_space<vmem>>, vector<256x128xbf16>
    %cst_69 = arith.constant dense<0.000000e+00> : vector<512x128xf32>
    %94 = tpu.matmul %92, %93, %cst_69 {dimension_numbers = #tpu.dot_dimension_numbers<[1], [0], [0], [1], [0, 0, 1, 1], [], []>} : vector<512x256xbf16>, vector<256x128xbf16>, vector<512x128xf32> -> vector<512x128xf32>
    %c0_70 = arith.constant 0 : index
    %c0_71 = arith.constant 0 : index
    %95 = vector.load %arg11[%c0_70, %c0_71] : memref<8x128xbf16, #tpu.memory_space<vmem>>, vector<8x128xbf16>
    %cst_72 = arith.constant dense<0.000000e+00> : vector<512x128xf32>
    %96 = tpu.matmul %0, %95, %cst_72 {dimension_numbers = #tpu.dot_dimension_numbers<[1], [0], [0], [1], [0, 0, 1, 1], [], []>} : vector<512x8xbf16>, vector<8x128xbf16>, vector<512x128xf32> -> vector<512x128xf32>
    %97 = arith.addf %94, %96 : vector<512x128xf32>
    %c0_73 = arith.constant 0 : index
    %c0_74 = arith.constant 0 : index
    %98 = vector.load %arg12[%c0_73, %c0_74] : memref<1x128xf32, #tpu.memory_space<vmem>>, vector<1x128xf32>
    %99 = vector.broadcast %98 : vector<1x128xf32> to vector<512x128xf32>
    %100 = arith.addf %97, %99 : vector<512x128xf32>
    %cst_75 = arith.constant 0.000000e+00 : f32
    %101 = vector.broadcast %cst_75 : f32 to vector<512x128xf32>
    %102 = arith.maximumf %100, %101 : vector<512x128xf32>
    %103 = arith.truncf %102 : vector<512x128xf32> to vector<512x128xbf16>
    %c0_76 = arith.constant 0 : index
    %c0_77 = arith.constant 0 : index
    %104 = vector.load %arg13[%c0_76, %c0_77] : memref<128x128xbf16, #tpu.memory_space<vmem>>, vector<128x128xbf16>
    %cst_78 = arith.constant dense<0.000000e+00> : vector<512x128xf32>
    %105 = tpu.matmul %103, %104, %cst_78 {dimension_numbers = #tpu.dot_dimension_numbers<[1], [0], [0], [1], [0, 0, 1, 1], [], []>} : vector<512x128xbf16>, vector<128x128xbf16>, vector<512x128xf32> -> vector<512x128xf32>
    %c0_79 = arith.constant 0 : index
    %c0_80 = arith.constant 0 : index
    %106 = vector.load %arg14[%c0_79, %c0_80] : memref<1x128xf32, #tpu.memory_space<vmem>>, vector<1x128xf32>
    %107 = vector.broadcast %106 : vector<1x128xf32> to vector<512x128xf32>
    %108 = arith.addf %105, %107 : vector<512x128xf32>
    %109 = tpu.iota {dimensions = array<i32: 1>} : vector<512x128xi32>
    %c3_i32 = arith.constant 3 : i32
    %110 = vector.broadcast %c3_i32 : i32 to vector<512x128xi32>
    %111 = arith.cmpi eq, %109, %110 : vector<512x128xi32>
    %cst_81 = arith.constant 0.000000e+00 : f32
    %112 = vector.shape_cast %86 : vector<512x1xf32> to vector<512x1xf32>
    %113 = vector.broadcast %112 : vector<512x1xf32> to vector<512x128xf32>
    %114 = vector.broadcast %cst_81 : f32 to vector<512x128xf32>
    %115 = arith.select %111, %113, %114 : vector<512x128xi1>, vector<512x128xf32>
    %116 = arith.addf %108, %115 : vector<512x128xf32>
    %117 = arith.truncf %116 : vector<512x128xf32> to vector<512x128xbf16>
    %c0_82 = arith.constant 0 : index
    %c0_83 = arith.constant 0 : index
    %118 = vector.load %arg15[%c0_82, %c0_83] : memref<512x128xbf16, #tpu.memory_space<vmem>>, vector<512x128xbf16>
    tpu.vector_store %arg15[%c0_82, %c0_83], %117 {strides = array<i32>} : memref<512x128xbf16, #tpu.memory_space<vmem>>, vector<512x128xbf16>,
    return
  }
  func.func @transform_0(%arg0: i32) -> (i32, i32) {
    %c0_i32 = arith.constant 0 : i32
    %c0_i32_0 = arith.constant 0 : i32
    return %arg0, %c0_i32 : i32, i32
  }
  func.func @transform_1(%arg0: i32) -> (i32, i32) {
    %c0_i32 = arith.constant 0 : i32
    %c0_i32_0 = arith.constant 0 : i32
    %c0_i32_1 = arith.constant 0 : i32
    return %c0_i32, %c0_i32_0 : i32, i32
  }
  func.func @transform_2(%arg0: i32) -> (i32, i32) {
    %c0_i32 = arith.constant 0 : i32
    %c0_i32_0 = arith.constant 0 : i32
    %c0_i32_1 = arith.constant 0 : i32
    return %c0_i32, %c0_i32_0 : i32, i32
  }
  func.func @transform_3(%arg0: i32) -> (i32, i32, i32) {
    %c0_i32 = arith.constant 0 : i32
    %c0_i32_0 = arith.constant 0 : i32
    %c0_i32_1 = arith.constant 0 : i32
    %c0_i32_2 = arith.constant 0 : i32
    return %c0_i32, %c0_i32_0, %c0_i32_1 : i32, i32, i32
  }
  func.func @transform_4(%arg0: i32) -> (i32, i32, i32) {
    %c0_i32 = arith.constant 0 : i32
    %c0_i32_0 = arith.constant 0 : i32
    %c0_i32_1 = arith.constant 0 : i32
    %c0_i32_2 = arith.constant 0 : i32
    return %c0_i32, %c0_i32_0, %c0_i32_1 : i32, i32, i32
  }
  func.func @transform_5(%arg0: i32) -> (i32, i32) {
    %c0_i32 = arith.constant 0 : i32
    %c0_i32_0 = arith.constant 0 : i32
    %c0_i32_1 = arith.constant 0 : i32
    return %c0_i32, %c0_i32_0 : i32, i32
  }
  func.func @transform_6(%arg0: i32) -> (i32, i32) {
    %c0_i32 = arith.constant 0 : i32
    %c0_i32_0 = arith.constant 0 : i32
    %c0_i32_1 = arith.constant 0 : i32
    return %c0_i32, %c0_i32_0 : i32, i32
  }
  func.func @transform_7(%arg0: i32) -> (i32, i32) {
    %c0_i32 = arith.constant 0 : i32
    %c0_i32_0 = arith.constant 0 : i32
    %c0_i32_1 = arith.constant 0 : i32
    return %c0_i32, %c0_i32_0 : i32, i32
  }
  func.func @transform_8(%arg0: i32) -> (i32, i32) {
    %c0_i32 = arith.constant 0 : i32
    %c0_i32_0 = arith.constant 0 : i32
    %c0_i32_1 = arith.constant 0 : i32
    return %c0_i32, %c0_i32_0 : i32, i32
  }
  func.func @transform_9(%arg0: i32) -> (i32, i32) {
    %c0_i32 = arith.constant 0 : i32
    %c0_i32_0 = arith.constant 0 : i32
    %c0_i32_1 = arith.constant 0 : i32
    return %c0_i32, %c0_i32_0 : i32, i32
  }
  func.func @transform_10(%arg0: i32) -> (i32, i32) {
    %c0_i32 = arith.constant 0 : i32
    %c0_i32_0 = arith.constant 0 : i32
    %c0_i32_1 = arith.constant 0 : i32
    return %c0_i32, %c0_i32_0 : i32, i32
  }
  func.func @transform_11(%arg0: i32) -> (i32, i32) {
    %c0_i32 = arith.constant 0 : i32
    %c0_i32_0 = arith.constant 0 : i32
    %c0_i32_1 = arith.constant 0 : i32
    return %c0_i32, %c0_i32_0 : i32, i32
  }
  func.func @transform_12(%arg0: i32) -> (i32, i32) {
    %c0_i32 = arith.constant 0 : i32
    %c0_i32_0 = arith.constant 0 : i32
    %c0_i32_1 = arith.constant 0 : i32
    return %c0_i32, %c0_i32_0 : i32, i32
  }
  func.func @transform_13(%arg0: i32) -> (i32, i32) {
    %c0_i32 = arith.constant 0 : i32
    %c0_i32_0 = arith.constant 0 : i32
    %c0_i32_1 = arith.constant 0 : i32
    return %c0_i32, %c0_i32_0 : i32, i32
  }
  func.func @transform_14(%arg0: i32) -> (i32, i32) {
    %c0_i32 = arith.constant 0 : i32
    %c0_i32_0 = arith.constant 0 : i32
    return %arg0, %c0_i32 : i32, i32
  }
}

</mosaic_0001>

<llo_original>
// kernel: nerf_mlp_forward.1
$region0: #{nerf_mlp_forward.1}
  #allocation0 [shape = 'u32[]', space=smem, size = 0x4, offset = 0x4, fixed_abs, tag = 'smem constant byte address 0x4 - core index']
  #allocation1 [shape = 'u32[144,128]{1,0:T(1,128)}', space=vmem, size = 0x12000, scoped, tag = 'internal scratch']
  %s0 = inlined_call_operand.vmem [shape: bf16[1024,8], index: 0, kind: input, shape index: {}]
  %s1 = inlined_call_operand.vmem [shape: bf16[8,256], index: 1, kind: input, shape index: {}]
  %s2 = inlined_call_operand.vmem [shape: f32[1,256], index: 2, kind: input, shape index: {}]
  %s3 = inlined_call_operand.vmem [shape: bf16[7,256,256], index: 3, kind: input, shape index: {}]
  %s4 = inlined_call_operand.vmem [shape: f32[7,1,256], index: 4, kind: input, shape index: {}]
  %s5 = inlined_call_operand.vmem [shape: bf16[8,256], index: 5, kind: input, shape index: {}]
  %s6 = inlined_call_operand.vmem [shape: f32[1,256], index: 6, kind: input, shape index: {}]
  %s7 = inlined_call_operand.vmem [shape: bf16[256,256], index: 7, kind: input, shape index: {}]
  %s8 = inlined_call_operand.vmem [shape: f32[1,256], index: 8, kind: input, shape index: {}]
  %s9 = inlined_call_operand.vmem [shape: bf16[256,128], index: 9, kind: input, shape index: {}]
  %s10 = inlined_call_operand.vmem [shape: bf16[8,128], index: 10, kind: input, shape index: {}]
  %s11 = inlined_call_operand.vmem [shape: f32[1,128], index: 11, kind: input, shape index: {}]
  %s12 = inlined_call_operand.vmem [shape: bf16[128,128], index: 12, kind: input, shape index: {}]
  %s13 = inlined_call_operand.vmem [shape: f32[1,128], index: 13, kind: input, shape index: {}]
  %s14 = inlined_call_operand.vmem [shape: bf16[1024,128], index: 14, kind: output, shape index: {}]
  %s15 = sld [smem:[#allocation0]]
  $region89: #{nerf_mlp_forward.1} parent=0
    _
  %s17 = ssub.s32 1, %s15
  %s18 = scalar_select 0, %s17, %s15
  loop: start=0, step=1, limit=4
  $region2: #{nerf_mlp_forward.1} parent=0 // loop_pre_header
    _
  $region3: #{nerf_mlp_forward.1} parent=0 // loop_header
    %s20 = sphi 0, %s24
    %p21 = scmp.ge.s32.totalorder %s20, 4
    %s30 = sphi 0, %s32
    %s33 = sphi 0, %s30
    %s34 = sphi 0, %s33
    %s50 = sphi 0, %s34
    %s54 = sphi 0, %s54
    %s56 = sphi 0, %s54
    %s57 = sphi 0, %s56
    %s71 = sphi 0, %s57
    %s75 = sphi 0, %s75
    %s77 = sphi 0, %s75
    %s78 = sphi 0, %s77
    %s92 = sphi 0, %s78
    %s96 = sphi 0, %s96
    %s98 = sphi 0, %s96
    %s99 = sphi 0, %s98
    %s113 = sphi 0, %s99
    %s117 = sphi 0, %s117
    %s119 = sphi 0, %s117
    %s120 = sphi 0, %s119
    %s134 = sphi 0, %s120
    %s138 = sphi 0, %s138
    %s140 = sphi 0, %s138
    %s141 = sphi 0, %s140
    %s155 = sphi 0, %s141
    %s159 = sphi 0, %s159
    %s161 = sphi 0, %s159
    %s162 = sphi 0, %s161
    %s176 = sphi 0, %s162
    %s180 = sphi 0, %s180
    %s182 = sphi 0, %s180
    %s183 = sphi 0, %s182
    %s197 = sphi 0, %s183
    %s201 = sphi 0, %s201
    %s203 = sphi 0, %s201
    %s204 = sphi 0, %s203
    %s218 = sphi 0, %s204
    %s222 = sphi 0, %s222
    %s224 = sphi 0, %s222
    %s225 = sphi 0, %s224
    %s239 = sphi 0, %s225
    %s243 = sphi 0, %s243
    %s245 = sphi 0, %s243
    %s246 = sphi 0, %s245
    %s260 = sphi 0, %s246
    %s264 = sphi 0, %s264
    %s266 = sphi 0, %s264
    %s267 = sphi 0, %s266
    %s281 = sphi 0, %s267
    %s285 = sphi 0, %s285
    %s287 = sphi 0, %s285
    %s288 = sphi 0, %s287
    %s302 = sphi 0, %s288
    %s306 = sphi 0, %s306
    %s308 = sphi 0, %s306
    %s309 = sphi 0, %s308
    %s323 = sphi 0, %s309
    %s329 = sphi 0, %s331
    %s332 = sphi 0, %s329
    %s333 = sphi 0, %s332
    %s349 = sphi 0, %s333
  $region4: #{nerf_mlp_forward.1} parent=0 // loop_header_branch
    %23 = sbr.rel (%p21) target = $region8
  $region5: #{nerf_mlp_forward.1} parent=0 // loop_body
    %s25 = ssub.s32 %s20, 1
    %s26 = ssub.s32 %s20, 2
    %s27 = sadd.s32 %s20, 1
    %s28 = ssub.s32 %s20, %s27
    %p29 = scmp.eq.s32.totalorder %s28, 0
    %s31 = sadd.s32 %s30, 1
    %s32 = scalar_select %p29, %s30, %s31
    %p35 = pneg %p29
    %p36 = scmp.eq.s32.totalorder %s20, 1
    %p37 = por %p35, %p36
    %p38 = scmp.ne.s32.totalorder %s30, %s33
    %p39 = scmp.eq.s32.totalorder %s20, 0
    %p40 = por %p38, %p39
    %p41 = scmp.ne.s32.totalorder %s30, %s33
    %p42 = scmp.eq.s32.totalorder %s25, 1
    %p43 = por %p41, %p42
    %p44 = scmp.ne.s32.totalorder %s33, %s34
    %p45 = scmp.eq.s32.totalorder %s25, 0
    %p46 = por %p44, %p45
    %p47 = scmp.ne.s32.totalorder %s33, %s34
    %p48 = scmp.eq.s32.totalorder %s26, 1
    %p49 = por %p47, %p48
    %p51 = scmp.ne.s32.totalorder %s34, %s50
    %p52 = scmp.eq.s32.totalorder %s26, 0
    %p53 = por %p51, %p52
    %s55 = sadd.s32 %s54, 1
    %p58 = scmp.eq.s32.totalorder %s20, 1
    %p59 = scmp.ne.s32.totalorder %s54, %s56
    %p60 = scmp.eq.s32.totalorder %s20, 0
    %p61 = por %p59, %p60
    %p62 = scmp.ne.s32.totalorder %s54, %s56
    %p63 = scmp.eq.s32.totalorder %s25, 1
    %p64 = por %p62, %p63
    %p65 = scmp.ne.s32.totalorder %s56, %s57
    %p66 = scmp.eq.s32.totalorder %s25, 0
    %p67 = por %p65, %p66
    %p68 = scmp.ne.s32.totalorder %s56, %s57
    %p69 = scmp.eq.s32.totalorder %s26, 1
    %p70 = por %p68, %p69
    %p72 = scmp.ne.s32.totalorder %s57, %s71
    %p73 = scmp.eq.s32.totalorder %s26, 0
    %p74 = por %p72, %p73
    %s76 = sadd.s32 %s75, 1
    %p79 = scmp.eq.s32.totalorder %s20, 1
    %p80 = scmp.ne.s32.totalorder %s75, %s77
    %p81 = scmp.eq.s32.totalorder %s20, 0
    %p82 = por %p80, %p81
    %p83 = scmp.ne.s32.totalorder %s75, %s77
    %p84 = scmp.eq.s32.totalorder %s25, 1
    %p85 = por %p83, %p84
    %p86 = scmp.ne.s32.totalorder %s77, %s78
    %p87 = scmp.eq.s32.totalorder %s25, 0
    %p88 = por %p86, %p87
    %p89 = scmp.ne.s32.totalorder %s77, %s78
    %p90 = scmp.eq.s32.totalorder %s26, 1
    %p91 = por %p89, %p90
    %p93 = scmp.ne.s32.totalorder %s78, %s92
    %p94 = scmp.eq.s32.totalorder %s26, 0
    %p95 = por %p93, %p94
    %s97 = sadd.s32 %s96, 1
    %p100 = scmp.eq.s32.totalorder %s20, 1
    %p101 = scmp.ne.s32.totalorder %s96, %s98
    %p102 = scmp.eq.s32.totalorder %s20, 0
    %p103 = por %p101, %p102
    %p104 = scmp.ne.s32.totalorder %s96, %s98
    %p105 = scmp.eq.s32.totalorder %s25, 1
    %p106 = por %p104, %p105
    %p107 = scmp.ne.s32.totalorder %s98, %s99
    %p108 = scmp.eq.s32.totalorder %s25, 0
    %p109 = por %p107, %p108
    %p110 = scmp.ne.s32.totalorder %s98, %s99
    %p111 = scmp.eq.s32.totalorder %s26, 1
    %p112 = por %p110, %p111
    %p114 = scmp.ne.s32.totalorder %s99, %s113
    %p115 = scmp.eq.s32.totalorder %s26, 0
    %p116 = por %p114, %p115
    %s118 = sadd.s32 %s117, 1
    %p121 = scmp.eq.s32.totalorder %s20, 1
    %p122 = scmp.ne.s32.totalorder %s117, %s119
    %p123 = scmp.eq.s32.totalorder %s20, 0
    %p124 = por %p122, %p123
    %p125 = scmp.ne.s32.totalorder %s117, %s119
    %p126 = scmp.eq.s32.totalorder %s25, 1
    %p127 = por %p125, %p126
    %p128 = scmp.ne.s32.totalorder %s119, %s120
    %p129 = scmp.eq.s32.totalorder %s25, 0
    %p130 = por %p128, %p129
    %p131 = scmp.ne.s32.totalorder %s119, %s120
    %p132 = scmp.eq.s32.totalorder %s26, 1
    %p133 = por %p131, %p132
    %p135 = scmp.ne.s32.totalorder %s120, %s134
    %p136 = scmp.eq.s32.totalorder %s26, 0
    %p137 = por %p135, %p136
    %s139 = sadd.s32 %s138, 1
    %p142 = scmp.eq.s32.totalorder %s20, 1
    %p143 = scmp.ne.s32.totalorder %s138, %s140
    %p144 = scmp.eq.s32.totalorder %s20, 0
    %p145 = por %p143, %p144
    %p146 = scmp.ne.s32.totalorder %s138, %s140
    %p147 = scmp.eq.s32.totalorder %s25, 1
    %p148 = por %p146, %p147
    %p149 = scmp.ne.s32.totalorder %s140, %s141
    %p150 = scmp.eq.s32.totalorder %s25, 0
    %p151 = por %p149, %p150
    %p152 = scmp.ne.s32.totalorder %s140, %s141
    %p153 = scmp.eq.s32.totalorder %s26, 1
    %p154 = por %p152, %p153
    %p156 = scmp.ne.s32.totalorder %s141, %s155
    %p157 = scmp.eq.s32.totalorder %s26, 0
    %p158 = por %p156, %p157
    %s160 = sadd.s32 %s159, 1
    %p163 = scmp.eq.s32.totalorder %s20, 1
    %p164 = scmp.ne.s32.totalorder %s159, %s161
    %p165 = scmp.eq.s32.totalorder %s20, 0
    %p166 = por %p164, %p165
    %p167 = scmp.ne.s32.totalorder %s159, %s161
    %p168 = scmp.eq.s32.totalorder %s25, 1
    %p169 = por %p167, %p168
    %p170 = scmp.ne.s32.totalorder %s161, %s162
    %p171 = scmp.eq.s32.totalorder %s25, 0
    %p172 = por %p170, %p171
    %p173 = scmp.ne.s32.totalorder %s161, %s162
    %p174 = scmp.eq.s32.totalorder %s26, 1
    %p175 = por %p173, %p174
    %p177 = scmp.ne.s32.totalorder %s162, %s176
    %p178 = scmp.eq.s32.totalorder %s26, 0
    %p179 = por %p177, %p178
    %s181 = sadd.s32 %s180, 1
    %p184 = scmp.eq.s32.totalorder %s20, 1
    %p185 = scmp.ne.s32.totalorder %s180, %s182
    %p186 = scmp.eq.s32.totalorder %s20, 0
    %p187 = por %p185, %p186
    %p188 = scmp.ne.s32.totalorder %s180, %s182
    %p189 = scmp.eq.s32.totalorder %s25, 1
    %p190 = por %p188, %p189
    %p191 = scmp.ne.s32.totalorder %s182, %s183
    %p192 = scmp.eq.s32.totalorder %s25, 0
    %p193 = por %p191, %p192
    %p194 = scmp.ne.s32.totalorder %s182, %s183
    %p195 = scmp.eq.s32.totalorder %s26, 1
    %p196 = por %p194, %p195
    %p198 = scmp.ne.s32.totalorder %s183, %s197
    %p199 = scmp.eq.s32.totalorder %s26, 0
    %p200 = por %p198, %p199
    %s202 = sadd.s32 %s201, 1
    %p205 = scmp.eq.s32.totalorder %s20, 1
    %p206 = scmp.ne.s32.totalorder %s201, %s203
    %p207 = scmp.eq.s32.totalorder %s20, 0
    %p208 = por %p206, %p207
    %p209 = scmp.ne.s32.totalorder %s201, %s203
    %p210 = scmp.eq.s32.totalorder %s25, 1
    %p211 = por %p209, %p210
    %p212 = scmp.ne.s32.totalorder %s203, %s204
    %p213 = scmp.eq.s32.totalorder %s25, 0
    %p214 = por %p212, %p213
    %p215 = scmp.ne.s32.totalorder %s203, %s204
    %p216 = scmp.eq.s32.totalorder %s26, 1
    %p217 = por %p215, %p216
    %p219 = scmp.ne.s32.totalorder %s204, %s218
    %p220 = scmp.eq.s32.totalorder %s26, 0
    %p221 = por %p219, %p220
    %s223 = sadd.s32 %s222, 1
    %p226 = scmp.eq.s32.totalorder %s20, 1
    %p227 = scmp.ne.s32.totalorder %s222, %s224
    %p228 = scmp.eq.s32.totalorder %s20, 0
    %p229 = por %p227, %p228
    %p230 = scmp.ne.s32.totalorder %s222, %s224
    %p231 = scmp.eq.s32.totalorder %s25, 1
    %p232 = por %p230, %p231
    %p233 = scmp.ne.s32.totalorder %s224, %s225
    %p234 = scmp.eq.s32.totalorder %s25, 0
    %p235 = por %p233, %p234
    %p236 = scmp.ne.s32.totalorder %s224, %s225
    %p237 = scmp.eq.s32.totalorder %s26, 1
    %p238 = por %p236, %p237
    %p240 = scmp.ne.s32.totalorder %s225, %s239
    %p241 = scmp.eq.s32.totalorder %s26, 0
    %p242 = por %p240, %p241
    %s244 = sadd.s32 %s243, 1
    %p247 = scmp.eq.s32.totalorder %s20, 1
    %p248 = scmp.ne.s32.totalorder %s243, %s245
    %p249 = scmp.eq.s32.totalorder %s20, 0
    %p250 = por %p248, %p249
    %p251 = scmp.ne.s32.totalorder %s243, %s245
    %p252 = scmp.eq.s32.totalorder %s25, 1
    %p253 = por %p251, %p252
    %p254 = scmp.ne.s32.totalorder %s245, %s246
    %p255 = scmp.eq.s32.totalorder %s25, 0
    %p256 = por %p254, %p255
    %p257 = scmp.ne.s32.totalorder %s245, %s246
    %p258 = scmp.eq.s32.totalorder %s26, 1
    %p259 = por %p257, %p258
    %p261 = scmp.ne.s32.totalorder %s246, %s260
    %p262 = scmp.eq.s32.totalorder %s26, 0
    %p263 = por %p261, %p262
    %s265 = sadd.s32 %s264, 1
    %p268 = scmp.eq.s32.totalorder %s20, 1
    %p269 = scmp.ne.s32.totalorder %s264, %s266
    %p270 = scmp.eq.s32.totalorder %s20, 0
    %p271 = por %p269, %p270
    %p272 = scmp.ne.s32.totalorder %s264, %s266
    %p273 = scmp.eq.s32.totalorder %s25, 1
    %p274 = por %p272, %p273
    %p275 = scmp.ne.s32.totalorder %s266, %s267
    %p276 = scmp.eq.s32.totalorder %s25, 0
    %p277 = por %p275, %p276
    %p278 = scmp.ne.s32.totalorder %s266, %s267
    %p279 = scmp.eq.s32.totalorder %s26, 1
    %p280 = por %p278, %p279
    %p282 = scmp.ne.s32.totalorder %s267, %s281
    %p283 = scmp.eq.s32.totalorder %s26, 0
    %p284 = por %p282, %p283
    %s286 = sadd.s32 %s285, 1
    %p289 = scmp.eq.s32.totalorder %s20, 1
    %p290 = scmp.ne.s32.totalorder %s285, %s287
    %p291 = scmp.eq.s32.totalorder %s20, 0
    %p292 = por %p290, %p291
    %p293 = scmp.ne.s32.totalorder %s285, %s287
    %p294 = scmp.eq.s32.totalorder %s25, 1
    %p295 = por %p293, %p294
    %p296 = scmp.ne.s32.totalorder %s287, %s288
    %p297 = scmp.eq.s32.totalorder %s25, 0
    %p298 = por %p296, %p297
    %p299 = scmp.ne.s32.totalorder %s287, %s288
    %p300 = scmp.eq.s32.totalorder %s26, 1
    %p301 = por %p299, %p300
    %p303 = scmp.ne.s32.totalorder %s288, %s302
    %p304 = scmp.eq.s32.totalorder %s26, 0
    %p305 = por %p303, %p304
    %s307 = sadd.s32 %s306, 1
    %p310 = scmp.eq.s32.totalorder %s20, 1
    %p311 = scmp.ne.s32.totalorder %s306, %s308
    %p312 = scmp.eq.s32.totalorder %s20, 0
    %p313 = por %p311, %p312
    %p314 = scmp.ne.s32.totalorder %s306, %s308
    %p315 = scmp.eq.s32.totalorder %s25, 1
    %p316 = por %p314, %p315
    %p317 = scmp.ne.s32.totalorder %s308, %s309
    %p318 = scmp.eq.s32.totalorder %s25, 0
    %p319 = por %p317, %p318
    %p320 = scmp.ne.s32.totalorder %s308, %s309
    %p321 = scmp.eq.s32.totalorder %s26, 1
    %p322 = por %p320, %p321
    %p324 = scmp.ne.s32.totalorder %s309, %s323
    %p325 = scmp.eq.s32.totalorder %s26, 0
    %p326 = por %p324, %p325
    %s327 = ssub.s32 %s20, %s27
    %p328 = scmp.eq.s32.totalorder %s327, 0
    %s330 = sadd.s32 %s329, 1
    %s331 = scalar_select %p328, %s329, %s330
    %p334 = pneg %p328
    %p335 = scmp.eq.s32.totalorder %s20, 1
    %p336 = por %p334, %p335
    %p337 = scmp.ne.s32.totalorder %s329, %s332
    %p338 = scmp.eq.s32.totalorder %s20, 0
    %p339 = por %p337, %p338
    %p340 = scmp.ne.s32.totalorder %s329, %s332
    %p341 = scmp.eq.s32.totalorder %s25, 1
    %p342 = por %p340, %p341
    %p343 = scmp.ne.s32.totalorder %s332, %s333
    %p344 = scmp.eq.s32.totalorder %s25, 0
    %p345 = por %p343, %p344
    %p346 = scmp.ne.s32.totalorder %s332, %s333
    %p347 = scmp.eq.s32.totalorder %s26, 1
    %p348 = por %p346, %p347
    %p350 = scmp.ne.s32.totalorder %s333, %s349
    %p351 = scmp.eq.s32.totalorder %s26, 0
    %p352 = por %p350, %p351
    %p353 = scmp.le.s32.totalorder 1, %s20
    %p354 = scmp.lt.s32.totalorder %s20, 3
    %p355 = pnand %p353, %p354
    %p356 = pneg %p355
    // Predicated region
    $region9: #{nerf_mlp_forward.1} parent=5 // pred_check
      _
    $region10: #{nerf_mlp_forward.1} parent=5 // pred_check_branch
      %358 = sbr.rel (%p355) target = $region12
    $region11: #{nerf_mlp_forward.1} parent=5 // pred_region
      %s359 = ssub.s32 %s20, 1
      // Predicated region
      $region13: #{nerf_mlp_forward.1} parent=11 // pred_check
        %p360 = pneg %p67
      $region14: #{nerf_mlp_forward.1} parent=11 // pred_check_branch
        %362 = sbr.rel (%p360) target = $region16
      $region15: #{nerf_mlp_forward.1} parent=11 // pred_region
        _
      $region16: #{nerf_mlp_forward.1} parent=11 // pred_fallthru
        _
      // Predicated region
      $region17: #{nerf_mlp_forward.1} parent=11 // pred_check
        %p363 = pneg %p88
      $region18: #{nerf_mlp_forward.1} parent=11 // pred_check_branch
        %365 = sbr.rel (%p363) target = $region20
      $region19: #{nerf_mlp_forward.1} parent=11 // pred_region
        _
      $region20: #{nerf_mlp_forward.1} parent=11 // pred_fallthru
        _
      // Predicated region
      $region21: #{nerf_mlp_forward.1} parent=11 // pred_check
        %p366 = pneg %p109
      $region22: #{nerf_mlp_forward.1} parent=11 // pred_check_branch
        %368 = sbr.rel (%p366) target = $region24
      $region23: #{nerf_mlp_forward.1} parent=11 // pred_region
        _
      $region24: #{nerf_mlp_forward.1} parent=11 // pred_fallthru
        _
      // Predicated region
      $region25: #{nerf_mlp_forward.1} parent=11 // pred_check
        %p369 = pneg %p130
      $region26: #{nerf_mlp_forward.1} parent=11 // pred_check_branch
        %371 = sbr.rel (%p369) target = $region28
      $region27: #{nerf_mlp_forward.1} parent=11 // pred_region
        _
      $region28: #{nerf_mlp_forward.1} parent=11 // pred_fallthru
        _
      // Predicated region
      $region29: #{nerf_mlp_forward.1} parent=11 // pred_check
        %p372 = pneg %p151
      $region30: #{nerf_mlp_forward.1} parent=11 // pred_check_branch
        %374 = sbr.rel (%p372) target = $region32
      $region31: #{nerf_mlp_forward.1} parent=11 // pred_region
        _
      $region32: #{nerf_mlp_forward.1} parent=11 // pred_fallthru
        _
      // Predicated region
      $region33: #{nerf_mlp_forward.1} parent=11 // pred_check
        %p375 = pneg %p172
      $region34: #{nerf_mlp_forward.1} parent=11 // pred_check_branch
        %377 = sbr.rel (%p375) target = $region36
      $region35: #{nerf_mlp_forward.1} parent=11 // pred_region
        _
      $region36: #{nerf_mlp_forward.1} parent=11 // pred_fallthru
        _
      // Predicated region
      $region37: #{nerf_mlp_forward.1} parent=11 // pred_check
        %p378 = pneg %p193
      $region38: #{nerf_mlp_forward.1} parent=11 // pred_check_branch
        %380 = sbr.rel (%p378) target = $region40
      $region39: #{nerf_mlp_forward.1} parent=11 // pred_region
        _
      $region40: #{nerf_mlp_forward.1} parent=11 // pred_fallthru
        _
      // Predicated region
      $region41: #{nerf_mlp_forward.1} parent=11 // pred_check
        %p381 = pneg %p214
      $region42: #{nerf_mlp_forward.1} parent=11 // pred_check_branch
        %383 = sbr.rel (%p381) target = $region44
      $region43: #{nerf_mlp_forward.1} parent=11 // pred_region
        _
      $region44: #{nerf_mlp_forward.1} parent=11 // pred_fallthru
        _
      // Predicated region
      $region45: #{nerf_mlp_forward.1} parent=11 // pred_check
        %p384 = pneg %p235
      $region46: #{nerf_mlp_forward.1} parent=11 // pred_check_branch
        %386 = sbr.rel (%p384) target = $region48
      $region47: #{nerf_mlp_forward.1} parent=11 // pred_region
        _
      $region48: #{nerf_mlp_forward.1} parent=11 // pred_fallthru
        _
      // Predicated region
      $region49: #{nerf_mlp_forward.1} parent=11 // pred_check
        %p387 = pneg %p256
      $region50: #{nerf_mlp_forward.1} parent=11 // pred_check_branch
        %389 = sbr.rel (%p387) target = $region52
      $region51: #{nerf_mlp_forward.1} parent=11 // pred_region
        _
      $region52: #{nerf_mlp_forward.1} parent=11 // pred_fallthru
        _
      // Predicated region
      $region53: #{nerf_mlp_forward.1} parent=11 // pred_check
        %p390 = pneg %p277
      $region54: #{nerf_mlp_forward.1} parent=11 // pred_check_branch
        %392 = sbr.rel (%p390) target = $region56
      $region55: #{nerf_mlp_forward.1} parent=11 // pred_region
        _
      $region56: #{nerf_mlp_forward.1} parent=11 // pred_fallthru
        _
      // Predicated region
      $region57: #{nerf_mlp_forward.1} parent=11 // pred_check
        %p393 = pneg %p298
      $region58: #{nerf_mlp_forward.1} parent=11 // pred_check_branch
        %395 = sbr.rel (%p393) target = $region60
      $region59: #{nerf_mlp_forward.1} parent=11 // pred_region
        _
      $region60: #{nerf_mlp_forward.1} parent=11 // pred_fallthru
        _
      // Predicated region
      $region61: #{nerf_mlp_forward.1} parent=11 // pred_check
        %p396 = pneg %p319
      $region62: #{nerf_mlp_forward.1} parent=11 // pred_check_branch
        %398 = sbr.rel (%p396) target = $region64
      $region63: #{nerf_mlp_forward.1} parent=11 // pred_region
        _
      $region64: #{nerf_mlp_forward.1} parent=11 // pred_fallthru
        _
    $region12: #{nerf_mlp_forward.1} parent=5 // pred_fallthru
      _
    %p399 = scmp.lt.s32.totalorder %s20, 2
    // Predicated region
    $region65: #{nerf_mlp_forward.1} parent=5 // pred_check
      %p400 = pneg %p399
    $region66: #{nerf_mlp_forward.1} parent=5 // pred_check_branch
      %402 = sbr.rel (%p400) target = $region68
    $region67: #{nerf_mlp_forward.1} parent=5 // pred_region
      // Predicated region
      $region69: #{nerf_mlp_forward.1} parent=67 // pred_check
        %p403 = pneg %p40
      $region70: #{nerf_mlp_forward.1} parent=67 // pred_check_branch
        %405 = sbr.rel (%p403) target = $region72
      $region71: #{nerf_mlp_forward.1} parent=67 // pred_region
        %s406 = smul.u32 64, %s20
        %p407 = scmp.lt.s32.totalorder %s406, 127
        %s408 = scalar_select %p407, %s406, 127
        %s409 = smul.addr %s408, 4
        %s410 = scalar_lea.vmem %s0, %s409
        %s411 = smul.u32 64, %s20
      $region72: #{nerf_mlp_forward.1} parent=67 // pred_fallthru
        _
    $region68: #{nerf_mlp_forward.1} parent=5 // pred_fallthru
      _
    %p412 = scmp.le.s32.totalorder 1, %s20
    %p413 = scmp.lt.s32.totalorder %s20, 3
    %p414 = pnand %p412, %p413
    %p415 = pneg %p414
    // Predicated region
    $region73: #{nerf_mlp_forward.1} parent=5 // pred_check
      _
    $region74: #{nerf_mlp_forward.1} parent=5 // pred_check_branch
      %417 = sbr.rel (%p414) target = $region76
    $region75: #{nerf_mlp_forward.1} parent=5 // pred_region
      %s418 = ssub.s32 %s20, 1
      %s419 = smul.u32 64, %s25
      %p420 = scmp.lt.s32.totalorder %s419, 127
      %s421 = scalar_select %p420, %s419, 127
      %s422 = smul.addr %s421, 4
      %s423 = scalar_lea.vmem %s0, %s422
      %p424 = pneg %p46
      %p425 = pneg %p43
      %p426 = pneg %p67
      %p427 = pneg %p64
      %p428 = pneg %p88
      %p429 = pneg %p85
      %p430 = pneg %p109
      %p431 = pneg %p106
      %p432 = pneg %p130
      %p433 = pneg %p127
      %p434 = pneg %p151
      %p435 = pneg %p148
      %p436 = pneg %p172
      %p437 = pneg %p169
      %p438 = pneg %p193
      %p439 = pneg %p190
      %p440 = pneg %p214
      %p441 = pneg %p211
      %p442 = pneg %p235
      %p443 = pneg %p232
      %p444 = pneg %p256
      %p445 = pneg %p253
      %p446 = pneg %p277
      %p447 = pneg %p274
      %p448 = pneg %p298
      %p449 = pneg %p295
      %p450 = pneg %p319
      %p451 = pneg %p316
      %p452 = pneg %p345
      %p453 = pneg %p342
      %s454 = smul.u32 64, %s25
      %p455 = scmp.lt.s32.totalorder %s454, 127
      %s456 = scalar_select %p455, %s454, 127
      %s457 = smul.addr %s456, 4
      %s458 = scalar_lea.vmem %s14, %s457
      %s459 = smul.u32 64, %s25
      %p460 = scmp.lt.s32.totalorder %s459, 127
      %s461 = scalar_select %p460, %s459, 127
      %s462 = smul.addr %s461, 4
      %s463 = scalar_lea.vmem %s0, %s462
      %s464 = smul.u32 64, %s25
      %s465 = smul.u32 64, %s25
      %p466 = scmp.lt.s32.totalorder %s465, 127
      %s467 = scalar_select %p466, %s465, 127
      %s468 = smul.addr %s467, 4
      %s469 = scalar_lea.vmem %s14, %s468
      %s470 = smul.u32 64, %s25
      %v472 = vld [vmem:[%s463] sm:$0xf]
      %v473 = vld [vmem:[%s463 + $0x4] sm:$0xf]
      %v474 = vld [vmem:[%s463 + $0x8] sm:$0xf]
      %v475 = vld [vmem:[%s463 + $0xc] sm:$0xf]
      %v476 = vld [vmem:[%s463 + $0x10] sm:$0xf]
      %v477 = vld [vmem:[%s463 + $0x14] sm:$0xf]
      %v478 = vld [vmem:[%s463 + $0x18] sm:$0xf]
      %v479 = vld [vmem:[%s463 + $0x1c] sm:$0xf]
      %v480 = vld [vmem:[%s463 + $0x20] sm:$0xf]
      %v481 = vld [vmem:[%s463 + $0x24] sm:$0xf]
      %v482 = vld [vmem:[%s463 + $0x28] sm:$0xf]
      %v483 = vld [vmem:[%s463 + $0x2c] sm:$0xf]
      %v484 = vld [vmem:[%s463 + $0x30] sm:$0xf]
      %v485 = vld [vmem:[%s463 + $0x34] sm:$0xf]
      %v486 = vld [vmem:[%s463 + $0x38] sm:$0xf]
      %v487 = vld [vmem:[%s463 + $0x3c] sm:$0xf]
      %v488 = vld [vmem:[%s463 + $0x40] sm:$0xf]
      %v489 = vld [vmem:[%s463 + $0x44] sm:$0xf]
      %v490 = vld [vmem:[%s463 + $0x48] sm:$0xf]
      %v491 = vld [vmem:[%s463 + $0x4c] sm:$0xf]
      %v492 = vld [vmem:[%s463 + $0x50] sm:$0xf]
      %v493 = vld [vmem:[%s463 + $0x54] sm:$0xf]
      %v494 = vld [vmem:[%s463 + $0x58] sm:$0xf]
      %v495 = vld [vmem:[%s463 + $0x5c] sm:$0xf]
      %v496 = vld [vmem:[%s463 + $0x60] sm:$0xf]
      %v497 = vld [vmem:[%s463 + $0x64] sm:$0xf]
      %v498 = vld [vmem:[%s463 + $0x68] sm:$0xf]
      %v499 = vld [vmem:[%s463 + $0x6c] sm:$0xf]
      %v500 = vld [vmem:[%s463 + $0x70] sm:$0xf]
      %v501 = vld [vmem:[%s463 + $0x74] sm:$0xf]
      %v502 = vld [vmem:[%s463 + $0x78] sm:$0xf]
      %v503 = vld [vmem:[%s463 + $0x7c] sm:$0xf]
      %v504 = vld [vmem:[%s463 + $0x80] sm:$0xf]
      %v505 = vld [vmem:[%s463 + $0x84] sm:$0xf]
      %v506 = vld [vmem:[%s463 + $0x88] sm:$0xf]
      %v507 = vld [vmem:[%s463 + $0x8c] sm:$0xf]
      %v508 = vld [vmem:[%s463 + $0x90] sm:$0xf]
      %v509 = vld [vmem:[%s463 + $0x94] sm:$0xf]
      %v510 = vld [vmem:[%s463 + $0x98] sm:$0xf]
      %v511 = vld [vmem:[%s463 + $0x9c] sm:$0xf]
      %v512 = vld [vmem:[%s463 + $0xa0] sm:$0xf]
      %v513 = vld [vmem:[%s463 + $0xa4] sm:$0xf]
      %v514 = vld [vmem:[%s463 + $0xa8] sm:$0xf]
      %v515 = vld [vmem:[%s463 + $0xac] sm:$0xf]
      %v516 = vld [vmem:[%s463 + $0xb0] sm:$0xf]
      %v517 = vld [vmem:[%s463 + $0xb4] sm:$0xf]
      %v518 = vld [vmem:[%s463 + $0xb8] sm:$0xf]
      %v519 = vld [vmem:[%s463 + $0xbc] sm:$0xf]
      %v520 = vld [vmem:[%s463 + $0xc0] sm:$0xf]
      %v521 = vld [vmem:[%s463 + $0xc4] sm:$0xf]
      %v522 = vld [vmem:[%s463 + $0xc8] sm:$0xf]
      %v523 = vld [vmem:[%s463 + $0xcc] sm:$0xf]
      %v524 = vld [vmem:[%s463 + $0xd0] sm:$0xf]
      %v525 = vld [vmem:[%s463 + $0xd4] sm:$0xf]
      %v526 = vld [vmem:[%s463 + $0xd8] sm:$0xf]
      %v527 = vld [vmem:[%s463 + $0xdc] sm:$0xf]
      %v528 = vld [vmem:[%s463 + $0xe0] sm:$0xf]
      %v529 = vld [vmem:[%s463 + $0xe4] sm:$0xf]
      %v530 = vld [vmem:[%s463 + $0xe8] sm:$0xf]
      %v531 = vld [vmem:[%s463 + $0xec] sm:$0xf]
      %v532 = vld [vmem:[%s463 + $0xf0] sm:$0xf]
      %v533 = vld [vmem:[%s463 + $0xf4] sm:$0xf]
      %v534 = vld [vmem:[%s463 + $0xf8] sm:$0xf]
      %v535 = vld [vmem:[%s463 + $0xfc] sm:$0xf]
      %v536 = vld [vmem:[%s1] sm:$0xff]
      %v537 = vld [vmem:[%s2] sm:$0x3]
      %v539 = vlaneseq
      %v540 = vshrl.u32 %v539, 7
      %v541 = vsub.s32 0, %v540
      %v542 = vrot.slane %v537, %v541
      %v543 = vlaneseq
      %v544 = vshrl.u32 %v543, 7
      %v545 = vsub.s32 1, %v544
      %v546 = vrot.slane %v537, %v545
      %v613 = vunpack.c.l.b16 %v472
      %v614 = vunpack.c.l.b16 %v473
      %v615 = vunpack.c.l.b16 %v474
      %v616 = vunpack.c.l.b16 %v475
      %v617 = vunpack.c.l.b16 %v476
      %v618 = vunpack.c.l.b16 %v477
      %v619 = vunpack.c.l.b16 %v478
      %v620 = vunpack.c.l.b16 %v479
      %v621 = vunpack.c.l.b16 %v480
      %v622 = vunpack.c.l.b16 %v481
      %v623 = vunpack.c.l.b16 %v482
      %v624 = vunpack.c.l.b16 %v483
      %v625 = vunpack.c.l.b16 %v484
      %v626 = vunpack.c.l.b16 %v485
      %v627 = vunpack.c.l.b16 %v486
      %v628 = vunpack.c.l.b16 %v487
      %v629 = vunpack.c.l.b16 %v488
      %v630 = vunpack.c.l.b16 %v489
      %v631 = vunpack.c.l.b16 %v490
      %v632 = vunpack.c.l.b16 %v491
      %v633 = vunpack.c.l.b16 %v492
      %v634 = vunpack.c.l.b16 %v493
      %v635 = vunpack.c.l.b16 %v494
      %v636 = vunpack.c.l.b16 %v495
      %v637 = vunpack.c.l.b16 %v496
      %v638 = vunpack.c.l.b16 %v497
      %v639 = vunpack.c.l.b16 %v498
      %v640 = vunpack.c.l.b16 %v499
      %v641 = vunpack.c.l.b16 %v500
      %v642 = vunpack.c.l.b16 %v501
      %v643 = vunpack.c.l.b16 %v502
      %v644 = vunpack.c.l.b16 %v503
      %v645 = vunpack.c.l.b16 %v504
      %v646 = vunpack.c.l.b16 %v505
      %v647 = vunpack.c.l.b16 %v506
      %v648 = vunpack.c.l.b16 %v507
      %v649 = vunpack.c.l.b16 %v508
      %v650 = vunpack.c.l.b16 %v509
      %v651 = vunpack.c.l.b16 %v510
      %v652 = vunpack.c.l.b16 %v511
      %v653 = vunpack.c.l.b16 %v512
      %v654 = vunpack.c.l.b16 %v513
      %v655 = vunpack.c.l.b16 %v514
      %v656 = vunpack.c.l.b16 %v515
      %v657 = vunpack.c.l.b16 %v516
      %v658 = vunpack.c.l.b16 %v517
      %v659 = vunpack.c.l.b16 %v518
      %v660 = vunpack.c.l.b16 %v519
      %v661 = vunpack.c.l.b16 %v520
      %v662 = vunpack.c.l.b16 %v521
      %v663 = vunpack.c.l.b16 %v522
      %v664 = vunpack.c.l.b16 %v523
      %v665 = vunpack.c.l.b16 %v524
      %v666 = vunpack.c.l.b16 %v525
      %v667 = vunpack.c.l.b16 %v526
      %v668 = vunpack.c.l.b16 %v527
      %v669 = vunpack.c.l.b16 %v528
      %v670 = vunpack.c.l.b16 %v529
      %v671 = vunpack.c.l.b16 %v530
      %v672 = vunpack.c.l.b16 %v531
      %v673 = vunpack.c.l.b16 %v532
      %v674 = vunpack.c.l.b16 %v533
      %v675 = vunpack.c.l.b16 %v534
      %v676 = vunpack.c.l.b16 %v535
      %v677 = vpack.c.b16 %v614, %v613
      %v678 = vpack.c.b16 %v616, %v615
      %v679 = vpack.c.b16 %v618, %v617
      %v680 = vpack.c.b16 %v620, %v619
      %v681 = vpack.c.b16 %v622, %v621
      %v682 = vpack.c.b16 %v624, %v623
      %v683 = vpack.c.b16 %v626, %v625
      %v684 = vpack.c.b16 %v628, %v627
      %v685 = vpack.c.b16 %v630, %v629
      %v686 = vpack.c.b16 %v632, %v631
      %v687 = vpack.c.b16 %v634, %v633
      %v688 = vpack.c.b16 %v636, %v635
      %v689 = vpack.c.b16 %v638, %v637
      %v690 = vpack.c.b16 %v640, %v639
      %v691 = vpack.c.b16 %v642, %v641
      %v692 = vpack.c.b16 %v644, %v643
      %v693 = vpack.c.b16 %v646, %v645
      %v694 = vpack.c.b16 %v648, %v647
      %v695 = vpack.c.b16 %v650, %v649
      %v696 = vpack.c.b16 %v652, %v651
      %v697 = vpack.c.b16 %v654, %v653
      %v698 = vpack.c.b16 %v656, %v655
      %v699 = vpack.c.b16 %v658, %v657
      %v700 = vpack.c.b16 %v660, %v659
      %v701 = vpack.c.b16 %v662, %v661
      %v702 = vpack.c.b16 %v664, %v663
      %v703 = vpack.c.b16 %v666, %v665
      %v704 = vpack.c.b16 %v668, %v667
      %v705 = vpack.c.b16 %v670, %v669
      %v706 = vpack.c.b16 %v672, %v671
      %v707 = vpack.c.b16 %v674, %v673
      %v708 = vpack.c.b16 %v676, %v675
      %v710 = vunpack.c.l.b16 %v536
      %v711 = vunpack.c.h.b16 %v536
      %v712 = vpack.c.b16 %v710, %v710
      %v713 = vpack.c.b16 %v711, %v711
      %vm714 = vcmask 64512
      %v716 = vsel %vm714, %v677, 0
      %v719 = vsel %vm714, %v678, 0
      %v722 = vsel %vm714, %v679, 0
      %v725 = vsel %vm714, %v680, 0
      %v728 = vsel %vm714, %v681, 0
      %v731 = vsel %vm714, %v682, 0
      %v734 = vsel %vm714, %v683, 0
      %v737 = vsel %vm714, %v684, 0
      %v740 = vsel %vm714, %v685, 0
      %v743 = vsel %vm714, %v686, 0
      %v746 = vsel %vm714, %v687, 0
      %v749 = vsel %vm714, %v688, 0
      %v752 = vsel %vm714, %v689, 0
      %v755 = vsel %vm714, %v690, 0
      %v758 = vsel %vm714, %v691, 0
      %v761 = vsel %vm714, %v692, 0
      %v764 = vsel %vm714, %v693, 0
      %v767 = vsel %vm714, %v694, 0
      %v770 = vsel %vm714, %v695, 0
      %v773 = vsel %vm714, %v696, 0
      %v776 = vsel %vm714, %v697, 0
      %v779 = vsel %vm714, %v698, 0
      %v782 = vsel %vm714, %v699, 0
      %v785 = vsel %vm714, %v700, 0
      %v788 = vsel %vm714, %v701, 0
      %v791 = vsel %vm714, %v702, 0
      %v794 = vsel %vm714, %v703, 0
      %v797 = vsel %vm714, %v704, 0
      %v800 = vsel %vm714, %v705, 0
      %v803 = vsel %vm714, %v706, 0
      %v806 = vsel %vm714, %v707, 0
      %v809 = vsel %vm714, %v708, 0
      %vm811 = vcmask 1043456
      %v813 = vsel %vm811, %v712, 0
      %v816 = vsel %vm811, %v713, 0
      %818 = vmatprep.subr.bf16.mxu0 %v816
      %819 = vmatpush1.bf16.msra.mxu0 %v813
      %820 = vmatprep.subr.bf16.mxu0 0
      %821 = vmatpush1.bf16.msra.mxu0 0
      %822 = vmatprep.subr.bf16.mxu0 0
      %823 = vmatpush1.bf16.msra.mxu0 0
      %824 = vmatprep.subr.bf16.mxu0 0
      %825 = vmatpush1.bf16.msra.mxu0 0
      %826 = vmatprep.subr.bf16.mxu0 0
      %827 = vmatpush1.bf16.msra.mxu0 0
      %828 = vmatprep.subr.bf16.mxu0 0
      %829 = vmatpush1.bf16.msra.mxu0 0
      %830 = vmatprep.subr.bf16.mxu0 0
      %831 = vmatpush1.bf16.msra.mxu0 0
      %832 = vmatprep.subr.bf16.mxu0 0
      %833 = vmatpush1.bf16.msra.mxu0 0
      %834 = vmatprep.subr.bf16.mxu0 0
      %835 = vmatpush1.bf16.msra.mxu0 0
      %836 = vmatprep.subr.bf16.mxu0 0
      %837 = vmatpush1.bf16.msra.mxu0 0
      %838 = vmatprep.subr.bf16.mxu0 0
      %839 = vmatpush1.bf16.msra.mxu0 0
      %840 = vmatprep.subr.bf16.mxu0 0
      %841 = vmatpush1.bf16.msra.mxu0 0
      %842 = vmatprep.subr.bf16.mxu0 0
      %843 = vmatpush1.bf16.msra.mxu0 0
      %844 = vmatprep.subr.bf16.mxu0 0
      %845 = vmatpush1.bf16.msra.mxu0 0
      %846 = vmatprep.subr.bf16.mxu0 0
      %847 = vmatpush1.bf16.msra.mxu0 0
      %848 = vmatprep.subr.bf16.mxu0 0
      %849 = vmatpush1.bf16.msra.mxu0 0
      %850 = vmatprep.mubr.bf16.mxu0 0
      %851 = vmatmul.mubr.bf16.gmra.mrb[0].mxu0 %v716
      %v852 = vpop.f32.mrb[0].mxu0
      %v853 = vadd.f32 %v542, %v852
      %v854 = vpop.f32.mrb[0].mxu0
      %v855 = vadd.f32 %v546, %v854
      %v856 = vpop.f32.mrb[0].mxu0
      %v857 = vadd.f32 %v542, %v856
      %v858 = vpop.f32.mrb[0].mxu0
      %v859 = vadd.f32 %v546, %v858
      %860 = vmatprep.mubr.bf16.mxu0 0
      %861 = vmatmul.mubr.bf16.gmra.mrb[0].mxu0 %v719
      %v862 = vpop.f32.mrb[0].mxu0
      %v863 = vadd.f32 %v542, %v862
      %v864 = vpop.f32.mrb[0].mxu0
      %v865 = vadd.f32 %v546, %v864
      %v866 = vpop.f32.mrb[0].mxu0
      %v867 = vadd.f32 %v542, %v866
      %v868 = vpop.f32.mrb[0].mxu0
      %v869 = vadd.f32 %v546, %v868
      %870 = vmatprep.mubr.bf16.mxu0 0
      %871 = vmatmul.mubr.bf16.gmra.mrb[0].mxu0 %v722
      %v872 = vpop.f32.mrb[0].mxu0
      %v873 = vadd.f32 %v542, %v872
      %v874 = vpop.f32.mrb[0].mxu0
      %v875 = vadd.f32 %v546, %v874
      %v876 = vpop.f32.mrb[0].mxu0
      %v877 = vadd.f32 %v542, %v876
      %v878 = vpop.f32.mrb[0].mxu0
      %v879 = vadd.f32 %v546, %v878
      %880 = vmatprep.mubr.bf16.mxu0 0
      %881 = vmatmul.mubr.bf16.gmra.mrb[0].mxu0 %v725
      %v882 = vpop.f32.mrb[0].mxu0
      %v883 = vadd.f32 %v542, %v882
      %v884 = vpop.f32.mrb[0].mxu0
      %v885 = vadd.f32 %v546, %v884
      %v886 = vpop.f32.mrb[0].mxu0
      %v887 = vadd.f32 %v542, %v886
      %v888 = vpop.f32.mrb[0].mxu0
      %v889 = vadd.f32 %v546, %v888
      %890 = vmatprep.mubr.bf16.mxu0 0
      %891 = vmatmul.mubr.bf16.gmra.mrb[0].mxu0 %v728
      %v892 = vpop.f32.mrb[0].mxu0
      %v893 = vadd.f32 %v542, %v892
      %v894 = vpop.f32.mrb[0].mxu0
      %v895 = vadd.f32 %v546, %v894
      %v896 = vpop.f32.mrb[0].mxu0
      %v897 = vadd.f32 %v542, %v896
      %v898 = vpop.f32.mrb[0].mxu0
      %v899 = vadd.f32 %v546, %v898
      %900 = vmatprep.mubr.bf16.mxu0 0
      %901 = vmatmul.mubr.bf16.gmra.mrb[0].mxu0 %v731
      %v902 = vpop.f32.mrb[0].mxu0
      %v903 = vadd.f32 %v542, %v902
      %v904 = vpop.f32.mrb[0].mxu0
      %v905 = vadd.f32 %v546, %v904
      %v906 = vpop.f32.mrb[0].mxu0
      %v907 = vadd.f32 %v542, %v906
      %v908 = vpop.f32.mrb[0].mxu0
      %v909 = vadd.f32 %v546, %v908
      %910 = vmatprep.mubr.bf16.mxu0 0
      %911 = vmatmul.mubr.bf16.gmra.mrb[0].mxu0 %v734
      %v912 = vpop.f32.mrb[0].mxu0
      %v913 = vadd.f32 %v542, %v912
      %v914 = vpop.f32.mrb[0].mxu0
      %v915 = vadd.f32 %v546, %v914
      %v916 = vpop.f32.mrb[0].mxu0
      %v917 = vadd.f32 %v542, %v916
      %v918 = vpop.f32.mrb[0].mxu0
      %v919 = vadd.f32 %v546, %v918
      %920 = vmatprep.mubr.bf16.mxu0 0
      %921 = vmatmul.mubr.bf16.gmra.mrb[0].mxu0 %v737
      %v922 = vpop.f32.mrb[0].mxu0
      %v923 = vadd.f32 %v542, %v922
      %v924 = vpop.f32.mrb[0].mxu0
      %v925 = vadd.f32 %v546, %v924
      %v926 = vpop.f32.mrb[0].mxu0
      %v927 = vadd.f32 %v542, %v926
      %v928 = vpop.f32.mrb[0].mxu0
      %v929 = vadd.f32 %v546, %v928
      %930 = vmatprep.mubr.bf16.mxu0 0
      %931 = vmatmul.mubr.bf16.gmra.mrb[0].mxu0 %v740
      %v932 = vpop.f32.mrb[0].mxu0
      %v933 = vadd.f32 %v542, %v932
      %v934 = vpop.f32.mrb[0].mxu0
      %v935 = vadd.f32 %v546, %v934
      %v936 = vpop.f32.mrb[0].mxu0
      %v937 = vadd.f32 %v542, %v936
      %v938 = vpop.f32.mrb[0].mxu0
      %v939 = vadd.f32 %v546, %v938
      %940 = vmatprep.mubr.bf16.mxu0 0
      %941 = vmatmul.mubr.bf16.gmra.mrb[0].mxu0 %v743
      %v942 = vpop.f32.mrb[0].mxu0
      %v943 = vadd.f32 %v542, %v942
      %v944 = vpop.f32.mrb[0].mxu0
      %v945 = vadd.f32 %v546, %v944
      %v946 = vpop.f32.mrb[0].mxu0
      %v947 = vadd.f32 %v542, %v946
      %v948 = vpop.f32.mrb[0].mxu0
      %v949 = vadd.f32 %v546, %v948
      %950 = vmatprep.mubr.bf16.mxu0 0
      %951 = vmatmul.mubr.bf16.gmra.mrb[0].mxu0 %v746
      %v952 = vpop.f32.mrb[0].mxu0
      %v953 = vadd.f32 %v542, %v952
      %v954 = vpop.f32.mrb[0].mxu0
      %v955 = vadd.f32 %v546, %v954
      %v956 = vpop.f32.mrb[0].mxu0
      %v957 = vadd.f32 %v542, %v956
      %v958 = vpop.f32.mrb[0].mxu0
      %v959 = vadd.f32 %v546, %v958
      %960 = vmatprep.mubr.bf16.mxu0 0
      %961 = vmatmul.mubr.bf16.gmra.mrb[0].mxu0 %v749
      %v962 = vpop.f32.mrb[0].mxu0
      %v963 = vadd.f32 %v542, %v962
      %v964 = vpop.f32.mrb[0].mxu0
      %v965 = vadd.f32 %v546, %v964
      %v966 = vpop.f32.mrb[0].mxu0
      %v967 = vadd.f32 %v542, %v966
      %v968 = vpop.f32.mrb[0].mxu0
      %v969 = vadd.f32 %v546, %v968
      %970 = vmatprep.mubr.bf16.mxu0 0
      %971 = vmatmul.mubr.bf16.gmra.mrb[0].mxu0 %v752
      %v972 = vpop.f32.mrb[0].mxu0
      %v973 = vadd.f32 %v542, %v972
      %v974 = vpop.f32.mrb[0].mxu0
      %v975 = vadd.f32 %v546, %v974
      %v976 = vpop.f32.mrb[0].mxu0
      %v977 = vadd.f32 %v542, %v976
      %v978 = vpop.f32.mrb[0].mxu0
      %v979 = vadd.f32 %v546, %v978
      %980 = vmatprep.mubr.bf16.mxu0 0
      %981 = vmatmul.mubr.bf16.gmra.mrb[0].mxu0 %v755
      %v982 = vpop.f32.mrb[0].mxu0
      %v983 = vadd.f32 %v542, %v982
      %v984 = vpop.f32.mrb[0].mxu0
      %v985 = vadd.f32 %v546, %v984
      %v986 = vpop.f32.mrb[0].mxu0
      %v987 = vadd.f32 %v542, %v986
      %v988 = vpop.f32.mrb[0].mxu0
      %v989 = vadd.f32 %v546, %v988
      %990 = vmatprep.mubr.bf16.mxu0 0
      %991 = vmatmul.mubr.bf16.gmra.mrb[0].mxu0 %v758
      %v992 = vpop.f32.mrb[0].mxu0
      %v993 = vadd.f32 %v542, %v992
      %v994 = vpop.f32.mrb[0].mxu0
      %v995 = vadd.f32 %v546, %v994
      %v996 = vpop.f32.mrb[0].mxu0
      %v997 = vadd.f32 %v542, %v996
      %v998 = vpop.f32.mrb[0].mxu0
      %v999 = vadd.f32 %v546, %v998
      %1000 = vmatprep.mubr.bf16.mxu0 0
      %1001 = vmatmul.mubr.bf16.gmra.mrb[0].mxu0 %v761
      %v1002 = vpop.f32.mrb[0].mxu0
      %v1003 = vadd.f32 %v542, %v1002
      %v1004 = vpop.f32.mrb[0].mxu0
      %v1005 = vadd.f32 %v546, %v1004
      %v1006 = vpop.f32.mrb[0].mxu0
      %v1007 = vadd.f32 %v542, %v1006
      %v1008 = vpop.f32.mrb[0].mxu0
      %v1009 = vadd.f32 %v546, %v1008
      %1010 = vmatprep.mubr.bf16.mxu0 0
      %1011 = vmatmul.mubr.bf16.gmra.mrb[0].mxu0 %v764
      %v1012 = vpop.f32.mrb[0].mxu0
      %v1013 = vadd.f32 %v542, %v1012
      %v1014 = vpop.f32.mrb[0].mxu0
      %v1015 = vadd.f32 %v546, %v1014
      %v1016 = vpop.f32.mrb[0].mxu0
      %v1017 = vadd.f32 %v542, %v1016
      %v1018 = vpop.f32.mrb[0].mxu0
      %v1019 = vadd.f32 %v546, %v1018
      %1020 = vmatprep.mubr.bf16.mxu0 0
      %1021 = vmatmul.mubr.bf16.gmra.mrb[0].mxu0 %v767
      %v1022 = vpop.f32.mrb[0].mxu0
      %v1023 = vadd.f32 %v542, %v1022
      %v1024 = vpop.f32.mrb[0].mxu0
      %v1025 = vadd.f32 %v546, %v1024
      %v1026 = vpop.f32.mrb[0].mxu0
      %v1027 = vadd.f32 %v542, %v1026
      %v1028 = vpop.f32.mrb[0].mxu0
      %v1029 = vadd.f32 %v546, %v1028
      %1030 = vmatprep.mubr.bf16.mxu0 0
      %1031 = vmatmul.mubr.bf16.gmra.mrb[0].mxu0 %v770
      %v1032 = vpop.f32.mrb[0].mxu0
      %v1033 = vadd.f32 %v542, %v1032
      %v1034 = vpop.f32.mrb[0].mxu0
      %v1035 = vadd.f32 %v546, %v1034
      %v1036 = vpop.f32.mrb[0].mxu0
      %v1037 = vadd.f32 %v542, %v1036
      %v1038 = vpop.f32.mrb[0].mxu0
      %v1039 = vadd.f32 %v546, %v1038
      %1040 = vmatprep.mubr.bf16.mxu0 0
      %1041 = vmatmul.mubr.bf16.gmra.mrb[0].mxu0 %v773
      %v1042 = vpop.f32.mrb[0].mxu0
      %v1043 = vadd.f32 %v542, %v1042
      %v1044 = vpop.f32.mrb[0].mxu0
      %v1045 = vadd.f32 %v546, %v1044
      %v1046 = vpop.f32.mrb[0].mxu0
      %v1047 = vadd.f32 %v542, %v1046
      %v1048 = vpop.f32.mrb[0].mxu0
      %v1049 = vadd.f32 %v546, %v1048
      %1050 = vmatprep.mubr.bf16.mxu0 0
      %1051 = vmatmul.mubr.bf16.gmra.mrb[0].mxu0 %v776
      %v1052 = vpop.f32.mrb[0].mxu0
      %v1053 = vadd.f32 %v542, %v1052
      %v1054 = vpop.f32.mrb[0].mxu0
      %v1055 = vadd.f32 %v546, %v1054
      %v1056 = vpop.f32.mrb[0].mxu0
      %v1057 = vadd.f32 %v542, %v1056
      %v1058 = vpop.f32.mrb[0].mxu0
      %v1059 = vadd.f32 %v546, %v1058
      %1060 = vmatprep.mubr.bf16.mxu0 0
      %1061 = vmatmul.mubr.bf16.gmra.mrb[0].mxu0 %v779
      %v1062 = vpop.f32.mrb[0].mxu0
      %v1063 = vadd.f32 %v542, %v1062
      %v1064 = vpop.f32.mrb[0].mxu0
      %v1065 = vadd.f32 %v546, %v1064
      %v1066 = vpop.f32.mrb[0].mxu0
      %v1067 = vadd.f32 %v542, %v1066
      %v1068 = vpop.f32.mrb[0].mxu0
      %v1069 = vadd.f32 %v546, %v1068
      %1070 = vmatprep.mubr.bf16.mxu0 0
      %1071 = vmatmul.mubr.bf16.gmra.mrb[0].mxu0 %v782
      %v1072 = vpop.f32.mrb[0].mxu0
      %v1073 = vadd.f32 %v542, %v1072
      %v1074 = vpop.f32.mrb[0].mxu0
      %v1075 = vadd.f32 %v546, %v1074
      %v1076 = vpop.f32.mrb[0].mxu0
      %v1077 = vadd.f32 %v542, %v1076
      %v1078 = vpop.f32.mrb[0].mxu0
      %v1079 = vadd.f32 %v546, %v1078
      %1080 = vmatprep.mubr.bf16.mxu0 0
      %1081 = vmatmul.mubr.bf16.gmra.mrb[0].mxu0 %v785
      %v1082 = vpop.f32.mrb[0].mxu0
      %v1083 = vadd.f32 %v542, %v1082
      %v1084 = vpop.f32.mrb[0].mxu0
      %v1085 = vadd.f32 %v546, %v1084
      %v1086 = vpop.f32.mrb[0].mxu0
      %v1087 = vadd.f32 %v542, %v1086
      %v1088 = vpop.f32.mrb[0].mxu0
      %v1089 = vadd.f32 %v546, %v1088
      %1090 = vmatprep.mubr.bf16.mxu0 0
      %1091 = vmatmul.mubr.bf16.gmra.mrb[0].mxu0 %v788
      %v1092 = vpop.f32.mrb[0].mxu0
      %v1093 = vadd.f32 %v542, %v1092
      %v1094 = vpop.f32.mrb[0].mxu0
      %v1095 = vadd.f32 %v546, %v1094
      %v1096 = vpop.f32.mrb[0].mxu0
      %v1097 = vadd.f32 %v542, %v1096
      %v1098 = vpop.f32.mrb[0].mxu0
      %v1099 = vadd.f32 %v546, %v1098
      %1100 = vmatprep.mubr.bf16.mxu0 0
      %1101 = vmatmul.mubr.bf16.gmra.mrb[0].mxu0 %v791
      %v1102 = vpop.f32.mrb[0].mxu0
      %v1103 = vadd.f32 %v542, %v1102
      %v1104 = vpop.f32.mrb[0].mxu0
      %v1105 = vadd.f32 %v546, %v1104
      %v1106 = vpop.f32.mrb[0].mxu0
      %v1107 = vadd.f32 %v542, %v1106
      %v1108 = vpop.f32.mrb[0].mxu0
      %v1109 = vadd.f32 %v546, %v1108
      %1110 = vmatprep.mubr.bf16.mxu0 0
      %1111 = vmatmul.mubr.bf16.gmra.mrb[0].mxu0 %v794
      %v1112 = vpop.f32.mrb[0].mxu0
      %v1113 = vadd.f32 %v542, %v1112
      %v1114 = vpop.f32.mrb[0].mxu0
      %v1115 = vadd.f32 %v546, %v1114
      %v1116 = vpop.f32.mrb[0].mxu0
      %v1117 = vadd.f32 %v542, %v1116
      %v1118 = vpop.f32.mrb[0].mxu0
      %v1119 = vadd.f32 %v546, %v1118
      %1120 = vmatprep.mubr.bf16.mxu0 0
      %1121 = vmatmul.mubr.bf16.gmra.mrb[0].mxu0 %v797
      %v1122 = vpop.f32.mrb[0].mxu0
      %v1123 = vadd.f32 %v542, %v1122
      %v1124 = vpop.f32.mrb[0].mxu0
      %v1125 = vadd.f32 %v546, %v1124
      %v1126 = vpop.f32.mrb[0].mxu0
      %v1127 = vadd.f32 %v542, %v1126
      %v1128 = vpop.f32.mrb[0].mxu0
      %v1129 = vadd.f32 %v546, %v1128
      %1130 = vmatprep.mubr.bf16.mxu0 0
      %1131 = vmatmul.mubr.bf16.gmra.mrb[0].mxu0 %v800
      %v1132 = vpop.f32.mrb[0].mxu0
      %v1133 = vadd.f32 %v542, %v1132
      %v1134 = vpop.f32.mrb[0].mxu0
      %v1135 = vadd.f32 %v546, %v1134
      %v1136 = vpop.f32.mrb[0].mxu0
      %v1137 = vadd.f32 %v542, %v1136
      %v1138 = vpop.f32.mrb[0].mxu0
      %v1139 = vadd.f32 %v546, %v1138
      %1140 = vmatprep.mubr.bf16.mxu0 0
      %1141 = vmatmul.mubr.bf16.gmra.mrb[0].mxu0 %v803
      %v1142 = vpop.f32.mrb[0].mxu0
      %v1143 = vadd.f32 %v542, %v1142
      %v1144 = vpop.f32.mrb[0].mxu0
      %v1145 = vadd.f32 %v546, %v1144
      %v1146 = vpop.f32.mrb[0].mxu0
      %v1147 = vadd.f32 %v542, %v1146
      %v1148 = vpop.f32.mrb[0].mxu0
      %v1149 = vadd.f32 %v546, %v1148
      %1150 = vmatprep.mubr.bf16.mxu0 0
      %1151 = vmatmul.mubr.bf16.gmra.mrb[0].mxu0 %v806
      %v1152 = vpop.f32.mrb[0].mxu0
      %v1153 = vadd.f32 %v542, %v1152
      %v1154 = vpop.f32.mrb[0].mxu0
      %v1155 = vadd.f32 %v546, %v1154
      %v1156 = vpop.f32.mrb[0].mxu0
      %v1157 = vadd.f32 %v542, %v1156
      %v1158 = vpop.f32.mrb[0].mxu0
      %v1159 = vadd.f32 %v546, %v1158
      %1160 = vmatprep.mubr.bf16.mxu0 0
      %1161 = vmatmul.mubr.bf16.gmra.mrb[0].mxu0 %v809
      %v1162 = vpop.f32.mrb[0].mxu0
      %v1163 = vadd.f32 %v542, %v1162
      %v1164 = vpop.f32.mrb[0].mxu0
      %v1165 = vadd.f32 %v546, %v1164
      %v1166 = vpop.f32.mrb[0].mxu0
      %v1167 = vadd.f32 %v542, %v1166
      %v1168 = vpop.f32.mrb[0].mxu0
      %v1169 = vadd.f32 %v546, %v1168
      %1170 = vdwg.mxu0
      %v1171 = vmax.f32 %v853, 0.0
      %v1172 = vmax.f32 %v855, 0.0
      %v1173 = vmax.f32 %v857, 0.0
      %v1174 = vmax.f32 %v859, 0.0
      %v1175 = vmax.f32 %v863, 0.0
      %v1176 = vmax.f32 %v865, 0.0
      %v1177 = vmax.f32 %v867, 0.0
      %v1178 = vmax.f32 %v869, 0.0
      %v1179 = vmax.f32 %v873, 0.0
      %v1180 = vmax.f32 %v875, 0.0
      %v1181 = vmax.f32 %v877, 0.0
      %v1182 = vmax.f32 %v879, 0.0
      %v1183 = vmax.f32 %v883, 0.0
      %v1184 = vmax.f32 %v885, 0.0
      %v1185 = vmax.f32 %v887, 0.0
      %v1186 = vmax.f32 %v889, 0.0
      %v1187 = vmax.f32 %v893, 0.0
      %v1188 = vmax.f32 %v895, 0.0
      %v1189 = vmax.f32 %v897, 0.0
      %v1190 = vmax.f32 %v899, 0.0
      %v1191 = vmax.f32 %v903, 0.0
      %v1192 = vmax.f32 %v905, 0.0
      %v1193 = vmax.f32 %v907, 0.0
      %v1194 = vmax.f32 %v909, 0.0
      %v1195 = vmax.f32 %v913, 0.0
      %v1196 = vmax.f32 %v915, 0.0
      %v1197 = vmax.f32 %v917, 0.0
      %v1198 = vmax.f32 %v919, 0.0
      %v1199 = vmax.f32 %v923, 0.0
      %v1200 = vmax.f32 %v925, 0.0
      %v1201 = vmax.f32 %v927, 0.0
      %v1202 = vmax.f32 %v929, 0.0
      %v1203 = vmax.f32 %v933, 0.0
      %v1204 = vmax.f32 %v935, 0.0
      %v1205 = vmax.f32 %v937, 0.0
      %v1206 = vmax.f32 %v939, 0.0
      %v1207 = vmax.f32 %v943, 0.0
      %v1208 = vmax.f32 %v945, 0.0
      %v1209 = vmax.f32 %v947, 0.0
      %v1210 = vmax.f32 %v949, 0.0
      %v1211 = vmax.f32 %v953, 0.0
      %v1212 = vmax.f32 %v955, 0.0
      %v1213 = vmax.f32 %v957, 0.0
      %v1214 = vmax.f32 %v959, 0.0
      %v1215 = vmax.f32 %v963, 0.0
      %v1216 = vmax.f32 %v965, 0.0
      %v1217 = vmax.f32 %v967, 0.0
      %v1218 = vmax.f32 %v969, 0.0
      %v1219 = vmax.f32 %v973, 0.0
      %v1220 = vmax.f32 %v975, 0.0
      %v1221 = vmax.f32 %v977, 0.0
      %v1222 = vmax.f32 %v979, 0.0
      %v1223 = vmax.f32 %v983, 0.0
      %v1224 = vmax.f32 %v985, 0.0
      %v1225 = vmax.f32 %v987, 0.0
      %v1226 = vmax.f32 %v989, 0.0
      %v1227 = vmax.f32 %v993, 0.0
      %v1228 = vmax.f32 %v995, 0.0
      %v1229 = vmax.f32 %v997, 0.0
      %v1230 = vmax.f32 %v999, 0.0
      %v1231 = vmax.f32 %v1003, 0.0
      %v1232 = vmax.f32 %v1005, 0.0
      %v1233 = vmax.f32 %v1007, 0.0
      %v1234 = vmax.f32 %v1009, 0.0
      %v1235 = vmax.f32 %v1013, 0.0
      %v1236 = vmax.f32 %v1015, 0.0
      %v1237 = vmax.f32 %v1017, 0.0
      %v1238 = vmax.f32 %v1019, 0.0
      %v1239 = vmax.f32 %v1023, 0.0
      %v1240 = vmax.f32 %v1025, 0.0
      %v1241 = vmax.f32 %v1027, 0.0
      %v1242 = vmax.f32 %v1029, 0.0
      %v1243 = vmax.f32 %v1033, 0.0
      %v1244 = vmax.f32 %v1035, 0.0
      %v1245 = vmax.f32 %v1037, 0.0
      %v1246 = vmax.f32 %v1039, 0.0
      %v1247 = vmax.f32 %v1043, 0.0
      %v1248 = vmax.f32 %v1045, 0.0
      %v1249 = vmax.f32 %v1047, 0.0
      %v1250 = vmax.f32 %v1049, 0.0
      %v1251 = vmax.f32 %v1053, 0.0
      %v1252 = vmax.f32 %v1055, 0.0
      %v1253 = vmax.f32 %v1057, 0.0
      %v1254 = vmax.f32 %v1059, 0.0
      %v1255 = vmax.f32 %v1063, 0.0
      %v1256 = vmax.f32 %v1065, 0.0
      %v1257 = vmax.f32 %v1067, 0.0
      %v1258 = vmax.f32 %v1069, 0.0
      %v1259 = vmax.f32 %v1073, 0.0
      %v1260 = vmax.f32 %v1075, 0.0
      %v1261 = vmax.f32 %v1077, 0.0
      %v1262 = vmax.f32 %v1079, 0.0
      %v1263 = vmax.f32 %v1083, 0.0
      %v1264 = vmax.f32 %v1085, 0.0
      %v1265 = vmax.f32 %v1087, 0.0
      %v1266 = vmax.f32 %v1089, 0.0
      %v1267 = vmax.f32 %v1093, 0.0
      %v1268 = vmax.f32 %v1095, 0.0
      %v1269 = vmax.f32 %v1097, 0.0
      %v1270 = vmax.f32 %v1099, 0.0
      %v1271 = vmax.f32 %v1103, 0.0
      %v1272 = vmax.f32 %v1105, 0.0
      %v1273 = vmax.f32 %v1107, 0.0
      %v1274 = vmax.f32 %v1109, 0.0
      %v1275 = vmax.f32 %v1113, 0.0
      %v1276 = vmax.f32 %v1115, 0.0
      %v1277 = vmax.f32 %v1117, 0.0
      %v1278 = vmax.f32 %v1119, 0.0
      %v1279 = vmax.f32 %v1123, 0.0
      %v1280 = vmax.f32 %v1125, 0.0
      %v1281 = vmax.f32 %v1127, 0.0
      %v1282 = vmax.f32 %v1129, 0.0
      %v1283 = vmax.f32 %v1133, 0.0
      %v1284 = vmax.f32 %v1135, 0.0
      %v1285 = vmax.f32 %v1137, 0.0
      %v1286 = vmax.f32 %v1139, 0.0
      %v1287 = vmax.f32 %v1143, 0.0
      %v1288 = vmax.f32 %v1145, 0.0
      %v1289 = vmax.f32 %v1147, 0.0
      %v1290 = vmax.f32 %v1149, 0.0
      %v1291 = vmax.f32 %v1153, 0.0
      %v1292 = vmax.f32 %v1155, 0.0
      %v1293 = vmax.f32 %v1157, 0.0
      %v1294 = vmax.f32 %v1159, 0.0
      %v1295 = vmax.f32 %v1163, 0.0
      %v1296 = vmax.f32 %v1165, 0.0
      %v1297 = vmax.f32 %v1167, 0.0
      %v1298 = vmax.f32 %v1169, 0.0
      %v1299 = vpack.c.bf16 %v1173, %v1171
      %v1300 = vpack.c.bf16 %v1174, %v1172
      %v1301 = vpack.c.bf16 %v1177, %v1175
      %v1302 = vpack.c.bf16 %v1178, %v1176
      %v1303 = vpack.c.bf16 %v1181, %v1179
      %v1304 = vpack.c.bf16 %v1182, %v1180
      %v1305 = vpack.c.bf16 %v1185, %v1183
      %v1306 = vpack.c.bf16 %v1186, %v1184
      %v1307 = vpack.c.bf16 %v1189, %v1187
      %v1308 = vpack.c.bf16 %v1190, %v1188
      %v1309 = vpack.c.bf16 %v1193, %v1191
      %v1310 = vpack.c.bf16 %v1194, %v1192
      %v1311 = vpack.c.bf16 %v1197, %v1195
      %v1312 = vpack.c.bf16 %v1198, %v1196
      %v1313 = vpack.c.bf16 %v1201, %v1199
      %v1314 = vpack.c.bf16 %v1202, %v1200
      %v1315 = vpack.c.bf16 %v1205, %v1203
      %v1316 = vpack.c.bf16 %v1206, %v1204
      %v1317 = vpack.c.bf16 %v1209, %v1207
      %v1318 = vpack.c.bf16 %v1210, %v1208
      %v1319 = vpack.c.bf16 %v1213, %v1211
      %v1320 = vpack.c.bf16 %v1214, %v1212
      %v1321 = vpack.c.bf16 %v1217, %v1215
      %v1322 = vpack.c.bf16 %v1218, %v1216
      %v1323 = vpack.c.bf16 %v1221, %v1219
      %v1324 = vpack.c.bf16 %v1222, %v1220
      %v1325 = vpack.c.bf16 %v1225, %v1223
      %v1326 = vpack.c.bf16 %v1226, %v1224
      %v1327 = vpack.c.bf16 %v1229, %v1227
      %v1328 = vpack.c.bf16 %v1230, %v1228
      %v1329 = vpack.c.bf16 %v1233, %v1231
      %v1330 = vpack.c.bf16 %v1234, %v1232
      %v1331 = vpack.c.bf16 %v1237, %v1235
      %v1332 = vpack.c.bf16 %v1238, %v1236
      %v1333 = vpack.c.bf16 %v1241, %v1239
      %v1334 = vpack.c.bf16 %v1242, %v1240
      %v1335 = vpack.c.bf16 %v1245, %v1243
      %v1336 = vpack.c.bf16 %v1246, %v1244
      %v1337 = vpack.c.bf16 %v1249, %v1247
      %v1338 = vpack.c.bf16 %v1250, %v1248
      %v1339 = vpack.c.bf16 %v1253, %v1251
      %v1340 = vpack.c.bf16 %v1254, %v1252
      %v1341 = vpack.c.bf16 %v1257, %v1255
      %v1342 = vpack.c.bf16 %v1258, %v1256
      %v1343 = vpack.c.bf16 %v1261, %v1259
      %v1344 = vpack.c.bf16 %v1262, %v1260
      %v1345 = vpack.c.bf16 %v1265, %v1263
      %v1346 = vpack.c.bf16 %v1266, %v1264
      %v1347 = vpack.c.bf16 %v1269, %v1267
      %v1348 = vpack.c.bf16 %v1270, %v1268
      %v1349 = vpack.c.bf16 %v1273, %v1271
      %v1350 = vpack.c.bf16 %v1274, %v1272
      %v1351 = vpack.c.bf16 %v1277, %v1275
      %v1352 = vpack.c.bf16 %v1278, %v1276
      %v1353 = vpack.c.bf16 %v1281, %v1279
      %v1354 = vpack.c.bf16 %v1282, %v1280
      %v1355 = vpack.c.bf16 %v1285, %v1283
      %v1356 = vpack.c.bf16 %v1286, %v1284
      %v1357 = vpack.c.bf16 %v1289, %v1287
      %v1358 = vpack.c.bf16 %v1290, %v1288
      %v1359 = vpack.c.bf16 %v1293, %v1291
      %v1360 = vpack.c.bf16 %v1294, %v1292
      %v1361 = vpack.c.bf16 %v1297, %v1295
      %v1362 = vpack.c.bf16 %v1298, %v1296
      %v1363 = vld [vmem:[%s3] sm:$0xff]
      %v1364 = vld [vmem:[%s3 + $0x8] sm:$0xff]
      %v1365 = vld [vmem:[%s3 + $0x10] sm:$0xff]
      %v1366 = vld [vmem:[%s3 + $0x18] sm:$0xff]
      %v1367 = vld [vmem:[%s3 + $0x20] sm:$0xff]
      %v1368 = vld [vmem:[%s3 + $0x28] sm:$0xff]
      %v1369 = vld [vmem:[%s3 + $0x30] sm:$0xff]
      %v1370 = vld [vmem:[%s3 + $0x38] sm:$0xff]
      %v1371 = vld [vmem:[%s3 + $0x40] sm:$0xff]
      %v1372 = vld [vmem:[%s3 + $0x48] sm:$0xff]
      %v1373 = vld [vmem:[%s3 + $0x50] sm:$0xff]
      %v1374 = vld [vmem:[%s3 + $0x58] sm:$0xff]
      %v1375 = vld [vmem:[%s3 + $0x60] sm:$0xff]
      %v1376 = vld [vmem:[%s3 + $0x68] sm:$0xff]
      %v1377 = vld [vmem:[%s3 + $0x70] sm:$0xff]
      %v1378 = vld [vmem:[%s3 + $0x78] sm:$0xff]
      %v1379 = vld [vmem:[%s3 + $0x80] sm:$0xff]
      %v1380 = vld [vmem:[%s3 + $0x88] sm:$0xff]
      %v1381 = vld [vmem:[%s3 + $0x90] sm:$0xff]
      %v1382 = vld [vmem:[%s3 + $0x98] sm:$0xff]
      %v1383 = vld [vmem:[%s3 + $0xa0] sm:$0xff]
      %v1384 = vld [vmem:[%s3 + $0xa8] sm:$0xff]
      %v1385 = vld [vmem:[%s3 + $0xb0] sm:$0xff]
      %v1386 = vld [vmem:[%s3 + $0xb8] sm:$0xff]
      %v1387 = vld [vmem:[%s3 + $0xc0] sm:$0xff]
      %v1388 = vld [vmem:[%s3 + $0xc8] sm:$0xff]
      %v1389 = vld [vmem:[%s3 + $0xd0] sm:$0xff]
      %v1390 = vld [vmem:[%s3 + $0xd8] sm:$0xff]
      %v1391 = vld [vmem:[%s3 + $0xe0] sm:$0xff]
      %v1392 = vld [vmem:[%s3 + $0xe8] sm:$0xff]
      %v1393 = vld [vmem:[%s3 + $0xf0] sm:$0xff]
      %v1394 = vld [vmem:[%s3 + $0xf8] sm:$0xff]
      %v1395 = vld [vmem:[%s4] sm:$0x3]
      %v1397 = vlaneseq
      %v1398 = vshrl.u32 %v1397, 7
      %v1399 = vsub.s32 0, %v1398
      %v1400 = vrot.slane %v1395, %v1399
      %v1401 = vlaneseq
      %v1402 = vshrl.u32 %v1401, 7
      %v1403 = vsub.s32 1, %v1402
      %v1404 = vrot.slane %v1395, %v1403
      %v1439 = vunpack.c.l.b16 %v1363
      %v1440 = vunpack.c.h.b16 %v1363
      %v1441 = vunpack.c.l.b16 %v1364
      %v1442 = vunpack.c.h.b16 %v1364
      %v1443 = vunpack.c.l.b16 %v1365
      %v1444 = vunpack.c.h.b16 %v1365
      %v1445 = vunpack.c.l.b16 %v1366
      %v1446 = vunpack.c.h.b16 %v1366
      %v1447 = vunpack.c.l.b16 %v1367
      %v1448 = vunpack.c.h.b16 %v1367
      %v1449 = vunpack.c.l.b16 %v1368
      %v1450 = vunpack.c.h.b16 %v1368
      %v1451 = vunpack.c.l.b16 %v1369
      %v1452 = vunpack.c.h.b16 %v1369
      %v1453 = vunpack.c.l.b16 %v1370
      %v1454 = vunpack.c.h.b16 %v1370
      %v1455 = vunpack.c.l.b16 %v1371
      %v1456 = vunpack.c.h.b16 %v1371
      %v1457 = vunpack.c.l.b16 %v1372
      %v1458 = vunpack.c.h.b16 %v1372
      %v1459 = vunpack.c.l.b16 %v1373
      %v1460 = vunpack.c.h.b16 %v1373
      %v1461 = vunpack.c.l.b16 %v1374
      %v1462 = vunpack.c.h.b16 %v1374
      %v1463 = vunpack.c.l.b16 %v1375
      %v1464 = vunpack.c.h.b16 %v1375
      %v1465 = vunpack.c.l.b16 %v1376
      %v1466 = vunpack.c.h.b16 %v1376
      %v1467 = vunpack.c.l.b16 %v1377
      %v1468 = vunpack.c.h.b16 %v1377
      %v1469 = vunpack.c.l.b16 %v1378
      %v1470 = vunpack.c.h.b16 %v1378
      %v1471 = vunpack.c.l.b16 %v1379
      %v1472 = vunpack.c.h.b16 %v1379
      %v1473 = vunpack.c.l.b16 %v1380
      %v1474 = vunpack.c.h.b16 %v1380
      %v1475 = vunpack.c.l.b16 %v1381
      %v1476 = vunpack.c.h.b16 %v1381
      %v1477 = vunpack.c.l.b16 %v1382
      %v1478 = vunpack.c.h.b16 %v1382
      %v1479 = vunpack.c.l.b16 %v1383
      %v1480 = vunpack.c.h.b16 %v1383
      %v1481 = vunpack.c.l.b16 %v1384
      %v1482 = vunpack.c.h.b16 %v1384
      %v1483 = vunpack.c.l.b16 %v1385
      %v1484 = vunpack.c.h.b16 %v1385
      %v1485 = vunpack.c.l.b16 %v1386
      %v1486 = vunpack.c.h.b16 %v1386
      %v1487 = vunpack.c.l.b16 %v1387
      %v1488 = vunpack.c.h.b16 %v1387
      %v1489 = vunpack.c.l.b16 %v1388
      %v1490 = vunpack.c.h.b16 %v1388
      %v1491 = vunpack.c.l.b16 %v1389
      %v1492 = vunpack.c.h.b16 %v1389
      %v1493 = vunpack.c.l.b16 %v1390
      %v1494 = vunpack.c.h.b16 %v1390
      %v1495 = vunpack.c.l.b16 %v1391
      %v1496 = vunpack.c.h.b16 %v1391
      %v1497 = vunpack.c.l.b16 %v1392
      %v1498 = vunpack.c.h.b16 %v1392
      %v1499 = vunpack.c.l.b16 %v1393
      %v1500 = vunpack.c.h.b16 %v1393
      %v1501 = vunpack.c.l.b16 %v1394
      %v1502 = vunpack.c.h.b16 %v1394
      %v1503 = vpack.c.b16 %v1441, %v1439
      %v1504 = vpack.c.b16 %v1442, %v1440
      %v1505 = vpack.c.b16 %v1445, %v1443
      %v1506 = vpack.c.b16 %v1446, %v1444
      %v1507 = vpack.c.b16 %v1449, %v1447
      %v1508 = vpack.c.b16 %v1450, %v1448
      %v1509 = vpack.c.b16 %v1453, %v1451
      %v1510 = vpack.c.b16 %v1454, %v1452
      %v1511 = vpack.c.b16 %v1457, %v1455
      %v1512 = vpack.c.b16 %v1458, %v1456
      %v1513 = vpack.c.b16 %v1461, %v1459
      %v1514 = vpack.c.b16 %v1462, %v1460
      %v1515 = vpack.c.b16 %v1465, %v1463
      %v1516 = vpack.c.b16 %v1466, %v1464
      %v1517 = vpack.c.b16 %v1469, %v1467
      %v1518 = vpack.c.b16 %v1470, %v1468
      %v1519 = vpack.c.b16 %v1473, %v1471
      %v1520 = vpack.c.b16 %v1474, %v1472
      %v1521 = vpack.c.b16 %v1477, %v1475
      %v1522 = vpack.c.b16 %v1478, %v1476
      %v1523 = vpack.c.b16 %v1481, %v1479
      %v1524 = vpack.c.b16 %v1482, %v1480
      %v1525 = vpack.c.b16 %v1485, %v1483
      %v1526 = vpack.c.b16 %v1486, %v1484
      %v1527 = vpack.c.b16 %v1489, %v1487
      %v1528 = vpack.c.b16 %v1490, %v1488
      %v1529 = vpack.c.b16 %v1493, %v1491
      %v1530 = vpack.c.b16 %v1494, %v1492
      %v1531 = vpack.c.b16 %v1497, %v1495
      %v1532 = vpack.c.b16 %v1498, %v1496
      %v1533 = vpack.c.b16 %v1501, %v1499
      %v1534 = vpack.c.b16 %v1502, %v1500
      %1567 = vmatprep.subr.bf16.mxu0 %v1504
      %1568 = vmatpush1.bf16.msra.mxu0 %v1503
      %1569 = vmatprep.subr.bf16.mxu0 %v1506
      %1570 = vmatpush1.bf16.msra.mxu0 %v1505
      %1571 = vmatprep.subr.bf16.mxu0 %v1508
      %1572 = vmatpush1.bf16.msra.mxu0 %v1507
      %1573 = vmatprep.subr.bf16.mxu0 %v1510
      %1574 = vmatpush1.bf16.msra.mxu0 %v1509
      %1575 = vmatprep.subr.bf16.mxu0 %v1512
      %1576 = vmatpush1.bf16.msra.mxu0 %v1511
      %1577 = vmatprep.subr.bf16.mxu0 %v1514
      %1578 = vmatpush1.bf16.msra.mxu0 %v1513
      %1579 = vmatprep.subr.bf16.mxu0 %v1516
      %1580 = vmatpush1.bf16.msra.mxu0 %v1515
      %1581 = vmatprep.subr.bf16.mxu0 %v1518
      %1582 = vmatpush1.bf16.msra.mxu0 %v1517
      %1583 = vmatprep.subr.bf16.mxu0 %v1520
      %1584 = vmatpush1.bf16.msra.mxu0 %v1519
      %1585 = vmatprep.subr.bf16.mxu0 %v1522
      %1586 = vmatpush1.bf16.msra.mxu0 %v1521
      %1587 = vmatprep.subr.bf16.mxu0 %v1524
      %1588 = vmatpush1.bf16.msra.mxu0 %v1523
      %1589 = vmatprep.subr.bf16.mxu0 %v1526
      %1590 = vmatpush1.bf16.msra.mxu0 %v1525
      %1591 = vmatprep.subr.bf16.mxu0 %v1528
      %1592 = vmatpush1.bf16.msra.mxu0 %v1527
      %1593 = vmatprep.subr.bf16.mxu0 %v1530
      %1594 = vmatpush1.bf16.msra.mxu0 %v1529
      %1595 = vmatprep.subr.bf16.mxu0 %v1532
      %1596 = vmatpush1.bf16.msra.mxu0 %v1531
      %1597 = vmatprep.subr.bf16.mxu0 %v1534
      %1598 = vmatpush1.bf16.msra.mxu0 %v1533
      %1599 = vmatprep.mubr.bf16.mxu0 %v1300
      %1600 = vmatmul.mubr.bf16.gmra.mrb[0].mxu0 %v1299
      %v1601 = vpop.f32.mrb[0].mxu0
      %v1602 = vadd.f32 %v1400, %v1601
      %v1603 = vpop.f32.mrb[0].mxu0
      %v1604 = vadd.f32 %v1404, %v1603
      %v1605 = vpop.f32.mrb[0].mxu0
      %v1606 = vadd.f32 %v1400, %v1605
      %v1607 = vpop.f32.mrb[0].mxu0
      %v1608 = vadd.f32 %v1404, %v1607
      %1609 = vmatprep.mubr.bf16.mxu0 %v1302
      %1610 = vmatmul.mubr.bf16.gmra.mrb[0].mxu0 %v1301
      %v1611 = vpop.f32.mrb[0].mxu0
      %v1612 = vadd.f32 %v1400, %v1611
      %v1613 = vpop.f32.mrb[0].mxu0
      %v1614 = vadd.f32 %v1404, %v1613
      %v1615 = vpop.f32.mrb[0].mxu0
      %v1616 = vadd.f32 %v1400, %v1615
      %v1617 = vpop.f32.mrb[0].mxu0
      %v1618 = vadd.f32 %v1404, %v1617
      %1619 = vmatprep.mubr.bf16.mxu0 %v1304
      %1620 = vmatmul.mubr.bf16.gmra.mrb[0].mxu0 %v1303
      %v1621 = vpop.f32.mrb[0].mxu0
      %v1622 = vadd.f32 %v1400, %v1621
      %v1623 = vpop.f32.mrb[0].mxu0
      %v1624 = vadd.f32 %v1404, %v1623
      %v1625 = vpop.f32.mrb[0].mxu0
      %v1626 = vadd.f32 %v1400, %v1625
      %v1627 = vpop.f32.mrb[0].mxu0
      %v1628 = vadd.f32 %v1404, %v1627
      %1629 = vmatprep.mubr.bf16.mxu0 %v1306
      %1630 = vmatmul.mubr.bf16.gmra.mrb[0].mxu0 %v1305
      %v1631 = vpop.f32.mrb[0].mxu0
      %v1632 = vadd.f32 %v1400, %v1631
      %v1633 = vpop.f32.mrb[0].mxu0
      %v1634 = vadd.f32 %v1404, %v1633
      %v1635 = vpop.f32.mrb[0].mxu0
      %v1636 = vadd.f32 %v1400, %v1635
      %v1637 = vpop.f32.mrb[0].mxu0
      %v1638 = vadd.f32 %v1404, %v1637
      %1639 = vmatprep.mubr.bf16.mxu0 %v1308
      %1640 = vmatmul.mubr.bf16.gmra.mrb[0].mxu0 %v1307
      %v1641 = vpop.f32.mrb[0].mxu0
      %v1642 = vadd.f32 %v1400, %v1641
      %v1643 = vpop.f32.mrb[0].mxu0
      %v1644 = vadd.f32 %v1404, %v1643
      %v1645 = vpop.f32.mrb[0].mxu0
      %v1646 = vadd.f32 %v1400, %v1645
      %v1647 = vpop.f32.mrb[0].mxu0
      %v1648 = vadd.f32 %v1404, %v1647
      %1649 = vmatprep.mubr.bf16.mxu0 %v1310
      %1650 = vmatmul.mubr.bf16.gmra.mrb[0].mxu0 %v1309
      %v1651 = vpop.f32.mrb[0].mxu0
      %v1652 = vadd.f32 %v1400, %v1651
      %v1653 = vpop.f32.mrb[0].mxu0
      %v1654 = vadd.f32 %v1404, %v1653
      %v1655 = vpop.f32.mrb[0].mxu0
      %v1656 = vadd.f32 %v1400, %v1655
      %v1657 = vpop.f32.mrb[0].mxu0
      %v1658 = vadd.f32 %v1404, %v1657
      %1659 = vmatprep.mubr.bf16.mxu0 %v1312
      %1660 = vmatmul.mubr.bf16.gmra.mrb[0].mxu0 %v1311
      %v1661 = vpop.f32.mrb[0].mxu0
      %v1662 = vadd.f32 %v1400, %v1661
      %v1663 = vpop.f32.mrb[0].mxu0
      %v1664 = vadd.f32 %v1404, %v1663
      %v1665 = vpop.f32.mrb[0].mxu0
      %v1666 = vadd.f32 %v1400, %v1665
      %v1667 = vpop.f32.mrb[0].mxu0
      %v1668 = vadd.f32 %v1404, %v1667
      %1669 = vmatprep.mubr.bf16.mxu0 %v1314
      %1670 = vmatmul.mubr.bf16.gmra.mrb[0].mxu0 %v1313
      %v1671 = vpop.f32.mrb[0].mxu0
      %v1672 = vadd.f32 %v1400, %v1671
      %v1673 = vpop.f32.mrb[0].mxu0
      %v1674 = vadd.f32 %v1404, %v1673
      %v1675 = vpop.f32.mrb[0].mxu0
      %v1676 = vadd.f32 %v1400, %v1675
      %v1677 = vpop.f32.mrb[0].mxu0
      %v1678 = vadd.f32 %v1404, %v1677
      %1679 = vmatprep.mubr.bf16.mxu0 %v1316
      %1680 = vmatmul.mubr.bf16.gmra.mrb[0].mxu0 %v1315
      %v1681 = vpop.f32.mrb[0].mxu0
      %v1682 = vadd.f32 %v1400, %v1681
      %v1683 = vpop.f32.mrb[0].mxu0
      %v1684 = vadd.f32 %v1404, %v1683
      %v1685 = vpop.f32.mrb[0].mxu0
      %v1686 = vadd.f32 %v1400, %v1685
      %v1687 = vpop.f32.mrb[0].mxu0
      %v1688 = vadd.f32 %v1404, %v1687
      %1689 = vmatprep.mubr.bf16.mxu0 %v1318
      %1690 = vmatmul.mubr.bf16.gmra.mrb[0].mxu0 %v1317
      %v1691 = vpop.f32.mrb[0].mxu0
      %v1692 = vadd.f32 %v1400, %v1691
      %v1693 = vpop.f32.mrb[0].mxu0
      %v1694 = vadd.f32 %v1404, %v1693
      %v1695 = vpop.f32.mrb[0].mxu0
      %v1696 = vadd.f32 %v1400, %v1695
      %v1697 = vpop.f32.mrb[0].mxu0
      %v1698 = vadd.f32 %v1404, %v1697
      %1699 = vmatprep.mubr.bf16.mxu0 %v1320
      %1700 = vmatmul.mubr.bf16.gmra.mrb[0].mxu0 %v1319
      %v1701 = vpop.f32.mrb[0].mxu0
      %v1702 = vadd.f32 %v1400, %v1701
      %v1703 = vpop.f32.mrb[0].mxu0
      %v1704 = vadd.f32 %v1404, %v1703
      %v1705 = vpop.f32.mrb[0].mxu0
      %v1706 = vadd.f32 %v1400, %v1705
      %v1707 = vpop.f32.mrb[0].mxu0
      %v1708 = vadd.f32 %v1404, %v1707
      %1709 = vmatprep.mubr.bf16.mxu0 %v1322
      %1710 = vmatmul.mubr.bf16.gmra.mrb[0].mxu0 %v1321
      %v1711 = vpop.f32.mrb[0].mxu0
      %v1712 = vadd.f32 %v1400, %v1711
      %v1713 = vpop.f32.mrb[0].mxu0
      %v1714 = vadd.f32 %v1404, %v1713
      %v1715 = vpop.f32.mrb[0].mxu0
      %v1716 = vadd.f32 %v1400, %v1715
      %v1717 = vpop.f32.mrb[0].mxu0
      %v1718 = vadd.f32 %v1404, %v1717
      %1719 = vmatprep.mubr.bf16.mxu0 %v1324
      %1720 = vmatmul.mubr.bf16.gmra.mrb[0].mxu0 %v1323
      %v1721 = vpop.f32.mrb[0].mxu0
      %v1722 = vadd.f32 %v1400, %v1721
      %v1723 = vpop.f32.mrb[0].mxu0
      %v1724 = vadd.f32 %v1404, %v1723
      %v1725 = vpop.f32.mrb[0].mxu0
      %v1726 = vadd.f32 %v1400, %v1725
      %v1727 = vpop.f32.mrb[0].mxu0
      %v1728 = vadd.f32 %v1404, %v1727
      %1729 = vmatprep.mubr.bf16.mxu0 %v1326
      %1730 = vmatmul.mubr.bf16.gmra.mrb[0].mxu0 %v1325
      %v1731 = vpop.f32.mrb[0].mxu0
      %v1732 = vadd.f32 %v1400, %v1731
      %v1733 = vpop.f32.mrb[0].mxu0
      %v1734 = vadd.f32 %v1404, %v1733
      %v1735 = vpop.f32.mrb[0].mxu0
      %v1736 = vadd.f32 %v1400, %v1735
      %v1737 = vpop.f32.mrb[0].mxu0
      %v1738 = vadd.f32 %v1404, %v1737
      %1739 = vmatprep.mubr.bf16.mxu0 %v1328
      %1740 = vmatmul.mubr.bf16.gmra.mrb[0].mxu0 %v1327
      %v1741 = vpop.f32.mrb[0].mxu0
      %v1742 = vadd.f32 %v1400, %v1741
      %v1743 = vpop.f32.mrb[0].mxu0
      %v1744 = vadd.f32 %v1404, %v1743
      %v1745 = vpop.f32.mrb[0].mxu0
      %v1746 = vadd.f32 %v1400, %v1745
      %v1747 = vpop.f32.mrb[0].mxu0
      %v1748 = vadd.f32 %v1404, %v1747
      %1749 = vmatprep.mubr.bf16.mxu0 %v1330
      %1750 = vmatmul.mubr.bf16.gmra.mrb[0].mxu0 %v1329
      %v1751 = vpop.f32.mrb[0].mxu0
      %v1752 = vadd.f32 %v1400, %v1751
      %v1753 = vpop.f32.mrb[0].mxu0
      %v1754 = vadd.f32 %v1404, %v1753
      %v1755 = vpop.f32.mrb[0].mxu0
      %v1756 = vadd.f32 %v1400, %v1755
      %v1757 = vpop.f32.mrb[0].mxu0
      %v1758 = vadd.f32 %v1404, %v1757
      %1759 = vmatprep.mubr.bf16.mxu0 %v1332
      %1760 = vmatmul.mubr.bf16.gmra.mrb[0].mxu0 %v1331
      %v1761 = vpop.f32.mrb[0].mxu0
      %v1762 = vadd.f32 %v1400, %v1761
      %v1763 = vpop.f32.mrb[0].mxu0
      %v1764 = vadd.f32 %v1404, %v1763
      %v1765 = vpop.f32.mrb[0].mxu0
      %v1766 = vadd.f32 %v1400, %v1765
      %v1767 = vpop.f32.mrb[0].mxu0
      %v1768 = vadd.f32 %v1404, %v1767
      %1769 = vmatprep.mubr.bf16.mxu0 %v1334
      %1770 = vmatmul.mubr.bf16.gmra.mrb[0].mxu0 %v1333
      %v1771 = vpop.f32.mrb[0].mxu0
      %v1772 = vadd.f32 %v1400, %v1771
      %v1773 = vpop.f32.mrb[0].mxu0
      %v1774 = vadd.f32 %v1404, %v1773
      %v1775 = vpop.f32.mrb[0].mxu0
      %v1776 = vadd.f32 %v1400, %v1775
      %v1777 = vpop.f32.mrb[0].mxu0
      %v1778 = vadd.f32 %v1404, %v1777
      %1779 = vmatprep.mubr.bf16.mxu0 %v1336
      %1780 = vmatmul.mubr.bf16.gmra.mrb[0].mxu0 %v1335
      %v1781 = vpop.f32.mrb[0].mxu0
      %v1782 = vadd.f32 %v1400, %v1781
      %v1783 = vpop.f32.mrb[0].mxu0
      %v1784 = vadd.f32 %v1404, %v1783
      %v1785 = vpop.f32.mrb[0].mxu0
      %v1786 = vadd.f32 %v1400, %v1785
      %v1787 = vpop.f32.mrb[0].mxu0
      %v1788 = vadd.f32 %v1404, %v1787
      %1789 = vmatprep.mubr.bf16.mxu0 %v1338
      %1790 = vmatmul.mubr.bf16.gmra.mrb[0].mxu0 %v1337
      %v1791 = vpop.f32.mrb[0].mxu0
      %v1792 = vadd.f32 %v1400, %v1791
      %v1793 = vpop.f32.mrb[0].mxu0
      %v1794 = vadd.f32 %v1404, %v1793
      %v1795 = vpop.f32.mrb[0].mxu0
      %v1796 = vadd.f32 %v1400, %v1795
      %v1797 = vpop.f32.mrb[0].mxu0
      %v1798 = vadd.f32 %v1404, %v1797
      %1799 = vmatprep.mubr.bf16.mxu0 %v1340
      %1800 = vmatmul.mubr.bf16.gmra.mrb[0].mxu0 %v1339
      %v1801 = vpop.f32.mrb[0].mxu0
      %v1802 = vadd.f32 %v1400, %v1801
      %v1803 = vpop.f32.mrb[0].mxu0
      %v1804 = vadd.f32 %v1404, %v1803
      %v1805 = vpop.f32.mrb[0].mxu0
      %v1806 = vadd.f32 %v1400, %v1805
      %v1807 = vpop.f32.mrb[0].mxu0
      %v1808 = vadd.f32 %v1404, %v1807
      %1809 = vmatprep.mubr.bf16.mxu0 %v1342
      %1810 = vmatmul.mubr.bf16.gmra.mrb[0].mxu0 %v1341
      %v1811 = vpop.f32.mrb[0].mxu0
      %v1812 = vadd.f32 %v1400, %v1811
      %v1813 = vpop.f32.mrb[0].mxu0
      %v1814 = vadd.f32 %v1404, %v1813
      %v1815 = vpop.f32.mrb[0].mxu0
      %v1816 = vadd.f32 %v1400, %v1815
      %v1817 = vpop.f32.mrb[0].mxu0
      %v1818 = vadd.f32 %v1404, %v1817
      %1819 = vmatprep.mubr.bf16.mxu0 %v1344
      %1820 = vmatmul.mubr.bf16.gmra.mrb[0].mxu0 %v1343
      %v1821 = vpop.f32.mrb[0].mxu0
      %v1822 = vadd.f32 %v1400, %v1821
      %v1823 = vpop.f32.mrb[0].mxu0
      %v1824 = vadd.f32 %v1404, %v1823
      %v1825 = vpop.f32.mrb[0].mxu0
      %v1826 = vadd.f32 %v1400, %v1825
      %v1827 = vpop.f32.mrb[0].mxu0
      %v1828 = vadd.f32 %v1404, %v1827
      %1829 = vmatprep.mubr.bf16.mxu0 %v1346
      %1830 = vmatmul.mubr.bf16.gmra.mrb[0].mxu0 %v1345
      %v1831 = vpop.f32.mrb[0].mxu0
      %v1832 = vadd.f32 %v1400, %v1831
      %v1833 = vpop.f32.mrb[0].mxu0
      %v1834 = vadd.f32 %v1404, %v1833
      %v1835 = vpop.f32.mrb[0].mxu0
      %v1836 = vadd.f32 %v1400, %v1835
      %v1837 = vpop.f32.mrb[0].mxu0
      %v1838 = vadd.f32 %v1404, %v1837
      %1839 = vmatprep.mubr.bf16.mxu0 %v1348
      %1840 = vmatmul.mubr.bf16.gmra.mrb[0].mxu0 %v1347
      %v1841 = vpop.f32.mrb[0].mxu0
      %v1842 = vadd.f32 %v1400, %v1841
      %v1843 = vpop.f32.mrb[0].mxu0
      %v1844 = vadd.f32 %v1404, %v1843
      %v1845 = vpop.f32.mrb[0].mxu0
      %v1846 = vadd.f32 %v1400, %v1845
      %v1847 = vpop.f32.mrb[0].mxu0
      %v1848 = vadd.f32 %v1404, %v1847
      %1849 = vmatprep.mubr.bf16.mxu0 %v1350
      %1850 = vmatmul.mubr.bf16.gmra.mrb[0].mxu0 %v1349
      %v1851 = vpop.f32.mrb[0].mxu0
      %v1852 = vadd.f32 %v1400, %v1851
      %v1853 = vpop.f32.mrb[0].mxu0
      %v1854 = vadd.f32 %v1404, %v1853
      %v1855 = vpop.f32.mrb[0].mxu0
      %v1856 = vadd.f32 %v1400, %v1855
      %v1857 = vpop.f32.mrb[0].mxu0
      %v1858 = vadd.f32 %v1404, %v1857
      %1859 = vmatprep.mubr.bf16.mxu0 %v1352
      %1860 = vmatmul.mubr.bf16.gmra.mrb[0].mxu0 %v1351
      %v1861 = vpop.f32.mrb[0].mxu0
      %v1862 = vadd.f32 %v1400, %v1861
      %v1863 = vpop.f32.mrb[0].mxu0
      %v1864 = vadd.f32 %v1404, %v1863
      %v1865 = vpop.f32.mrb[0].mxu0
      %v1866 = vadd.f32 %v1400, %v1865
      %v1867 = vpop.f32.mrb[0].mxu0
      %v1868 = vadd.f32 %v1404, %v1867
      %1869 = vmatprep.mubr.bf16.mxu0 %v1354
      %1870 = vmatmul.mubr.bf16.gmra.mrb[0].mxu0 %v1353
      %v1871 = vpop.f32.mrb[0].mxu0
      %v1872 = vadd.f32 %v1400, %v1871
      %v1873 = vpop.f32.mrb[0].mxu0
      %v1874 = vadd.f32 %v1404, %v1873
      %v1875 = vpop.f32.mrb[0].mxu0
      %v1876 = vadd.f32 %v1400, %v1875
      %v1877 = vpop.f32.mrb[0].mxu0
      %v1878 = vadd.f32 %v1404, %v1877
      %1879 = vmatprep.mubr.bf16.mxu0 %v1356
      %1880 = vmatmul.mubr.bf16.gmra.mrb[0].mxu0 %v1355
      %v1881 = vpop.f32.mrb[0].mxu0
      %v1882 = vadd.f32 %v1400, %v1881
      %v1883 = vpop.f32.mrb[0].mxu0
      %v1884 = vadd.f32 %v1404, %v1883
      %v1885 = vpop.f32.mrb[0].mxu0
      %v1886 = vadd.f32 %v1400, %v1885
      %v1887 = vpop.f32.mrb[0].mxu0
      %v1888 = vadd.f32 %v1404, %v1887
      %1889 = vmatprep.mubr.bf16.mxu0 %v1358
      %1890 = vmatmul.mubr.bf16.gmra.mrb[0].mxu0 %v1357
      %v1891 = vpop.f32.mrb[0].mxu0
      %v1892 = vadd.f32 %v1400, %v1891
      %v1893 = vpop.f32.mrb[0].mxu0
      %v1894 = vadd.f32 %v1404, %v1893
      %v1895 = vpop.f32.mrb[0].mxu0
      %v1896 = vadd.f32 %v1400, %v1895
      %v1897 = vpop.f32.mrb[0].mxu0
      %v1898 = vadd.f32 %v1404, %v1897
      %1899 = vmatprep.mubr.bf16.mxu0 %v1360
      %1900 = vmatmul.mubr.bf16.gmra.mrb[0].mxu0 %v1359
      %v1901 = vpop.f32.mrb[0].mxu0
      %v1902 = vadd.f32 %v1400, %v1901
      %v1903 = vpop.f32.mrb[0].mxu0
      %v1904 = vadd.f32 %v1404, %v1903
      %v1905 = vpop.f32.mrb[0].mxu0
      %v1906 = vadd.f32 %v1400, %v1905
      %v1907 = vpop.f32.mrb[0].mxu0
      %v1908 = vadd.f32 %v1404, %v1907
      %1909 = vmatprep.mubr.bf16.mxu0 %v1362
      %1910 = vmatmul.mubr.bf16.gmra.mrb[0].mxu0 %v1361
      %v1911 = vpop.f32.mrb[0].mxu0
      %v1912 = vadd.f32 %v1400, %v1911
      %v1913 = vpop.f32.mrb[0].mxu0
      %v1914 = vadd.f32 %v1404, %v1913
      %v1915 = vpop.f32.mrb[0].mxu0
      %v1916 = vadd.f32 %v1400, %v1915
      %v1917 = vpop.f32.mrb[0].mxu0
      %v1918 = vadd.f32 %v1404, %v1917
      %1919 = vdwg.mxu0
      %v1920 = vmax.f32 %v1602, 0.0
      %v1921 = vmax.f32 %v1604, 0.0
      %v1922 = vmax.f32 %v1606, 0.0
      %v1923 = vmax.f32 %v1608, 0.0
      %v1924 = vmax.f32 %v1612, 0.0
      %v1925 = vmax.f32 %v1614, 0.0
      %v1926 = vmax.f32 %v1616, 0.0
      %v1927 = vmax.f32 %v1618, 0.0
      %v1928 = vmax.f32 %v1622, 0.0
      %v1929 = vmax.f32 %v1624, 0.0
      %v1930 = vmax.f32 %v1626, 0.0
      %v1931 = vmax.f32 %v1628, 0.0
      %v1932 = vmax.f32 %v1632, 0.0
      %v1933 = vmax.f32 %v1634, 0.0
      %v1934 = vmax.f32 %v1636, 0.0
      %v1935 = vmax.f32 %v1638, 0.0
      %v1936 = vmax.f32 %v1642, 0.0
      %v1937 = vmax.f32 %v1644, 0.0
      %v1938 = vmax.f32 %v1646, 0.0
      %v1939 = vmax.f32 %v1648, 0.0
      %v1940 = vmax.f32 %v1652, 0.0
      %v1941 = vmax.f32 %v1654, 0.0
      %v1942 = vmax.f32 %v1656, 0.0
      %v1943 = vmax.f32 %v1658, 0.0
      %v1944 = vmax.f32 %v1662, 0.0
      %v1945 = vmax.f32 %v1664, 0.0
      %v1946 = vmax.f32 %v1666, 0.0
      %v1947 = vmax.f32 %v1668, 0.0
      %v1948 = vmax.f32 %v1672, 0.0
      %v1949 = vmax.f32 %v1674, 0.0
      %v1950 = vmax.f32 %v1676, 0.0
      %v1951 = vmax.f32 %v1678, 0.0
      %v1952 = vmax.f32 %v1682, 0.0
      %v1953 = vmax.f32 %v1684, 0.0
      %v1954 = vmax.f32 %v1686, 0.0
      %v1955 = vmax.f32 %v1688, 0.0
      %v1956 = vmax.f32 %v1692, 0.0
      %v1957 = vmax.f32 %v1694, 0.0
      %v1958 = vmax.f32 %v1696, 0.0
      %v1959 = vmax.f32 %v1698, 0.0
      %v1960 = vmax.f32 %v1702, 0.0
      %v1961 = vmax.f32 %v1704, 0.0
      %v1962 = vmax.f32 %v1706, 0.0
      %v1963 = vmax.f32 %v1708, 0.0
      %v1964 = vmax.f32 %v1712, 0.0
      %v1965 = vmax.f32 %v1714, 0.0
      %v1966 = vmax.f32 %v1716, 0.0
      %v1967 = vmax.f32 %v1718, 0.0
      %v1968 = vmax.f32 %v1722, 0.0
      %v1969 = vmax.f32 %v1724, 0.0
      %v1970 = vmax.f32 %v1726, 0.0
      %v1971 = vmax.f32 %v1728, 0.0
      %v1972 = vmax.f32 %v1732, 0.0
      %v1973 = vmax.f32 %v1734, 0.0
      %v1974 = vmax.f32 %v1736, 0.0
      %v1975 = vmax.f32 %v1738, 0.0
      %v1976 = vmax.f32 %v1742, 0.0
      %v1977 = vmax.f32 %v1744, 0.0
      %v1978 = vmax.f32 %v1746, 0.0
      %v1979 = vmax.f32 %v1748, 0.0
      %v1980 = vmax.f32 %v1752, 0.0
      %v1981 = vmax.f32 %v1754, 0.0
      %v1982 = vmax.f32 %v1756, 0.0
      %v1983 = vmax.f32 %v1758, 0.0
      %v1984 = vmax.f32 %v1762, 0.0
      %v1985 = vmax.f32 %v1764, 0.0
      %v1986 = vmax.f32 %v1766, 0.0
      %v1987 = vmax.f32 %v1768, 0.0
      %v1988 = vmax.f32 %v1772, 0.0
      %v1989 = vmax.f32 %v1774, 0.0
      %v1990 = vmax.f32 %v1776, 0.0
      %v1991 = vmax.f32 %v1778, 0.0
      %v1992 = vmax.f32 %v1782, 0.0
      %v1993 = vmax.f32 %v1784, 0.0
      %v1994 = vmax.f32 %v1786, 0.0
      %v1995 = vmax.f32 %v1788, 0.0
      %v1996 = vmax.f32 %v1792, 0.0
      %v1997 = vmax.f32 %v1794, 0.0
      %v1998 = vmax.f32 %v1796, 0.0
      %v1999 = vmax.f32 %v1798, 0.0
      %v2000 = vmax.f32 %v1802, 0.0
      %v2001 = vmax.f32 %v1804, 0.0
      %v2002 = vmax.f32 %v1806, 0.0
      %v2003 = vmax.f32 %v1808, 0.0
      %v2004 = vmax.f32 %v1812, 0.0
      %v2005 = vmax.f32 %v1814, 0.0
      %v2006 = vmax.f32 %v1816, 0.0
      %v2007 = vmax.f32 %v1818, 0.0
      %v2008 = vmax.f32 %v1822, 0.0
      %v2009 = vmax.f32 %v1824, 0.0
      %v2010 = vmax.f32 %v1826, 0.0
      %v2011 = vmax.f32 %v1828, 0.0
      %v2012 = vmax.f32 %v1832, 0.0
      %v2013 = vmax.f32 %v1834, 0.0
      %v2014 = vmax.f32 %v1836, 0.0
      %v2015 = vmax.f32 %v1838, 0.0
      %v2016 = vmax.f32 %v1842, 0.0
      %v2017 = vmax.f32 %v1844, 0.0
      %v2018 = vmax.f32 %v1846, 0.0
      %v2019 = vmax.f32 %v1848, 0.0
      %v2020 = vmax.f32 %v1852, 0.0
      %v2021 = vmax.f32 %v1854, 0.0
      %v2022 = vmax.f32 %v1856, 0.0
      %v2023 = vmax.f32 %v1858, 0.0
      %v2024 = vmax.f32 %v1862, 0.0
      %v2025 = vmax.f32 %v1864, 0.0
      %v2026 = vmax.f32 %v1866, 0.0
      %v2027 = vmax.f32 %v1868, 0.0
      %v2028 = vmax.f32 %v1872, 0.0
      %v2029 = vmax.f32 %v1874, 0.0
      %v2030 = vmax.f32 %v1876, 0.0
      %v2031 = vmax.f32 %v1878, 0.0
      %v2032 = vmax.f32 %v1882, 0.0
      %v2033 = vmax.f32 %v1884, 0.0
      %v2034 = vmax.f32 %v1886, 0.0
      %v2035 = vmax.f32 %v1888, 0.0
      %v2036 = vmax.f32 %v1892, 0.0
      %v2037 = vmax.f32 %v1894, 0.0
      %v2038 = vmax.f32 %v1896, 0.0
      %v2039 = vmax.f32 %v1898, 0.0
      %v2040 = vmax.f32 %v1902, 0.0
      %v2041 = vmax.f32 %v1904, 0.0
      %v2042 = vmax.f32 %v1906, 0.0
      %v2043 = vmax.f32 %v1908, 0.0
      %v2044 = vmax.f32 %v1912, 0.0
      %v2045 = vmax.f32 %v1914, 0.0
      %v2046 = vmax.f32 %v1916, 0.0
      %v2047 = vmax.f32 %v1918, 0.0
      %v2048 = vpack.c.bf16 %v1922, %v1920
      %v2049 = vpack.c.bf16 %v1923, %v1921
      %v2050 = vpack.c.bf16 %v1926, %v1924
      %v2051 = vpack.c.bf16 %v1927, %v1925
      %v2052 = vpack.c.bf16 %v1930, %v1928
      %v2053 = vpack.c.bf16 %v1931, %v1929
      %v2054 = vpack.c.bf16 %v1934, %v1932
      %v2055 = vpack.c.bf16 %v1935, %v1933
      %v2056 = vpack.c.bf16 %v1938, %v1936
      %v2057 = vpack.c.bf16 %v1939, %v1937
      %v2058 = vpack.c.bf16 %v1942, %v1940
      %v2059 = vpack.c.bf16 %v1943, %v1941
      %v2060 = vpack.c.bf16 %v1946, %v1944
      %v2061 = vpack.c.bf16 %v1947, %v1945
      %v2062 = vpack.c.bf16 %v1950, %v1948
      %v2063 = vpack.c.bf16 %v1951, %v1949
      %v2064 = vpack.c.bf16 %v1954, %v1952
      %v2065 = vpack.c.bf16 %v1955, %v1953
      %v2066 = vpack.c.bf16 %v1958, %v1956
      %v2067 = vpack.c.bf16 %v1959, %v1957
      %v2068 = vpack.c.bf16 %v1962, %v1960
      %v2069 = vpack.c.bf16 %v1963, %v1961
      %v2070 = vpack.c.bf16 %v1966, %v1964
      %v2071 = vpack.c.bf16 %v1967, %v1965
      %v2072 = vpack.c.bf16 %v1970, %v1968
      %v2073 = vpack.c.bf16 %v1971, %v1969
      %v2074 = vpack.c.bf16 %v1974, %v1972
      %v2075 = vpack.c.bf16 %v1975, %v1973
      %v2076 = vpack.c.bf16 %v1978, %v1976
      %v2077 = vpack.c.bf16 %v1979, %v1977
      %v2078 = vpack.c.bf16 %v1982, %v1980
      %v2079 = vpack.c.bf16 %v1983, %v1981
      %v2080 = vpack.c.bf16 %v1986, %v1984
      %v2081 = vpack.c.bf16 %v1987, %v1985
      %v2082 = vpack.c.bf16 %v1990, %v1988
      %v2083 = vpack.c.bf16 %v1991, %v1989
      %v2084 = vpack.c.bf16 %v1994, %v1992
      %v2085 = vpack.c.bf16 %v1995, %v1993
      %v2086 = vpack.c.bf16 %v1998, %v1996
      %v2087 = vpack.c.bf16 %v1999, %v1997
      %v2088 = vpack.c.bf16 %v2002, %v2000
      %v2089 = vpack.c.bf16 %v2003, %v2001
      %v2090 = vpack.c.bf16 %v2006, %v2004
      %v2091 = vpack.c.bf16 %v2007, %v2005
      %v2092 = vpack.c.bf16 %v2010, %v2008
      %v2093 = vpack.c.bf16 %v2011, %v2009
      %v2094 = vpack.c.bf16 %v2014, %v2012
      %v2095 = vpack.c.bf16 %v2015, %v2013
      %v2096 = vpack.c.bf16 %v2018, %v2016
      %v2097 = vpack.c.bf16 %v2019, %v2017
      %v2098 = vpack.c.bf16 %v2022, %v2020
      %v2099 = vpack.c.bf16 %v2023, %v2021
      %v2100 = vpack.c.bf16 %v2026, %v2024
      %v2101 = vpack.c.bf16 %v2027, %v2025
      %v2102 = vpack.c.bf16 %v2030, %v2028
      %v2103 = vpack.c.bf16 %v2031, %v2029
      %v2104 = vpack.c.bf16 %v2034, %v2032
      %v2105 = vpack.c.bf16 %v2035, %v2033
      %v2106 = vpack.c.bf16 %v2038, %v2036
      %v2107 = vpack.c.bf16 %v2039, %v2037
      %v2108 = vpack.c.bf16 %v2042, %v2040
      %v2109 = vpack.c.bf16 %v2043, %v2041
      %v2110 = vpack.c.bf16 %v2046, %v2044
      %v2111 = vpack.c.bf16 %v2047, %v2045
      %s2112 = scalar_lea.vmem %s3, 256
      %v2113 = vld [vmem:[%s2112] sm:$0xff]
      %v2114 = vld [vmem:[%s2112 + $0x8] sm:$0xff]
      %v2115 = vld [vmem:[%s2112 + $0x10] sm:$0xff]
      %v2116 = vld [vmem:[%s2112 + $0x18] sm:$0xff]
      %v2117 = vld [vmem:[%s2112 + $0x20] sm:$0xff]
      %v2118 = vld [vmem:[%s2112 + $0x28] sm:$0xff]
      %v2119 = vld [vmem:[%s2112 + $0x30] sm:$0xff]
      %v2120 = vld [vmem:[%s2112 + $0x38] sm:$0xff]
      %v2121 = vld [vmem:[%s2112 + $0x40] sm:$0xff]
      %v2122 = vld [vmem:[%s2112 + $0x48] sm:$0xff]
      %v2123 = vld [vmem:[%s2112 + $0x50] sm:$0xff]
      %v2124 = vld [vmem:[%s2112 + $0x58] sm:$0xff]
      %v2125 = vld [vmem:[%s2112 + $0x60] sm:$0xff]
      %v2126 = vld [vmem:[%s2112 + $0x68] sm:$0xff]
      %v2127 = vld [vmem:[%s2112 + $0x70] sm:$0xff]
      %v2128 = vld [vmem:[%s2112 + $0x78] sm:$0xff]
      %v2129 = vld [vmem:[%s2112 + $0x80] sm:$0xff]
      %v2130 = vld [vmem:[%s2112 + $0x88] sm:$0xff]
      %v2131 = vld [vmem:[%s2112 + $0x90] sm:$0xff]
      %v2132 = vld [vmem:[%s2112 + $0x98] sm:$0xff]
      %v2133 = vld [vmem:[%s2112 + $0xa0] sm:$0xff]
      %v2134 = vld [vmem:[%s2112 + $0xa8] sm:$0xff]
      %v2135 = vld [vmem:[%s2112 + $0xb0] sm:$0xff]
      %v2136 = vld [vmem:[%s2112 + $0xb8] sm:$0xff]
      %v2137 = vld [vmem:[%s2112 + $0xc0] sm:$0xff]
      %v2138 = vld [vmem:[%s2112 + $0xc8] sm:$0xff]
      %v2139 = vld [vmem:[%s2112 + $0xd0] sm:$0xff]
      %v2140 = vld [vmem:[%s2112 + $0xd8] sm:$0xff]
      %v2141 = vld [vmem:[%s2112 + $0xe0] sm:$0xff]
      %v2142 = vld [vmem:[%s2112 + $0xe8] sm:$0xff]
      %v2143 = vld [vmem:[%s2112 + $0xf0] sm:$0xff]
      %v2144 = vld [vmem:[%s2112 + $0xf8] sm:$0xff]
      %s2145 = scalar_lea.vmem %s4, 2
      %v2146 = vld [vmem:[%s2145] sm:$0x3]
      %v2148 = vlaneseq
      %v2149 = vshrl.u32 %v2148, 7
      %v2150 = vsub.s32 0, %v2149
      %v2151 = vrot.slane %v2146, %v2150
      %v2152 = vlaneseq
      %v2153 = vshrl.u32 %v2152, 7
      %v2154 = vsub.s32 1, %v2153
      %v2155 = vrot.slane %v2146, %v2154
      %v2190 = vunpack.c.l.b16 %v2113
      %v2191 = vunpack.c.h.b16 %v2113
      %v2192 = vunpack.c.l.b16 %v2114
      %v2193 = vunpack.c.h.b16 %v2114
      %v2194 = vunpack.c.l.b16 %v2115
      %v2195 = vunpack.c.h.b16 %v2115
      %v2196 = vunpack.c.l.b16 %v2116
      %v2197 = vunpack.c.h.b16 %v2116
      %v2198 = vunpack.c.l.b16 %v2117
      %v2199 = vunpack.c.h.b16 %v2117
      %v2200 = vunpack.c.l.b16 %v2118
      %v2201 = vunpack.c.h.b16 %v2118
      %v2202 = vunpack.c.l.b16 %v2119
      %v2203 = vunpack.c.h.b16 %v2119
      %v2204 = vunpack.c.l.b16 %v2120
      %v2205 = vunpack.c.h.b16 %v2120
      %v2206 = vunpack.c.l.b16 %v2121
      %v2207 = vunpack.c.h.b16 %v2121
      %v2208 = vunpack.c.l.b16 %v2122
      %v2209 = vunpack.c.h.b16 %v2122
      %v2210 = vunpack.c.l.b16 %v2123
      %v2211 = vunpack.c.h.b16 %v2123
      %v2212 = vunpack.c.l.b16 %v2124
      %v2213 = vunpack.c.h.b16 %v2124
      %v2214 = vunpack.c.l.b16 %v2125
      %v2215 = vunpack.c.h.b16 %v2125
      %v2216 = vunpack.c.l.b16 %v2126
      %v2217 = vunpack.c.h.b16 %v2126
      %v2218 = vunpack.c.l.b16 %v2127
      %v2219 = vunpack.c.h.b16 %v2127
      %v2220 = vunpack.c.l.b16 %v2128
      %v2221 = vunpack.c.h.b16 %v2128
      %v2222 = vunpack.c.l.b16 %v2129
      %v2223 = vunpack.c.h.b16 %v2129
      %v2224 = vunpack.c.l.b16 %v2130
      %v2225 = vunpack.c.h.b16 %v2130
      %v2226 = vunpack.c.l.b16 %v2131
      %v2227 = vunpack.c.h.b16 %v2131
      %v2228 = vunpack.c.l.b16 %v2132
      %v2229 = vunpack.c.h.b16 %v2132
      %v2230 = vunpack.c.l.b16 %v2133
      %v2231 = vunpack.c.h.b16 %v2133
      %v2232 = vunpack.c.l.b16 %v2134
      %v2233 = vunpack.c.h.b16 %v2134
      %v2234 = vunpack.c.l.b16 %v2135
      %v2235 = vunpack.c.h.b16 %v2135
      %v2236 = vunpack.c.l.b16 %v2136
      %v2237 = vunpack.c.h.b16 %v2136
      %v2238 = vunpack.c.l.b16 %v2137
      %v2239 = vunpack.c.h.b16 %v2137
      %v2240 = vunpack.c.l.b16 %v2138
      %v2241 = vunpack.c.h.b16 %v2138
      %v2242 = vunpack.c.l.b16 %v2139
      %v2243 = vunpack.c.h.b16 %v2139
      %v2244 = vunpack.c.l.b16 %v2140
      %v2245 = vunpack.c.h.b16 %v2140
      %v2246 = vunpack.c.l.b16 %v2141
      %v2247 = vunpack.c.h.b16 %v2141
      %v2248 = vunpack.c.l.b16 %v2142
      %v2249 = vunpack.c.h.b16 %v2142
      %v2250 = vunpack.c.l.b16 %v2143
      %v2251 = vunpack.c.h.b16 %v2143
      %v2252 = vunpack.c.l.b16 %v2144
      %v2253 = vunpack.c.h.b16 %v2144
      %v2254 = vpack.c.b16 %v2192, %v2190
      %v2255 = vpack.c.b16 %v2193, %v2191
      %v2256 = vpack.c.b16 %v2196, %v2194
      %v2257 = vpack.c.b16 %v2197, %v2195
      %v2258 = vpack.c.b16 %v2200, %v2198
      %v2259 = vpack.c.b16 %v2201, %v2199
      %v2260 = vpack.c.b16 %v2204, %v2202
      %v2261 = vpack.c.b16 %v2205, %v2203
      %v2262 = vpack.c.b16 %v2208, %v2206
      %v2263 = vpack.c.b16 %v2209, %v2207
      %v2264 = vpack.c.b16 %v2212, %v2210
      %v2265 = vpack.c.b16 %v2213, %v2211
      %v2266 = vpack.c.b16 %v2216, %v2214
      %v2267 = vpack.c.b16 %v2217, %v2215
      %v2268 = vpack.c.b16 %v2220, %v2218
      %v2269 = vpack.c.b16 %v2221, %v2219
      %v2270 = vpack.c.b16 %v2224, %v2222
      %v2271 = vpack.c.b16 %v2225, %v2223
      %v2272 = vpack.c.b16 %v2228, %v2226
      %v2273 = vpack.c.b16 %v2229, %v2227
      %v2274 = vpack.c.b16 %v2232, %v2230
      %v2275 = vpack.c.b16 %v2233, %v2231
      %v2276 = vpack.c.b16 %v2236, %v2234
      %v2277 = vpack.c.b16 %v2237, %v2235
      %v2278 = vpack.c.b16 %v2240, %v2238
      %v2279 = vpack.c.b16 %v2241, %v2239
      %v2280 = vpack.c.b16 %v2244, %v2242
      %v2281 = vpack.c.b16 %v2245, %v2243
      %v2282 = vpack.c.b16 %v2248, %v2246
      %v2283 = vpack.c.b16 %v2249, %v2247
      %v2284 = vpack.c.b16 %v2252, %v2250
      %v2285 = vpack.c.b16 %v2253, %v2251
      %2318 = vmatprep.subr.bf16.mxu0 %v2255
      %2319 = vmatpush1.bf16.msra.mxu0 %v2254
      %2320 = vmatprep.subr.bf16.mxu0 %v2257
      %2321 = vmatpush1.bf16.msra.mxu0 %v2256
      %2322 = vmatprep.subr.bf16.mxu0 %v2259
      %2323 = vmatpush1.bf16.msra.mxu0 %v2258
      %2324 = vmatprep.subr.bf16.mxu0 %v2261
      %2325 = vmatpush1.bf16.msra.mxu0 %v2260
      %2326 = vmatprep.subr.bf16.mxu0 %v2263
      %2327 = vmatpush1.bf16.msra.mxu0 %v2262
      %2328 = vmatprep.subr.bf16.mxu0 %v2265
      %2329 = vmatpush1.bf16.msra.mxu0 %v2264
      %2330 = vmatprep.subr.bf16.mxu0 %v2267
      %2331 = vmatpush1.bf16.msra.mxu0 %v2266
      %2332 = vmatprep.subr.bf16.mxu0 %v2269
      %2333 = vmatpush1.bf16.msra.mxu0 %v2268
      %2334 = vmatprep.subr.bf16.mxu0 %v2271
      %2335 = vmatpush1.bf16.msra.mxu0 %v2270
      %2336 = vmatprep.subr.bf16.mxu0 %v2273
      %2337 = vmatpush1.bf16.msra.mxu0 %v2272
      %2338 = vmatprep.subr.bf16.mxu0 %v2275
      %2339 = vmatpush1.bf16.msra.mxu0 %v2274
      %2340 = vmatprep.subr.bf16.mxu0 %v2277
      %2341 = vmatpush1.bf16.msra.mxu0 %v2276
      %2342 = vmatprep.subr.bf16.mxu0 %v2279
      %2343 = vmatpush1.bf16.msra.mxu0 %v2278
      %2344 = vmatprep.subr.bf16.mxu0 %v2281
      %2345 = vmatpush1.bf16.msra.mxu0 %v2280
      %2346 = vmatprep.subr.bf16.mxu0 %v2283
      %2347 = vmatpush1.bf16.msra.mxu0 %v2282
      %2348 = vmatprep.subr.bf16.mxu0 %v2285
      %2349 = vmatpush1.bf16.msra.mxu0 %v2284
      %2350 = vmatprep.mubr.bf16.mxu0 %v2049
      %2351 = vmatmul.mubr.bf16.gmra.mrb[0].mxu0 %v2048
      %v2352 = vpop.f32.mrb[0].mxu0
      %v2353 = vadd.f32 %v2151, %v2352
      %v2354 = vpop.f32.mrb[0].mxu0
      %v2355 = vadd.f32 %v2155, %v2354
      %v2356 = vpop.f32.mrb[0].mxu0
      %v2357 = vadd.f32 %v2151, %v2356
      %v2358 = vpop.f32.mrb[0].mxu0
      %v2359 = vadd.f32 %v2155, %v2358
      %2360 = vmatprep.mubr.bf16.mxu0 %v2051
      %2361 = vmatmul.mubr.bf16.gmra.mrb[0].mxu0 %v2050
      %v2362 = vpop.f32.mrb[0].mxu0
      %v2363 = vadd.f32 %v2151, %v2362
      %v2364 = vpop.f32.mrb[0].mxu0
      %v2365 = vadd.f32 %v2155, %v2364
      %v2366 = vpop.f32.mrb[0].mxu0
      %v2367 = vadd.f32 %v2151, %v2366
      %v2368 = vpop.f32.mrb[0].mxu0
      %v2369 = vadd.f32 %v2155, %v2368
      %2370 = vmatprep.mubr.bf16.mxu0 %v2053
      %2371 = vmatmul.mubr.bf16.gmra.mrb[0].mxu0 %v2052
      %v2372 = vpop.f32.mrb[0].mxu0
      %v2373 = vadd.f32 %v2151, %v2372
      %v2374 = vpop.f32.mrb[0].mxu0
      %v2375 = vadd.f32 %v2155, %v2374
      %v2376 = vpop.f32.mrb[0].mxu0
      %v2377 = vadd.f32 %v2151, %v2376
      %v2378 = vpop.f32.mrb[0].mxu0
      %v2379 = vadd.f32 %v2155, %v2378
      %2380 = vmatprep.mubr.bf16.mxu0 %v2055
      %2381 = vmatmul.mubr.bf16.gmra.mrb[0].mxu0 %v2054
      %v2382 = vpop.f32.mrb[0].mxu0
      %v2383 = vadd.f32 %v2151, %v2382
      %v2384 = vpop.f32.mrb[0].mxu0
      %v2385 = vadd.f32 %v2155, %v2384
      %v2386 = vpop.f32.mrb[0].mxu0
      %v2387 = vadd.f32 %v2151, %v2386
      %v2388 = vpop.f32.mrb[0].mxu0
      %v2389 = vadd.f32 %v2155, %v2388
      %2390 = vmatprep.mubr.bf16.mxu0 %v2057
      %2391 = vmatmul.mubr.bf16.gmra.mrb[0].mxu0 %v2056
      %v2392 = vpop.f32.mrb[0].mxu0
      %v2393 = vadd.f32 %v2151, %v2392
      %v2394 = vpop.f32.mrb[0].mxu0
      %v2395 = vadd.f32 %v2155, %v2394
      %v2396 = vpop.f32.mrb[0].mxu0
      %v2397 = vadd.f32 %v2151, %v2396
      %v2398 = vpop.f32.mrb[0].mxu0
      %v2399 = vadd.f32 %v2155, %v2398
      %2400 = vmatprep.mubr.bf16.mxu0 %v2059
      %2401 = vmatmul.mubr.bf16.gmra.mrb[0].mxu0 %v2058
      %v2402 = vpop.f32.mrb[0].mxu0
      %v2403 = vadd.f32 %v2151, %v2402
      %v2404 = vpop.f32.mrb[0].mxu0
      %v2405 = vadd.f32 %v2155, %v2404
      %v2406 = vpop.f32.mrb[0].mxu0
      %v2407 = vadd.f32 %v2151, %v2406
      %v2408 = vpop.f32.mrb[0].mxu0
      %v2409 = vadd.f32 %v2155, %v2408
      %2410 = vmatprep.mubr.bf16.mxu0 %v2061
      %2411 = vmatmul.mubr.bf16.gmra.mrb[0].mxu0 %v2060
      %v2412 = vpop.f32.mrb[0].mxu0
      %v2413 = vadd.f32 %v2151, %v2412
      %v2414 = vpop.f32.mrb[0].mxu0
      %v2415 = vadd.f32 %v2155, %v2414
      %v2416 = vpop.f32.mrb[0].mxu0
      %v2417 = vadd.f32 %v2151, %v2416
      %v2418 = vpop.f32.mrb[0].mxu0
      %v2419 = vadd.f32 %v2155, %v2418
      %2420 = vmatprep.mubr.bf16.mxu0 %v2063
      %2421 = vmatmul.mubr.bf16.gmra.mrb[0].mxu0 %v2062
      %v2422 = vpop.f32.mrb[0].mxu0
      %v2423 = vadd.f32 %v2151, %v2422
      %v2424 = vpop.f32.mrb[0].mxu0
      %v2425 = vadd.f32 %v2155, %v2424
      %v2426 = vpop.f32.mrb[0].mxu0
      %v2427 = vadd.f32 %v2151, %v2426
      %v2428 = vpop.f32.mrb[0].mxu0
      %v2429 = vadd.f32 %v2155, %v2428
      %2430 = vmatprep.mubr.bf16.mxu0 %v2065
      %2431 = vmatmul.mubr.bf16.gmra.mrb[0].mxu0 %v2064
      %v2432 = vpop.f32.mrb[0].mxu0
      %v2433 = vadd.f32 %v2151, %v2432
      %v2434 = vpop.f32.mrb[0].mxu0
      %v2435 = vadd.f32 %v2155, %v2434
      %v2436 = vpop.f32.mrb[0].mxu0
      %v2437 = vadd.f32 %v2151, %v2436
      %v2438 = vpop.f32.mrb[0].mxu0
      %v2439 = vadd.f32 %v2155, %v2438
      %2440 = vmatprep.mubr.bf16.mxu0 %v2067
      %2441 = vmatmul.mubr.bf16.gmra.mrb[0].mxu0 %v2066
      %v2442 = vpop.f32.mrb[0].mxu0
      %v2443 = vadd.f32 %v2151, %v2442
      %v2444 = vpop.f32.mrb[0].mxu0
      %v2445 = vadd.f32 %v2155, %v2444
      %v2446 = vpop.f32.mrb[0].mxu0
      %v2447 = vadd.f32 %v2151, %v2446
      %v2448 = vpop.f32.mrb[0].mxu0
      %v2449 = vadd.f32 %v2155, %v2448
      %2450 = vmatprep.mubr.bf16.mxu0 %v2069
      %2451 = vmatmul.mubr.bf16.gmra.mrb[0].mxu0 %v2068
      %v2452 = vpop.f32.mrb[0].mxu0
      %v2453 = vadd.f32 %v2151, %v2452
      %v2454 = vpop.f32.mrb[0].mxu0
      %v2455 = vadd.f32 %v2155, %v2454
      %v2456 = vpop.f32.mrb[0].mxu0
      %v2457 = vadd.f32 %v2151, %v2456
      %v2458 = vpop.f32.mrb[0].mxu0
      %v2459 = vadd.f32 %v2155, %v2458
      %2460 = vmatprep.mubr.bf16.mxu0 %v2071
      %2461 = vmatmul.mubr.bf16.gmra.mrb[0].mxu0 %v2070
      %v2462 = vpop.f32.mrb[0].mxu0
      %v2463 = vadd.f32 %v2151, %v2462
      %v2464 = vpop.f32.mrb[0].mxu0
      %v2465 = vadd.f32 %v2155, %v2464
      %v2466 = vpop.f32.mrb[0].mxu0
      %v2467 = vadd.f32 %v2151, %v2466
      %v2468 = vpop.f32.mrb[0].mxu0
      %v2469 = vadd.f32 %v2155, %v2468
      %2470 = vmatprep.mubr.bf16.mxu0 %v2073
      %2471 = vmatmul.mubr.bf16.gmra.mrb[0].mxu0 %v2072
      %v2472 = vpop.f32.mrb[0].mxu0
      %v2473 = vadd.f32 %v2151, %v2472
      %v2474 = vpop.f32.mrb[0].mxu0
      %v2475 = vadd.f32 %v2155, %v2474
      %v2476 = vpop.f32.mrb[0].mxu0
      %v2477 = vadd.f32 %v2151, %v2476
      %v2478 = vpop.f32.mrb[0].mxu0
      %v2479 = vadd.f32 %v2155, %v2478
      %2480 = vmatprep.mubr.bf16.mxu0 %v2075
      %2481 = vmatmul.mubr.bf16.gmra.mrb[0].mxu0 %v2074
      %v2482 = vpop.f32.mrb[0].mxu0
      %v2483 = vadd.f32 %v2151, %v2482
      %v2484 = vpop.f32.mrb[0].mxu0
      %v2485 = vadd.f32 %v2155, %v2484
      %v2486 = vpop.f32.mrb[0].mxu0
      %v2487 = vadd.f32 %v2151, %v2486
      %v2488 = vpop.f32.mrb[0].mxu0
      %v2489 = vadd.f32 %v2155, %v2488
      %2490 = vmatprep.mubr.bf16.mxu0 %v2077
      %2491 = vmatmul.mubr.bf16.gmra.mrb[0].mxu0 %v2076
      %v2492 = vpop.f32.mrb[0].mxu0
      %v2493 = vadd.f32 %v2151, %v2492
      %v2494 = vpop.f32.mrb[0].mxu0
      %v2495 = vadd.f32 %v2155, %v2494
      %v2496 = vpop.f32.mrb[0].mxu0
      %v2497 = vadd.f32 %v2151, %v2496
      %v2498 = vpop.f32.mrb[0].mxu0
      %v2499 = vadd.f32 %v2155, %v2498
      %2500 = vmatprep.mubr.bf16.mxu0 %v2079
      %2501 = vmatmul.mubr.bf16.gmra.mrb[0].mxu0 %v2078
      %v2502 = vpop.f32.mrb[0].mxu0
      %v2503 = vadd.f32 %v2151, %v2502
      %v2504 = vpop.f32.mrb[0].mxu0
      %v2505 = vadd.f32 %v2155, %v2504
      %v2506 = vpop.f32.mrb[0].mxu0
      %v2507 = vadd.f32 %v2151, %v2506
      %v2508 = vpop.f32.mrb[0].mxu0
      %v2509 = vadd.f32 %v2155, %v2508
      %2510 = vmatprep.mubr.bf16.mxu0 %v2081
      %2511 = vmatmul.mubr.bf16.gmra.mrb[0].mxu0 %v2080
      %v2512 = vpop.f32.mrb[0].mxu0
      %v2513 = vadd.f32 %v2151, %v2512
      %v2514 = vpop.f32.mrb[0].mxu0
      %v2515 = vadd.f32 %v2155, %v2514
      %v2516 = vpop.f32.mrb[0].mxu0
      %v2517 = vadd.f32 %v2151, %v2516
      %v2518 = vpop.f32.mrb[0].mxu0
      %v2519 = vadd.f32 %v2155, %v2518
      %2520 = vmatprep.mubr.bf16.mxu0 %v2083
      %2521 = vmatmul.mubr.bf16.gmra.mrb[0].mxu0 %v2082
      %v2522 = vpop.f32.mrb[0].mxu0
      %v2523 = vadd.f32 %v2151, %v2522
      %v2524 = vpop.f32.mrb[0].mxu0
      %v2525 = vadd.f32 %v2155, %v2524
      %v2526 = vpop.f32.mrb[0].mxu0
      %v2527 = vadd.f32 %v2151, %v2526
      %v2528 = vpop.f32.mrb[0].mxu0
      %v2529 = vadd.f32 %v2155, %v2528
      %2530 = vmatprep.mubr.bf16.mxu0 %v2085
      %2531 = vmatmul.mubr.bf16.gmra.mrb[0].mxu0 %v2084
      %v2532 = vpop.f32.mrb[0].mxu0
      %v2533 = vadd.f32 %v2151, %v2532
      %v2534 = vpop.f32.mrb[0].mxu0
      %v2535 = vadd.f32 %v2155, %v2534
      %v2536 = vpop.f32.mrb[0].mxu0
      %v2537 = vadd.f32 %v2151, %v2536
      %v2538 = vpop.f32.mrb[0].mxu0
      %v2539 = vadd.f32 %v2155, %v2538
      %2540 = vmatprep.mubr.bf16.mxu0 %v2087
      %2541 = vmatmul.mubr.bf16.gmra.mrb[0].mxu0 %v2086
      %v2542 = vpop.f32.mrb[0].mxu0
      %v2543 = vadd.f32 %v2151, %v2542
      %v2544 = vpop.f32.mrb[0].mxu0
      %v2545 = vadd.f32 %v2155, %v2544
      %v2546 = vpop.f32.mrb[0].mxu0
      %v2547 = vadd.f32 %v2151, %v2546
      %v2548 = vpop.f32.mrb[0].mxu0
      %v2549 = vadd.f32 %v2155, %v2548
      %2550 = vmatprep.mubr.bf16.mxu0 %v2089
      %2551 = vmatmul.mubr.bf16.gmra.mrb[0].mxu0 %v2088
      %v2552 = vpop.f32.mrb[0].mxu0
      %v2553 = vadd.f32 %v2151, %v2552
      %v2554 = vpop.f32.mrb[0].mxu0
      %v2555 = vadd.f32 %v2155, %v2554
      %v2556 = vpop.f32.mrb[0].mxu0
      %v2557 = vadd.f32 %v2151, %v2556
      %v2558 = vpop.f32.mrb[0].mxu0
      %v2559 = vadd.f32 %v2155, %v2558
      %2560 = vmatprep.mubr.bf16.mxu0 %v2091
      %2561 = vmatmul.mubr.bf16.gmra.mrb[0].mxu0 %v2090
      %v2562 = vpop.f32.mrb[0].mxu0
      %v2563 = vadd.f32 %v2151, %v2562
      %v2564 = vpop.f32.mrb[0].mxu0
      %v2565 = vadd.f32 %v2155, %v2564
      %v2566 = vpop.f32.mrb[0].mxu0
      %v2567 = vadd.f32 %v2151, %v2566
      %v2568 = vpop.f32.mrb[0].mxu0
      %v2569 = vadd.f32 %v2155, %v2568
      %2570 = vmatprep.mubr.bf16.mxu0 %v2093
      %2571 = vmatmul.mubr.bf16.gmra.mrb[0].mxu0 %v2092
      %v2572 = vpop.f32.mrb[0].mxu0
      %v2573 = vadd.f32 %v2151, %v2572
      %v2574 = vpop.f32.mrb[0].mxu0
      %v2575 = vadd.f32 %v2155, %v2574
      %v2576 = vpop.f32.mrb[0].mxu0
      %v2577 = vadd.f32 %v2151, %v2576
      %v2578 = vpop.f32.mrb[0].mxu0
      %v2579 = vadd.f32 %v2155, %v2578
      %2580 = vmatprep.mubr.bf16.mxu0 %v2095
      %2581 = vmatmul.mubr.bf16.gmra.mrb[0].mxu0 %v2094
      %v2582 = vpop.f32.mrb[0].mxu0
      %v2583 = vadd.f32 %v2151, %v2582
      %v2584 = vpop.f32.mrb[0].mxu0
      %v2585 = vadd.f32 %v2155, %v2584
      %v2586 = vpop.f32.mrb[0].mxu0
      %v2587 = vadd.f32 %v2151, %v2586
      %v2588 = vpop.f32.mrb[0].mxu0
      %v2589 = vadd.f32 %v2155, %v2588
      %2590 = vmatprep.mubr.bf16.mxu0 %v2097
      %2591 = vmatmul.mubr.bf16.gmra.mrb[0].mxu0 %v2096
      %v2592 = vpop.f32.mrb[0].mxu0
      %v2593 = vadd.f32 %v2151, %v2592
      %v2594 = vpop.f32.mrb[0].mxu0
      %v2595 = vadd.f32 %v2155, %v2594
      %v2596 = vpop.f32.mrb[0].mxu0
      %v2597 = vadd.f32 %v2151, %v2596
      %v2598 = vpop.f32.mrb[0].mxu0
      %v2599 = vadd.f32 %v2155, %v2598
      %2600 = vmatprep.mubr.bf16.mxu0 %v2099
      %2601 = vmatmul.mubr.bf16.gmra.mrb[0].mxu0 %v2098
      %v2602 = vpop.f32.mrb[0].mxu0
      %v2603 = vadd.f32 %v2151, %v2602
      %v2604 = vpop.f32.mrb[0].mxu0
      %v2605 = vadd.f32 %v2155, %v2604
      %v2606 = vpop.f32.mrb[0].mxu0
      %v2607 = vadd.f32 %v2151, %v2606
      %v2608 = vpop.f32.mrb[0].mxu0
      %v2609 = vadd.f32 %v2155, %v2608
      %2610 = vmatprep.mubr.bf16.mxu0 %v2101
      %2611 = vmatmul.mubr.bf16.gmra.mrb[0].mxu0 %v2100
      %v2612 = vpop.f32.mrb[0].mxu0
      %v2613 = vadd.f32 %v2151, %v2612
      %v2614 = vpop.f32.mrb[0].mxu0
      %v2615 = vadd.f32 %v2155, %v2614
      %v2616 = vpop.f32.mrb[0].mxu0
      %v2617 = vadd.f32 %v2151, %v2616
      %v2618 = vpop.f32.mrb[0].mxu0
      %v2619 = vadd.f32 %v2155, %v2618
      %2620 = vmatprep.mubr.bf16.mxu0 %v2103
      %2621 = vmatmul.mubr.bf16.gmra.mrb[0].mxu0 %v2102
      %v2622 = vpop.f32.mrb[0].mxu0
      %v2623 = vadd.f32 %v2151, %v2622
      %v2624 = vpop.f32.mrb[0].mxu0
      %v2625 = vadd.f32 %v2155, %v2624
      %v2626 = vpop.f32.mrb[0].mxu0
      %v2627 = vadd.f32 %v2151, %v2626
      %v2628 = vpop.f32.mrb[0].mxu0
      %v2629 = vadd.f32 %v2155, %v2628
      %2630 = vmatprep.mubr.bf16.mxu0 %v2105
      %2631 = vmatmul.mubr.bf16.gmra.mrb[0].mxu0 %v2104
      %v2632 = vpop.f32.mrb[0].mxu0
      %v2633 = vadd.f32 %v2151, %v2632
      %v2634 = vpop.f32.mrb[0].mxu0
      %v2635 = vadd.f32 %v2155, %v2634
      %v2636 = vpop.f32.mrb[0].mxu0
      %v2637 = vadd.f32 %v2151, %v2636
      %v2638 = vpop.f32.mrb[0].mxu0
      %v2639 = vadd.f32 %v2155, %v2638
      %2640 = vmatprep.mubr.bf16.mxu0 %v2107
      %2641 = vmatmul.mubr.bf16.gmra.mrb[0].mxu0 %v2106
      %v2642 = vpop.f32.mrb[0].mxu0
      %v2643 = vadd.f32 %v2151, %v2642
      %v2644 = vpop.f32.mrb[0].mxu0
      %v2645 = vadd.f32 %v2155, %v2644
      %v2646 = vpop.f32.mrb[0].mxu0
      %v2647 = vadd.f32 %v2151, %v2646
      %v2648 = vpop.f32.mrb[0].mxu0
      %v2649 = vadd.f32 %v2155, %v2648
      %2650 = vmatprep.mubr.bf16.mxu0 %v2109
      %2651 = vmatmul.mubr.bf16.gmra.mrb[0].mxu0 %v2108
      %v2652 = vpop.f32.mrb[0].mxu0
      %v2653 = vadd.f32 %v2151, %v2652
      %v2654 = vpop.f32.mrb[0].mxu0
      %v2655 = vadd.f32 %v2155, %v2654
      %v2656 = vpop.f32.mrb[0].mxu0
      %v2657 = vadd.f32 %v2151, %v2656
      %v2658 = vpop.f32.mrb[0].mxu0
      %v2659 = vadd.f32 %v2155, %v2658
      %2660 = vmatprep.mubr.bf16.mxu0 %v2111
      %2661 = vmatmul.mubr.bf16.gmra.mrb[0].mxu0 %v2110
      %v2662 = vpop.f32.mrb[0].mxu0
      %v2663 = vadd.f32 %v2151, %v2662
      %v2664 = vpop.f32.mrb[0].mxu0
      %v2665 = vadd.f32 %v2155, %v2664
      %v2666 = vpop.f32.mrb[0].mxu0
      %v2667 = vadd.f32 %v2151, %v2666
      %v2668 = vpop.f32.mrb[0].mxu0
      %v2669 = vadd.f32 %v2155, %v2668
      %2670 = vdwg.mxu0
      %v2671 = vmax.f32 %v2353, 0.0
      %v2672 = vmax.f32 %v2355, 0.0
      %v2673 = vmax.f32 %v2357, 0.0
      %v2674 = vmax.f32 %v2359, 0.0
      %v2675 = vmax.f32 %v2363, 0.0
      %v2676 = vmax.f32 %v2365, 0.0
      %v2677 = vmax.f32 %v2367, 0.0
      %v2678 = vmax.f32 %v2369, 0.0
      %v2679 = vmax.f32 %v2373, 0.0
      %v2680 = vmax.f32 %v2375, 0.0
      %v2681 = vmax.f32 %v2377, 0.0
      %v2682 = vmax.f32 %v2379, 0.0
      %v2683 = vmax.f32 %v2383, 0.0
      %v2684 = vmax.f32 %v2385, 0.0
      %v2685 = vmax.f32 %v2387, 0.0
      %v2686 = vmax.f32 %v2389, 0.0
      %v2687 = vmax.f32 %v2393, 0.0
      %v2688 = vmax.f32 %v2395, 0.0
      %v2689 = vmax.f32 %v2397, 0.0
      %v2690 = vmax.f32 %v2399, 0.0
      %v2691 = vmax.f32 %v2403, 0.0
      %v2692 = vmax.f32 %v2405, 0.0
      %v2693 = vmax.f32 %v2407, 0.0
      %v2694 = vmax.f32 %v2409, 0.0
      %v2695 = vmax.f32 %v2413, 0.0
      %v2696 = vmax.f32 %v2415, 0.0
      %v2697 = vmax.f32 %v2417, 0.0
      %v2698 = vmax.f32 %v2419, 0.0
      %v2699 = vmax.f32 %v2423, 0.0
      %v2700 = vmax.f32 %v2425, 0.0
      %v2701 = vmax.f32 %v2427, 0.0
      %v2702 = vmax.f32 %v2429, 0.0
      %v2703 = vmax.f32 %v2433, 0.0
      %v2704 = vmax.f32 %v2435, 0.0
      %v2705 = vmax.f32 %v2437, 0.0
      %v2706 = vmax.f32 %v2439, 0.0
      %v2707 = vmax.f32 %v2443, 0.0
      %v2708 = vmax.f32 %v2445, 0.0
      %v2709 = vmax.f32 %v2447, 0.0
      %v2710 = vmax.f32 %v2449, 0.0
      %v2711 = vmax.f32 %v2453, 0.0
      %v2712 = vmax.f32 %v2455, 0.0
      %v2713 = vmax.f32 %v2457, 0.0
      %v2714 = vmax.f32 %v2459, 0.0
      %v2715 = vmax.f32 %v2463, 0.0
      %v2716 = vmax.f32 %v2465, 0.0
      %v2717 = vmax.f32 %v2467, 0.0
      %v2718 = vmax.f32 %v2469, 0.0
      %v2719 = vmax.f32 %v2473, 0.0
      %v2720 = vmax.f32 %v2475, 0.0
      %v2721 = vmax.f32 %v2477, 0.0
      %v2722 = vmax.f32 %v2479, 0.0
      %v2723 = vmax.f32 %v2483, 0.0
      %v2724 = vmax.f32 %v2485, 0.0
      %v2725 = vmax.f32 %v2487, 0.0
      %v2726 = vmax.f32 %v2489, 0.0
      %v2727 = vmax.f32 %v2493, 0.0
      %v2728 = vmax.f32 %v2495, 0.0
      %v2729 = vmax.f32 %v2497, 0.0
      %v2730 = vmax.f32 %v2499, 0.0
      %v2731 = vmax.f32 %v2503, 0.0
      %v2732 = vmax.f32 %v2505, 0.0
      %v2733 = vmax.f32 %v2507, 0.0
      %v2734 = vmax.f32 %v2509, 0.0
      %v2735 = vmax.f32 %v2513, 0.0
      %v2736 = vmax.f32 %v2515, 0.0
      %v2737 = vmax.f32 %v2517, 0.0
      %v2738 = vmax.f32 %v2519, 0.0
      %v2739 = vmax.f32 %v2523, 0.0
      %v2740 = vmax.f32 %v2525, 0.0
      %v2741 = vmax.f32 %v2527, 0.0
      %v2742 = vmax.f32 %v2529, 0.0
      %v2743 = vmax.f32 %v2533, 0.0
      %v2744 = vmax.f32 %v2535, 0.0
      %v2745 = vmax.f32 %v2537, 0.0
      %v2746 = vmax.f32 %v2539, 0.0
      %v2747 = vmax.f32 %v2543, 0.0
      %v2748 = vmax.f32 %v2545, 0.0
      %v2749 = vmax.f32 %v2547, 0.0
      %v2750 = vmax.f32 %v2549, 0.0
      %v2751 = vmax.f32 %v2553, 0.0
      %v2752 = vmax.f32 %v2555, 0.0
      %v2753 = vmax.f32 %v2557, 0.0
      %v2754 = vmax.f32 %v2559, 0.0
      %v2755 = vmax.f32 %v2563, 0.0
      %v2756 = vmax.f32 %v2565, 0.0
      %v2757 = vmax.f32 %v2567, 0.0
      %v2758 = vmax.f32 %v2569, 0.0
      %v2759 = vmax.f32 %v2573, 0.0
      %v2760 = vmax.f32 %v2575, 0.0
      %v2761 = vmax.f32 %v2577, 0.0
      %v2762 = vmax.f32 %v2579, 0.0
      %v2763 = vmax.f32 %v2583, 0.0
      %v2764 = vmax.f32 %v2585, 0.0
      %v2765 = vmax.f32 %v2587, 0.0
      %v2766 = vmax.f32 %v2589, 0.0
      %v2767 = vmax.f32 %v2593, 0.0
      %v2768 = vmax.f32 %v2595, 0.0
      %v2769 = vmax.f32 %v2597, 0.0
      %v2770 = vmax.f32 %v2599, 0.0
      %v2771 = vmax.f32 %v2603, 0.0
      %v2772 = vmax.f32 %v2605, 0.0
      %v2773 = vmax.f32 %v2607, 0.0
      %v2774 = vmax.f32 %v2609, 0.0
      %v2775 = vmax.f32 %v2613, 0.0
      %v2776 = vmax.f32 %v2615, 0.0
      %v2777 = vmax.f32 %v2617, 0.0
      %v2778 = vmax.f32 %v2619, 0.0
      %v2779 = vmax.f32 %v2623, 0.0
      %v2780 = vmax.f32 %v2625, 0.0
      %v2781 = vmax.f32 %v2627, 0.0
      %v2782 = vmax.f32 %v2629, 0.0
      %v2783 = vmax.f32 %v2633, 0.0
      %v2784 = vmax.f32 %v2635, 0.0
      %v2785 = vmax.f32 %v2637, 0.0
      %v2786 = vmax.f32 %v2639, 0.0
      %v2787 = vmax.f32 %v2643, 0.0
      %v2788 = vmax.f32 %v2645, 0.0
      %v2789 = vmax.f32 %v2647, 0.0
      %v2790 = vmax.f32 %v2649, 0.0
      %v2791 = vmax.f32 %v2653, 0.0
      %v2792 = vmax.f32 %v2655, 0.0
      %v2793 = vmax.f32 %v2657, 0.0
      %v2794 = vmax.f32 %v2659, 0.0
      %v2795 = vmax.f32 %v2663, 0.0
      %v2796 = vmax.f32 %v2665, 0.0
      %v2797 = vmax.f32 %v2667, 0.0
      %v2798 = vmax.f32 %v2669, 0.0
      %v2799 = vpack.c.bf16 %v2673, %v2671
      %v2800 = vpack.c.bf16 %v2674, %v2672
      %v2801 = vpack.c.bf16 %v2677, %v2675
      %v2802 = vpack.c.bf16 %v2678, %v2676
      %v2803 = vpack.c.bf16 %v2681, %v2679
      %v2804 = vpack.c.bf16 %v2682, %v2680
      %v2805 = vpack.c.bf16 %v2685, %v2683
      %v2806 = vpack.c.bf16 %v2686, %v2684
      %v2807 = vpack.c.bf16 %v2689, %v2687
      %v2808 = vpack.c.bf16 %v2690, %v2688
      %v2809 = vpack.c.bf16 %v2693, %v2691
      %v2810 = vpack.c.bf16 %v2694, %v2692
      %v2811 = vpack.c.bf16 %v2697, %v2695
      %v2812 = vpack.c.bf16 %v2698, %v2696
      %v2813 = vpack.c.bf16 %v2701, %v2699
      %v2814 = vpack.c.bf16 %v2702, %v2700
      %v2815 = vpack.c.bf16 %v2705, %v2703
      %v2816 = vpack.c.bf16 %v2706, %v2704
      %v2817 = vpack.c.bf16 %v2709, %v2707
      %v2818 = vpack.c.bf16 %v2710, %v2708
      %v2819 = vpack.c.bf16 %v2713, %v2711
      %v2820 = vpack.c.bf16 %v2714, %v2712
      %v2821 = vpack.c.bf16 %v2717, %v2715
      %v2822 = vpack.c.bf16 %v2718, %v2716
      %v2823 = vpack.c.bf16 %v2721, %v2719
      %v2824 = vpack.c.bf16 %v2722, %v2720
      %v2825 = vpack.c.bf16 %v2725, %v2723
      %v2826 = vpack.c.bf16 %v2726, %v2724
      %v2827 = vpack.c.bf16 %v2729, %v2727
      %v2828 = vpack.c.bf16 %v2730, %v2728
      %v2829 = vpack.c.bf16 %v2733, %v2731
      %v2830 = vpack.c.bf16 %v2734, %v2732
      %v2831 = vpack.c.bf16 %v2737, %v2735
      %v2832 = vpack.c.bf16 %v2738, %v2736
      %v2833 = vpack.c.bf16 %v2741, %v2739
      %v2834 = vpack.c.bf16 %v2742, %v2740
      %v2835 = vpack.c.bf16 %v2745, %v2743
      %v2836 = vpack.c.bf16 %v2746, %v2744
      %v2837 = vpack.c.bf16 %v2749, %v2747
      %v2838 = vpack.c.bf16 %v2750, %v2748
      %v2839 = vpack.c.bf16 %v2753, %v2751
      %v2840 = vpack.c.bf16 %v2754, %v2752
      %v2841 = vpack.c.bf16 %v2757, %v2755
      %v2842 = vpack.c.bf16 %v2758, %v2756
      %v2843 = vpack.c.bf16 %v2761, %v2759
      %v2844 = vpack.c.bf16 %v2762, %v2760
      %v2845 = vpack.c.bf16 %v2765, %v2763
      %v2846 = vpack.c.bf16 %v2766, %v2764
      %v2847 = vpack.c.bf16 %v2769, %v2767
      %v2848 = vpack.c.bf16 %v2770, %v2768
      %v2849 = vpack.c.bf16 %v2773, %v2771
      %v2850 = vpack.c.bf16 %v2774, %v2772
      %v2851 = vpack.c.bf16 %v2777, %v2775
      %v2852 = vpack.c.bf16 %v2778, %v2776
      %v2853 = vpack.c.bf16 %v2781, %v2779
      %v2854 = vpack.c.bf16 %v2782, %v2780
      %v2855 = vpack.c.bf16 %v2785, %v2783
      %v2856 = vpack.c.bf16 %v2786, %v2784
      %v2857 = vpack.c.bf16 %v2789, %v2787
      %v2858 = vpack.c.bf16 %v2790, %v2788
      %v2859 = vpack.c.bf16 %v2793, %v2791
      %v2860 = vpack.c.bf16 %v2794, %v2792
      %v2861 = vpack.c.bf16 %v2797, %v2795
      %v2862 = vpack.c.bf16 %v2798, %v2796
      %s2863 = scalar_lea.vmem %s3, 512
      %v2864 = vld [vmem:[%s2863] sm:$0xff]
      %v2865 = vld [vmem:[%s2863 + $0x8] sm:$0xff]
      %v2866 = vld [vmem:[%s2863 + $0x10] sm:$0xff]
      %v2867 = vld [vmem:[%s2863 + $0x18] sm:$0xff]
      %v2868 = vld [vmem:[%s2863 + $0x20] sm:$0xff]
      %v2869 = vld [vmem:[%s2863 + $0x28] sm:$0xff]
      %v2870 = vld [vmem:[%s2863 + $0x30] sm:$0xff]
      %v2871 = vld [vmem:[%s2863 + $0x38] sm:$0xff]
      %v2872 = vld [vmem:[%s2863 + $0x40] sm:$0xff]
      %v2873 = vld [vmem:[%s2863 + $0x48] sm:$0xff]
      %v2874 = vld [vmem:[%s2863 + $0x50] sm:$0xff]
      %v2875 = vld [vmem:[%s2863 + $0x58] sm:$0xff]
      %v2876 = vld [vmem:[%s2863 + $0x60] sm:$0xff]
      %v2877 = vld [vmem:[%s2863 + $0x68] sm:$0xff]
      %v2878 = vld [vmem:[%s2863 + $0x70] sm:$0xff]
      %v2879 = vld [vmem:[%s2863 + $0x78] sm:$0xff]
      %v2880 = vld [vmem:[%s2863 + $0x80] sm:$0xff]
      %v2881 = vld [vmem:[%s2863 + $0x88] sm:$0xff]
      %v2882 = vld [vmem:[%s2863 + $0x90] sm:$0xff]
      %v2883 = vld [vmem:[%s2863 + $0x98] sm:$0xff]
      %v2884 = vld [vmem:[%s2863 + $0xa0] sm:$0xff]
      %v2885 = vld [vmem:[%s2863 + $0xa8] sm:$0xff]
      %v2886 = vld [vmem:[%s2863 + $0xb0] sm:$0xff]
      %v2887 = vld [vmem:[%s2863 + $0xb8] sm:$0xff]
      %v2888 = vld [vmem:[%s2863 + $0xc0] sm:$0xff]
      %v2889 = vld [vmem:[%s2863 + $0xc8] sm:$0xff]
      %v2890 = vld [vmem:[%s2863 + $0xd0] sm:$0xff]
      %v2891 = vld [vmem:[%s2863 + $0xd8] sm:$0xff]
      %v2892 = vld [vmem:[%s2863 + $0xe0] sm:$0xff]
      %v2893 = vld [vmem:[%s2863 + $0xe8] sm:$0xff]
      %v2894 = vld [vmem:[%s2863 + $0xf0] sm:$0xff]
      %v2895 = vld [vmem:[%s2863 + $0xf8] sm:$0xff]
      %s2896 = scalar_lea.vmem %s4, 4
      %v2897 = vld [vmem:[%s2896] sm:$0x3]
      %v2899 = vlaneseq
      %v2900 = vshrl.u32 %v2899, 7
      %v2901 = vsub.s32 0, %v2900
      %v2902 = vrot.slane %v2897, %v2901
      %v2903 = vlaneseq
      %v2904 = vshrl.u32 %v2903, 7
      %v2905 = vsub.s32 1, %v2904
      %v2906 = vrot.slane %v2897, %v2905
      %v2941 = vunpack.c.l.b16 %v2864
      %v2942 = vunpack.c.h.b16 %v2864
      %v2943 = vunpack.c.l.b16 %v2865
      %v2944 = vunpack.c.h.b16 %v2865
      %v2945 = vunpack.c.l.b16 %v2866
      %v2946 = vunpack.c.h.b16 %v2866
      %v2947 = vunpack.c.l.b16 %v2867
      %v2948 = vunpack.c.h.b16 %v2867
      %v2949 = vunpack.c.l.b16 %v2868
      %v2950 = vunpack.c.h.b16 %v2868
      %v2951 = vunpack.c.l.b16 %v2869
      %v2952 = vunpack.c.h.b16 %v2869
      %v2953 = vunpack.c.l.b16 %v2870
      %v2954 = vunpack.c.h.b16 %v2870
      %v2955 = vunpack.c.l.b16 %v2871
      %v2956 = vunpack.c.h.b16 %v2871
      %v2957 = vunpack.c.l.b16 %v2872
      %v2958 = vunpack.c.h.b16 %v2872
      %v2959 = vunpack.c.l.b16 %v2873
      %v2960 = vunpack.c.h.b16 %v2873
      %v2961 = vunpack.c.l.b16 %v2874
      %v2962 = vunpack.c.h.b16 %v2874
      %v2963 = vunpack.c.l.b16 %v2875
      %v2964 = vunpack.c.h.b16 %v2875
      %v2965 = vunpack.c.l.b16 %v2876
      %v2966 = vunpack.c.h.b16 %v2876
      %v2967 = vunpack.c.l.b16 %v2877
      %v2968 = vunpack.c.h.b16 %v2877
      %v2969 = vunpack.c.l.b16 %v2878
      %v2970 = vunpack.c.h.b16 %v2878
      %v2971 = vunpack.c.l.b16 %v2879
      %v2972 = vunpack.c.h.b16 %v2879
      %v2973 = vunpack.c.l.b16 %v2880
      %v2974 = vunpack.c.h.b16 %v2880
      %v2975 = vunpack.c.l.b16 %v2881
      %v2976 = vunpack.c.h.b16 %v2881
      %v2977 = vunpack.c.l.b16 %v2882
      %v2978 = vunpack.c.h.b16 %v2882
      %v2979 = vunpack.c.l.b16 %v2883
      %v2980 = vunpack.c.h.b16 %v2883
      %v2981 = vunpack.c.l.b16 %v2884
      %v2982 = vunpack.c.h.b16 %v2884
      %v2983 = vunpack.c.l.b16 %v2885
      %v2984 = vunpack.c.h.b16 %v2885
      %v2985 = vunpack.c.l.b16 %v2886
      %v2986 = vunpack.c.h.b16 %v2886
      %v2987 = vunpack.c.l.b16 %v2887
      %v2988 = vunpack.c.h.b16 %v2887
      %v2989 = vunpack.c.l.b16 %v2888
      %v2990 = vunpack.c.h.b16 %v2888
      %v2991 = vunpack.c.l.b16 %v2889
      %v2992 = vunpack.c.h.b16 %v2889
      %v2993 = vunpack.c.l.b16 %v2890
      %v2994 = vunpack.c.h.b16 %v2890
      %v2995 = vunpack.c.l.b16 %v2891
      %v2996 = vunpack.c.h.b16 %v2891
      %v2997 = vunpack.c.l.b16 %v2892
      %v2998 = vunpack.c.h.b16 %v2892
      %v2999 = vunpack.c.l.b16 %v2893
      %v3000 = vunpack.c.h.b16 %v2893
      %v3001 = vunpack.c.l.b16 %v2894
      %v3002 = vunpack.c.h.b16 %v2894
      %v3003 = vunpack.c.l.b16 %v2895
      %v3004 = vunpack.c.h.b16 %v2895
      %v3005 = vpack.c.b16 %v2943, %v2941
      %v3006 = vpack.c.b16 %v2944, %v2942
      %v3007 = vpack.c.b16 %v2947, %v2945
      %v3008 = vpack.c.b16 %v2948, %v2946
      %v3009 = vpack.c.b16 %v2951, %v2949
      %v3010 = vpack.c.b16 %v2952, %v2950
      %v3011 = vpack.c.b16 %v2955, %v2953
      %v3012 = vpack.c.b16 %v2956, %v2954
      %v3013 = vpack.c.b16 %v2959, %v2957
      %v3014 = vpack.c.b16 %v2960, %v2958
      %v3015 = vpack.c.b16 %v2963, %v2961
      %v3016 = vpack.c.b16 %v2964, %v2962
      %v3017 = vpack.c.b16 %v2967, %v2965
      %v3018 = vpack.c.b16 %v2968, %v2966
      %v3019 = vpack.c.b16 %v2971, %v2969
      %v3020 = vpack.c.b16 %v2972, %v2970
      %v3021 = vpack.c.b16 %v2975, %v2973
      %v3022 = vpack.c.b16 %v2976, %v2974
      %v3023 = vpack.c.b16 %v2979, %v2977
      %v3024 = vpack.c.b16 %v2980, %v2978
      %v3025 = vpack.c.b16 %v2983, %v2981
      %v3026 = vpack.c.b16 %v2984, %v2982
      %v3027 = vpack.c.b16 %v2987, %v2985
      %v3028 = vpack.c.b16 %v2988, %v2986
      %v3029 = vpack.c.b16 %v2991, %v2989
      %v3030 = vpack.c.b16 %v2992, %v2990
      %v3031 = vpack.c.b16 %v2995, %v2993
      %v3032 = vpack.c.b16 %v2996, %v2994
      %v3033 = vpack.c.b16 %v2999, %v2997
      %v3034 = vpack.c.b16 %v3000, %v2998
      %v3035 = vpack.c.b16 %v3003, %v3001
      %v3036 = vpack.c.b16 %v3004, %v3002
      %3069 = vmatprep.subr.bf16.mxu0 %v3006
      %3070 = vmatpush1.bf16.msra.mxu0 %v3005
      %3071 = vmatprep.subr.bf16.mxu0 %v3008
      %3072 = vmatpush1.bf16.msra.mxu0 %v3007
      %3073 = vmatprep.subr.bf16.mxu0 %v3010
      %3074 = vmatpush1.bf16.msra.mxu0 %v3009
      %3075 = vmatprep.subr.bf16.mxu0 %v3012
      %3076 = vmatpush1.bf16.msra.mxu0 %v3011
      %3077 = vmatprep.subr.bf16.mxu0 %v3014
      %3078 = vmatpush1.bf16.msra.mxu0 %v3013
      %3079 = vmatprep.subr.bf16.mxu0 %v3016
      %3080 = vmatpush1.bf16.msra.mxu0 %v3015
      %3081 = vmatprep.subr.bf16.mxu0 %v3018
      %3082 = vmatpush1.bf16.msra.mxu0 %v3017
      %3083 = vmatprep.subr.bf16.mxu0 %v3020
      %3084 = vmatpush1.bf16.msra.mxu0 %v3019
      %3085 = vmatprep.subr.bf16.mxu0 %v3022
      %3086 = vmatpush1.bf16.msra.mxu0 %v3021
      %3087 = vmatprep.subr.bf16.mxu0 %v3024
      %3088 = vmatpush1.bf16.msra.mxu0 %v3023
      %3089 = vmatprep.subr.bf16.mxu0 %v3026
      %3090 = vmatpush1.bf16.msra.mxu0 %v3025
      %3091 = vmatprep.subr.bf16.mxu0 %v3028
      %3092 = vmatpush1.bf16.msra.mxu0 %v3027
      %3093 = vmatprep.subr.bf16.mxu0 %v3030
      %3094 = vmatpush1.bf16.msra.mxu0 %v3029
      %3095 = vmatprep.subr.bf16.mxu0 %v3032
      %3096 = vmatpush1.bf16.msra.mxu0 %v3031
      %3097 = vmatprep.subr.bf16.mxu0 %v3034
      %3098 = vmatpush1.bf16.msra.mxu0 %v3033
      %3099 = vmatprep.subr.bf16.mxu0 %v3036
      %3100 = vmatpush1.bf16.msra.mxu0 %v3035
      %3101 = vmatprep.mubr.bf16.mxu0 %v2800
      %3102 = vmatmul.mubr.bf16.gmra.mrb[0].mxu0 %v2799
      %v3103 = vpop.f32.mrb[0].mxu0
      %v3104 = vadd.f32 %v2902, %v3103
      %v3105 = vpop.f32.mrb[0].mxu0
      %v3106 = vadd.f32 %v2906, %v3105
      %v3107 = vpop.f32.mrb[0].mxu0
      %v3108 = vadd.f32 %v2902, %v3107
      %v3109 = vpop.f32.mrb[0].mxu0
      %v3110 = vadd.f32 %v2906, %v3109
      %3111 = vmatprep.mubr.bf16.mxu0 %v2802
      %3112 = vmatmul.mubr.bf16.gmra.mrb[0].mxu0 %v2801
      %v3113 = vpop.f32.mrb[0].mxu0
      %v3114 = vadd.f32 %v2902, %v3113
      %v3115 = vpop.f32.mrb[0].mxu0
      %v3116 = vadd.f32 %v2906, %v3115
      %v3117 = vpop.f32.mrb[0].mxu0
      %v3118 = vadd.f32 %v2902, %v3117
      %v3119 = vpop.f32.mrb[0].mxu0
      %v3120 = vadd.f32 %v2906, %v3119
      %3121 = vmatprep.mubr.bf16.mxu0 %v2804
      %3122 = vmatmul.mubr.bf16.gmra.mrb[0].mxu0 %v2803
      %v3123 = vpop.f32.mrb[0].mxu0
      %v3124 = vadd.f32 %v2902, %v3123
      %v3125 = vpop.f32.mrb[0].mxu0
      %v3126 = vadd.f32 %v2906, %v3125
      %v3127 = vpop.f32.mrb[0].mxu0
      %v3128 = vadd.f32 %v2902, %v3127
      %v3129 = vpop.f32.mrb[0].mxu0
      %v3130 = vadd.f32 %v2906, %v3129
      %3131 = vmatprep.mubr.bf16.mxu0 %v2806
      %3132 = vmatmul.mubr.bf16.gmra.mrb[0].mxu0 %v2805
      %v3133 = vpop.f32.mrb[0].mxu0
      %v3134 = vadd.f32 %v2902, %v3133
      %v3135 = vpop.f32.mrb[0].mxu0
      %v3136 = vadd.f32 %v2906, %v3135
      %v3137 = vpop.f32.mrb[0].mxu0
      %v3138 = vadd.f32 %v2902, %v3137
      %v3139 = vpop.f32.mrb[0].mxu0
      %v3140 = vadd.f32 %v2906, %v3139
      %3141 = vmatprep.mubr.bf16.mxu0 %v2808
      %3142 = vmatmul.mubr.bf16.gmra.mrb[0].mxu0 %v2807
      %v3143 = vpop.f32.mrb[0].mxu0
      %v3144 = vadd.f32 %v2902, %v3143
      %v3145 = vpop.f32.mrb[0].mxu0
      %v3146 = vadd.f32 %v2906, %v3145
      %v3147 = vpop.f32.mrb[0].mxu0
      %v3148 = vadd.f32 %v2902, %v3147
      %v3149 = vpop.f32.mrb[0].mxu0
      %v3150 = vadd.f32 %v2906, %v3149
      %3151 = vmatprep.mubr.bf16.mxu0 %v2810
      %3152 = vmatmul.mubr.bf16.gmra.mrb[0].mxu0 %v2809
      %v3153 = vpop.f32.mrb[0].mxu0
      %v3154 = vadd.f32 %v2902, %v3153
      %v3155 = vpop.f32.mrb[0].mxu0
      %v3156 = vadd.f32 %v2906, %v3155
      %v3157 = vpop.f32.mrb[0].mxu0
      %v3158 = vadd.f32 %v2902, %v3157
      %v3159 = vpop.f32.mrb[0].mxu0
      %v3160 = vadd.f32 %v2906, %v3159
      %3161 = vmatprep.mubr.bf16.mxu0 %v2812
      %3162 = vmatmul.mubr.bf16.gmra.mrb[0].mxu0 %v2811
      %v3163 = vpop.f32.mrb[0].mxu0
      %v3164 = vadd.f32 %v2902, %v3163
      %v3165 = vpop.f32.mrb[0].mxu0
      %v3166 = vadd.f32 %v2906, %v3165
      %v3167 = vpop.f32.mrb[0].mxu0
      %v3168 = vadd.f32 %v2902, %v3167
      %v3169 = vpop.f32.mrb[0].mxu0
      %v3170 = vadd.f32 %v2906, %v3169
      %3171 = vmatprep.mubr.bf16.mxu0 %v2814
      %3172 = vmatmul.mubr.bf16.gmra.mrb[0].mxu0 %v2813
      %v3173 = vpop.f32.mrb[0].mxu0
      %v3174 = vadd.f32 %v2902, %v3173
      %v3175 = vpop.f32.mrb[0].mxu0
      %v3176 = vadd.f32 %v2906, %v3175
      %v3177 = vpop.f32.mrb[0].mxu0
      %v3178 = vadd.f32 %v2902, %v3177
      %v3179 = vpop.f32.mrb[0].mxu0
      %v3180 = vadd.f32 %v2906, %v3179
      %3181 = vmatprep.mubr.bf16.mxu0 %v2816
      %3182 = vmatmul.mubr.bf16.gmra.mrb[0].mxu0 %v2815
      %v3183 = vpop.f32.mrb[0].mxu0
      %v3184 = vadd.f32 %v2902, %v3183
      %v3185 = vpop.f32.mrb[0].mxu0
      %v3186 = vadd.f32 %v2906, %v3185
      %v3187 = vpop.f32.mrb[0].mxu0
      %v3188 = vadd.f32 %v2902, %v3187
      %v3189 = vpop.f32.mrb[0].mxu0
      %v3190 = vadd.f32 %v2906, %v3189
      %3191 = vmatprep.mubr.bf16.mxu0 %v2818
      %3192 = vmatmul.mubr.bf16.gmra.mrb[0].mxu0 %v2817
      %v3193 = vpop.f32.mrb[0].mxu0
      %v3194 = vadd.f32 %v2902, %v3193
      %v3195 = vpop.f32.mrb[0].mxu0
      %v3196 = vadd.f32 %v2906, %v3195
      %v3197 = vpop.f32.mrb[0].mxu0
      %v3198 = vadd.f32 %v2902, %v3197
      %v3199 = vpop.f32.mrb[0].mxu0
      %v3200 = vadd.f32 %v2906, %v3199
      %3201 = vmatprep.mubr.bf16.mxu0 %v2820
      %3202 = vmatmul.mubr.bf16.gmra.mrb[0].mxu0 %v2819
      %v3203 = vpop.f32.mrb[0].mxu0
      %v3204 = vadd.f32 %v2902, %v3203
      %v3205 = vpop.f32.mrb[0].mxu0
      %v3206 = vadd.f32 %v2906, %v3205
      %v3207 = vpop.f32.mrb[0].mxu0
      %v3208 = vadd.f32 %v2902, %v3207
      %v3209 = vpop.f32.mrb[0].mxu0
      %v3210 = vadd.f32 %v2906, %v3209
      %3211 = vmatprep.mubr.bf16.mxu0 %v2822
      %3212 = vmatmul.mubr.bf16.gmra.mrb[0].mxu0 %v2821
      %v3213 = vpop.f32.mrb[0].mxu0
      %v3214 = vadd.f32 %v2902, %v3213
      %v3215 = vpop.f32.mrb[0].mxu0
      %v3216 = vadd.f32 %v2906, %v3215
      %v3217 = vpop.f32.mrb[0].mxu0
      %v3218 = vadd.f32 %v2902, %v3217
      %v3219 = vpop.f32.mrb[0].mxu0
      %v3220 = vadd.f32 %v2906, %v3219
      %3221 = vmatprep.mubr.bf16.mxu0 %v2824
      %3222 = vmatmul.mubr.bf16.gmra.mrb[0].mxu0 %v2823
      %v3223 = vpop.f32.mrb[0].mxu0
      %v3224 = vadd.f32 %v2902, %v3223
      %v3225 = vpop.f32.mrb[0].mxu0
      %v3226 = vadd.f32 %v2906, %v3225
      %v3227 = vpop.f32.mrb[0].mxu0
      %v3228 = vadd.f32 %v2902, %v3227
      %v3229 = vpop.f32.mrb[0].mxu0
      %v3230 = vadd.f32 %v2906, %v3229
      %3231 = vmatprep.mubr.bf16.mxu0 %v2826
      %3232 = vmatmul.mubr.bf16.gmra.mrb[0].mxu0 %v2825
      %v3233 = vpop.f32.mrb[0].mxu0
      %v3234 = vadd.f32 %v2902, %v3233
      %v3235 = vpop.f32.mrb[0].mxu0
      %v3236 = vadd.f32 %v2906, %v3235
      %v3237 = vpop.f32.mrb[0].mxu0
      %v3238 = vadd.f32 %v2902, %v3237
      %v3239 = vpop.f32.mrb[0].mxu0
      %v3240 = vadd.f32 %v2906, %v3239
      %3241 = vmatprep.mubr.bf16.mxu0 %v2828
      %3242 = vmatmul.mubr.bf16.gmra.mrb[0].mxu0 %v2827
      %v3243 = vpop.f32.mrb[0].mxu0
      %v3244 = vadd.f32 %v2902, %v3243
      %v3245 = vpop.f32.mrb[0].mxu0
      %v3246 = vadd.f32 %v2906, %v3245
      %v3247 = vpop.f32.mrb[0].mxu0
      %v3248 = vadd.f32 %v2902, %v3247
      %v3249 = vpop.f32.mrb[0].mxu0
      %v3250 = vadd.f32 %v2906, %v3249
      %3251 = vmatprep.mubr.bf16.mxu0 %v2830
      %3252 = vmatmul.mubr.bf16.gmra.mrb[0].mxu0 %v2829
      %v3253 = vpop.f32.mrb[0].mxu0
      %v3254 = vadd.f32 %v2902, %v3253
      %v3255 = vpop.f32.mrb[0].mxu0
      %v3256 = vadd.f32 %v2906, %v3255
      %v3257 = vpop.f32.mrb[0].mxu0
      %v3258 = vadd.f32 %v2902, %v3257
      %v3259 = vpop.f32.mrb[0].mxu0
      %v3260 = vadd.f32 %v2906, %v3259
      %3261 = vmatprep.mubr.bf16.mxu0 %v2832
      %3262 = vmatmul.mubr.bf16.gmra.mrb[0].mxu0 %v2831
      %v3263 = vpop.f32.mrb[0].mxu0
      %v3264 = vadd.f32 %v2902, %v3263
      %v3265 = vpop.f32.mrb[0].mxu0
      %v3266 = vadd.f32 %v2906, %v3265
      %v3267 = vpop.f32.mrb[0].mxu0
      %v3268 = vadd.f32 %v2902, %v3267
      %v3269 = vpop.f32.mrb[0].mxu0
      %v3270 = vadd.f32 %v2906, %v3269
      %3271 = vmatprep.mubr.bf16.mxu0 %v2834
      %3272 = vmatmul.mubr.bf16.gmra.mrb[0].mxu0 %v2833
      %v3273 = vpop.f32.mrb[0].mxu0
      %v3274 = vadd.f32 %v2902, %v3273
      %v3275 = vpop.f32.mrb[0].mxu0
      %v3276 = vadd.f32 %v2906, %v3275
      %v3277 = vpop.f32.mrb[0].mxu0
      %v3278 = vadd.f32 %v2902, %v3277
      %v3279 = vpop.f32.mrb[0].mxu0
      %v3280 = vadd.f32 %v2906, %v3279
      %3281 = vmatprep.mubr.bf16.mxu0 %v2836
      %3282 = vmatmul.mubr.bf16.gmra.mrb[0].mxu0 %v2835
      %v3283 = vpop.f32.mrb[0].mxu0
      %v3284 = vadd.f32 %v2902, %v3283
      %v3285 = vpop.f32.mrb[0].mxu0
      %v3286 = vadd.f32 %v2906, %v3285
      %v3287 = vpop.f32.mrb[0].mxu0
      %v3288 = vadd.f32 %v2902, %v3287
      %v3289 = vpop.f32.mrb[0].mxu0
      %v3290 = vadd.f32 %v2906, %v3289
      %3291 = vmatprep.mubr.bf16.mxu0 %v2838
      %3292 = vmatmul.mubr.bf16.gmra.mrb[0].mxu0 %v2837
      %v3293 = vpop.f32.mrb[0].mxu0
      %v3294 = vadd.f32 %v2902, %v3293
      %v3295 = vpop.f32.mrb[0].mxu0
      %v3296 = vadd.f32 %v2906, %v3295
      %v3297 = vpop.f32.mrb[0].mxu0
      %v3298 = vadd.f32 %v2902, %v3297
      %v3299 = vpop.f32.mrb[0].mxu0
      %v3300 = vadd.f32 %v2906, %v3299
      %3301 = vmatprep.mubr.bf16.mxu0 %v2840
      %3302 = vmatmul.mubr.bf16.gmra.mrb[0].mxu0 %v2839
      %v3303 = vpop.f32.mrb[0].mxu0
      %v3304 = vadd.f32 %v2902, %v3303
      %v3305 = vpop.f32.mrb[0].mxu0
      %v3306 = vadd.f32 %v2906, %v3305
      %v3307 = vpop.f32.mrb[0].mxu0
      %v3308 = vadd.f32 %v2902, %v3307
      %v3309 = vpop.f32.mrb[0].mxu0
      %v3310 = vadd.f32 %v2906, %v3309
      %3311 = vmatprep.mubr.bf16.mxu0 %v2842
      %3312 = vmatmul.mubr.bf16.gmra.mrb[0].mxu0 %v2841
      %v3313 = vpop.f32.mrb[0].mxu0
      %v3314 = vadd.f32 %v2902, %v3313
      %v3315 = vpop.f32.mrb[0].mxu0
      %v3316 = vadd.f32 %v2906, %v3315
      %v3317 = vpop.f32.mrb[0].mxu0
      %v3318 = vadd.f32 %v2902, %v3317
      %v3319 = vpop.f32.mrb[0].mxu0
      %v3320 = vadd.f32 %v2906, %v3319
      %3321 = vmatprep.mubr.bf16.mxu0 %v2844
      %3322 = vmatmul.mubr.bf16.gmra.mrb[0].mxu0 %v2843
      %v3323 = vpop.f32.mrb[0].mxu0
      %v3324 = vadd.f32 %v2902, %v3323
      %v3325 = vpop.f32.mrb[0].mxu0
      %v3326 = vadd.f32 %v2906, %v3325
      %v3327 = vpop.f32.mrb[0].mxu0
      %v3328 = vadd.f32 %v2902, %v3327
      %v3329 = vpop.f32.mrb[0].mxu0
      %v3330 = vadd.f32 %v2906, %v3329
      %3331 = vmatprep.mubr.bf16.mxu0 %v2846
      %3332 = vmatmul.mubr.bf16.gmra.mrb[0].mxu0 %v2845
      %v3333 = vpop.f32.mrb[0].mxu0
      %v3334 = vadd.f32 %v2902, %v3333
      %v3335 = vpop.f32.mrb[0].mxu0
      %v3336 = vadd.f32 %v2906, %v3335
      %v3337 = vpop.f32.mrb[0].mxu0
      %v3338 = vadd.f32 %v2902, %v3337
      %v3339 = vpop.f32.mrb[0].mxu0
      %v3340 = vadd.f32 %v2906, %v3339
      %3341 = vmatprep.mubr.bf16.mxu0 %v2848
      %3342 = vmatmul.mubr.bf16.gmra.mrb[0].mxu0 %v2847
      %v3343 = vpop.f32.mrb[0].mxu0
      %v3344 = vadd.f32 %v2902, %v3343
      %v3345 = vpop.f32.mrb[0].mxu0
      %v3346 = vadd.f32 %v2906, %v3345
      %v3347 = vpop.f32.mrb[0].mxu0
      %v3348 = vadd.f32 %v2902, %v3347
      %v3349 = vpop.f32.mrb[0].mxu0
      %v3350 = vadd.f32 %v2906, %v3349
      %3351 = vmatprep.mubr.bf16.mxu0 %v2850
      %3352 = vmatmul.mubr.bf16.gmra.mrb[0].mxu0 %v2849
      %v3353 = vpop.f32.mrb[0].mxu0
      %v3354 = vadd.f32 %v2902, %v3353
      %v3355 = vpop.f32.mrb[0].mxu0
      %v3356 = vadd.f32 %v2906, %v3355
      %v3357 = vpop.f32.mrb[0].mxu0
      %v3358 = vadd.f32 %v2902, %v3357
      %v3359 = vpop.f32.mrb[0].mxu0
      %v3360 = vadd.f32 %v2906, %v3359
      %3361 = vmatprep.mubr.bf16.mxu0 %v2852
      %3362 = vmatmul.mubr.bf16.gmra.mrb[0].mxu0 %v2851
      %v3363 = vpop.f32.mrb[0].mxu0
      %v3364 = vadd.f32 %v2902, %v3363
      %v3365 = vpop.f32.mrb[0].mxu0
      %v3366 = vadd.f32 %v2906, %v3365
      %v3367 = vpop.f32.mrb[0].mxu0
      %v3368 = vadd.f32 %v2902, %v3367
      %v3369 = vpop.f32.mrb[0].mxu0
      %v3370 = vadd.f32 %v2906, %v3369
      %3371 = vmatprep.mubr.bf16.mxu0 %v2854
      %3372 = vmatmul.mubr.bf16.gmra.mrb[0].mxu0 %v2853
      %v3373 = vpop.f32.mrb[0].mxu0
      %v3374 = vadd.f32 %v2902, %v3373
      %v3375 = vpop.f32.mrb[0].mxu0
      %v3376 = vadd.f32 %v2906, %v3375
      %v3377 = vpop.f32.mrb[0].mxu0
      %v3378 = vadd.f32 %v2902, %v3377
      %v3379 = vpop.f32.mrb[0].mxu0
      %v3380 = vadd.f32 %v2906, %v3379
      %3381 = vmatprep.mubr.bf16.mxu0 %v2856
      %3382 = vmatmul.mubr.bf16.gmra.mrb[0].mxu0 %v2855
      %v3383 = vpop.f32.mrb[0].mxu0
      %v3384 = vadd.f32 %v2902, %v3383
      %v3385 = vpop.f32.mrb[0].mxu0
      %v3386 = vadd.f32 %v2906, %v3385
      %v3387 = vpop.f32.mrb[0].mxu0
      %v3388 = vadd.f32 %v2902, %v3387
      %v3389 = vpop.f32.mrb[0].mxu0
      %v3390 = vadd.f32 %v2906, %v3389
      %3391 = vmatprep.mubr.bf16.mxu0 %v2858
      %3392 = vmatmul.mubr.bf16.gmra.mrb[0].mxu0 %v2857
      %v3393 = vpop.f32.mrb[0].mxu0
      %v3394 = vadd.f32 %v2902, %v3393
      %v3395 = vpop.f32.mrb[0].mxu0
      %v3396 = vadd.f32 %v2906, %v3395
      %v3397 = vpop.f32.mrb[0].mxu0
      %v3398 = vadd.f32 %v2902, %v3397
      %v3399 = vpop.f32.mrb[0].mxu0
      %v3400 = vadd.f32 %v2906, %v3399
      %3401 = vmatprep.mubr.bf16.mxu0 %v2860
      %3402 = vmatmul.mubr.bf16.gmra.mrb[0].mxu0 %v2859
      %v3403 = vpop.f32.mrb[0].mxu0
      %v3404 = vadd.f32 %v2902, %v3403
      %v3405 = vpop.f32.mrb[0].mxu0
      %v3406 = vadd.f32 %v2906, %v3405
      %v3407 = vpop.f32.mrb[0].mxu0
      %v3408 = vadd.f32 %v2902, %v3407
      %v3409 = vpop.f32.mrb[0].mxu0
      %v3410 = vadd.f32 %v2906, %v3409
      %3411 = vmatprep.mubr.bf16.mxu0 %v2862
      %3412 = vmatmul.mubr.bf16.gmra.mrb[0].mxu0 %v2861
      %v3413 = vpop.f32.mrb[0].mxu0
      %v3414 = vadd.f32 %v2902, %v3413
      %v3415 = vpop.f32.mrb[0].mxu0
      %v3416 = vadd.f32 %v2906, %v3415
      %v3417 = vpop.f32.mrb[0].mxu0
      %v3418 = vadd.f32 %v2902, %v3417
      %v3419 = vpop.f32.mrb[0].mxu0
      %v3420 = vadd.f32 %v2906, %v3419
      %3421 = vdwg.mxu0
      %v3422 = vmax.f32 %v3104, 0.0
      %v3423 = vmax.f32 %v3106, 0.0
      %v3424 = vmax.f32 %v3108, 0.0
      %v3425 = vmax.f32 %v3110, 0.0
      %v3426 = vmax.f32 %v3114, 0.0
      %v3427 = vmax.f32 %v3116, 0.0
      %v3428 = vmax.f32 %v3118, 0.0
      %v3429 = vmax.f32 %v3120, 0.0
      %v3430 = vmax.f32 %v3124, 0.0
      %v3431 = vmax.f32 %v3126, 0.0
      %v3432 = vmax.f32 %v3128, 0.0
      %v3433 = vmax.f32 %v3130, 0.0
      %v3434 = vmax.f32 %v3134, 0.0
      %v3435 = vmax.f32 %v3136, 0.0
      %v3436 = vmax.f32 %v3138, 0.0
      %v3437 = vmax.f32 %v3140, 0.0
      %v3438 = vmax.f32 %v3144, 0.0
      %v3439 = vmax.f32 %v3146, 0.0
      %v3440 = vmax.f32 %v3148, 0.0
      %v3441 = vmax.f32 %v3150, 0.0
      %v3442 = vmax.f32 %v3154, 0.0
      %v3443 = vmax.f32 %v3156, 0.0
      %v3444 = vmax.f32 %v3158, 0.0
      %v3445 = vmax.f32 %v3160, 0.0
      %v3446 = vmax.f32 %v3164, 0.0
      %v3447 = vmax.f32 %v3166, 0.0
      %v3448 = vmax.f32 %v3168, 0.0
      %v3449 = vmax.f32 %v3170, 0.0
      %v3450 = vmax.f32 %v3174, 0.0
      %v3451 = vmax.f32 %v3176, 0.0
      %v3452 = vmax.f32 %v3178, 0.0
      %v3453 = vmax.f32 %v3180, 0.0
      %v3454 = vmax.f32 %v3184, 0.0
      %v3455 = vmax.f32 %v3186, 0.0
      %v3456 = vmax.f32 %v3188, 0.0
      %v3457 = vmax.f32 %v3190, 0.0
      %v3458 = vmax.f32 %v3194, 0.0
      %v3459 = vmax.f32 %v3196, 0.0
      %v3460 = vmax.f32 %v3198, 0.0
      %v3461 = vmax.f32 %v3200, 0.0
      %v3462 = vmax.f32 %v3204, 0.0
      %v3463 = vmax.f32 %v3206, 0.0
      %v3464 = vmax.f32 %v3208, 0.0
      %v3465 = vmax.f32 %v3210, 0.0
      %v3466 = vmax.f32 %v3214, 0.0
      %v3467 = vmax.f32 %v3216, 0.0
      %v3468 = vmax.f32 %v3218, 0.0
      %v3469 = vmax.f32 %v3220, 0.0
      %v3470 = vmax.f32 %v3224, 0.0
      %v3471 = vmax.f32 %v3226, 0.0
      %v3472 = vmax.f32 %v3228, 0.0
      %v3473 = vmax.f32 %v3230, 0.0
      %v3474 = vmax.f32 %v3234, 0.0
      %v3475 = vmax.f32 %v3236, 0.0
      %v3476 = vmax.f32 %v3238, 0.0
      %v3477 = vmax.f32 %v3240, 0.0
      %v3478 = vmax.f32 %v3244, 0.0
      %v3479 = vmax.f32 %v3246, 0.0
      %v3480 = vmax.f32 %v3248, 0.0
      %v3481 = vmax.f32 %v3250, 0.0
      %v3482 = vmax.f32 %v3254, 0.0
      %v3483 = vmax.f32 %v3256, 0.0
      %v3484 = vmax.f32 %v3258, 0.0
      %v3485 = vmax.f32 %v3260, 0.0
      %v3486 = vmax.f32 %v3264, 0.0
      %v3487 = vmax.f32 %v3266, 0.0
      %v3488 = vmax.f32 %v3268, 0.0
      %v3489 = vmax.f32 %v3270, 0.0
      %v3490 = vmax.f32 %v3274, 0.0
      %v3491 = vmax.f32 %v3276, 0.0
      %v3492 = vmax.f32 %v3278, 0.0
      %v3493 = vmax.f32 %v3280, 0.0
      %v3494 = vmax.f32 %v3284, 0.0
      %v3495 = vmax.f32 %v3286, 0.0
      %v3496 = vmax.f32 %v3288, 0.0
      %v3497 = vmax.f32 %v3290, 0.0
      %v3498 = vmax.f32 %v3294, 0.0
      %v3499 = vmax.f32 %v3296, 0.0
      %v3500 = vmax.f32 %v3298, 0.0
      %v3501 = vmax.f32 %v3300, 0.0
      %v3502 = vmax.f32 %v3304, 0.0
      %v3503 = vmax.f32 %v3306, 0.0
      %v3504 = vmax.f32 %v3308, 0.0
      %v3505 = vmax.f32 %v3310, 0.0
      %v3506 = vmax.f32 %v3314, 0.0
      %v3507 = vmax.f32 %v3316, 0.0
      %v3508 = vmax.f32 %v3318, 0.0
      %v3509 = vmax.f32 %v3320, 0.0
      %v3510 = vmax.f32 %v3324, 0.0
      %v3511 = vmax.f32 %v3326, 0.0
      %v3512 = vmax.f32 %v3328, 0.0
      %v3513 = vmax.f32 %v3330, 0.0
      %v3514 = vmax.f32 %v3334, 0.0
      %v3515 = vmax.f32 %v3336, 0.0
      %v3516 = vmax.f32 %v3338, 0.0
      %v3517 = vmax.f32 %v3340, 0.0
      %v3518 = vmax.f32 %v3344, 0.0
      %v3519 = vmax.f32 %v3346, 0.0
      %v3520 = vmax.f32 %v3348, 0.0
      %v3521 = vmax.f32 %v3350, 0.0
      %v3522 = vmax.f32 %v3354, 0.0
      %v3523 = vmax.f32 %v3356, 0.0
      %v3524 = vmax.f32 %v3358, 0.0
      %v3525 = vmax.f32 %v3360, 0.0
      %v3526 = vmax.f32 %v3364, 0.0
      %v3527 = vmax.f32 %v3366, 0.0
      %v3528 = vmax.f32 %v3368, 0.0
      %v3529 = vmax.f32 %v3370, 0.0
      %v3530 = vmax.f32 %v3374, 0.0
      %v3531 = vmax.f32 %v3376, 0.0
      %v3532 = vmax.f32 %v3378, 0.0
      %v3533 = vmax.f32 %v3380, 0.0
      %v3534 = vmax.f32 %v3384, 0.0
      %v3535 = vmax.f32 %v3386, 0.0
      %v3536 = vmax.f32 %v3388, 0.0
      %v3537 = vmax.f32 %v3390, 0.0
      %v3538 = vmax.f32 %v3394, 0.0
      %v3539 = vmax.f32 %v3396, 0.0
      %v3540 = vmax.f32 %v3398, 0.0
      %v3541 = vmax.f32 %v3400, 0.0
      %v3542 = vmax.f32 %v3404, 0.0
      %v3543 = vmax.f32 %v3406, 0.0
      %v3544 = vmax.f32 %v3408, 0.0
      %v3545 = vmax.f32 %v3410, 0.0
      %v3546 = vmax.f32 %v3414, 0.0
      %v3547 = vmax.f32 %v3416, 0.0
      %v3548 = vmax.f32 %v3418, 0.0
      %v3549 = vmax.f32 %v3420, 0.0
      %v3550 = vpack.c.bf16 %v3424, %v3422
      %v3551 = vpack.c.bf16 %v3425, %v3423
      %v3552 = vpack.c.bf16 %v3428, %v3426
      %v3553 = vpack.c.bf16 %v3429, %v3427
      %v3554 = vpack.c.bf16 %v3432, %v3430
      %v3555 = vpack.c.bf16 %v3433, %v3431
      %v3556 = vpack.c.bf16 %v3436, %v3434
      %v3557 = vpack.c.bf16 %v3437, %v3435
      %v3558 = vpack.c.bf16 %v3440, %v3438
      %v3559 = vpack.c.bf16 %v3441, %v3439
      %v3560 = vpack.c.bf16 %v3444, %v3442
      %v3561 = vpack.c.bf16 %v3445, %v3443
      %v3562 = vpack.c.bf16 %v3448, %v3446
      %v3563 = vpack.c.bf16 %v3449, %v3447
      %v3564 = vpack.c.bf16 %v3452, %v3450
      %v3565 = vpack.c.bf16 %v3453, %v3451
      %v3566 = vpack.c.bf16 %v3456, %v3454
      %v3567 = vpack.c.bf16 %v3457, %v3455
      %v3568 = vpack.c.bf16 %v3460, %v3458
      %v3569 = vpack.c.bf16 %v3461, %v3459
      %v3570 = vpack.c.bf16 %v3464, %v3462
      %v3571 = vpack.c.bf16 %v3465, %v3463
      %v3572 = vpack.c.bf16 %v3468, %v3466
      %v3573 = vpack.c.bf16 %v3469, %v3467
      %v3574 = vpack.c.bf16 %v3472, %v3470
      %v3575 = vpack.c.bf16 %v3473, %v3471
      %v3576 = vpack.c.bf16 %v3476, %v3474
      %v3577 = vpack.c.bf16 %v3477, %v3475
      %v3578 = vpack.c.bf16 %v3480, %v3478
      %v3579 = vpack.c.bf16 %v3481, %v3479
      %v3580 = vpack.c.bf16 %v3484, %v3482
      %v3581 = vpack.c.bf16 %v3485, %v3483
      %v3582 = vpack.c.bf16 %v3488, %v3486
      %v3583 = vpack.c.bf16 %v3489, %v3487
      %v3584 = vpack.c.bf16 %v3492, %v3490
      %v3585 = vpack.c.bf16 %v3493, %v3491
      %v3586 = vpack.c.bf16 %v3496, %v3494
      %v3587 = vpack.c.bf16 %v3497, %v3495
      %v3588 = vpack.c.bf16 %v3500, %v3498
      %v3589 = vpack.c.bf16 %v3501, %v3499
      %v3590 = vpack.c.bf16 %v3504, %v3502
      %v3591 = vpack.c.bf16 %v3505, %v3503
      %v3592 = vpack.c.bf16 %v3508, %v3506
      %v3593 = vpack.c.bf16 %v3509, %v3507
      %v3594 = vpack.c.bf16 %v3512, %v3510
      %v3595 = vpack.c.bf16 %v3513, %v3511
      %v3596 = vpack.c.bf16 %v3516, %v3514
      %v3597 = vpack.c.bf16 %v3517, %v3515
      %v3598 = vpack.c.bf16 %v3520, %v3518
      %v3599 = vpack.c.bf16 %v3521, %v3519
      %v3600 = vpack.c.bf16 %v3524, %v3522
      %v3601 = vpack.c.bf16 %v3525, %v3523
      %v3602 = vpack.c.bf16 %v3528, %v3526
      %v3603 = vpack.c.bf16 %v3529, %v3527
      %v3604 = vpack.c.bf16 %v3532, %v3530
      %v3605 = vpack.c.bf16 %v3533, %v3531
      %v3606 = vpack.c.bf16 %v3536, %v3534
      %v3607 = vpack.c.bf16 %v3537, %v3535
      %v3608 = vpack.c.bf16 %v3540, %v3538
      %v3609 = vpack.c.bf16 %v3541, %v3539
      %v3610 = vpack.c.bf16 %v3544, %v3542
      %v3611 = vpack.c.bf16 %v3545, %v3543
      %v3612 = vpack.c.bf16 %v3548, %v3546
      %v3613 = vpack.c.bf16 %v3549, %v3547
      %s3614 = scalar_lea.vmem %s3, 768
      %v3615 = vld [vmem:[%s3614] sm:$0xff]
      %v3616 = vld [vmem:[%s3614 + $0x8] sm:$0xff]
      %v3617 = vld [vmem:[%s3614 + $0x10] sm:$0xff]
      %v3618 = vld [vmem:[%s3614 + $0x18] sm:$0xff]
      %v3619 = vld [vmem:[%s3614 + $0x20] sm:$0xff]
      %v3620 = vld [vmem:[%s3614 + $0x28] sm:$0xff]
      %v3621 = vld [vmem:[%s3614 + $0x30] sm:$0xff]
      %v3622 = vld [vmem:[%s3614 + $0x38] sm:$0xff]
      %v3623 = vld [vmem:[%s3614 + $0x40] sm:$0xff]
      %v3624 = vld [vmem:[%s3614 + $0x48] sm:$0xff]
      %v3625 = vld [vmem:[%s3614 + $0x50] sm:$0xff]
      %v3626 = vld [vmem:[%s3614 + $0x58] sm:$0xff]
      %v3627 = vld [vmem:[%s3614 + $0x60] sm:$0xff]
      %v3628 = vld [vmem:[%s3614 + $0x68] sm:$0xff]
      %v3629 = vld [vmem:[%s3614 + $0x70] sm:$0xff]
      %v3630 = vld [vmem:[%s3614 + $0x78] sm:$0xff]
      %v3631 = vld [vmem:[%s3614 + $0x80] sm:$0xff]
      %v3632 = vld [vmem:[%s3614 + $0x88] sm:$0xff]
      %v3633 = vld [vmem:[%s3614 + $0x90] sm:$0xff]
      %v3634 = vld [vmem:[%s3614 + $0x98] sm:$0xff]
      %v3635 = vld [vmem:[%s3614 + $0xa0] sm:$0xff]
      %v3636 = vld [vmem:[%s3614 + $0xa8] sm:$0xff]
      %v3637 = vld [vmem:[%s3614 + $0xb0] sm:$0xff]
      %v3638 = vld [vmem:[%s3614 + $0xb8] sm:$0xff]
      %v3639 = vld [vmem:[%s3614 + $0xc0] sm:$0xff]
      %v3640 = vld [vmem:[%s3614 + $0xc8] sm:$0xff]
      %v3641 = vld [vmem:[%s3614 + $0xd0] sm:$0xff]
      %v3642 = vld [vmem:[%s3614 + $0xd8] sm:$0xff]
      %v3643 = vld [vmem:[%s3614 + $0xe0] sm:$0xff]
      %v3644 = vld [vmem:[%s3614 + $0xe8] sm:$0xff]
      %v3645 = vld [vmem:[%s3614 + $0xf0] sm:$0xff]
      %v3646 = vld [vmem:[%s3614 + $0xf8] sm:$0xff]
      %s3647 = scalar_lea.vmem %s4, 6
      %v3648 = vld [vmem:[%s3647] sm:$0x3]
      %v3650 = vlaneseq
      %v3651 = vshrl.u32 %v3650, 7
      %v3652 = vsub.s32 0, %v3651
      %v3653 = vrot.slane %v3648, %v3652
      %v3654 = vlaneseq
      %v3655 = vshrl.u32 %v3654, 7
      %v3656 = vsub.s32 1, %v3655
      %v3657 = vrot.slane %v3648, %v3656
      %v3692 = vunpack.c.l.b16 %v3615
      %v3693 = vunpack.c.h.b16 %v3615
      %v3694 = vunpack.c.l.b16 %v3616
      %v3695 = vunpack.c.h.b16 %v3616
      %v3696 = vunpack.c.l.b16 %v3617
      %v3697 = vunpack.c.h.b16 %v3617
      %v3698 = vunpack.c.l.b16 %v3618
      %v3699 = vunpack.c.h.b16 %v3618
      %v3700 = vunpack.c.l.b16 %v3619
      %v3701 = vunpack.c.h.b16 %v3619
      %v3702 = vunpack.c.l.b16 %v3620
      %v3703 = vunpack.c.h.b16 %v3620
      %v3704 = vunpack.c.l.b16 %v3621
      %v3705 = vunpack.c.h.b16 %v3621
      %v3706 = vunpack.c.l.b16 %v3622
      %v3707 = vunpack.c.h.b16 %v3622
      %v3708 = vunpack.c.l.b16 %v3623
      %v3709 = vunpack.c.h.b16 %v3623
      %v3710 = vunpack.c.l.b16 %v3624
      %v3711 = vunpack.c.h.b16 %v3624
      %v3712 = vunpack.c.l.b16 %v3625
      %v3713 = vunpack.c.h.b16 %v3625
      %v3714 = vunpack.c.l.b16 %v3626
      %v3715 = vunpack.c.h.b16 %v3626
      %v3716 = vunpack.c.l.b16 %v3627
      %v3717 = vunpack.c.h.b16 %v3627
      %v3718 = vunpack.c.l.b16 %v3628
      %v3719 = vunpack.c.h.b16 %v3628
      %v3720 = vunpack.c.l.b16 %v3629
      %v3721 = vunpack.c.h.b16 %v3629
      %v3722 = vunpack.c.l.b16 %v3630
      %v3723 = vunpack.c.h.b16 %v3630
      %v3724 = vunpack.c.l.b16 %v3631
      %v3725 = vunpack.c.h.b16 %v3631
      %v3726 = vunpack.c.l.b16 %v3632
      %v3727 = vunpack.c.h.b16 %v3632
      %v3728 = vunpack.c.l.b16 %v3633
      %v3729 = vunpack.c.h.b16 %v3633
      %v3730 = vunpack.c.l.b16 %v3634
      %v3731 = vunpack.c.h.b16 %v3634
      %v3732 = vunpack.c.l.b16 %v3635
      %v3733 = vunpack.c.h.b16 %v3635
      %v3734 = vunpack.c.l.b16 %v3636
      %v3735 = vunpack.c.h.b16 %v3636
      %v3736 = vunpack.c.l.b16 %v3637
      %v3737 = vunpack.c.h.b16 %v3637
      %v3738 = vunpack.c.l.b16 %v3638
      %v3739 = vunpack.c.h.b16 %v3638
      %v3740 = vunpack.c.l.b16 %v3639
      %v3741 = vunpack.c.h.b16 %v3639
      %v3742 = vunpack.c.l.b16 %v3640
      %v3743 = vunpack.c.h.b16 %v3640
      %v3744 = vunpack.c.l.b16 %v3641
      %v3745 = vunpack.c.h.b16 %v3641
      %v3746 = vunpack.c.l.b16 %v3642
      %v3747 = vunpack.c.h.b16 %v3642
      %v3748 = vunpack.c.l.b16 %v3643
      %v3749 = vunpack.c.h.b16 %v3643
      %v3750 = vunpack.c.l.b16 %v3644
      %v3751 = vunpack.c.h.b16 %v3644
      %v3752 = vunpack.c.l.b16 %v3645
      %v3753 = vunpack.c.h.b16 %v3645
      %v3754 = vunpack.c.l.b16 %v3646
      %v3755 = vunpack.c.h.b16 %v3646
      %v3756 = vpack.c.b16 %v3694, %v3692
      %v3757 = vpack.c.b16 %v3695, %v3693
      %v3758 = vpack.c.b16 %v3698, %v3696
      %v3759 = vpack.c.b16 %v3699, %v3697
      %v3760 = vpack.c.b16 %v3702, %v3700
      %v3761 = vpack.c.b16 %v3703, %v3701
      %v3762 = vpack.c.b16 %v3706, %v3704
      %v3763 = vpack.c.b16 %v3707, %v3705
      %v3764 = vpack.c.b16 %v3710, %v3708
      %v3765 = vpack.c.b16 %v3711, %v3709
      %v3766 = vpack.c.b16 %v3714, %v3712
      %v3767 = vpack.c.b16 %v3715, %v3713
      %v3768 = vpack.c.b16 %v3718, %v3716
      %v3769 = vpack.c.b16 %v3719, %v3717
      %v3770 = vpack.c.b16 %v3722, %v3720
      %v3771 = vpack.c.b16 %v3723, %v3721
      %v3772 = vpack.c.b16 %v3726, %v3724
      %v3773 = vpack.c.b16 %v3727, %v3725
      %v3774 = vpack.c.b16 %v3730, %v3728
      %v3775 = vpack.c.b16 %v3731, %v3729
      %v3776 = vpack.c.b16 %v3734, %v3732
      %v3777 = vpack.c.b16 %v3735, %v3733
      %v3778 = vpack.c.b16 %v3738, %v3736
      %v3779 = vpack.c.b16 %v3739, %v3737
      %v3780 = vpack.c.b16 %v3742, %v3740
      %v3781 = vpack.c.b16 %v3743, %v3741
      %v3782 = vpack.c.b16 %v3746, %v3744
      %v3783 = vpack.c.b16 %v3747, %v3745
      %v3784 = vpack.c.b16 %v3750, %v3748
      %v3785 = vpack.c.b16 %v3751, %v3749
      %v3786 = vpack.c.b16 %v3754, %v3752
      %v3787 = vpack.c.b16 %v3755, %v3753
      %3820 = vmatprep.subr.bf16.mxu0 %v3757
      %3821 = vmatpush1.bf16.msra.mxu0 %v3756
      %3822 = vmatprep.subr.bf16.mxu0 %v3759
      %3823 = vmatpush1.bf16.msra.mxu0 %v3758
      %3824 = vmatprep.subr.bf16.mxu0 %v3761
      %3825 = vmatpush1.bf16.msra.mxu0 %v3760
      %3826 = vmatprep.subr.bf16.mxu0 %v3763
      %3827 = vmatpush1.bf16.msra.mxu0 %v3762
      %3828 = vmatprep.subr.bf16.mxu0 %v3765
      %3829 = vmatpush1.bf16.msra.mxu0 %v3764
      %3830 = vmatprep.subr.bf16.mxu0 %v3767
      %3831 = vmatpush1.bf16.msra.mxu0 %v3766
      %3832 = vmatprep.subr.bf16.mxu0 %v3769
      %3833 = vmatpush1.bf16.msra.mxu0 %v3768
      %3834 = vmatprep.subr.bf16.mxu0 %v3771
      %3835 = vmatpush1.bf16.msra.mxu0 %v3770
      %3836 = vmatprep.subr.bf16.mxu0 %v3773
      %3837 = vmatpush1.bf16.msra.mxu0 %v3772
      %3838 = vmatprep.subr.bf16.mxu0 %v3775
      %3839 = vmatpush1.bf16.msra.mxu0 %v3774
      %3840 = vmatprep.subr.bf16.mxu0 %v3777
      %3841 = vmatpush1.bf16.msra.mxu0 %v3776
      %3842 = vmatprep.subr.bf16.mxu0 %v3779
      %3843 = vmatpush1.bf16.msra.mxu0 %v3778
      %3844 = vmatprep.subr.bf16.mxu0 %v3781
      %3845 = vmatpush1.bf16.msra.mxu0 %v3780
      %3846 = vmatprep.subr.bf16.mxu0 %v3783
      %3847 = vmatpush1.bf16.msra.mxu0 %v3782
      %3848 = vmatprep.subr.bf16.mxu0 %v3785
      %3849 = vmatpush1.bf16.msra.mxu0 %v3784
      %3850 = vmatprep.subr.bf16.mxu0 %v3787
      %3851 = vmatpush1.bf16.msra.mxu0 %v3786
      %3852 = vmatprep.mubr.bf16.mxu0 %v3551
      %3853 = vmatmul.mubr.bf16.gmra.mrb[0].mxu0 %v3550
      %v3854 = vpop.f32.mrb[0].mxu0
      %v3855 = vadd.f32 %v3653, %v3854
      %v3856 = vpop.f32.mrb[0].mxu0
      %v3857 = vadd.f32 %v3657, %v3856
      %v3858 = vpop.f32.mrb[0].mxu0
      %v3859 = vadd.f32 %v3653, %v3858
      %v3860 = vpop.f32.mrb[0].mxu0
      %v3861 = vadd.f32 %v3657, %v3860
      %3862 = vmatprep.mubr.bf16.mxu0 %v3553
      %3863 = vmatmul.mubr.bf16.gmra.mrb[0].mxu0 %v3552
      %v3864 = vpop.f32.mrb[0].mxu0
      %v3865 = vadd.f32 %v3653, %v3864
      %v3866 = vpop.f32.mrb[0].mxu0
      %v3867 = vadd.f32 %v3657, %v3866
      %v3868 = vpop.f32.mrb[0].mxu0
      %v3869 = vadd.f32 %v3653, %v3868
      %v3870 = vpop.f32.mrb[0].mxu0
      %v3871 = vadd.f32 %v3657, %v3870
      %3872 = vmatprep.mubr.bf16.mxu0 %v3555
      %3873 = vmatmul.mubr.bf16.gmra.mrb[0].mxu0 %v3554
      %v3874 = vpop.f32.mrb[0].mxu0
      %v3875 = vadd.f32 %v3653, %v3874
      %v3876 = vpop.f32.mrb[0].mxu0
      %v3877 = vadd.f32 %v3657, %v3876
      %v3878 = vpop.f32.mrb[0].mxu0
      %v3879 = vadd.f32 %v3653, %v3878
      %v3880 = vpop.f32.mrb[0].mxu0
      %v3881 = vadd.f32 %v3657, %v3880
      %3882 = vmatprep.mubr.bf16.mxu0 %v3557
      %3883 = vmatmul.mubr.bf16.gmra.mrb[0].mxu0 %v3556
      %v3884 = vpop.f32.mrb[0].mxu0
      %v3885 = vadd.f32 %v3653, %v3884
      %v3886 = vpop.f32.mrb[0].mxu0
      %v3887 = vadd.f32 %v3657, %v3886
      %v3888 = vpop.f32.mrb[0].mxu0
      %v3889 = vadd.f32 %v3653, %v3888
      %v3890 = vpop.f32.mrb[0].mxu0
      %v3891 = vadd.f32 %v3657, %v3890
      %3892 = vmatprep.mubr.bf16.mxu0 %v3559
      %3893 = vmatmul.mubr.bf16.gmra.mrb[0].mxu0 %v3558
      %v3894 = vpop.f32.mrb[0].mxu0
      %v3895 = vadd.f32 %v3653, %v3894
      %v3896 = vpop.f32.mrb[0].mxu0
      %v3897 = vadd.f32 %v3657, %v3896
      %v3898 = vpop.f32.mrb[0].mxu0
      %v3899 = vadd.f32 %v3653, %v3898
      %v3900 = vpop.f32.mrb[0].mxu0
      %v3901 = vadd.f32 %v3657, %v3900
      %3902 = vmatprep.mubr.bf16.mxu0 %v3561
      %3903 = vmatmul.mubr.bf16.gmra.mrb[0].mxu0 %v3560
      %v3904 = vpop.f32.mrb[0].mxu0
      %v3905 = vadd.f32 %v3653, %v3904
      %v3906 = vpop.f32.mrb[0].mxu0
      %v3907 = vadd.f32 %v3657, %v3906
      %v3908 = vpop.f32.mrb[0].mxu0
      %v3909 = vadd.f32 %v3653, %v3908
      %v3910 = vpop.f32.mrb[0].mxu0
      %v3911 = vadd.f32 %v3657, %v3910
      %3912 = vmatprep.mubr.bf16.mxu0 %v3563
      %3913 = vmatmul.mubr.bf16.gmra.mrb[0].mxu0 %v3562
      %v3914 = vpop.f32.mrb[0].mxu0
      %v3915 = vadd.f32 %v3653, %v3914
      %v3916 = vpop.f32.mrb[0].mxu0
      %v3917 = vadd.f32 %v3657, %v3916
      %v3918 = vpop.f32.mrb[0].mxu0
      %v3919 = vadd.f32 %v3653, %v3918
      %v3920 = vpop.f32.mrb[0].mxu0
      %v3921 = vadd.f32 %v3657, %v3920
      %3922 = vmatprep.mubr.bf16.mxu0 %v3565
      %3923 = vmatmul.mubr.bf16.gmra.mrb[0].mxu0 %v3564
      %v3924 = vpop.f32.mrb[0].mxu0
      %v3925 = vadd.f32 %v3653, %v3924
      %v3926 = vpop.f32.mrb[0].mxu0
      %v3927 = vadd.f32 %v3657, %v3926
      %v3928 = vpop.f32.mrb[0].mxu0
      %v3929 = vadd.f32 %v3653, %v3928
      %v3930 = vpop.f32.mrb[0].mxu0
      %v3931 = vadd.f32 %v3657, %v3930
      %3932 = vmatprep.mubr.bf16.mxu0 %v3567
      %3933 = vmatmul.mubr.bf16.gmra.mrb[0].mxu0 %v3566
      %v3934 = vpop.f32.mrb[0].mxu0
      %v3935 = vadd.f32 %v3653, %v3934
      %v3936 = vpop.f32.mrb[0].mxu0
      %v3937 = vadd.f32 %v3657, %v3936
      %v3938 = vpop.f32.mrb[0].mxu0
      %v3939 = vadd.f32 %v3653, %v3938
      %v3940 = vpop.f32.mrb[0].mxu0
      %v3941 = vadd.f32 %v3657, %v3940
      %3942 = vmatprep.mubr.bf16.mxu0 %v3569
      %3943 = vmatmul.mubr.bf16.gmra.mrb[0].mxu0 %v3568
      %v3944 = vpop.f32.mrb[0].mxu0
      %v3945 = vadd.f32 %v3653, %v3944
      %v3946 = vpop.f32.mrb[0].mxu0
      %v3947 = vadd.f32 %v3657, %v3946
      %v3948 = vpop.f32.mrb[0].mxu0
      %v3949 = vadd.f32 %v3653, %v3948
      %v3950 = vpop.f32.mrb[0].mxu0
      %v3951 = vadd.f32 %v3657, %v3950
      %3952 = vmatprep.mubr.bf16.mxu0 %v3571
      %3953 = vmatmul.mubr.bf16.gmra.mrb[0].mxu0 %v3570
      %v3954 = vpop.f32.mrb[0].mxu0
      %v3955 = vadd.f32 %v3653, %v3954
      %v3956 = vpop.f32.mrb[0].mxu0
      %v3957 = vadd.f32 %v3657, %v3956
      %v3958 = vpop.f32.mrb[0].mxu0
      %v3959 = vadd.f32 %v3653, %v3958
      %v3960 = vpop.f32.mrb[0].mxu0
      %v3961 = vadd.f32 %v3657, %v3960
      %3962 = vmatprep.mubr.bf16.mxu0 %v3573
      %3963 = vmatmul.mubr.bf16.gmra.mrb[0].mxu0 %v3572
      %v3964 = vpop.f32.mrb[0].mxu0
      %v3965 = vadd.f32 %v3653, %v3964
      %v3966 = vpop.f32.mrb[0].mxu0
      %v3967 = vadd.f32 %v3657, %v3966
      %v3968 = vpop.f32.mrb[0].mxu0
      %v3969 = vadd.f32 %v3653, %v3968
      %v3970 = vpop.f32.mrb[0].mxu0
      %v3971 = vadd.f32 %v3657, %v3970
      %3972 = vmatprep.mubr.bf16.mxu0 %v3575
      %3973 = vmatmul.mubr.bf16.gmra.mrb[0].mxu0 %v3574
      %v3974 = vpop.f32.mrb[0].mxu0
      %v3975 = vadd.f32 %v3653, %v3974
      %v3976 = vpop.f32.mrb[0].mxu0
      %v3977 = vadd.f32 %v3657, %v3976
      %v3978 = vpop.f32.mrb[0].mxu0
      %v3979 = vadd.f32 %v3653, %v3978
      %v3980 = vpop.f32.mrb[0].mxu0
      %v3981 = vadd.f32 %v3657, %v3980
      %3982 = vmatprep.mubr.bf16.mxu0 %v3577
      %3983 = vmatmul.mubr.bf16.gmra.mrb[0].mxu0 %v3576
      %v3984 = vpop.f32.mrb[0].mxu0
      %v3985 = vadd.f32 %v3653, %v3984
      %v3986 = vpop.f32.mrb[0].mxu0
      %v3987 = vadd.f32 %v3657, %v3986
      %v3988 = vpop.f32.mrb[0].mxu0
      %v3989 = vadd.f32 %v3653, %v3988
      %v3990 = vpop.f32.mrb[0].mxu0
      %v3991 = vadd.f32 %v3657, %v3990
      %3992 = vmatprep.mubr.bf16.mxu0 %v3579
      %3993 = vmatmul.mubr.bf16.gmra.mrb[0].mxu0 %v3578
      %v3994 = vpop.f32.mrb[0].mxu0
      %v3995 = vadd.f32 %v3653, %v3994
      %v3996 = vpop.f32.mrb[0].mxu0
      %v3997 = vadd.f32 %v3657, %v3996
      %v3998 = vpop.f32.mrb[0].mxu0
      %v3999 = vadd.f32 %v3653, %v3998
      %v4000 = vpop.f32.mrb[0].mxu0
      %v4001 = vadd.f32 %v3657, %v4000
      %4002 = vmatprep.mubr.bf16.mxu0 %v3581
      %4003 = vmatmul.mubr.bf16.gmra.mrb[0].mxu0 %v3580
      %v4004 = vpop.f32.mrb[0].mxu0
      %v4005 = vadd.f32 %v3653, %v4004
      %v4006 = vpop.f32.mrb[0].mxu0
      %v4007 = vadd.f32 %v3657, %v4006
      %v4008 = vpop.f32.mrb[0].mxu0
      %v4009 = vadd.f32 %v3653, %v4008
      %v4010 = vpop.f32.mrb[0].mxu0
      %v4011 = vadd.f32 %v3657, %v4010
      %4012 = vmatprep.mubr.bf16.mxu0 %v3583
      %4013 = vmatmul.mubr.bf16.gmra.mrb[0].mxu0 %v3582
      %v4014 = vpop.f32.mrb[0].mxu0
      %v4015 = vadd.f32 %v3653, %v4014
      %v4016 = vpop.f32.mrb[0].mxu0
      %v4017 = vadd.f32 %v3657, %v4016
      %v4018 = vpop.f32.mrb[0].mxu0
      %v4019 = vadd.f32 %v3653, %v4018
      %v4020 = vpop.f32.mrb[0].mxu0
      %v4021 = vadd.f32 %v3657, %v4020
      %4022 = vmatprep.mubr.bf16.mxu0 %v3585
      %4023 = vmatmul.mubr.bf16.gmra.mrb[0].mxu0 %v3584
      %v4024 = vpop.f32.mrb[0].mxu0
      %v4025 = vadd.f32 %v3653, %v4024
      %v4026 = vpop.f32.mrb[0].mxu0
      %v4027 = vadd.f32 %v3657, %v4026
      %v4028 = vpop.f32.mrb[0].mxu0
      %v4029 = vadd.f32 %v3653, %v4028
      %v4030 = vpop.f32.mrb[0].mxu0
      %v4031 = vadd.f32 %v3657, %v4030
      %4032 = vmatprep.mubr.bf16.mxu0 %v3587
      %4033 = vmatmul.mubr.bf16.gmra.mrb[0].mxu0 %v3586
      %v4034 = vpop.f32.mrb[0].mxu0
      %v4035 = vadd.f32 %v3653, %v4034
      %v4036 = vpop.f32.mrb[0].mxu0
      %v4037 = vadd.f32 %v3657, %v4036
      %v4038 = vpop.f32.mrb[0].mxu0
      %v4039 = vadd.f32 %v3653, %v4038
      %v4040 = vpop.f32.mrb[0].mxu0
      %v4041 = vadd.f32 %v3657, %v4040
      %4042 = vmatprep.mubr.bf16.mxu0 %v3589
      %4043 = vmatmul.mubr.bf16.gmra.mrb[0].mxu0 %v3588
      %v4044 = vpop.f32.mrb[0].mxu0
      %v4045 = vadd.f32 %v3653, %v4044
      %v4046 = vpop.f32.mrb[0].mxu0
      %v4047 = vadd.f32 %v3657, %v4046
      %v4048 = vpop.f32.mrb[0].mxu0
      %v4049 = vadd.f32 %v3653, %v4048
      %v4050 = vpop.f32.mrb[0].mxu0
      %v4051 = vadd.f32 %v3657, %v4050
      %4052 = vmatprep.mubr.bf16.mxu0 %v3591
      %4053 = vmatmul.mubr.bf16.gmra.mrb[0].mxu0 %v3590
      %v4054 = vpop.f32.mrb[0].mxu0
      %v4055 = vadd.f32 %v3653, %v4054
      %v4056 = vpop.f32.mrb[0].mxu0
      %v4057 = vadd.f32 %v3657, %v4056
      %v4058 = vpop.f32.mrb[0].mxu0
      %v4059 = vadd.f32 %v3653, %v4058
      %v4060 = vpop.f32.mrb[0].mxu0
      %v4061 = vadd.f32 %v3657, %v4060
      %4062 = vmatprep.mubr.bf16.mxu0 %v3593
      %4063 = vmatmul.mubr.bf16.gmra.mrb[0].mxu0 %v3592
      %v4064 = vpop.f32.mrb[0].mxu0
      %v4065 = vadd.f32 %v3653, %v4064
      %v4066 = vpop.f32.mrb[0].mxu0
      %v4067 = vadd.f32 %v3657, %v4066
      %v4068 = vpop.f32.mrb[0].mxu0
      %v4069 = vadd.f32 %v3653, %v4068
      %v4070 = vpop.f32.mrb[0].mxu0
      %v4071 = vadd.f32 %v3657, %v4070
      %4072 = vmatprep.mubr.bf16.mxu0 %v3595
      %4073 = vmatmul.mubr.bf16.gmra.mrb[0].mxu0 %v3594
      %v4074 = vpop.f32.mrb[0].mxu0
      %v4075 = vadd.f32 %v3653, %v4074
      %v4076 = vpop.f32.mrb[0].mxu0
      %v4077 = vadd.f32 %v3657, %v4076
      %v4078 = vpop.f32.mrb[0].mxu0
      %v4079 = vadd.f32 %v3653, %v4078
      %v4080 = vpop.f32.mrb[0].mxu0
      %v4081 = vadd.f32 %v3657, %v4080
      %4082 = vmatprep.mubr.bf16.mxu0 %v3597
      %4083 = vmatmul.mubr.bf16.gmra.mrb[0].mxu0 %v3596
      %v4084 = vpop.f32.mrb[0].mxu0
      %v4085 = vadd.f32 %v3653, %v4084
      %v4086 = vpop.f32.mrb[0].mxu0
      %v4087 = vadd.f32 %v3657, %v4086
      %v4088 = vpop.f32.mrb[0].mxu0
      %v4089 = vadd.f32 %v3653, %v4088
      %v4090 = vpop.f32.mrb[0].mxu0
      %v4091 = vadd.f32 %v3657, %v4090
      %4092 = vmatprep.mubr.bf16.mxu0 %v3599
      %4093 = vmatmul.mubr.bf16.gmra.mrb[0].mxu0 %v3598
      %v4094 = vpop.f32.mrb[0].mxu0
      %v4095 = vadd.f32 %v3653, %v4094
      %v4096 = vpop.f32.mrb[0].mxu0
      %v4097 = vadd.f32 %v3657, %v4096
      %v4098 = vpop.f32.mrb[0].mxu0
      %v4099 = vadd.f32 %v3653, %v4098
      %v4100 = vpop.f32.mrb[0].mxu0
      %v4101 = vadd.f32 %v3657, %v4100
      %4102 = vmatprep.mubr.bf16.mxu0 %v3601
      %4103 = vmatmul.mubr.bf16.gmra.mrb[0].mxu0 %v3600
      %v4104 = vpop.f32.mrb[0].mxu0
      %v4105 = vadd.f32 %v3653, %v4104
      %v4106 = vpop.f32.mrb[0].mxu0
      %v4107 = vadd.f32 %v3657, %v4106
      %v4108 = vpop.f32.mrb[0].mxu0
      %v4109 = vadd.f32 %v3653, %v4108
      %v4110 = vpop.f32.mrb[0].mxu0
      %v4111 = vadd.f32 %v3657, %v4110
      %4112 = vmatprep.mubr.bf16.mxu0 %v3603
      %4113 = vmatmul.mubr.bf16.gmra.mrb[0].mxu0 %v3602
      %v4114 = vpop.f32.mrb[0].mxu0
      %v4115 = vadd.f32 %v3653, %v4114
      %v4116 = vpop.f32.mrb[0].mxu0
      %v4117 = vadd.f32 %v3657, %v4116
      %v4118 = vpop.f32.mrb[0].mxu0
      %v4119 = vadd.f32 %v3653, %v4118
      %v4120 = vpop.f32.mrb[0].mxu0
      %v4121 = vadd.f32 %v3657, %v4120
      %4122 = vmatprep.mubr.bf16.mxu0 %v3605
      %4123 = vmatmul.mubr.bf16.gmra.mrb[0].mxu0 %v3604
      %v4124 = vpop.f32.mrb[0].mxu0
      %v4125 = vadd.f32 %v3653, %v4124
      %v4126 = vpop.f32.mrb[0].mxu0
      %v4127 = vadd.f32 %v3657, %v4126
      %v4128 = vpop.f32.mrb[0].mxu0
      %v4129 = vadd.f32 %v3653, %v4128
      %v4130 = vpop.f32.mrb[0].mxu0
      %v4131 = vadd.f32 %v3657, %v4130
      %4132 = vmatprep.mubr.bf16.mxu0 %v3607
      %4133 = vmatmul.mubr.bf16.gmra.mrb[0].mxu0 %v3606
      %v4134 = vpop.f32.mrb[0].mxu0
      %v4135 = vadd.f32 %v3653, %v4134
      %v4136 = vpop.f32.mrb[0].mxu0
      %v4137 = vadd.f32 %v3657, %v4136
      %v4138 = vpop.f32.mrb[0].mxu0
      %v4139 = vadd.f32 %v3653, %v4138
      %v4140 = vpop.f32.mrb[0].mxu0
      %v4141 = vadd.f32 %v3657, %v4140
      %4142 = vmatprep.mubr.bf16.mxu0 %v3609
      %4143 = vmatmul.mubr.bf16.gmra.mrb[0].mxu0 %v3608
      %v4144 = vpop.f32.mrb[0].mxu0
      %v4145 = vadd.f32 %v3653, %v4144
      %v4146 = vpop.f32.mrb[0].mxu0
      %v4147 = vadd.f32 %v3657, %v4146
      %v4148 = vpop.f32.mrb[0].mxu0
      %v4149 = vadd.f32 %v3653, %v4148
      %v4150 = vpop.f32.mrb[0].mxu0
      %v4151 = vadd.f32 %v3657, %v4150
      %4152 = vmatprep.mubr.bf16.mxu0 %v3611
      %4153 = vmatmul.mubr.bf16.gmra.mrb[0].mxu0 %v3610
      %v4154 = vpop.f32.mrb[0].mxu0
      %v4155 = vadd.f32 %v3653, %v4154
      %v4156 = vpop.f32.mrb[0].mxu0
      %v4157 = vadd.f32 %v3657, %v4156
      %v4158 = vpop.f32.mrb[0].mxu0
      %v4159 = vadd.f32 %v3653, %v4158
      %v4160 = vpop.f32.mrb[0].mxu0
      %v4161 = vadd.f32 %v3657, %v4160
      %4162 = vmatprep.mubr.bf16.mxu0 %v3613
      %4163 = vmatmul.mubr.bf16.gmra.mrb[0].mxu0 %v3612
      %v4164 = vpop.f32.mrb[0].mxu0
      %v4165 = vadd.f32 %v3653, %v4164
      %v4166 = vpop.f32.mrb[0].mxu0
      %v4167 = vadd.f32 %v3657, %v4166
      %v4168 = vpop.f32.mrb[0].mxu0
      %v4169 = vadd.f32 %v3653, %v4168
      %v4170 = vpop.f32.mrb[0].mxu0
      %v4171 = vadd.f32 %v3657, %v4170
      %4172 = vdwg.mxu0
      %v4173 = vmax.f32 %v3855, 0.0
      %v4174 = vmax.f32 %v3857, 0.0
      %v4175 = vmax.f32 %v3859, 0.0
      %v4176 = vmax.f32 %v3861, 0.0
      %v4177 = vmax.f32 %v3865, 0.0
      %v4178 = vmax.f32 %v3867, 0.0
      %v4179 = vmax.f32 %v3869, 0.0
      %v4180 = vmax.f32 %v3871, 0.0
      %v4181 = vmax.f32 %v3875, 0.0
      %v4182 = vmax.f32 %v3877, 0.0
      %v4183 = vmax.f32 %v3879, 0.0
      %v4184 = vmax.f32 %v3881, 0.0
      %v4185 = vmax.f32 %v3885, 0.0
      %v4186 = vmax.f32 %v3887, 0.0
      %v4187 = vmax.f32 %v3889, 0.0
      %v4188 = vmax.f32 %v3891, 0.0
      %v4189 = vmax.f32 %v3895, 0.0
      %v4190 = vmax.f32 %v3897, 0.0
      %v4191 = vmax.f32 %v3899, 0.0
      %v4192 = vmax.f32 %v3901, 0.0
      %v4193 = vmax.f32 %v3905, 0.0
      %v4194 = vmax.f32 %v3907, 0.0
      %v4195 = vmax.f32 %v3909, 0.0
      %v4196 = vmax.f32 %v3911, 0.0
      %v4197 = vmax.f32 %v3915, 0.0
      %v4198 = vmax.f32 %v3917, 0.0
      %v4199 = vmax.f32 %v3919, 0.0
      %v4200 = vmax.f32 %v3921, 0.0
      %v4201 = vmax.f32 %v3925, 0.0
      %v4202 = vmax.f32 %v3927, 0.0
      %v4203 = vmax.f32 %v3929, 0.0
      %v4204 = vmax.f32 %v3931, 0.0
      %v4205 = vmax.f32 %v3935, 0.0
      %v4206 = vmax.f32 %v3937, 0.0
      %v4207 = vmax.f32 %v3939, 0.0
      %v4208 = vmax.f32 %v3941, 0.0
      %v4209 = vmax.f32 %v3945, 0.0
      %v4210 = vmax.f32 %v3947, 0.0
      %v4211 = vmax.f32 %v3949, 0.0
      %v4212 = vmax.f32 %v3951, 0.0
      %v4213 = vmax.f32 %v3955, 0.0
      %v4214 = vmax.f32 %v3957, 0.0
      %v4215 = vmax.f32 %v3959, 0.0
      %v4216 = vmax.f32 %v3961, 0.0
      %v4217 = vmax.f32 %v3965, 0.0
      %v4218 = vmax.f32 %v3967, 0.0
      %v4219 = vmax.f32 %v3969, 0.0
      %v4220 = vmax.f32 %v3971, 0.0
      %v4221 = vmax.f32 %v3975, 0.0
      %v4222 = vmax.f32 %v3977, 0.0
      %v4223 = vmax.f32 %v3979, 0.0
      %v4224 = vmax.f32 %v3981, 0.0
      %v4225 = vmax.f32 %v3985, 0.0
      %v4226 = vmax.f32 %v3987, 0.0
      %v4227 = vmax.f32 %v3989, 0.0
      %v4228 = vmax.f32 %v3991, 0.0
      %v4229 = vmax.f32 %v3995, 0.0
      %v4230 = vmax.f32 %v3997, 0.0
      %v4231 = vmax.f32 %v3999, 0.0
      %v4232 = vmax.f32 %v4001, 0.0
      %v4233 = vmax.f32 %v4005, 0.0
      %v4234 = vmax.f32 %v4007, 0.0
      %v4235 = vmax.f32 %v4009, 0.0
      %v4236 = vmax.f32 %v4011, 0.0
      %v4237 = vmax.f32 %v4015, 0.0
      %v4238 = vmax.f32 %v4017, 0.0
      %v4239 = vmax.f32 %v4019, 0.0
      %v4240 = vmax.f32 %v4021, 0.0
      %v4241 = vmax.f32 %v4025, 0.0
      %v4242 = vmax.f32 %v4027, 0.0
      %v4243 = vmax.f32 %v4029, 0.0
      %v4244 = vmax.f32 %v4031, 0.0
      %v4245 = vmax.f32 %v4035, 0.0
      %v4246 = vmax.f32 %v4037, 0.0
      %v4247 = vmax.f32 %v4039, 0.0
      %v4248 = vmax.f32 %v4041, 0.0
      %v4249 = vmax.f32 %v4045, 0.0
      %v4250 = vmax.f32 %v4047, 0.0
      %v4251 = vmax.f32 %v4049, 0.0
      %v4252 = vmax.f32 %v4051, 0.0
      %v4253 = vmax.f32 %v4055, 0.0
      %v4254 = vmax.f32 %v4057, 0.0
      %v4255 = vmax.f32 %v4059, 0.0
      %v4256 = vmax.f32 %v4061, 0.0
      %v4257 = vmax.f32 %v4065, 0.0
      %v4258 = vmax.f32 %v4067, 0.0
      %v4259 = vmax.f32 %v4069, 0.0
      %v4260 = vmax.f32 %v4071, 0.0
      %v4261 = vmax.f32 %v4075, 0.0
      %v4262 = vmax.f32 %v4077, 0.0
      %v4263 = vmax.f32 %v4079, 0.0
      %v4264 = vmax.f32 %v4081, 0.0
      %v4265 = vmax.f32 %v4085, 0.0
      %v4266 = vmax.f32 %v4087, 0.0
      %v4267 = vmax.f32 %v4089, 0.0
      %v4268 = vmax.f32 %v4091, 0.0
      %v4269 = vmax.f32 %v4095, 0.0
      %v4270 = vmax.f32 %v4097, 0.0
      %v4271 = vmax.f32 %v4099, 0.0
      %v4272 = vmax.f32 %v4101, 0.0
      %v4273 = vmax.f32 %v4105, 0.0
      %v4274 = vmax.f32 %v4107, 0.0
      %v4275 = vmax.f32 %v4109, 0.0
      %v4276 = vmax.f32 %v4111, 0.0
      %v4277 = vmax.f32 %v4115, 0.0
      %v4278 = vmax.f32 %v4117, 0.0
      %v4279 = vmax.f32 %v4119, 0.0
      %v4280 = vmax.f32 %v4121, 0.0
      %v4281 = vmax.f32 %v4125, 0.0
      %v4282 = vmax.f32 %v4127, 0.0
      %v4283 = vmax.f32 %v4129, 0.0
      %v4284 = vmax.f32 %v4131, 0.0
      %v4285 = vmax.f32 %v4135, 0.0
      %v4286 = vmax.f32 %v4137, 0.0
      %v4287 = vmax.f32 %v4139, 0.0
      %v4288 = vmax.f32 %v4141, 0.0
      %v4289 = vmax.f32 %v4145, 0.0
      %v4290 = vmax.f32 %v4147, 0.0
      %v4291 = vmax.f32 %v4149, 0.0
      %v4292 = vmax.f32 %v4151, 0.0
      %v4293 = vmax.f32 %v4155, 0.0
      %v4294 = vmax.f32 %v4157, 0.0
      %v4295 = vmax.f32 %v4159, 0.0
      %v4296 = vmax.f32 %v4161, 0.0
      %v4297 = vmax.f32 %v4165, 0.0
      %v4298 = vmax.f32 %v4167, 0.0
      %v4299 = vmax.f32 %v4169, 0.0
      %v4300 = vmax.f32 %v4171, 0.0
      %v4301 = vpack.c.bf16 %v4175, %v4173
      %v4302 = vpack.c.bf16 %v4176, %v4174
      %v4303 = vpack.c.bf16 %v4179, %v4177
      %v4304 = vpack.c.bf16 %v4180, %v4178
      %v4305 = vpack.c.bf16 %v4183, %v4181
      %v4306 = vpack.c.bf16 %v4184, %v4182
      %v4307 = vpack.c.bf16 %v4187, %v4185
      %v4308 = vpack.c.bf16 %v4188, %v4186
      %v4309 = vpack.c.bf16 %v4191, %v4189
      %v4310 = vpack.c.bf16 %v4192, %v4190
      %v4311 = vpack.c.bf16 %v4195, %v4193
      %v4312 = vpack.c.bf16 %v4196, %v4194
      %v4313 = vpack.c.bf16 %v4199, %v4197
      %v4314 = vpack.c.bf16 %v4200, %v4198
      %v4315 = vpack.c.bf16 %v4203, %v4201
      %v4316 = vpack.c.bf16 %v4204, %v4202
      %v4317 = vpack.c.bf16 %v4207, %v4205
      %v4318 = vpack.c.bf16 %v4208, %v4206
      %v4319 = vpack.c.bf16 %v4211, %v4209
      %v4320 = vpack.c.bf16 %v4212, %v4210
      %v4321 = vpack.c.bf16 %v4215, %v4213
      %v4322 = vpack.c.bf16 %v4216, %v4214
      %v4323 = vpack.c.bf16 %v4219, %v4217
      %v4324 = vpack.c.bf16 %v4220, %v4218
      %v4325 = vpack.c.bf16 %v4223, %v4221
      %v4326 = vpack.c.bf16 %v4224, %v4222
      %v4327 = vpack.c.bf16 %v4227, %v4225
      %v4328 = vpack.c.bf16 %v4228, %v4226
      %v4329 = vpack.c.bf16 %v4231, %v4229
      %v4330 = vpack.c.bf16 %v4232, %v4230
      %v4331 = vpack.c.bf16 %v4235, %v4233
      %v4332 = vpack.c.bf16 %v4236, %v4234
      %v4333 = vpack.c.bf16 %v4239, %v4237
      %v4334 = vpack.c.bf16 %v4240, %v4238
      %v4335 = vpack.c.bf16 %v4243, %v4241
      %v4336 = vpack.c.bf16 %v4244, %v4242
      %v4337 = vpack.c.bf16 %v4247, %v4245
      %v4338 = vpack.c.bf16 %v4248, %v4246
      %v4339 = vpack.c.bf16 %v4251, %v4249
      %v4340 = vpack.c.bf16 %v4252, %v4250
      %v4341 = vpack.c.bf16 %v4255, %v4253
      %v4342 = vpack.c.bf16 %v4256, %v4254
      %v4343 = vpack.c.bf16 %v4259, %v4257
      %v4344 = vpack.c.bf16 %v4260, %v4258
      %v4345 = vpack.c.bf16 %v4263, %v4261
      %v4346 = vpack.c.bf16 %v4264, %v4262
      %v4347 = vpack.c.bf16 %v4267, %v4265
      %v4348 = vpack.c.bf16 %v4268, %v4266
      %v4349 = vpack.c.bf16 %v4271, %v4269
      %v4350 = vpack.c.bf16 %v4272, %v4270
      %v4351 = vpack.c.bf16 %v4275, %v4273
      %v4352 = vpack.c.bf16 %v4276, %v4274
      %v4353 = vpack.c.bf16 %v4279, %v4277
      %v4354 = vpack.c.bf16 %v4280, %v4278
      %v4355 = vpack.c.bf16 %v4283, %v4281
      %v4356 = vpack.c.bf16 %v4284, %v4282
      %v4357 = vpack.c.bf16 %v4287, %v4285
      %v4358 = vpack.c.bf16 %v4288, %v4286
      %v4359 = vpack.c.bf16 %v4291, %v4289
      %v4360 = vpack.c.bf16 %v4292, %v4290
      %v4361 = vpack.c.bf16 %v4295, %v4293
      %v4362 = vpack.c.bf16 %v4296, %v4294
      %v4363 = vpack.c.bf16 %v4299, %v4297
      %v4364 = vpack.c.bf16 %v4300, %v4298
      %s4365 = scalar_lea.vmem %s3, 1024
      %v4366 = vld [vmem:[%s4365] sm:$0xff]
      %v4367 = vld [vmem:[%s4365 + $0x8] sm:$0xff]
      %v4368 = vld [vmem:[%s4365 + $0x10] sm:$0xff]
      %v4369 = vld [vmem:[%s4365 + $0x18] sm:$0xff]
      %v4370 = vld [vmem:[%s4365 + $0x20] sm:$0xff]
      %v4371 = vld [vmem:[%s4365 + $0x28] sm:$0xff]
      %v4372 = vld [vmem:[%s4365 + $0x30] sm:$0xff]
      %v4373 = vld [vmem:[%s4365 + $0x38] sm:$0xff]
      %v4374 = vld [vmem:[%s4365 + $0x40] sm:$0xff]
      %v4375 = vld [vmem:[%s4365 + $0x48] sm:$0xff]
      %v4376 = vld [vmem:[%s4365 + $0x50] sm:$0xff]
      %v4377 = vld [vmem:[%s4365 + $0x58] sm:$0xff]
      %v4378 = vld [vmem:[%s4365 + $0x60] sm:$0xff]
      %v4379 = vld [vmem:[%s4365 + $0x68] sm:$0xff]
      %v4380 = vld [vmem:[%s4365 + $0x70] sm:$0xff]
      %v4381 = vld [vmem:[%s4365 + $0x78] sm:$0xff]
      %v4382 = vld [vmem:[%s4365 + $0x80] sm:$0xff]
      %v4383 = vld [vmem:[%s4365 + $0x88] sm:$0xff]
      %v4384 = vld [vmem:[%s4365 + $0x90] sm:$0xff]
      %v4385 = vld [vmem:[%s4365 + $0x98] sm:$0xff]
      %v4386 = vld [vmem:[%s4365 + $0xa0] sm:$0xff]
      %v4387 = vld [vmem:[%s4365 + $0xa8] sm:$0xff]
      %v4388 = vld [vmem:[%s4365 + $0xb0] sm:$0xff]
      %v4389 = vld [vmem:[%s4365 + $0xb8] sm:$0xff]
      %v4390 = vld [vmem:[%s4365 + $0xc0] sm:$0xff]
      %v4391 = vld [vmem:[%s4365 + $0xc8] sm:$0xff]
      %v4392 = vld [vmem:[%s4365 + $0xd0] sm:$0xff]
      %v4393 = vld [vmem:[%s4365 + $0xd8] sm:$0xff]
      %v4394 = vld [vmem:[%s4365 + $0xe0] sm:$0xff]
      %v4395 = vld [vmem:[%s4365 + $0xe8] sm:$0xff]
      %v4396 = vld [vmem:[%s4365 + $0xf0] sm:$0xff]
      %v4397 = vld [vmem:[%s4365 + $0xf8] sm:$0xff]
      %s4398 = scalar_lea.vmem %s4, 8
      %v4399 = vld [vmem:[%s4398] sm:$0x3]
      %v4401 = vlaneseq
      %v4402 = vshrl.u32 %v4401, 7
      %v4403 = vsub.s32 0, %v4402
      %v4404 = vrot.slane %v4399, %v4403
      %v4405 = vlaneseq
      %v4406 = vshrl.u32 %v4405, 7
      %v4407 = vsub.s32 1, %v4406
      %v4408 = vrot.slane %v4399, %v4407
      %v4443 = vunpack.c.l.b16 %v4366
      %v4444 = vunpack.c.h.b16 %v4366
      %v4445 = vunpack.c.l.b16 %v4367
      %v4446 = vunpack.c.h.b16 %v4367
      %v4447 = vunpack.c.l.b16 %v4368
      %v4448 = vunpack.c.h.b16 %v4368
      %v4449 = vunpack.c.l.b16 %v4369
      %v4450 = vunpack.c.h.b16 %v4369
      %v4451 = vunpack.c.l.b16 %v4370
      %v4452 = vunpack.c.h.b16 %v4370
      %v4453 = vunpack.c.l.b16 %v4371
      %v4454 = vunpack.c.h.b16 %v4371
      %v4455 = vunpack.c.l.b16 %v4372
      %v4456 = vunpack.c.h.b16 %v4372
      %v4457 = vunpack.c.l.b16 %v4373
      %v4458 = vunpack.c.h.b16 %v4373
      %v4459 = vunpack.c.l.b16 %v4374
      %v4460 = vunpack.c.h.b16 %v4374
      %v4461 = vunpack.c.l.b16 %v4375
      %v4462 = vunpack.c.h.b16 %v4375
      %v4463 = vunpack.c.l.b16 %v4376
      %v4464 = vunpack.c.h.b16 %v4376
      %v4465 = vunpack.c.l.b16 %v4377
      %v4466 = vunpack.c.h.b16 %v4377
      %v4467 = vunpack.c.l.b16 %v4378
      %v4468 = vunpack.c.h.b16 %v4378
      %v4469 = vunpack.c.l.b16 %v4379
      %v4470 = vunpack.c.h.b16 %v4379
      %v4471 = vunpack.c.l.b16 %v4380
      %v4472 = vunpack.c.h.b16 %v4380
      %v4473 = vunpack.c.l.b16 %v4381
      %v4474 = vunpack.c.h.b16 %v4381
      %v4475 = vunpack.c.l.b16 %v4382
      %v4476 = vunpack.c.h.b16 %v4382
      %v4477 = vunpack.c.l.b16 %v4383
      %v4478 = vunpack.c.h.b16 %v4383
      %v4479 = vunpack.c.l.b16 %v4384
      %v4480 = vunpack.c.h.b16 %v4384
      %v4481 = vunpack.c.l.b16 %v4385
      %v4482 = vunpack.c.h.b16 %v4385
      %v4483 = vunpack.c.l.b16 %v4386
      %v4484 = vunpack.c.h.b16 %v4386
      %v4485 = vunpack.c.l.b16 %v4387
      %v4486 = vunpack.c.h.b16 %v4387
      %v4487 = vunpack.c.l.b16 %v4388
      %v4488 = vunpack.c.h.b16 %v4388
      %v4489 = vunpack.c.l.b16 %v4389
      %v4490 = vunpack.c.h.b16 %v4389
      %v4491 = vunpack.c.l.b16 %v4390
      %v4492 = vunpack.c.h.b16 %v4390
      %v4493 = vunpack.c.l.b16 %v4391
      %v4494 = vunpack.c.h.b16 %v4391
      %v4495 = vunpack.c.l.b16 %v4392
      %v4496 = vunpack.c.h.b16 %v4392
      %v4497 = vunpack.c.l.b16 %v4393
      %v4498 = vunpack.c.h.b16 %v4393
      %v4499 = vunpack.c.l.b16 %v4394
      %v4500 = vunpack.c.h.b16 %v4394
      %v4501 = vunpack.c.l.b16 %v4395
      %v4502 = vunpack.c.h.b16 %v4395
      %v4503 = vunpack.c.l.b16 %v4396
      %v4504 = vunpack.c.h.b16 %v4396
      %v4505 = vunpack.c.l.b16 %v4397
      %v4506 = vunpack.c.h.b16 %v4397
      %v4507 = vpack.c.b16 %v4445, %v4443
      %v4508 = vpack.c.b16 %v4446, %v4444
      %v4509 = vpack.c.b16 %v4449, %v4447
      %v4510 = vpack.c.b16 %v4450, %v4448
      %v4511 = vpack.c.b16 %v4453, %v4451
      %v4512 = vpack.c.b16 %v4454, %v4452
      %v4513 = vpack.c.b16 %v4457, %v4455
      %v4514 = vpack.c.b16 %v4458, %v4456
      %v4515 = vpack.c.b16 %v4461, %v4459
      %v4516 = vpack.c.b16 %v4462, %v4460
      %v4517 = vpack.c.b16 %v4465, %v4463
      %v4518 = vpack.c.b16 %v4466, %v4464
      %v4519 = vpack.c.b16 %v4469, %v4467
      %v4520 = vpack.c.b16 %v4470, %v4468
      %v4521 = vpack.c.b16 %v4473, %v4471
      %v4522 = vpack.c.b16 %v4474, %v4472
      %v4523 = vpack.c.b16 %v4477, %v4475
      %v4524 = vpack.c.b16 %v4478, %v4476
      %v4525 = vpack.c.b16 %v4481, %v4479
      %v4526 = vpack.c.b16 %v4482, %v4480
      %v4527 = vpack.c.b16 %v4485, %v4483
      %v4528 = vpack.c.b16 %v4486, %v4484
      %v4529 = vpack.c.b16 %v4489, %v4487
      %v4530 = vpack.c.b16 %v4490, %v4488
      %v4531 = vpack.c.b16 %v4493, %v4491
      %v4532 = vpack.c.b16 %v4494, %v4492
      %v4533 = vpack.c.b16 %v4497, %v4495
      %v4534 = vpack.c.b16 %v4498, %v4496
      %v4535 = vpack.c.b16 %v4501, %v4499
      %v4536 = vpack.c.b16 %v4502, %v4500
      %v4537 = vpack.c.b16 %v4505, %v4503
      %v4538 = vpack.c.b16 %v4506, %v4504
      %4571 = vmatprep.subr.bf16.mxu0 %v4508
      %4572 = vmatpush1.bf16.msra.mxu0 %v4507
      %4573 = vmatprep.subr.bf16.mxu0 %v4510
      %4574 = vmatpush1.bf16.msra.mxu0 %v4509
      %4575 = vmatprep.subr.bf16.mxu0 %v4512
      %4576 = vmatpush1.bf16.msra.mxu0 %v4511
      %4577 = vmatprep.subr.bf16.mxu0 %v4514
      %4578 = vmatpush1.bf16.msra.mxu0 %v4513
      %4579 = vmatprep.subr.bf16.mxu0 %v4516
      %4580 = vmatpush1.bf16.msra.mxu0 %v4515
      %4581 = vmatprep.subr.bf16.mxu0 %v4518
      %4582 = vmatpush1.bf16.msra.mxu0 %v4517
      %4583 = vmatprep.subr.bf16.mxu0 %v4520
      %4584 = vmatpush1.bf16.msra.mxu0 %v4519
      %4585 = vmatprep.subr.bf16.mxu0 %v4522
      %4586 = vmatpush1.bf16.msra.mxu0 %v4521
      %4587 = vmatprep.subr.bf16.mxu0 %v4524
      %4588 = vmatpush1.bf16.msra.mxu0 %v4523
      %4589 = vmatprep.subr.bf16.mxu0 %v4526
      %4590 = vmatpush1.bf16.msra.mxu0 %v4525
      %4591 = vmatprep.subr.bf16.mxu0 %v4528
      %4592 = vmatpush1.bf16.msra.mxu0 %v4527
      %4593 = vmatprep.subr.bf16.mxu0 %v4530
      %4594 = vmatpush1.bf16.msra.mxu0 %v4529
      %4595 = vmatprep.subr.bf16.mxu0 %v4532
      %4596 = vmatpush1.bf16.msra.mxu0 %v4531
      %4597 = vmatprep.subr.bf16.mxu0 %v4534
      %4598 = vmatpush1.bf16.msra.mxu0 %v4533
      %4599 = vmatprep.subr.bf16.mxu0 %v4536
      %4600 = vmatpush1.bf16.msra.mxu0 %v4535
      %4601 = vmatprep.subr.bf16.mxu0 %v4538
      %4602 = vmatpush1.bf16.msra.mxu0 %v4537
      %4603 = vmatprep.mubr.bf16.mxu0 %v4302
      %4604 = vmatmul.mubr.bf16.gmra.mrb[0].mxu0 %v4301
      %v4605 = vpop.f32.mrb[0].mxu0
      %v4606 = vadd.f32 %v4404, %v4605
      %v4607 = vpop.f32.mrb[0].mxu0
      %v4608 = vadd.f32 %v4408, %v4607
      %v4609 = vpop.f32.mrb[0].mxu0
      %v4610 = vadd.f32 %v4404, %v4609
      %v4611 = vpop.f32.mrb[0].mxu0
      %v4612 = vadd.f32 %v4408, %v4611
      %4613 = vmatprep.mubr.bf16.mxu0 %v4304
      %4614 = vmatmul.mubr.bf16.gmra.mrb[0].mxu0 %v4303
      %v4615 = vpop.f32.mrb[0].mxu0
      %v4616 = vadd.f32 %v4404, %v4615
      %v4617 = vpop.f32.mrb[0].mxu0
      %v4618 = vadd.f32 %v4408, %v4617
      %v4619 = vpop.f32.mrb[0].mxu0
      %v4620 = vadd.f32 %v4404, %v4619
      %v4621 = vpop.f32.mrb[0].mxu0
      %v4622 = vadd.f32 %v4408, %v4621
      %4623 = vmatprep.mubr.bf16.mxu0 %v4306
      %4624 = vmatmul.mubr.bf16.gmra.mrb[0].mxu0 %v4305
      %v4625 = vpop.f32.mrb[0].mxu0
      %v4626 = vadd.f32 %v4404, %v4625
      %v4627 = vpop.f32.mrb[0].mxu0
      %v4628 = vadd.f32 %v4408, %v4627
      %v4629 = vpop.f32.mrb[0].mxu0
      %v4630 = vadd.f32 %v4404, %v4629
      %v4631 = vpop.f32.mrb[0].mxu0
      %v4632 = vadd.f32 %v4408, %v4631
      %4633 = vmatprep.mubr.bf16.mxu0 %v4308
      %4634 = vmatmul.mubr.bf16.gmra.mrb[0].mxu0 %v4307
      %v4635 = vpop.f32.mrb[0].mxu0
      %v4636 = vadd.f32 %v4404, %v4635
      %v4637 = vpop.f32.mrb[0].mxu0
      %v4638 = vadd.f32 %v4408, %v4637
      %v4639 = vpop.f32.mrb[0].mxu0
      %v4640 = vadd.f32 %v4404, %v4639
      %v4641 = vpop.f32.mrb[0].mxu0
      %v4642 = vadd.f32 %v4408, %v4641
      %4643 = vmatprep.mubr.bf16.mxu0 %v4310
      %4644 = vmatmul.mubr.bf16.gmra.mrb[0].mxu0 %v4309
      %v4645 = vpop.f32.mrb[0].mxu0
      %v4646 = vadd.f32 %v4404, %v4645
      %v4647 = vpop.f32.mrb[0].mxu0
      %v4648 = vadd.f32 %v4408, %v4647
      %v4649 = vpop.f32.mrb[0].mxu0
      %v4650 = vadd.f32 %v4404, %v4649
      %v4651 = vpop.f32.mrb[0].mxu0
      %v4652 = vadd.f32 %v4408, %v4651
      %4653 = vmatprep.mubr.bf16.mxu0 %v4312
      %4654 = vmatmul.mubr.bf16.gmra.mrb[0].mxu0 %v4311
      %v4655 = vpop.f32.mrb[0].mxu0
      %v4656 = vadd.f32 %v4404, %v4655
      %v4657 = vpop.f32.mrb[0].mxu0
      %v4658 = vadd.f32 %v4408, %v4657
      %v4659 = vpop.f32.mrb[0].mxu0
      %v4660 = vadd.f32 %v4404, %v4659
      %v4661 = vpop.f32.mrb[0].mxu0
      %v4662 = vadd.f32 %v4408, %v4661
      %4663 = vmatprep.mubr.bf16.mxu0 %v4314
      %4664 = vmatmul.mubr.bf16.gmra.mrb[0].mxu0 %v4313
      %v4665 = vpop.f32.mrb[0].mxu0
      %v4666 = vadd.f32 %v4404, %v4665
      %v4667 = vpop.f32.mrb[0].mxu0
      %v4668 = vadd.f32 %v4408, %v4667
      %v4669 = vpop.f32.mrb[0].mxu0
      %v4670 = vadd.f32 %v4404, %v4669
      %v4671 = vpop.f32.mrb[0].mxu0
      %v4672 = vadd.f32 %v4408, %v4671
      %4673 = vmatprep.mubr.bf16.mxu0 %v4316
      %4674 = vmatmul.mubr.bf16.gmra.mrb[0].mxu0 %v4315
      %v4675 = vpop.f32.mrb[0].mxu0
      %v4676 = vadd.f32 %v4404, %v4675
      %v4677 = vpop.f32.mrb[0].mxu0
      %v4678 = vadd.f32 %v4408, %v4677
      %v4679 = vpop.f32.mrb[0].mxu0
      %v4680 = vadd.f32 %v4404, %v4679
      %v4681 = vpop.f32.mrb[0].mxu0
      %v4682 = vadd.f32 %v4408, %v4681
      %4683 = vmatprep.mubr.bf16.mxu0 %v4318
      %4684 = vmatmul.mubr.bf16.gmra.mrb[0].mxu0 %v4317
      %v4685 = vpop.f32.mrb[0].mxu0
      %v4686 = vadd.f32 %v4404, %v4685
      %v4687 = vpop.f32.mrb[0].mxu0
      %v4688 = vadd.f32 %v4408, %v4687
      %v4689 = vpop.f32.mrb[0].mxu0
      %v4690 = vadd.f32 %v4404, %v4689
      %v4691 = vpop.f32.mrb[0].mxu0
      %v4692 = vadd.f32 %v4408, %v4691
      %4693 = vmatprep.mubr.bf16.mxu0 %v4320
      %4694 = vmatmul.mubr.bf16.gmra.mrb[0].mxu0 %v4319
      %v4695 = vpop.f32.mrb[0].mxu0
      %v4696 = vadd.f32 %v4404, %v4695
      %v4697 = vpop.f32.mrb[0].mxu0
      %v4698 = vadd.f32 %v4408, %v4697
      %v4699 = vpop.f32.mrb[0].mxu0
      %v4700 = vadd.f32 %v4404, %v4699
      %v4701 = vpop.f32.mrb[0].mxu0
      %v4702 = vadd.f32 %v4408, %v4701
      %4703 = vmatprep.mubr.bf16.mxu0 %v4322
      %4704 = vmatmul.mubr.bf16.gmra.mrb[0].mxu0 %v4321
      %v4705 = vpop.f32.mrb[0].mxu0
      %v4706 = vadd.f32 %v4404, %v4705
      %v4707 = vpop.f32.mrb[0].mxu0
      %v4708 = vadd.f32 %v4408, %v4707
      %v4709 = vpop.f32.mrb[0].mxu0
      %v4710 = vadd.f32 %v4404, %v4709
      %v4711 = vpop.f32.mrb[0].mxu0
      %v4712 = vadd.f32 %v4408, %v4711
      %4713 = vmatprep.mubr.bf16.mxu0 %v4324
      %4714 = vmatmul.mubr.bf16.gmra.mrb[0].mxu0 %v4323
      %v4715 = vpop.f32.mrb[0].mxu0
      %v4716 = vadd.f32 %v4404, %v4715
      %v4717 = vpop.f32.mrb[0].mxu0
      %v4718 = vadd.f32 %v4408, %v4717
      %v4719 = vpop.f32.mrb[0].mxu0
      %v4720 = vadd.f32 %v4404, %v4719
      %v4721 = vpop.f32.mrb[0].mxu0
      %v4722 = vadd.f32 %v4408, %v4721
      %4723 = vmatprep.mubr.bf16.mxu0 %v4326
      %4724 = vmatmul.mubr.bf16.gmra.mrb[0].mxu0 %v4325
      %v4725 = vpop.f32.mrb[0].mxu0
      %v4726 = vadd.f32 %v4404, %v4725
      %v4727 = vpop.f32.mrb[0].mxu0
      %v4728 = vadd.f32 %v4408, %v4727
      %v4729 = vpop.f32.mrb[0].mxu0
      %v4730 = vadd.f32 %v4404, %v4729
      %v4731 = vpop.f32.mrb[0].mxu0
      %v4732 = vadd.f32 %v4408, %v4731
      %4733 = vmatprep.mubr.bf16.mxu0 %v4328
      %4734 = vmatmul.mubr.bf16.gmra.mrb[0].mxu0 %v4327
      %v4735 = vpop.f32.mrb[0].mxu0
      %v4736 = vadd.f32 %v4404, %v4735
      %v4737 = vpop.f32.mrb[0].mxu0
      %v4738 = vadd.f32 %v4408, %v4737
      %v4739 = vpop.f32.mrb[0].mxu0
      %v4740 = vadd.f32 %v4404, %v4739
      %v4741 = vpop.f32.mrb[0].mxu0
      %v4742 = vadd.f32 %v4408, %v4741
      %4743 = vmatprep.mubr.bf16.mxu0 %v4330
      %4744 = vmatmul.mubr.bf16.gmra.mrb[0].mxu0 %v4329
      %v4745 = vpop.f32.mrb[0].mxu0
      %v4746 = vadd.f32 %v4404, %v4745
      %v4747 = vpop.f32.mrb[0].mxu0
      %v4748 = vadd.f32 %v4408, %v4747
      %v4749 = vpop.f32.mrb[0].mxu0
      %v4750 = vadd.f32 %v4404, %v4749
      %v4751 = vpop.f32.mrb[0].mxu0
      %v4752 = vadd.f32 %v4408, %v4751
      %4753 = vmatprep.mubr.bf16.mxu0 %v4332
      %4754 = vmatmul.mubr.bf16.gmra.mrb[0].mxu0 %v4331
      %v4755 = vpop.f32.mrb[0].mxu0
      %v4756 = vadd.f32 %v4404, %v4755
      %v4757 = vpop.f32.mrb[0].mxu0
      %v4758 = vadd.f32 %v4408, %v4757
      %v4759 = vpop.f32.mrb[0].mxu0
      %v4760 = vadd.f32 %v4404, %v4759
      %v4761 = vpop.f32.mrb[0].mxu0
      %v4762 = vadd.f32 %v4408, %v4761
      %4763 = vmatprep.mubr.bf16.mxu0 %v4334
      %4764 = vmatmul.mubr.bf16.gmra.mrb[0].mxu0 %v4333
      %v4765 = vpop.f32.mrb[0].mxu0
      %v4766 = vadd.f32 %v4404, %v4765
      %v4767 = vpop.f32.mrb[0].mxu0
      %v4768 = vadd.f32 %v4408, %v4767
      %v4769 = vpop.f32.mrb[0].mxu0
      %v4770 = vadd.f32 %v4404, %v4769
      %v4771 = vpop.f32.mrb[0].mxu0
      %v4772 = vadd.f32 %v4408, %v4771
      %4773 = vmatprep.mubr.bf16.mxu0 %v4336
      %4774 = vmatmul.mubr.bf16.gmra.mrb[0].mxu0 %v4335
      %v4775 = vpop.f32.mrb[0].mxu0
      %v4776 = vadd.f32 %v4404, %v4775
      %v4777 = vpop.f32.mrb[0].mxu0
      %v4778 = vadd.f32 %v4408, %v4777
      %v4779 = vpop.f32.mrb[0].mxu0
      %v4780 = vadd.f32 %v4404, %v4779
      %v4781 = vpop.f32.mrb[0].mxu0
      %v4782 = vadd.f32 %v4408, %v4781
      %4783 = vmatprep.mubr.bf16.mxu0 %v4338
      %4784 = vmatmul.mubr.bf16.gmra.mrb[0].mxu0 %v4337
      %v4785 = vpop.f32.mrb[0].mxu0
      %v4786 = vadd.f32 %v4404, %v4785
      %v4787 = vpop.f32.mrb[0].mxu0
      %v4788 = vadd.f32 %v4408, %v4787
      %v4789 = vpop.f32.mrb[0].mxu0
      %v4790 = vadd.f32 %v4404, %v4789
      %v4791 = vpop.f32.mrb[0].mxu0
      %v4792 = vadd.f32 %v4408, %v4791
      %4793 = vmatprep.mubr.bf16.mxu0 %v4340
      %4794 = vmatmul.mubr.bf16.gmra.mrb[0].mxu0 %v4339
      %v4795 = vpop.f32.mrb[0].mxu0
      %v4796 = vadd.f32 %v4404, %v4795
      %v4797 = vpop.f32.mrb[0].mxu0
      %v4798 = vadd.f32 %v4408, %v4797
      %v4799 = vpop.f32.mrb[0].mxu0
      %v4800 = vadd.f32 %v4404, %v4799
      %v4801 = vpop.f32.mrb[0].mxu0
      %v4802 = vadd.f32 %v4408, %v4801
      %4803 = vmatprep.mubr.bf16.mxu0 %v4342
      %4804 = vmatmul.mubr.bf16.gmra.mrb[0].mxu0 %v4341
      %v4805 = vpop.f32.mrb[0].mxu0
      %v4806 = vadd.f32 %v4404, %v4805
      %v4807 = vpop.f32.mrb[0].mxu0
      %v4808 = vadd.f32 %v4408, %v4807
      %v4809 = vpop.f32.mrb[0].mxu0
      %v4810 = vadd.f32 %v4404, %v4809
      %v4811 = vpop.f32.mrb[0].mxu0
      %v4812 = vadd.f32 %v4408, %v4811
      %4813 = vmatprep.mubr.bf16.mxu0 %v4344
      %4814 = vmatmul.mubr.bf16.gmra.mrb[0].mxu0 %v4343
      %v4815 = vpop.f32.mrb[0].mxu0
      %v4816 = vadd.f32 %v4404, %v4815
      %v4817 = vpop.f32.mrb[0].mxu0
      %v4818 = vadd.f32 %v4408, %v4817
      %v4819 = vpop.f32.mrb[0].mxu0
      %v4820 = vadd.f32 %v4404, %v4819
      %v4821 = vpop.f32.mrb[0].mxu0
      %v4822 = vadd.f32 %v4408, %v4821
      %4823 = vmatprep.mubr.bf16.mxu0 %v4346
      %4824 = vmatmul.mubr.bf16.gmra.mrb[0].mxu0 %v4345
      %v4825 = vpop.f32.mrb[0].mxu0
      %v4826 = vadd.f32 %v4404, %v4825
      %v4827 = vpop.f32.mrb[0].mxu0
      %v4828 = vadd.f32 %v4408, %v4827
      %v4829 = vpop.f32.mrb[0].mxu0
      %v4830 = vadd.f32 %v4404, %v4829
      %v4831 = vpop.f32.mrb[0].mxu0
      %v4832 = vadd.f32 %v4408, %v4831
      %4833 = vmatprep.mubr.bf16.mxu0 %v4348
      %4834 = vmatmul.mubr.bf16.gmra.mrb[0].mxu0 %v4347
      %v4835 = vpop.f32.mrb[0].mxu0
      %v4836 = vadd.f32 %v4404, %v4835
      %v4837 = vpop.f32.mrb[0].mxu0
      %v4838 = vadd.f32 %v4408, %v4837
      %v4839 = vpop.f32.mrb[0].mxu0
      %v4840 = vadd.f32 %v4404, %v4839
      %v4841 = vpop.f32.mrb[0].mxu0
      %v4842 = vadd.f32 %v4408, %v4841
      %4843 = vmatprep.mubr.bf16.mxu0 %v4350
      %4844 = vmatmul.mubr.bf16.gmra.mrb[0].mxu0 %v4349
      %v4845 = vpop.f32.mrb[0].mxu0
      %v4846 = vadd.f32 %v4404, %v4845
      %v4847 = vpop.f32.mrb[0].mxu0
      %v4848 = vadd.f32 %v4408, %v4847
      %v4849 = vpop.f32.mrb[0].mxu0
      %v4850 = vadd.f32 %v4404, %v4849
      %v4851 = vpop.f32.mrb[0].mxu0
      %v4852 = vadd.f32 %v4408, %v4851
      %4853 = vmatprep.mubr.bf16.mxu0 %v4352
      %4854 = vmatmul.mubr.bf16.gmra.mrb[0].mxu0 %v4351
      %v4855 = vpop.f32.mrb[0].mxu0
      %v4856 = vadd.f32 %v4404, %v4855
      %v4857 = vpop.f32.mrb[0].mxu0
      %v4858 = vadd.f32 %v4408, %v4857
      %v4859 = vpop.f32.mrb[0].mxu0
      %v4860 = vadd.f32 %v4404, %v4859
      %v4861 = vpop.f32.mrb[0].mxu0
      %v4862 = vadd.f32 %v4408, %v4861
      %4863 = vmatprep.mubr.bf16.mxu0 %v4354
      %4864 = vmatmul.mubr.bf16.gmra.mrb[0].mxu0 %v4353
      %v4865 = vpop.f32.mrb[0].mxu0
      %v4866 = vadd.f32 %v4404, %v4865
      %v4867 = vpop.f32.mrb[0].mxu0
      %v4868 = vadd.f32 %v4408, %v4867
      %v4869 = vpop.f32.mrb[0].mxu0
      %v4870 = vadd.f32 %v4404, %v4869
      %v4871 = vpop.f32.mrb[0].mxu0
      %v4872 = vadd.f32 %v4408, %v4871
      %4873 = vmatprep.mubr.bf16.mxu0 %v4356
      %4874 = vmatmul.mubr.bf16.gmra.mrb[0].mxu0 %v4355
      %v4875 = vpop.f32.mrb[0].mxu0
      %v4876 = vadd.f32 %v4404, %v4875
      %v4877 = vpop.f32.mrb[0].mxu0
      %v4878 = vadd.f32 %v4408, %v4877
      %v4879 = vpop.f32.mrb[0].mxu0
      %v4880 = vadd.f32 %v4404, %v4879
      %v4881 = vpop.f32.mrb[0].mxu0
      %v4882 = vadd.f32 %v4408, %v4881
      %4883 = vmatprep.mubr.bf16.mxu0 %v4358
      %4884 = vmatmul.mubr.bf16.gmra.mrb[0].mxu0 %v4357
      %v4885 = vpop.f32.mrb[0].mxu0
      %v4886 = vadd.f32 %v4404, %v4885
      %v4887 = vpop.f32.mrb[0].mxu0
      %v4888 = vadd.f32 %v4408, %v4887
      %v4889 = vpop.f32.mrb[0].mxu0
      %v4890 = vadd.f32 %v4404, %v4889
      %v4891 = vpop.f32.mrb[0].mxu0
      %v4892 = vadd.f32 %v4408, %v4891
      %4893 = vmatprep.mubr.bf16.mxu0 %v4360
      %4894 = vmatmul.mubr.bf16.gmra.mrb[0].mxu0 %v4359
      %v4895 = vpop.f32.mrb[0].mxu0
      %v4896 = vadd.f32 %v4404, %v4895
      %v4897 = vpop.f32.mrb[0].mxu0
      %v4898 = vadd.f32 %v4408, %v4897
      %v4899 = vpop.f32.mrb[0].mxu0
      %v4900 = vadd.f32 %v4404, %v4899
      %v4901 = vpop.f32.mrb[0].mxu0
      %v4902 = vadd.f32 %v4408, %v4901
      %4903 = vmatprep.mubr.bf16.mxu0 %v4362
      %4904 = vmatmul.mubr.bf16.gmra.mrb[0].mxu0 %v4361
      %v4905 = vpop.f32.mrb[0].mxu0
      %v4906 = vadd.f32 %v4404, %v4905
      %v4907 = vpop.f32.mrb[0].mxu0
      %v4908 = vadd.f32 %v4408, %v4907
      %v4909 = vpop.f32.mrb[0].mxu0
      %v4910 = vadd.f32 %v4404, %v4909
      %v4911 = vpop.f32.mrb[0].mxu0
      %v4912 = vadd.f32 %v4408, %v4911
      %4913 = vmatprep.mubr.bf16.mxu0 %v4364
      %4914 = vmatmul.mubr.bf16.gmra.mrb[0].mxu0 %v4363
      %v4915 = vpop.f32.mrb[0].mxu0
      %v4916 = vadd.f32 %v4404, %v4915
      %v4917 = vpop.f32.mrb[0].mxu0
      %v4918 = vadd.f32 %v4408, %v4917
      %v4919 = vpop.f32.mrb[0].mxu0
      %v4920 = vadd.f32 %v4404, %v4919
      %v4921 = vpop.f32.mrb[0].mxu0
      %v4922 = vadd.f32 %v4408, %v4921
      %4923 = vdwg.mxu0
      %v4924 = vld [vmem:[%s5] sm:$0xff]
      %v4926 = vunpack.c.l.b16 %v4924
      %v4927 = vunpack.c.h.b16 %v4924
      %v4928 = vpack.c.b16 %v4926, %v4926
      %v4929 = vpack.c.b16 %v4927, %v4927
      %v4931 = vsel %vm811, %v4928, 0
      %v4934 = vsel %vm811, %v4929, 0
      %4936 = vmatprep.subr.bf16.mxu0 %v4934
      %4937 = vmatpush1.bf16.msra.mxu0 %v4931
      %4938 = vmatprep.subr.bf16.mxu0 0
      %4939 = vmatpush1.bf16.msra.mxu0 0
      %4940 = vmatprep.subr.bf16.mxu0 0
      %4941 = vmatpush1.bf16.msra.mxu0 0
      %4942 = vmatprep.subr.bf16.mxu0 0
      %4943 = vmatpush1.bf16.msra.mxu0 0
      %4944 = vmatprep.subr.bf16.mxu0 0
      %4945 = vmatpush1.bf16.msra.mxu0 0
      %4946 = vmatprep.subr.bf16.mxu0 0
      %4947 = vmatpush1.bf16.msra.mxu0 0
      %4948 = vmatprep.subr.bf16.mxu0 0
      %4949 = vmatpush1.bf16.msra.mxu0 0
      %4950 = vmatprep.subr.bf16.mxu0 0
      %4951 = vmatpush1.bf16.msra.mxu0 0
      %4952 = vmatprep.subr.bf16.mxu0 0
      %4953 = vmatpush1.bf16.msra.mxu0 0
      %4954 = vmatprep.subr.bf16.mxu0 0
      %4955 = vmatpush1.bf16.msra.mxu0 0
      %4956 = vmatprep.subr.bf16.mxu0 0
      %4957 = vmatpush1.bf16.msra.mxu0 0
      %4958 = vmatprep.subr.bf16.mxu0 0
      %4959 = vmatpush1.bf16.msra.mxu0 0
      %4960 = vmatprep.subr.bf16.mxu0 0
      %4961 = vmatpush1.bf16.msra.mxu0 0
      %4962 = vmatprep.subr.bf16.mxu0 0
      %4963 = vmatpush1.bf16.msra.mxu0 0
      %4964 = vmatprep.subr.bf16.mxu0 0
      %4965 = vmatpush1.bf16.msra.mxu0 0
      %4966 = vmatprep.subr.bf16.mxu0 0
      %4967 = vmatpush1.bf16.msra.mxu0 0
      %4968 = vmatprep.mubr.bf16.mxu0 0
      %4969 = vmatmul.mubr.bf16.gmra.mrb[0].mxu0 %v716
      %v4970 = vpop.f32.mrb[0].mxu0
      %v4971 = vadd.f32 0.0, %v4970
      %v4972 = vpop.f32.mrb[0].mxu0
      %v4973 = vadd.f32 0.0, %v4972
      %v4974 = vpop.f32.mrb[0].mxu0
      %v4975 = vadd.f32 0.0, %v4974
      %v4976 = vpop.f32.mrb[0].mxu0
      %v4977 = vadd.f32 0.0, %v4976
      %4978 = vmatprep.mubr.bf16.mxu0 0
      %4979 = vmatmul.mubr.bf16.gmra.mrb[0].mxu0 %v719
      %v4980 = vpop.f32.mrb[0].mxu0
      %v4981 = vadd.f32 0.0, %v4980
      %v4982 = vpop.f32.mrb[0].mxu0
      %v4983 = vadd.f32 0.0, %v4982
      %v4984 = vpop.f32.mrb[0].mxu0
      %v4985 = vadd.f32 0.0, %v4984
      %v4986 = vpop.f32.mrb[0].mxu0
      %v4987 = vadd.f32 0.0, %v4986
      %4988 = vmatprep.mubr.bf16.mxu0 0
      %4989 = vmatmul.mubr.bf16.gmra.mrb[0].mxu0 %v722
      %v4990 = vpop.f32.mrb[0].mxu0
      %v4991 = vadd.f32 0.0, %v4990
      %v4992 = vpop.f32.mrb[0].mxu0
      %v4993 = vadd.f32 0.0, %v4992
      %v4994 = vpop.f32.mrb[0].mxu0
      %v4995 = vadd.f32 0.0, %v4994
      %v4996 = vpop.f32.mrb[0].mxu0
      %v4997 = vadd.f32 0.0, %v4996
      %4998 = vmatprep.mubr.bf16.mxu0 0
      %4999 = vmatmul.mubr.bf16.gmra.mrb[0].mxu0 %v725
      %v5000 = vpop.f32.mrb[0].mxu0
      %v5001 = vadd.f32 0.0, %v5000
      %v5002 = vpop.f32.mrb[0].mxu0
      %v5003 = vadd.f32 0.0, %v5002
      %v5004 = vpop.f32.mrb[0].mxu0
      %v5005 = vadd.f32 0.0, %v5004
      %v5006 = vpop.f32.mrb[0].mxu0
      %v5007 = vadd.f32 0.0, %v5006
      %5008 = vmatprep.mubr.bf16.mxu0 0
      %5009 = vmatmul.mubr.bf16.gmra.mrb[0].mxu0 %v728
      %v5010 = vpop.f32.mrb[0].mxu0
      %v5011 = vadd.f32 0.0, %v5010
      %v5012 = vpop.f32.mrb[0].mxu0
      %v5013 = vadd.f32 0.0, %v5012
      %v5014 = vpop.f32.mrb[0].mxu0
      %v5015 = vadd.f32 0.0, %v5014
      %v5016 = vpop.f32.mrb[0].mxu0
      %v5017 = vadd.f32 0.0, %v5016
      %5018 = vmatprep.mubr.bf16.mxu0 0
      %5019 = vmatmul.mubr.bf16.gmra.mrb[0].mxu0 %v731
      %v5020 = vpop.f32.mrb[0].mxu0
      %v5021 = vadd.f32 0.0, %v5020
      %v5022 = vpop.f32.mrb[0].mxu0
      %v5023 = vadd.f32 0.0, %v5022
      %v5024 = vpop.f32.mrb[0].mxu0
      %v5025 = vadd.f32 0.0, %v5024
      %v5026 = vpop.f32.mrb[0].mxu0
      %v5027 = vadd.f32 0.0, %v5026
      %5028 = vmatprep.mubr.bf16.mxu0 0
      %5029 = vmatmul.mubr.bf16.gmra.mrb[0].mxu0 %v734
      %v5030 = vpop.f32.mrb[0].mxu0
      %v5031 = vadd.f32 0.0, %v5030
      %v5032 = vpop.f32.mrb[0].mxu0
      %v5033 = vadd.f32 0.0, %v5032
      %v5034 = vpop.f32.mrb[0].mxu0
      %v5035 = vadd.f32 0.0, %v5034
      %v5036 = vpop.f32.mrb[0].mxu0
      %v5037 = vadd.f32 0.0, %v5036
      %5038 = vmatprep.mubr.bf16.mxu0 0
      %5039 = vmatmul.mubr.bf16.gmra.mrb[0].mxu0 %v737
      %v5040 = vpop.f32.mrb[0].mxu0
      %v5041 = vadd.f32 0.0, %v5040
      %v5042 = vpop.f32.mrb[0].mxu0
      %v5043 = vadd.f32 0.0, %v5042
      %v5044 = vpop.f32.mrb[0].mxu0
      %v5045 = vadd.f32 0.0, %v5044
      %v5046 = vpop.f32.mrb[0].mxu0
      %v5047 = vadd.f32 0.0, %v5046
      %5048 = vmatprep.mubr.bf16.mxu0 0
      %5049 = vmatmul.mubr.bf16.gmra.mrb[0].mxu0 %v740
      %v5050 = vpop.f32.mrb[0].mxu0
      %v5051 = vadd.f32 0.0, %v5050
      %v5052 = vpop.f32.mrb[0].mxu0
      %v5053 = vadd.f32 0.0, %v5052
      %v5054 = vpop.f32.mrb[0].mxu0
      %v5055 = vadd.f32 0.0, %v5054
      %v5056 = vpop.f32.mrb[0].mxu0
      %v5057 = vadd.f32 0.0, %v5056
      %5058 = vmatprep.mubr.bf16.mxu0 0
      %5059 = vmatmul.mubr.bf16.gmra.mrb[0].mxu0 %v743
      %v5060 = vpop.f32.mrb[0].mxu0
      %v5061 = vadd.f32 0.0, %v5060
      %v5062 = vpop.f32.mrb[0].mxu0
      %v5063 = vadd.f32 0.0, %v5062
      %v5064 = vpop.f32.mrb[0].mxu0
      %v5065 = vadd.f32 0.0, %v5064
      %v5066 = vpop.f32.mrb[0].mxu0
      %v5067 = vadd.f32 0.0, %v5066
      %5068 = vmatprep.mubr.bf16.mxu0 0
      %5069 = vmatmul.mubr.bf16.gmra.mrb[0].mxu0 %v746
      %v5070 = vpop.f32.mrb[0].mxu0
      %v5071 = vadd.f32 0.0, %v5070
      %v5072 = vpop.f32.mrb[0].mxu0
      %v5073 = vadd.f32 0.0, %v5072
      %v5074 = vpop.f32.mrb[0].mxu0
      %v5075 = vadd.f32 0.0, %v5074
      %v5076 = vpop.f32.mrb[0].mxu0
      %v5077 = vadd.f32 0.0, %v5076
      %5078 = vmatprep.mubr.bf16.mxu0 0
      %5079 = vmatmul.mubr.bf16.gmra.mrb[0].mxu0 %v749
      %v5080 = vpop.f32.mrb[0].mxu0
      %v5081 = vadd.f32 0.0, %v5080
      %v5082 = vpop.f32.mrb[0].mxu0
      %v5083 = vadd.f32 0.0, %v5082
      %v5084 = vpop.f32.mrb[0].mxu0
      %v5085 = vadd.f32 0.0, %v5084
      %v5086 = vpop.f32.mrb[0].mxu0
      %v5087 = vadd.f32 0.0, %v5086
      %5088 = vmatprep.mubr.bf16.mxu0 0
      %5089 = vmatmul.mubr.bf16.gmra.mrb[0].mxu0 %v752
      %v5090 = vpop.f32.mrb[0].mxu0
      %v5091 = vadd.f32 0.0, %v5090
      %v5092 = vpop.f32.mrb[0].mxu0
      %v5093 = vadd.f32 0.0, %v5092
      %v5094 = vpop.f32.mrb[0].mxu0
      %v5095 = vadd.f32 0.0, %v5094
      %v5096 = vpop.f32.mrb[0].mxu0
      %v5097 = vadd.f32 0.0, %v5096
      %5098 = vmatprep.mubr.bf16.mxu0 0
      %5099 = vmatmul.mubr.bf16.gmra.mrb[0].mxu0 %v755
      %v5100 = vpop.f32.mrb[0].mxu0
      %v5101 = vadd.f32 0.0, %v5100
      %v5102 = vpop.f32.mrb[0].mxu0
      %v5103 = vadd.f32 0.0, %v5102
      %v5104 = vpop.f32.mrb[0].mxu0
      %v5105 = vadd.f32 0.0, %v5104
      %v5106 = vpop.f32.mrb[0].mxu0
      %v5107 = vadd.f32 0.0, %v5106
      %5108 = vmatprep.mubr.bf16.mxu0 0
      %5109 = vmatmul.mubr.bf16.gmra.mrb[0].mxu0 %v758
      %v5110 = vpop.f32.mrb[0].mxu0
      %v5111 = vadd.f32 0.0, %v5110
      %v5112 = vpop.f32.mrb[0].mxu0
      %v5113 = vadd.f32 0.0, %v5112
      %v5114 = vpop.f32.mrb[0].mxu0
      %v5115 = vadd.f32 0.0, %v5114
      %v5116 = vpop.f32.mrb[0].mxu0
      %v5117 = vadd.f32 0.0, %v5116
      %5118 = vmatprep.mubr.bf16.mxu0 0
      %5119 = vmatmul.mubr.bf16.gmra.mrb[0].mxu0 %v761
      %v5120 = vpop.f32.mrb[0].mxu0
      %v5121 = vadd.f32 0.0, %v5120
      %v5122 = vpop.f32.mrb[0].mxu0
      %v5123 = vadd.f32 0.0, %v5122
      %v5124 = vpop.f32.mrb[0].mxu0
      %v5125 = vadd.f32 0.0, %v5124
      %v5126 = vpop.f32.mrb[0].mxu0
      %v5127 = vadd.f32 0.0, %v5126
      %5128 = vmatprep.mubr.bf16.mxu0 0
      %5129 = vmatmul.mubr.bf16.gmra.mrb[0].mxu0 %v764
      %v5130 = vpop.f32.mrb[0].mxu0
      %v5131 = vadd.f32 0.0, %v5130
      %v5132 = vpop.f32.mrb[0].mxu0
      %v5133 = vadd.f32 0.0, %v5132
      %v5134 = vpop.f32.mrb[0].mxu0
      %v5135 = vadd.f32 0.0, %v5134
      %v5136 = vpop.f32.mrb[0].mxu0
      %v5137 = vadd.f32 0.0, %v5136
      %5138 = vmatprep.mubr.bf16.mxu0 0
      %5139 = vmatmul.mubr.bf16.gmra.mrb[0].mxu0 %v767
      %v5140 = vpop.f32.mrb[0].mxu0
      %v5141 = vadd.f32 0.0, %v5140
      %v5142 = vpop.f32.mrb[0].mxu0
      %v5143 = vadd.f32 0.0, %v5142
      %v5144 = vpop.f32.mrb[0].mxu0
      %v5145 = vadd.f32 0.0, %v5144
      %v5146 = vpop.f32.mrb[0].mxu0
      %v5147 = vadd.f32 0.0, %v5146
      %5148 = vmatprep.mubr.bf16.mxu0 0
      %5149 = vmatmul.mubr.bf16.gmra.mrb[0].mxu0 %v770
      %v5150 = vpop.f32.mrb[0].mxu0
      %v5151 = vadd.f32 0.0, %v5150
      %v5152 = vpop.f32.mrb[0].mxu0
      %v5153 = vadd.f32 0.0, %v5152
      %v5154 = vpop.f32.mrb[0].mxu0
      %v5155 = vadd.f32 0.0, %v5154
      %v5156 = vpop.f32.mrb[0].mxu0
      %v5157 = vadd.f32 0.0, %v5156
      %5158 = vmatprep.mubr.bf16.mxu0 0
      %5159 = vmatmul.mubr.bf16.gmra.mrb[0].mxu0 %v773
      %v5160 = vpop.f32.mrb[0].mxu0
      %v5161 = vadd.f32 0.0, %v5160
      %v5162 = vpop.f32.mrb[0].mxu0
      %v5163 = vadd.f32 0.0, %v5162
      %v5164 = vpop.f32.mrb[0].mxu0
      %v5165 = vadd.f32 0.0, %v5164
      %v5166 = vpop.f32.mrb[0].mxu0
      %v5167 = vadd.f32 0.0, %v5166
      %5168 = vmatprep.mubr.bf16.mxu0 0
      %5169 = vmatmul.mubr.bf16.gmra.mrb[0].mxu0 %v776
      %v5170 = vpop.f32.mrb[0].mxu0
      %v5171 = vadd.f32 0.0, %v5170
      %v5172 = vpop.f32.mrb[0].mxu0
      %v5173 = vadd.f32 0.0, %v5172
      %v5174 = vpop.f32.mrb[0].mxu0
      %v5175 = vadd.f32 0.0, %v5174
      %v5176 = vpop.f32.mrb[0].mxu0
      %v5177 = vadd.f32 0.0, %v5176
      %5178 = vmatprep.mubr.bf16.mxu0 0
      %5179 = vmatmul.mubr.bf16.gmra.mrb[0].mxu0 %v779
      %v5180 = vpop.f32.mrb[0].mxu0
      %v5181 = vadd.f32 0.0, %v5180
      %v5182 = vpop.f32.mrb[0].mxu0
      %v5183 = vadd.f32 0.0, %v5182
      %v5184 = vpop.f32.mrb[0].mxu0
      %v5185 = vadd.f32 0.0, %v5184
      %v5186 = vpop.f32.mrb[0].mxu0
      %v5187 = vadd.f32 0.0, %v5186
      %5188 = vmatprep.mubr.bf16.mxu0 0
      %5189 = vmatmul.mubr.bf16.gmra.mrb[0].mxu0 %v782
      %v5190 = vpop.f32.mrb[0].mxu0
      %v5191 = vadd.f32 0.0, %v5190
      %v5192 = vpop.f32.mrb[0].mxu0
      %v5193 = vadd.f32 0.0, %v5192
      %v5194 = vpop.f32.mrb[0].mxu0
      %v5195 = vadd.f32 0.0, %v5194
      %v5196 = vpop.f32.mrb[0].mxu0
      %v5197 = vadd.f32 0.0, %v5196
      %5198 = vmatprep.mubr.bf16.mxu0 0
      %5199 = vmatmul.mubr.bf16.gmra.mrb[0].mxu0 %v785
      %v5200 = vpop.f32.mrb[0].mxu0
      %v5201 = vadd.f32 0.0, %v5200
      %v5202 = vpop.f32.mrb[0].mxu0
      %v5203 = vadd.f32 0.0, %v5202
      %v5204 = vpop.f32.mrb[0].mxu0
      %v5205 = vadd.f32 0.0, %v5204
      %v5206 = vpop.f32.mrb[0].mxu0
      %v5207 = vadd.f32 0.0, %v5206
      %5208 = vmatprep.mubr.bf16.mxu0 0
      %5209 = vmatmul.mubr.bf16.gmra.mrb[0].mxu0 %v788
      %v5210 = vpop.f32.mrb[0].mxu0
      %v5211 = vadd.f32 0.0, %v5210
      %v5212 = vpop.f32.mrb[0].mxu0
      %v5213 = vadd.f32 0.0, %v5212
      %v5214 = vpop.f32.mrb[0].mxu0
      %v5215 = vadd.f32 0.0, %v5214
      %v5216 = vpop.f32.mrb[0].mxu0
      %v5217 = vadd.f32 0.0, %v5216
      %5218 = vmatprep.mubr.bf16.mxu0 0
      %5219 = vmatmul.mubr.bf16.gmra.mrb[0].mxu0 %v791
      %v5220 = vpop.f32.mrb[0].mxu0
      %v5221 = vadd.f32 0.0, %v5220
      %v5222 = vpop.f32.mrb[0].mxu0
      %v5223 = vadd.f32 0.0, %v5222
      %v5224 = vpop.f32.mrb[0].mxu0
      %v5225 = vadd.f32 0.0, %v5224
      %v5226 = vpop.f32.mrb[0].mxu0
      %v5227 = vadd.f32 0.0, %v5226
      %5228 = vmatprep.mubr.bf16.mxu0 0
      %5229 = vmatmul.mubr.bf16.gmra.mrb[0].mxu0 %v794
      %v5230 = vpop.f32.mrb[0].mxu0
      %v5231 = vadd.f32 0.0, %v5230
      %v5232 = vpop.f32.mrb[0].mxu0
      %v5233 = vadd.f32 0.0, %v5232
      %v5234 = vpop.f32.mrb[0].mxu0
      %v5235 = vadd.f32 0.0, %v5234
      %v5236 = vpop.f32.mrb[0].mxu0
      %v5237 = vadd.f32 0.0, %v5236
      %5238 = vmatprep.mubr.bf16.mxu0 0
      %5239 = vmatmul.mubr.bf16.gmra.mrb[0].mxu0 %v797
      %v5240 = vpop.f32.mrb[0].mxu0
      %v5241 = vadd.f32 0.0, %v5240
      %v5242 = vpop.f32.mrb[0].mxu0
      %v5243 = vadd.f32 0.0, %v5242
      %v5244 = vpop.f32.mrb[0].mxu0
      %v5245 = vadd.f32 0.0, %v5244
      %v5246 = vpop.f32.mrb[0].mxu0
      %v5247 = vadd.f32 0.0, %v5246
      %5248 = vmatprep.mubr.bf16.mxu0 0
      %5249 = vmatmul.mubr.bf16.gmra.mrb[0].mxu0 %v800
      %v5250 = vpop.f32.mrb[0].mxu0
      %v5251 = vadd.f32 0.0, %v5250
      %v5252 = vpop.f32.mrb[0].mxu0
      %v5253 = vadd.f32 0.0, %v5252
      %v5254 = vpop.f32.mrb[0].mxu0
      %v5255 = vadd.f32 0.0, %v5254
      %v5256 = vpop.f32.mrb[0].mxu0
      %v5257 = vadd.f32 0.0, %v5256
      %5258 = vmatprep.mubr.bf16.mxu0 0
      %5259 = vmatmul.mubr.bf16.gmra.mrb[0].mxu0 %v803
      %v5260 = vpop.f32.mrb[0].mxu0
      %v5261 = vadd.f32 0.0, %v5260
      %v5262 = vpop.f32.mrb[0].mxu0
      %v5263 = vadd.f32 0.0, %v5262
      %v5264 = vpop.f32.mrb[0].mxu0
      %v5265 = vadd.f32 0.0, %v5264
      %v5266 = vpop.f32.mrb[0].mxu0
      %v5267 = vadd.f32 0.0, %v5266
      %5268 = vmatprep.mubr.bf16.mxu0 0
      %5269 = vmatmul.mubr.bf16.gmra.mrb[0].mxu0 %v806
      %v5270 = vpop.f32.mrb[0].mxu0
      %v5271 = vadd.f32 0.0, %v5270
      %v5272 = vpop.f32.mrb[0].mxu0
      %v5273 = vadd.f32 0.0, %v5272
      %v5274 = vpop.f32.mrb[0].mxu0
      %v5275 = vadd.f32 0.0, %v5274
      %v5276 = vpop.f32.mrb[0].mxu0
      %v5277 = vadd.f32 0.0, %v5276
      %5278 = vmatprep.mubr.bf16.mxu0 0
      %5279 = vmatmul.mubr.bf16.gmra.mrb[0].mxu0 %v809
      %v5280 = vpop.f32.mrb[0].mxu0
      %v5281 = vadd.f32 0.0, %v5280
      %v5282 = vpop.f32.mrb[0].mxu0
      %v5283 = vadd.f32 0.0, %v5282
      %v5284 = vpop.f32.mrb[0].mxu0
      %v5285 = vadd.f32 0.0, %v5284
      %v5286 = vpop.f32.mrb[0].mxu0
      %v5287 = vadd.f32 0.0, %v5286
      %5288 = vdwg.mxu0
      %v5289 = vadd.f32 %v4606, %v4971
      %v5290 = vadd.f32 %v4608, %v4973
      %v5291 = vadd.f32 %v4610, %v4975
      %v5292 = vadd.f32 %v4612, %v4977
      %v5293 = vadd.f32 %v4616, %v4981
      %v5294 = vadd.f32 %v4618, %v4983
      %v5295 = vadd.f32 %v4620, %v4985
      %v5296 = vadd.f32 %v4622, %v4987
      %v5297 = vadd.f32 %v4626, %v4991
      %v5298 = vadd.f32 %v4628, %v4993
      %v5299 = vadd.f32 %v4630, %v4995
      %v5300 = vadd.f32 %v4632, %v4997
      %v5301 = vadd.f32 %v4636, %v5001
      %v5302 = vadd.f32 %v4638, %v5003
      %v5303 = vadd.f32 %v4640, %v5005
      %v5304 = vadd.f32 %v4642, %v5007
      %v5305 = vadd.f32 %v4646, %v5011
      %v5306 = vadd.f32 %v4648, %v5013
      %v5307 = vadd.f32 %v4650, %v5015
      %v5308 = vadd.f32 %v4652, %v5017
      %v5309 = vadd.f32 %v4656, %v5021
      %v5310 = vadd.f32 %v4658, %v5023
      %v5311 = vadd.f32 %v4660, %v5025
      %v5312 = vadd.f32 %v4662, %v5027
      %v5313 = vadd.f32 %v4666, %v5031
      %v5314 = vadd.f32 %v4668, %v5033
      %v5315 = vadd.f32 %v4670, %v5035
      %v5316 = vadd.f32 %v4672, %v5037
      %v5317 = vadd.f32 %v4676, %v5041
      %v5318 = vadd.f32 %v4678, %v5043
      %v5319 = vadd.f32 %v4680, %v5045
      %v5320 = vadd.f32 %v4682, %v5047
      %v5321 = vadd.f32 %v4686, %v5051
      %v5322 = vadd.f32 %v4688, %v5053
      %v5323 = vadd.f32 %v4690, %v5055
      %v5324 = vadd.f32 %v4692, %v5057
      %v5325 = vadd.f32 %v4696, %v5061
      %v5326 = vadd.f32 %v4698, %v5063
      %v5327 = vadd.f32 %v4700, %v5065
      %v5328 = vadd.f32 %v4702, %v5067
      %v5329 = vadd.f32 %v4706, %v5071
      %v5330 = vadd.f32 %v4708, %v5073
      %v5331 = vadd.f32 %v4710, %v5075
      %v5332 = vadd.f32 %v4712, %v5077
      %v5333 = vadd.f32 %v4716, %v5081
      %v5334 = vadd.f32 %v4718, %v5083
      %v5335 = vadd.f32 %v4720, %v5085
      %v5336 = vadd.f32 %v4722, %v5087
      %v5337 = vadd.f32 %v4726, %v5091
      %v5338 = vadd.f32 %v4728, %v5093
      %v5339 = vadd.f32 %v4730, %v5095
      %v5340 = vadd.f32 %v4732, %v5097
      %v5341 = vadd.f32 %v4736, %v5101
      %v5342 = vadd.f32 %v4738, %v5103
      %v5343 = vadd.f32 %v4740, %v5105
      %v5344 = vadd.f32 %v4742, %v5107
      %v5345 = vadd.f32 %v4746, %v5111
      %v5346 = vadd.f32 %v4748, %v5113
      %v5347 = vadd.f32 %v4750, %v5115
      %v5348 = vadd.f32 %v4752, %v5117
      %v5349 = vadd.f32 %v4756, %v5121
      %v5350 = vadd.f32 %v4758, %v5123
      %v5351 = vadd.f32 %v4760, %v5125
      %v5352 = vadd.f32 %v4762, %v5127
      %v5353 = vadd.f32 %v4766, %v5131
      %v5354 = vadd.f32 %v4768, %v5133
      %v5355 = vadd.f32 %v4770, %v5135
      %v5356 = vadd.f32 %v4772, %v5137
      %v5357 = vadd.f32 %v4776, %v5141
      %v5358 = vadd.f32 %v4778, %v5143
      %v5359 = vadd.f32 %v4780, %v5145
      %v5360 = vadd.f32 %v4782, %v5147
      %v5361 = vadd.f32 %v4786, %v5151
      %v5362 = vadd.f32 %v4788, %v5153
      %v5363 = vadd.f32 %v4790, %v5155
      %v5364 = vadd.f32 %v4792, %v5157
      %v5365 = vadd.f32 %v4796, %v5161
      %v5366 = vadd.f32 %v4798, %v5163
      %v5367 = vadd.f32 %v4800, %v5165
      %v5368 = vadd.f32 %v4802, %v5167
      %v5369 = vadd.f32 %v4806, %v5171
      %v5370 = vadd.f32 %v4808, %v5173
      %v5371 = vadd.f32 %v4810, %v5175
      %v5372 = vadd.f32 %v4812, %v5177
      %v5373 = vadd.f32 %v4816, %v5181
      %v5374 = vadd.f32 %v4818, %v5183
      %v5375 = vadd.f32 %v4820, %v5185
      %v5376 = vadd.f32 %v4822, %v5187
      %v5377 = vadd.f32 %v4826, %v5191
      %v5378 = vadd.f32 %v4828, %v5193
      %v5379 = vadd.f32 %v4830, %v5195
      %v5380 = vadd.f32 %v4832, %v5197
      %v5381 = vadd.f32 %v4836, %v5201
      %v5382 = vadd.f32 %v4838, %v5203
      %v5383 = vadd.f32 %v4840, %v5205
      %v5384 = vadd.f32 %v4842, %v5207
      %v5385 = vadd.f32 %v4846, %v5211
      %v5386 = vadd.f32 %v4848, %v5213
      %v5387 = vadd.f32 %v4850, %v5215
      %v5388 = vadd.f32 %v4852, %v5217
      %v5389 = vadd.f32 %v4856, %v5221
      %v5390 = vadd.f32 %v4858, %v5223
      %v5391 = vadd.f32 %v4860, %v5225
      %v5392 = vadd.f32 %v4862, %v5227
      %v5393 = vadd.f32 %v4866, %v5231
      %v5394 = vadd.f32 %v4868, %v5233
      %v5395 = vadd.f32 %v4870, %v5235
      %v5396 = vadd.f32 %v4872, %v5237
      %v5397 = vadd.f32 %v4876, %v5241
      %v5398 = vadd.f32 %v4878, %v5243
      %v5399 = vadd.f32 %v4880, %v5245
      %v5400 = vadd.f32 %v4882, %v5247
      %v5401 = vadd.f32 %v4886, %v5251
      %v5402 = vadd.f32 %v4888, %v5253
      %v5403 = vadd.f32 %v4890, %v5255
      %v5404 = vadd.f32 %v4892, %v5257
      %v5405 = vadd.f32 %v4896, %v5261
      %v5406 = vadd.f32 %v4898, %v5263
      %v5407 = vadd.f32 %v4900, %v5265
      %v5408 = vadd.f32 %v4902, %v5267
      %v5409 = vadd.f32 %v4906, %v5271
      %v5410 = vadd.f32 %v4908, %v5273
      %v5411 = vadd.f32 %v4910, %v5275
      %v5412 = vadd.f32 %v4912, %v5277
      %v5413 = vadd.f32 %v4916, %v5281
      %v5414 = vadd.f32 %v4918, %v5283
      %v5415 = vadd.f32 %v4920, %v5285
      %v5416 = vadd.f32 %v4922, %v5287
      %v5417 = vmax.f32 %v5289, 0.0
      %v5418 = vmax.f32 %v5290, 0.0
      %v5419 = vmax.f32 %v5291, 0.0
      %v5420 = vmax.f32 %v5292, 0.0
      %v5421 = vmax.f32 %v5293, 0.0
      %v5422 = vmax.f32 %v5294, 0.0
      %v5423 = vmax.f32 %v5295, 0.0
      %v5424 = vmax.f32 %v5296, 0.0
      %v5425 = vmax.f32 %v5297, 0.0
      %v5426 = vmax.f32 %v5298, 0.0
      %v5427 = vmax.f32 %v5299, 0.0
      %v5428 = vmax.f32 %v5300, 0.0
      %v5429 = vmax.f32 %v5301, 0.0
      %v5430 = vmax.f32 %v5302, 0.0
      %v5431 = vmax.f32 %v5303, 0.0
      %v5432 = vmax.f32 %v5304, 0.0
      %v5433 = vmax.f32 %v5305, 0.0
      %v5434 = vmax.f32 %v5306, 0.0
      %v5435 = vmax.f32 %v5307, 0.0
      %v5436 = vmax.f32 %v5308, 0.0
      %v5437 = vmax.f32 %v5309, 0.0
      %v5438 = vmax.f32 %v5310, 0.0
      %v5439 = vmax.f32 %v5311, 0.0
      %v5440 = vmax.f32 %v5312, 0.0
      %v5441 = vmax.f32 %v5313, 0.0
      %v5442 = vmax.f32 %v5314, 0.0
      %v5443 = vmax.f32 %v5315, 0.0
      %v5444 = vmax.f32 %v5316, 0.0
      %v5445 = vmax.f32 %v5317, 0.0
      %v5446 = vmax.f32 %v5318, 0.0
      %v5447 = vmax.f32 %v5319, 0.0
      %v5448 = vmax.f32 %v5320, 0.0
      %v5449 = vmax.f32 %v5321, 0.0
      %v5450 = vmax.f32 %v5322, 0.0
      %v5451 = vmax.f32 %v5323, 0.0
      %v5452 = vmax.f32 %v5324, 0.0
      %v5453 = vmax.f32 %v5325, 0.0
      %v5454 = vmax.f32 %v5326, 0.0
      %v5455 = vmax.f32 %v5327, 0.0
      %v5456 = vmax.f32 %v5328, 0.0
      %v5457 = vmax.f32 %v5329, 0.0
      %v5458 = vmax.f32 %v5330, 0.0
      %v5459 = vmax.f32 %v5331, 0.0
      %v5460 = vmax.f32 %v5332, 0.0
      %v5461 = vmax.f32 %v5333, 0.0
      %v5462 = vmax.f32 %v5334, 0.0
      %v5463 = vmax.f32 %v5335, 0.0
      %v5464 = vmax.f32 %v5336, 0.0
      %v5465 = vmax.f32 %v5337, 0.0
      %v5466 = vmax.f32 %v5338, 0.0
      %v5467 = vmax.f32 %v5339, 0.0
      %v5468 = vmax.f32 %v5340, 0.0
      %v5469 = vmax.f32 %v5341, 0.0
      %v5470 = vmax.f32 %v5342, 0.0
      %v5471 = vmax.f32 %v5343, 0.0
      %v5472 = vmax.f32 %v5344, 0.0
      %v5473 = vmax.f32 %v5345, 0.0
      %v5474 = vmax.f32 %v5346, 0.0
      %v5475 = vmax.f32 %v5347, 0.0
      %v5476 = vmax.f32 %v5348, 0.0
      %v5477 = vmax.f32 %v5349, 0.0
      %v5478 = vmax.f32 %v5350, 0.0
      %v5479 = vmax.f32 %v5351, 0.0
      %v5480 = vmax.f32 %v5352, 0.0
      %v5481 = vmax.f32 %v5353, 0.0
      %v5482 = vmax.f32 %v5354, 0.0
      %v5483 = vmax.f32 %v5355, 0.0
      %v5484 = vmax.f32 %v5356, 0.0
      %v5485 = vmax.f32 %v5357, 0.0
      %v5486 = vmax.f32 %v5358, 0.0
      %v5487 = vmax.f32 %v5359, 0.0
      %v5488 = vmax.f32 %v5360, 0.0
      %v5489 = vmax.f32 %v5361, 0.0
      %v5490 = vmax.f32 %v5362, 0.0
      %v5491 = vmax.f32 %v5363, 0.0
      %v5492 = vmax.f32 %v5364, 0.0
      %v5493 = vmax.f32 %v5365, 0.0
      %v5494 = vmax.f32 %v5366, 0.0
      %v5495 = vmax.f32 %v5367, 0.0
      %v5496 = vmax.f32 %v5368, 0.0
      %v5497 = vmax.f32 %v5369, 0.0
      %v5498 = vmax.f32 %v5370, 0.0
      %v5499 = vmax.f32 %v5371, 0.0
      %v5500 = vmax.f32 %v5372, 0.0
      %v5501 = vmax.f32 %v5373, 0.0
      %v5502 = vmax.f32 %v5374, 0.0
      %v5503 = vmax.f32 %v5375, 0.0
      %v5504 = vmax.f32 %v5376, 0.0
      %v5505 = vmax.f32 %v5377, 0.0
      %v5506 = vmax.f32 %v5378, 0.0
      %v5507 = vmax.f32 %v5379, 0.0
      %v5508 = vmax.f32 %v5380, 0.0
      %v5509 = vmax.f32 %v5381, 0.0
      %v5510 = vmax.f32 %v5382, 0.0
      %v5511 = vmax.f32 %v5383, 0.0
      %v5512 = vmax.f32 %v5384, 0.0
      %v5513 = vmax.f32 %v5385, 0.0
      %v5514 = vmax.f32 %v5386, 0.0
      %v5515 = vmax.f32 %v5387, 0.0
      %v5516 = vmax.f32 %v5388, 0.0
      %v5517 = vmax.f32 %v5389, 0.0
      %v5518 = vmax.f32 %v5390, 0.0
      %v5519 = vmax.f32 %v5391, 0.0
      %v5520 = vmax.f32 %v5392, 0.0
      %v5521 = vmax.f32 %v5393, 0.0
      %v5522 = vmax.f32 %v5394, 0.0
      %v5523 = vmax.f32 %v5395, 0.0
      %v5524 = vmax.f32 %v5396, 0.0
      %v5525 = vmax.f32 %v5397, 0.0
      %v5526 = vmax.f32 %v5398, 0.0
      %v5527 = vmax.f32 %v5399, 0.0
      %v5528 = vmax.f32 %v5400, 0.0
      %v5529 = vmax.f32 %v5401, 0.0
      %v5530 = vmax.f32 %v5402, 0.0
      %v5531 = vmax.f32 %v5403, 0.0
      %v5532 = vmax.f32 %v5404, 0.0
      %v5533 = vmax.f32 %v5405, 0.0
      %v5534 = vmax.f32 %v5406, 0.0
      %v5535 = vmax.f32 %v5407, 0.0
      %v5536 = vmax.f32 %v5408, 0.0
      %v5537 = vmax.f32 %v5409, 0.0
      %v5538 = vmax.f32 %v5410, 0.0
      %v5539 = vmax.f32 %v5411, 0.0
      %v5540 = vmax.f32 %v5412, 0.0
      %v5541 = vmax.f32 %v5413, 0.0
      %v5542 = vmax.f32 %v5414, 0.0
      %v5543 = vmax.f32 %v5415, 0.0
      %v5544 = vmax.f32 %v5416, 0.0
      %v5545 = vpack.c.bf16 %v5419, %v5417
      %v5546 = vpack.c.bf16 %v5420, %v5418
      %v5547 = vpack.c.bf16 %v5423, %v5421
      %v5548 = vpack.c.bf16 %v5424, %v5422
      %v5549 = vpack.c.bf16 %v5427, %v5425
      %v5550 = vpack.c.bf16 %v5428, %v5426
      %v5551 = vpack.c.bf16 %v5431, %v5429
      %v5552 = vpack.c.bf16 %v5432, %v5430
      %v5553 = vpack.c.bf16 %v5435, %v5433
      %v5554 = vpack.c.bf16 %v5436, %v5434
      %v5555 = vpack.c.bf16 %v5439, %v5437
      %v5556 = vpack.c.bf16 %v5440, %v5438
      %v5557 = vpack.c.bf16 %v5443, %v5441
      %v5558 = vpack.c.bf16 %v5444, %v5442
      %v5559 = vpack.c.bf16 %v5447, %v5445
      %v5560 = vpack.c.bf16 %v5448, %v5446
      %v5561 = vpack.c.bf16 %v5451, %v5449
      %v5562 = vpack.c.bf16 %v5452, %v5450
      %v5563 = vpack.c.bf16 %v5455, %v5453
      %v5564 = vpack.c.bf16 %v5456, %v5454
      %v5565 = vpack.c.bf16 %v5459, %v5457
      %v5566 = vpack.c.bf16 %v5460, %v5458
      %v5567 = vpack.c.bf16 %v5463, %v5461
      %v5568 = vpack.c.bf16 %v5464, %v5462
      %v5569 = vpack.c.bf16 %v5467, %v5465
      %v5570 = vpack.c.bf16 %v5468, %v5466
      %v5571 = vpack.c.bf16 %v5471, %v5469
      %v5572 = vpack.c.bf16 %v5472, %v5470
      %v5573 = vpack.c.bf16 %v5475, %v5473
      %v5574 = vpack.c.bf16 %v5476, %v5474
      %v5575 = vpack.c.bf16 %v5479, %v5477
      %v5576 = vpack.c.bf16 %v5480, %v5478
      %v5577 = vpack.c.bf16 %v5483, %v5481
      %v5578 = vpack.c.bf16 %v5484, %v5482
      %v5579 = vpack.c.bf16 %v5487, %v5485
      %v5580 = vpack.c.bf16 %v5488, %v5486
      %v5581 = vpack.c.bf16 %v5491, %v5489
      %v5582 = vpack.c.bf16 %v5492, %v5490
      %v5583 = vpack.c.bf16 %v5495, %v5493
      %v5584 = vpack.c.bf16 %v5496, %v5494
      %v5585 = vpack.c.bf16 %v5499, %v5497
      %v5586 = vpack.c.bf16 %v5500, %v5498
      %v5587 = vpack.c.bf16 %v5503, %v5501
      %v5588 = vpack.c.bf16 %v5504, %v5502
      %v5589 = vpack.c.bf16 %v5507, %v5505
      %v5590 = vpack.c.bf16 %v5508, %v5506
      %v5591 = vpack.c.bf16 %v5511, %v5509
      %v5592 = vpack.c.bf16 %v5512, %v5510
      %v5593 = vpack.c.bf16 %v5515, %v5513
      %v5594 = vpack.c.bf16 %v5516, %v5514
      %v5595 = vpack.c.bf16 %v5519, %v5517
      %v5596 = vpack.c.bf16 %v5520, %v5518
      %v5597 = vpack.c.bf16 %v5523, %v5521
      %v5598 = vpack.c.bf16 %v5524, %v5522
      %v5599 = vpack.c.bf16 %v5527, %v5525
      %v5600 = vpack.c.bf16 %v5528, %v5526
      %v5601 = vpack.c.bf16 %v5531, %v5529
      %v5602 = vpack.c.bf16 %v5532, %v5530
      %v5603 = vpack.c.bf16 %v5535, %v5533
      %v5604 = vpack.c.bf16 %v5536, %v5534
      %v5605 = vpack.c.bf16 %v5539, %v5537
      %v5606 = vpack.c.bf16 %v5540, %v5538
      %v5607 = vpack.c.bf16 %v5543, %v5541
      %v5608 = vpack.c.bf16 %v5544, %v5542
      %s5609 = scalar_lea.vmem %s3, 1280
      %v5610 = vld [vmem:[%s5609] sm:$0xff]
      %v5611 = vld [vmem:[%s5609 + $0x8] sm:$0xff]
      %v5612 = vld [vmem:[%s5609 + $0x10] sm:$0xff]
      %v5613 = vld [vmem:[%s5609 + $0x18] sm:$0xff]
      %v5614 = vld [vmem:[%s5609 + $0x20] sm:$0xff]
      %v5615 = vld [vmem:[%s5609 + $0x28] sm:$0xff]
      %v5616 = vld [vmem:[%s5609 + $0x30] sm:$0xff]
      %v5617 = vld [vmem:[%s5609 + $0x38] sm:$0xff]
      %v5618 = vld [vmem:[%s5609 + $0x40] sm:$0xff]
      %v5619 = vld [vmem:[%s5609 + $0x48] sm:$0xff]
      %v5620 = vld [vmem:[%s5609 + $0x50] sm:$0xff]
      %v5621 = vld [vmem:[%s5609 + $0x58] sm:$0xff]
      %v5622 = vld [vmem:[%s5609 + $0x60] sm:$0xff]
      %v5623 = vld [vmem:[%s5609 + $0x68] sm:$0xff]
      %v5624 = vld [vmem:[%s5609 + $0x70] sm:$0xff]
      %v5625 = vld [vmem:[%s5609 + $0x78] sm:$0xff]
      %v5626 = vld [vmem:[%s5609 + $0x80] sm:$0xff]
      %v5627 = vld [vmem:[%s5609 + $0x88] sm:$0xff]
      %v5628 = vld [vmem:[%s5609 + $0x90] sm:$0xff]
      %v5629 = vld [vmem:[%s5609 + $0x98] sm:$0xff]
      %v5630 = vld [vmem:[%s5609 + $0xa0] sm:$0xff]
      %v5631 = vld [vmem:[%s5609 + $0xa8] sm:$0xff]
      %v5632 = vld [vmem:[%s5609 + $0xb0] sm:$0xff]
      %v5633 = vld [vmem:[%s5609 + $0xb8] sm:$0xff]
      %v5634 = vld [vmem:[%s5609 + $0xc0] sm:$0xff]
      %v5635 = vld [vmem:[%s5609 + $0xc8] sm:$0xff]
      %v5636 = vld [vmem:[%s5609 + $0xd0] sm:$0xff]
      %v5637 = vld [vmem:[%s5609 + $0xd8] sm:$0xff]
      %v5638 = vld [vmem:[%s5609 + $0xe0] sm:$0xff]
      %v5639 = vld [vmem:[%s5609 + $0xe8] sm:$0xff]
      %v5640 = vld [vmem:[%s5609 + $0xf0] sm:$0xff]
      %v5641 = vld [vmem:[%s5609 + $0xf8] sm:$0xff]
      %s5642 = scalar_lea.vmem %s4, 10
      %v5643 = vld [vmem:[%s5642] sm:$0x3]
      %v5645 = vlaneseq
      %v5646 = vshrl.u32 %v5645, 7
      %v5647 = vsub.s32 0, %v5646
      %v5648 = vrot.slane %v5643, %v5647
      %v5649 = vlaneseq
      %v5650 = vshrl.u32 %v5649, 7
      %v5651 = vsub.s32 1, %v5650
      %v5652 = vrot.slane %v5643, %v5651
      %v5687 = vunpack.c.l.b16 %v5610
      %v5688 = vunpack.c.h.b16 %v5610
      %v5689 = vunpack.c.l.b16 %v5611
      %v5690 = vunpack.c.h.b16 %v5611
      %v5691 = vunpack.c.l.b16 %v5612
      %v5692 = vunpack.c.h.b16 %v5612
      %v5693 = vunpack.c.l.b16 %v5613
      %v5694 = vunpack.c.h.b16 %v5613
      %v5695 = vunpack.c.l.b16 %v5614
      %v5696 = vunpack.c.h.b16 %v5614
      %v5697 = vunpack.c.l.b16 %v5615
      %v5698 = vunpack.c.h.b16 %v5615
      %v5699 = vunpack.c.l.b16 %v5616
      %v5700 = vunpack.c.h.b16 %v5616
      %v5701 = vunpack.c.l.b16 %v5617
      %v5702 = vunpack.c.h.b16 %v5617
      %v5703 = vunpack.c.l.b16 %v5618
      %v5704 = vunpack.c.h.b16 %v5618
      %v5705 = vunpack.c.l.b16 %v5619
      %v5706 = vunpack.c.h.b16 %v5619
      %v5707 = vunpack.c.l.b16 %v5620
      %v5708 = vunpack.c.h.b16 %v5620
      %v5709 = vunpack.c.l.b16 %v5621
      %v5710 = vunpack.c.h.b16 %v5621
      %v5711 = vunpack.c.l.b16 %v5622
      %v5712 = vunpack.c.h.b16 %v5622
      %v5713 = vunpack.c.l.b16 %v5623
      %v5714 = vunpack.c.h.b16 %v5623
      %v5715 = vunpack.c.l.b16 %v5624
      %v5716 = vunpack.c.h.b16 %v5624
      %v5717 = vunpack.c.l.b16 %v5625
      %v5718 = vunpack.c.h.b16 %v5625
      %v5719 = vunpack.c.l.b16 %v5626
      %v5720 = vunpack.c.h.b16 %v5626
      %v5721 = vunpack.c.l.b16 %v5627
      %v5722 = vunpack.c.h.b16 %v5627
      %v5723 = vunpack.c.l.b16 %v5628
      %v5724 = vunpack.c.h.b16 %v5628
      %v5725 = vunpack.c.l.b16 %v5629
      %v5726 = vunpack.c.h.b16 %v5629
      %v5727 = vunpack.c.l.b16 %v5630
      %v5728 = vunpack.c.h.b16 %v5630
      %v5729 = vunpack.c.l.b16 %v5631
      %v5730 = vunpack.c.h.b16 %v5631
      %v5731 = vunpack.c.l.b16 %v5632
      %v5732 = vunpack.c.h.b16 %v5632
      %v5733 = vunpack.c.l.b16 %v5633
      %v5734 = vunpack.c.h.b16 %v5633
      %v5735 = vunpack.c.l.b16 %v5634
      %v5736 = vunpack.c.h.b16 %v5634
      %v5737 = vunpack.c.l.b16 %v5635
      %v5738 = vunpack.c.h.b16 %v5635
      %v5739 = vunpack.c.l.b16 %v5636
      %v5740 = vunpack.c.h.b16 %v5636
      %v5741 = vunpack.c.l.b16 %v5637
      %v5742 = vunpack.c.h.b16 %v5637
      %v5743 = vunpack.c.l.b16 %v5638
      %v5744 = vunpack.c.h.b16 %v5638
      %v5745 = vunpack.c.l.b16 %v5639
      %v5746 = vunpack.c.h.b16 %v5639
      %v5747 = vunpack.c.l.b16 %v5640
      %v5748 = vunpack.c.h.b16 %v5640
      %v5749 = vunpack.c.l.b16 %v5641
      %v5750 = vunpack.c.h.b16 %v5641
      %v5751 = vpack.c.b16 %v5689, %v5687
      %v5752 = vpack.c.b16 %v5690, %v5688
      %v5753 = vpack.c.b16 %v5693, %v5691
      %v5754 = vpack.c.b16 %v5694, %v5692
      %v5755 = vpack.c.b16 %v5697, %v5695
      %v5756 = vpack.c.b16 %v5698, %v5696
      %v5757 = vpack.c.b16 %v5701, %v5699
      %v5758 = vpack.c.b16 %v5702, %v5700
      %v5759 = vpack.c.b16 %v5705, %v5703
      %v5760 = vpack.c.b16 %v5706, %v5704
      %v5761 = vpack.c.b16 %v5709, %v5707
      %v5762 = vpack.c.b16 %v5710, %v5708
      %v5763 = vpack.c.b16 %v5713, %v5711
      %v5764 = vpack.c.b16 %v5714, %v5712
      %v5765 = vpack.c.b16 %v5717, %v5715
      %v5766 = vpack.c.b16 %v5718, %v5716
      %v5767 = vpack.c.b16 %v5721, %v5719
      %v5768 = vpack.c.b16 %v5722, %v5720
      %v5769 = vpack.c.b16 %v5725, %v5723
      %v5770 = vpack.c.b16 %v5726, %v5724
      %v5771 = vpack.c.b16 %v5729, %v5727
      %v5772 = vpack.c.b16 %v5730, %v5728
      %v5773 = vpack.c.b16 %v5733, %v5731
      %v5774 = vpack.c.b16 %v5734, %v5732
      %v5775 = vpack.c.b16 %v5737, %v5735
      %v5776 = vpack.c.b16 %v5738, %v5736
      %v5777 = vpack.c.b16 %v5741, %v5739
      %v5778 = vpack.c.b16 %v5742, %v5740
      %v5779 = vpack.c.b16 %v5745, %v5743
      %v5780 = vpack.c.b16 %v5746, %v5744
      %v5781 = vpack.c.b16 %v5749, %v5747
      %v5782 = vpack.c.b16 %v5750, %v5748
      %5815 = vmatprep.subr.bf16.mxu0 %v5752
      %5816 = vmatpush1.bf16.msra.mxu0 %v5751
      %5817 = vmatprep.subr.bf16.mxu0 %v5754
      %5818 = vmatpush1.bf16.msra.mxu0 %v5753
      %5819 = vmatprep.subr.bf16.mxu0 %v5756
      %5820 = vmatpush1.bf16.msra.mxu0 %v5755
      %5821 = vmatprep.subr.bf16.mxu0 %v5758
      %5822 = vmatpush1.bf16.msra.mxu0 %v5757
      %5823 = vmatprep.subr.bf16.mxu0 %v5760
      %5824 = vmatpush1.bf16.msra.mxu0 %v5759
      %5825 = vmatprep.subr.bf16.mxu0 %v5762
      %5826 = vmatpush1.bf16.msra.mxu0 %v5761
      %5827 = vmatprep.subr.bf16.mxu0 %v5764
      %5828 = vmatpush1.bf16.msra.mxu0 %v5763
      %5829 = vmatprep.subr.bf16.mxu0 %v5766
      %5830 = vmatpush1.bf16.msra.mxu0 %v5765
      %5831 = vmatprep.subr.bf16.mxu0 %v5768
      %5832 = vmatpush1.bf16.msra.mxu0 %v5767
      %5833 = vmatprep.subr.bf16.mxu0 %v5770
      %5834 = vmatpush1.bf16.msra.mxu0 %v5769
      %5835 = vmatprep.subr.bf16.mxu0 %v5772
      %5836 = vmatpush1.bf16.msra.mxu0 %v5771
      %5837 = vmatprep.subr.bf16.mxu0 %v5774
      %5838 = vmatpush1.bf16.msra.mxu0 %v5773
      %5839 = vmatprep.subr.bf16.mxu0 %v5776
      %5840 = vmatpush1.bf16.msra.mxu0 %v5775
      %5841 = vmatprep.subr.bf16.mxu0 %v5778
      %5842 = vmatpush1.bf16.msra.mxu0 %v5777
      %5843 = vmatprep.subr.bf16.mxu0 %v5780
      %5844 = vmatpush1.bf16.msra.mxu0 %v5779
      %5845 = vmatprep.subr.bf16.mxu0 %v5782
      %5846 = vmatpush1.bf16.msra.mxu0 %v5781
      %5847 = vmatprep.mubr.bf16.mxu0 %v5546
      %5848 = vmatmul.mubr.bf16.gmra.mrb[0].mxu0 %v5545
      %v5849 = vpop.f32.mrb[0].mxu0
      %v5850 = vadd.f32 %v5648, %v5849
      %v5851 = vpop.f32.mrb[0].mxu0
      %v5852 = vadd.f32 %v5652, %v5851
      %v5853 = vpop.f32.mrb[0].mxu0
      %v5854 = vadd.f32 %v5648, %v5853
      %v5855 = vpop.f32.mrb[0].mxu0
      %v5856 = vadd.f32 %v5652, %v5855
      %5857 = vmatprep.mubr.bf16.mxu0 %v5548
      %5858 = vmatmul.mubr.bf16.gmra.mrb[0].mxu0 %v5547
      %v5859 = vpop.f32.mrb[0].mxu0
      %v5860 = vadd.f32 %v5648, %v5859
      %v5861 = vpop.f32.mrb[0].mxu0
      %v5862 = vadd.f32 %v5652, %v5861
      %v5863 = vpop.f32.mrb[0].mxu0
      %v5864 = vadd.f32 %v5648, %v5863
      %v5865 = vpop.f32.mrb[0].mxu0
      %v5866 = vadd.f32 %v5652, %v5865
      %5867 = vmatprep.mubr.bf16.mxu0 %v5550
      %5868 = vmatmul.mubr.bf16.gmra.mrb[0].mxu0 %v5549
      %v5869 = vpop.f32.mrb[0].mxu0
      %v5870 = vadd.f32 %v5648, %v5869
      %v5871 = vpop.f32.mrb[0].mxu0
      %v5872 = vadd.f32 %v5652, %v5871
      %v5873 = vpop.f32.mrb[0].mxu0
      %v5874 = vadd.f32 %v5648, %v5873
      %v5875 = vpop.f32.mrb[0].mxu0
      %v5876 = vadd.f32 %v5652, %v5875
      %5877 = vmatprep.mubr.bf16.mxu0 %v5552
      %5878 = vmatmul.mubr.bf16.gmra.mrb[0].mxu0 %v5551
      %v5879 = vpop.f32.mrb[0].mxu0
      %v5880 = vadd.f32 %v5648, %v5879
      %v5881 = vpop.f32.mrb[0].mxu0
      %v5882 = vadd.f32 %v5652, %v5881
      %v5883 = vpop.f32.mrb[0].mxu0
      %v5884 = vadd.f32 %v5648, %v5883
      %v5885 = vpop.f32.mrb[0].mxu0
      %v5886 = vadd.f32 %v5652, %v5885
      %5887 = vmatprep.mubr.bf16.mxu0 %v5554
      %5888 = vmatmul.mubr.bf16.gmra.mrb[0].mxu0 %v5553
      %v5889 = vpop.f32.mrb[0].mxu0
      %v5890 = vadd.f32 %v5648, %v5889
      %v5891 = vpop.f32.mrb[0].mxu0
      %v5892 = vadd.f32 %v5652, %v5891
      %v5893 = vpop.f32.mrb[0].mxu0
      %v5894 = vadd.f32 %v5648, %v5893
      %v5895 = vpop.f32.mrb[0].mxu0
      %v5896 = vadd.f32 %v5652, %v5895
      %5897 = vmatprep.mubr.bf16.mxu0 %v5556
      %5898 = vmatmul.mubr.bf16.gmra.mrb[0].mxu0 %v5555
      %v5899 = vpop.f32.mrb[0].mxu0
      %v5900 = vadd.f32 %v5648, %v5899
      %v5901 = vpop.f32.mrb[0].mxu0
      %v5902 = vadd.f32 %v5652, %v5901
      %v5903 = vpop.f32.mrb[0].mxu0
      %v5904 = vadd.f32 %v5648, %v5903
      %v5905 = vpop.f32.mrb[0].mxu0
      %v5906 = vadd.f32 %v5652, %v5905
      %5907 = vmatprep.mubr.bf16.mxu0 %v5558
      %5908 = vmatmul.mubr.bf16.gmra.mrb[0].mxu0 %v5557
      %v5909 = vpop.f32.mrb[0].mxu0
      %v5910 = vadd.f32 %v5648, %v5909
      %v5911 = vpop.f32.mrb[0].mxu0
      %v5912 = vadd.f32 %v5652, %v5911
      %v5913 = vpop.f32.mrb[0].mxu0
      %v5914 = vadd.f32 %v5648, %v5913
      %v5915 = vpop.f32.mrb[0].mxu0
      %v5916 = vadd.f32 %v5652, %v5915
      %5917 = vmatprep.mubr.bf16.mxu0 %v5560
      %5918 = vmatmul.mubr.bf16.gmra.mrb[0].mxu0 %v5559
      %v5919 = vpop.f32.mrb[0].mxu0
      %v5920 = vadd.f32 %v5648, %v5919
      %v5921 = vpop.f32.mrb[0].mxu0
      %v5922 = vadd.f32 %v5652, %v5921
      %v5923 = vpop.f32.mrb[0].mxu0
      %v5924 = vadd.f32 %v5648, %v5923
      %v5925 = vpop.f32.mrb[0].mxu0
      %v5926 = vadd.f32 %v5652, %v5925
      %5927 = vmatprep.mubr.bf16.mxu0 %v5562
      %5928 = vmatmul.mubr.bf16.gmra.mrb[0].mxu0 %v5561
      %v5929 = vpop.f32.mrb[0].mxu0
      %v5930 = vadd.f32 %v5648, %v5929
      %v5931 = vpop.f32.mrb[0].mxu0
      %v5932 = vadd.f32 %v5652, %v5931
      %v5933 = vpop.f32.mrb[0].mxu0
      %v5934 = vadd.f32 %v5648, %v5933
      %v5935 = vpop.f32.mrb[0].mxu0
      %v5936 = vadd.f32 %v5652, %v5935
      %5937 = vmatprep.mubr.bf16.mxu0 %v5564
      %5938 = vmatmul.mubr.bf16.gmra.mrb[0].mxu0 %v5563
      %v5939 = vpop.f32.mrb[0].mxu0
      %v5940 = vadd.f32 %v5648, %v5939
      %v5941 = vpop.f32.mrb[0].mxu0
      %v5942 = vadd.f32 %v5652, %v5941
      %v5943 = vpop.f32.mrb[0].mxu0
      %v5944 = vadd.f32 %v5648, %v5943
      %v5945 = vpop.f32.mrb[0].mxu0
      %v5946 = vadd.f32 %v5652, %v5945
      %5947 = vmatprep.mubr.bf16.mxu0 %v5566
      %5948 = vmatmul.mubr.bf16.gmra.mrb[0].mxu0 %v5565
      %v5949 = vpop.f32.mrb[0].mxu0
      %v5950 = vadd.f32 %v5648, %v5949
      %v5951 = vpop.f32.mrb[0].mxu0
      %v5952 = vadd.f32 %v5652, %v5951
      %v5953 = vpop.f32.mrb[0].mxu0
      %v5954 = vadd.f32 %v5648, %v5953
      %v5955 = vpop.f32.mrb[0].mxu0
      %v5956 = vadd.f32 %v5652, %v5955
      %5957 = vmatprep.mubr.bf16.mxu0 %v5568
      %5958 = vmatmul.mubr.bf16.gmra.mrb[0].mxu0 %v5567
      %v5959 = vpop.f32.mrb[0].mxu0
      %v5960 = vadd.f32 %v5648, %v5959
      %v5961 = vpop.f32.mrb[0].mxu0
      %v5962 = vadd.f32 %v5652, %v5961
      %v5963 = vpop.f32.mrb[0].mxu0
      %v5964 = vadd.f32 %v5648, %v5963
      %v5965 = vpop.f32.mrb[0].mxu0
      %v5966 = vadd.f32 %v5652, %v5965
      %5967 = vmatprep.mubr.bf16.mxu0 %v5570
      %5968 = vmatmul.mubr.bf16.gmra.mrb[0].mxu0 %v5569
      %v5969 = vpop.f32.mrb[0].mxu0
      %v5970 = vadd.f32 %v5648, %v5969
      %v5971 = vpop.f32.mrb[0].mxu0
      %v5972 = vadd.f32 %v5652, %v5971
      %v5973 = vpop.f32.mrb[0].mxu0
      %v5974 = vadd.f32 %v5648, %v5973
      %v5975 = vpop.f32.mrb[0].mxu0
      %v5976 = vadd.f32 %v5652, %v5975
      %5977 = vmatprep.mubr.bf16.mxu0 %v5572
      %5978 = vmatmul.mubr.bf16.gmra.mrb[0].mxu0 %v5571
      %v5979 = vpop.f32.mrb[0].mxu0
      %v5980 = vadd.f32 %v5648, %v5979
      %v5981 = vpop.f32.mrb[0].mxu0
      %v5982 = vadd.f32 %v5652, %v5981
      %v5983 = vpop.f32.mrb[0].mxu0
      %v5984 = vadd.f32 %v5648, %v5983
      %v5985 = vpop.f32.mrb[0].mxu0
      %v5986 = vadd.f32 %v5652, %v5985
      %5987 = vmatprep.mubr.bf16.mxu0 %v5574
      %5988 = vmatmul.mubr.bf16.gmra.mrb[0].mxu0 %v5573
      %v5989 = vpop.f32.mrb[0].mxu0
      %v5990 = vadd.f32 %v5648, %v5989
      %v5991 = vpop.f32.mrb[0].mxu0
      %v5992 = vadd.f32 %v5652, %v5991
      %v5993 = vpop.f32.mrb[0].mxu0
      %v5994 = vadd.f32 %v5648, %v5993
      %v5995 = vpop.f32.mrb[0].mxu0
      %v5996 = vadd.f32 %v5652, %v5995
      %5997 = vmatprep.mubr.bf16.mxu0 %v5576
      %5998 = vmatmul.mubr.bf16.gmra.mrb[0].mxu0 %v5575
      %v5999 = vpop.f32.mrb[0].mxu0
      %v6000 = vadd.f32 %v5648, %v5999
      %v6001 = vpop.f32.mrb[0].mxu0
      %v6002 = vadd.f32 %v5652, %v6001
      %v6003 = vpop.f32.mrb[0].mxu0
      %v6004 = vadd.f32 %v5648, %v6003
      %v6005 = vpop.f32.mrb[0].mxu0
      %v6006 = vadd.f32 %v5652, %v6005
      %6007 = vmatprep.mubr.bf16.mxu0 %v5578
      %6008 = vmatmul.mubr.bf16.gmra.mrb[0].mxu0 %v5577
      %v6009 = vpop.f32.mrb[0].mxu0
      %v6010 = vadd.f32 %v5648, %v6009
      %v6011 = vpop.f32.mrb[0].mxu0
      %v6012 = vadd.f32 %v5652, %v6011
      %v6013 = vpop.f32.mrb[0].mxu0
      %v6014 = vadd.f32 %v5648, %v6013
      %v6015 = vpop.f32.mrb[0].mxu0
      %v6016 = vadd.f32 %v5652, %v6015
      %6017 = vmatprep.mubr.bf16.mxu0 %v5580
      %6018 = vmatmul.mubr.bf16.gmra.mrb[0].mxu0 %v5579
      %v6019 = vpop.f32.mrb[0].mxu0
      %v6020 = vadd.f32 %v5648, %v6019
      %v6021 = vpop.f32.mrb[0].mxu0
      %v6022 = vadd.f32 %v5652, %v6021
      %v6023 = vpop.f32.mrb[0].mxu0
      %v6024 = vadd.f32 %v5648, %v6023
      %v6025 = vpop.f32.mrb[0].mxu0
      %v6026 = vadd.f32 %v5652, %v6025
      %6027 = vmatprep.mubr.bf16.mxu0 %v5582
      %6028 = vmatmul.mubr.bf16.gmra.mrb[0].mxu0 %v5581
      %v6029 = vpop.f32.mrb[0].mxu0
      %v6030 = vadd.f32 %v5648, %v6029
      %v6031 = vpop.f32.mrb[0].mxu0
      %v6032 = vadd.f32 %v5652, %v6031
      %v6033 = vpop.f32.mrb[0].mxu0
      %v6034 = vadd.f32 %v5648, %v6033
      %v6035 = vpop.f32.mrb[0].mxu0
      %v6036 = vadd.f32 %v5652, %v6035
      %6037 = vmatprep.mubr.bf16.mxu0 %v5584
      %6038 = vmatmul.mubr.bf16.gmra.mrb[0].mxu0 %v5583
      %v6039 = vpop.f32.mrb[0].mxu0
      %v6040 = vadd.f32 %v5648, %v6039
      %v6041 = vpop.f32.mrb[0].mxu0
      %v6042 = vadd.f32 %v5652, %v6041
      %v6043 = vpop.f32.mrb[0].mxu0
      %v6044 = vadd.f32 %v5648, %v6043
      %v6045 = vpop.f32.mrb[0].mxu0
      %v6046 = vadd.f32 %v5652, %v6045
      %6047 = vmatprep.mubr.bf16.mxu0 %v5586
      %6048 = vmatmul.mubr.bf16.gmra.mrb[0].mxu0 %v5585
      %v6049 = vpop.f32.mrb[0].mxu0
      %v6050 = vadd.f32 %v5648, %v6049
      %v6051 = vpop.f32.mrb[0].mxu0
      %v6052 = vadd.f32 %v5652, %v6051
      %v6053 = vpop.f32.mrb[0].mxu0
      %v6054 = vadd.f32 %v5648, %v6053
      %v6055 = vpop.f32.mrb[0].mxu0
      %v6056 = vadd.f32 %v5652, %v6055
      %6057 = vmatprep.mubr.bf16.mxu0 %v5588
      %6058 = vmatmul.mubr.bf16.gmra.mrb[0].mxu0 %v5587
      %v6059 = vpop.f32.mrb[0].mxu0
      %v6060 = vadd.f32 %v5648, %v6059
      %v6061 = vpop.f32.mrb[0].mxu0
      %v6062 = vadd.f32 %v5652, %v6061
      %v6063 = vpop.f32.mrb[0].mxu0
      %v6064 = vadd.f32 %v5648, %v6063
      %v6065 = vpop.f32.mrb[0].mxu0
      %v6066 = vadd.f32 %v5652, %v6065
      %6067 = vmatprep.mubr.bf16.mxu0 %v5590
      %6068 = vmatmul.mubr.bf16.gmra.mrb[0].mxu0 %v5589
      %v6069 = vpop.f32.mrb[0].mxu0
      %v6070 = vadd.f32 %v5648, %v6069
      %v6071 = vpop.f32.mrb[0].mxu0
      %v6072 = vadd.f32 %v5652, %v6071
      %v6073 = vpop.f32.mrb[0].mxu0
      %v6074 = vadd.f32 %v5648, %v6073
      %v6075 = vpop.f32.mrb[0].mxu0
      %v6076 = vadd.f32 %v5652, %v6075
      %6077 = vmatprep.mubr.bf16.mxu0 %v5592
      %6078 = vmatmul.mubr.bf16.gmra.mrb[0].mxu0 %v5591
      %v6079 = vpop.f32.mrb[0].mxu0
      %v6080 = vadd.f32 %v5648, %v6079
      %v6081 = vpop.f32.mrb[0].mxu0
      %v6082 = vadd.f32 %v5652, %v6081
      %v6083 = vpop.f32.mrb[0].mxu0
      %v6084 = vadd.f32 %v5648, %v6083
      %v6085 = vpop.f32.mrb[0].mxu0
      %v6086 = vadd.f32 %v5652, %v6085
      %6087 = vmatprep.mubr.bf16.mxu0 %v5594
      %6088 = vmatmul.mubr.bf16.gmra.mrb[0].mxu0 %v5593
      %v6089 = vpop.f32.mrb[0].mxu0
      %v6090 = vadd.f32 %v5648, %v6089
      %v6091 = vpop.f32.mrb[0].mxu0
      %v6092 = vadd.f32 %v5652, %v6091
      %v6093 = vpop.f32.mrb[0].mxu0
      %v6094 = vadd.f32 %v5648, %v6093
      %v6095 = vpop.f32.mrb[0].mxu0
      %v6096 = vadd.f32 %v5652, %v6095
      %6097 = vmatprep.mubr.bf16.mxu0 %v5596
      %6098 = vmatmul.mubr.bf16.gmra.mrb[0].mxu0 %v5595
      %v6099 = vpop.f32.mrb[0].mxu0
      %v6100 = vadd.f32 %v5648, %v6099
      %v6101 = vpop.f32.mrb[0].mxu0
      %v6102 = vadd.f32 %v5652, %v6101
      %v6103 = vpop.f32.mrb[0].mxu0
      %v6104 = vadd.f32 %v5648, %v6103
      %v6105 = vpop.f32.mrb[0].mxu0
      %v6106 = vadd.f32 %v5652, %v6105
      %6107 = vmatprep.mubr.bf16.mxu0 %v5598
      %6108 = vmatmul.mubr.bf16.gmra.mrb[0].mxu0 %v5597
      %v6109 = vpop.f32.mrb[0].mxu0
      %v6110 = vadd.f32 %v5648, %v6109
      %v6111 = vpop.f32.mrb[0].mxu0
      %v6112 = vadd.f32 %v5652, %v6111
      %v6113 = vpop.f32.mrb[0].mxu0
      %v6114 = vadd.f32 %v5648, %v6113
      %v6115 = vpop.f32.mrb[0].mxu0
      %v6116 = vadd.f32 %v5652, %v6115
      %6117 = vmatprep.mubr.bf16.mxu0 %v5600
      %6118 = vmatmul.mubr.bf16.gmra.mrb[0].mxu0 %v5599
      %v6119 = vpop.f32.mrb[0].mxu0
      %v6120 = vadd.f32 %v5648, %v6119
      %v6121 = vpop.f32.mrb[0].mxu0
      %v6122 = vadd.f32 %v5652, %v6121
      %v6123 = vpop.f32.mrb[0].mxu0
      %v6124 = vadd.f32 %v5648, %v6123
      %v6125 = vpop.f32.mrb[0].mxu0
      %v6126 = vadd.f32 %v5652, %v6125
      %6127 = vmatprep.mubr.bf16.mxu0 %v5602
      %6128 = vmatmul.mubr.bf16.gmra.mrb[0].mxu0 %v5601
      %v6129 = vpop.f32.mrb[0].mxu0
      %v6130 = vadd.f32 %v5648, %v6129
      %v6131 = vpop.f32.mrb[0].mxu0
      %v6132 = vadd.f32 %v5652, %v6131
      %v6133 = vpop.f32.mrb[0].mxu0
      %v6134 = vadd.f32 %v5648, %v6133
      %v6135 = vpop.f32.mrb[0].mxu0
      %v6136 = vadd.f32 %v5652, %v6135
      %6137 = vmatprep.mubr.bf16.mxu0 %v5604
      %6138 = vmatmul.mubr.bf16.gmra.mrb[0].mxu0 %v5603
      %v6139 = vpop.f32.mrb[0].mxu0
      %v6140 = vadd.f32 %v5648, %v6139
      %v6141 = vpop.f32.mrb[0].mxu0
      %v6142 = vadd.f32 %v5652, %v6141
      %v6143 = vpop.f32.mrb[0].mxu0
      %v6144 = vadd.f32 %v5648, %v6143
      %v6145 = vpop.f32.mrb[0].mxu0
      %v6146 = vadd.f32 %v5652, %v6145
      %6147 = vmatprep.mubr.bf16.mxu0 %v5606
      %6148 = vmatmul.mubr.bf16.gmra.mrb[0].mxu0 %v5605
      %v6149 = vpop.f32.mrb[0].mxu0
      %v6150 = vadd.f32 %v5648, %v6149
      %v6151 = vpop.f32.mrb[0].mxu0
      %v6152 = vadd.f32 %v5652, %v6151
      %v6153 = vpop.f32.mrb[0].mxu0
      %v6154 = vadd.f32 %v5648, %v6153
      %v6155 = vpop.f32.mrb[0].mxu0
      %v6156 = vadd.f32 %v5652, %v6155
      %6157 = vmatprep.mubr.bf16.mxu0 %v5608
      %6158 = vmatmul.mubr.bf16.gmra.mrb[0].mxu0 %v5607
      %v6159 = vpop.f32.mrb[0].mxu0
      %v6160 = vadd.f32 %v5648, %v6159
      %v6161 = vpop.f32.mrb[0].mxu0
      %v6162 = vadd.f32 %v5652, %v6161
      %v6163 = vpop.f32.mrb[0].mxu0
      %v6164 = vadd.f32 %v5648, %v6163
      %v6165 = vpop.f32.mrb[0].mxu0
      %v6166 = vadd.f32 %v5652, %v6165
      %6167 = vdwg.mxu0
      %v6168 = vmax.f32 %v5850, 0.0
      %v6169 = vmax.f32 %v5852, 0.0
      %v6170 = vmax.f32 %v5854, 0.0
      %v6171 = vmax.f32 %v5856, 0.0
      %v6172 = vmax.f32 %v5860, 0.0
      %v6173 = vmax.f32 %v5862, 0.0
      %v6174 = vmax.f32 %v5864, 0.0
      %v6175 = vmax.f32 %v5866, 0.0
      %v6176 = vmax.f32 %v5870, 0.0
      %v6177 = vmax.f32 %v5872, 0.0
      %v6178 = vmax.f32 %v5874, 0.0
      %v6179 = vmax.f32 %v5876, 0.0
      %v6180 = vmax.f32 %v5880, 0.0
      %v6181 = vmax.f32 %v5882, 0.0
      %v6182 = vmax.f32 %v5884, 0.0
      %v6183 = vmax.f32 %v5886, 0.0
      %v6184 = vmax.f32 %v5890, 0.0
      %v6185 = vmax.f32 %v5892, 0.0
      %v6186 = vmax.f32 %v5894, 0.0
      %v6187 = vmax.f32 %v5896, 0.0
      %v6188 = vmax.f32 %v5900, 0.0
      %v6189 = vmax.f32 %v5902, 0.0
      %v6190 = vmax.f32 %v5904, 0.0
      %v6191 = vmax.f32 %v5906, 0.0
      %v6192 = vmax.f32 %v5910, 0.0
      %v6193 = vmax.f32 %v5912, 0.0
      %v6194 = vmax.f32 %v5914, 0.0
      %v6195 = vmax.f32 %v5916, 0.0
      %v6196 = vmax.f32 %v5920, 0.0
      %v6197 = vmax.f32 %v5922, 0.0
      %v6198 = vmax.f32 %v5924, 0.0
      %v6199 = vmax.f32 %v5926, 0.0
      %v6200 = vmax.f32 %v5930, 0.0
      %v6201 = vmax.f32 %v5932, 0.0
      %v6202 = vmax.f32 %v5934, 0.0
      %v6203 = vmax.f32 %v5936, 0.0
      %v6204 = vmax.f32 %v5940, 0.0
      %v6205 = vmax.f32 %v5942, 0.0
      %v6206 = vmax.f32 %v5944, 0.0
      %v6207 = vmax.f32 %v5946, 0.0
      %v6208 = vmax.f32 %v5950, 0.0
      %v6209 = vmax.f32 %v5952, 0.0
      %v6210 = vmax.f32 %v5954, 0.0
      %v6211 = vmax.f32 %v5956, 0.0
      %v6212 = vmax.f32 %v5960, 0.0
      %v6213 = vmax.f32 %v5962, 0.0
      %v6214 = vmax.f32 %v5964, 0.0
      %v6215 = vmax.f32 %v5966, 0.0
      %v6216 = vmax.f32 %v5970, 0.0
      %v6217 = vmax.f32 %v5972, 0.0
      %v6218 = vmax.f32 %v5974, 0.0
      %v6219 = vmax.f32 %v5976, 0.0
      %v6220 = vmax.f32 %v5980, 0.0
      %v6221 = vmax.f32 %v5982, 0.0
      %v6222 = vmax.f32 %v5984, 0.0
      %v6223 = vmax.f32 %v5986, 0.0
      %v6224 = vmax.f32 %v5990, 0.0
      %v6225 = vmax.f32 %v5992, 0.0
      %v6226 = vmax.f32 %v5994, 0.0
      %v6227 = vmax.f32 %v5996, 0.0
      %v6228 = vmax.f32 %v6000, 0.0
      %v6229 = vmax.f32 %v6002, 0.0
      %v6230 = vmax.f32 %v6004, 0.0
      %v6231 = vmax.f32 %v6006, 0.0
      %v6232 = vmax.f32 %v6010, 0.0
      %v6233 = vmax.f32 %v6012, 0.0
      %v6234 = vmax.f32 %v6014, 0.0
      %v6235 = vmax.f32 %v6016, 0.0
      %v6236 = vmax.f32 %v6020, 0.0
      %v6237 = vmax.f32 %v6022, 0.0
      %v6238 = vmax.f32 %v6024, 0.0
      %v6239 = vmax.f32 %v6026, 0.0
      %v6240 = vmax.f32 %v6030, 0.0
      %v6241 = vmax.f32 %v6032, 0.0
      %v6242 = vmax.f32 %v6034, 0.0
      %v6243 = vmax.f32 %v6036, 0.0
      %v6244 = vmax.f32 %v6040, 0.0
      %v6245 = vmax.f32 %v6042, 0.0
      %v6246 = vmax.f32 %v6044, 0.0
      %v6247 = vmax.f32 %v6046, 0.0
      %v6248 = vmax.f32 %v6050, 0.0
      %v6249 = vmax.f32 %v6052, 0.0
      %v6250 = vmax.f32 %v6054, 0.0
      %v6251 = vmax.f32 %v6056, 0.0
      %v6252 = vmax.f32 %v6060, 0.0
      %v6253 = vmax.f32 %v6062, 0.0
      %v6254 = vmax.f32 %v6064, 0.0
      %v6255 = vmax.f32 %v6066, 0.0
      %v6256 = vmax.f32 %v6070, 0.0
      %v6257 = vmax.f32 %v6072, 0.0
      %v6258 = vmax.f32 %v6074, 0.0
      %v6259 = vmax.f32 %v6076, 0.0
      %v6260 = vmax.f32 %v6080, 0.0
      %v6261 = vmax.f32 %v6082, 0.0
      %v6262 = vmax.f32 %v6084, 0.0
      %v6263 = vmax.f32 %v6086, 0.0
      %v6264 = vmax.f32 %v6090, 0.0
      %v6265 = vmax.f32 %v6092, 0.0
      %v6266 = vmax.f32 %v6094, 0.0
      %v6267 = vmax.f32 %v6096, 0.0
      %v6268 = vmax.f32 %v6100, 0.0
      %v6269 = vmax.f32 %v6102, 0.0
      %v6270 = vmax.f32 %v6104, 0.0
      %v6271 = vmax.f32 %v6106, 0.0
      %v6272 = vmax.f32 %v6110, 0.0
      %v6273 = vmax.f32 %v6112, 0.0
      %v6274 = vmax.f32 %v6114, 0.0
      %v6275 = vmax.f32 %v6116, 0.0
      %v6276 = vmax.f32 %v6120, 0.0
      %v6277 = vmax.f32 %v6122, 0.0
      %v6278 = vmax.f32 %v6124, 0.0
      %v6279 = vmax.f32 %v6126, 0.0
      %v6280 = vmax.f32 %v6130, 0.0
      %v6281 = vmax.f32 %v6132, 0.0
      %v6282 = vmax.f32 %v6134, 0.0
      %v6283 = vmax.f32 %v6136, 0.0
      %v6284 = vmax.f32 %v6140, 0.0
      %v6285 = vmax.f32 %v6142, 0.0
      %v6286 = vmax.f32 %v6144, 0.0
      %v6287 = vmax.f32 %v6146, 0.0
      %v6288 = vmax.f32 %v6150, 0.0
      %v6289 = vmax.f32 %v6152, 0.0
      %v6290 = vmax.f32 %v6154, 0.0
      %v6291 = vmax.f32 %v6156, 0.0
      %v6292 = vmax.f32 %v6160, 0.0
      %v6293 = vmax.f32 %v6162, 0.0
      %v6294 = vmax.f32 %v6164, 0.0
      %v6295 = vmax.f32 %v6166, 0.0
      %v6296 = vpack.c.bf16 %v6170, %v6168
      %v6297 = vpack.c.bf16 %v6171, %v6169
      %v6298 = vpack.c.bf16 %v6174, %v6172
      %v6299 = vpack.c.bf16 %v6175, %v6173
      %v6300 = vpack.c.bf16 %v6178, %v6176
      %v6301 = vpack.c.bf16 %v6179, %v6177
      %v6302 = vpack.c.bf16 %v6182, %v6180
      %v6303 = vpack.c.bf16 %v6183, %v6181
      %v6304 = vpack.c.bf16 %v6186, %v6184
      %v6305 = vpack.c.bf16 %v6187, %v6185
      %v6306 = vpack.c.bf16 %v6190, %v6188
      %v6307 = vpack.c.bf16 %v6191, %v6189
      %v6308 = vpack.c.bf16 %v6194, %v6192
      %v6309 = vpack.c.bf16 %v6195, %v6193
      %v6310 = vpack.c.bf16 %v6198, %v6196
      %v6311 = vpack.c.bf16 %v6199, %v6197
      %v6312 = vpack.c.bf16 %v6202, %v6200
      %v6313 = vpack.c.bf16 %v6203, %v6201
      %v6314 = vpack.c.bf16 %v6206, %v6204
      %v6315 = vpack.c.bf16 %v6207, %v6205
      %v6316 = vpack.c.bf16 %v6210, %v6208
      %v6317 = vpack.c.bf16 %v6211, %v6209
      %v6318 = vpack.c.bf16 %v6214, %v6212
      %v6319 = vpack.c.bf16 %v6215, %v6213
      %v6320 = vpack.c.bf16 %v6218, %v6216
      %v6321 = vpack.c.bf16 %v6219, %v6217
      %v6322 = vpack.c.bf16 %v6222, %v6220
      %v6323 = vpack.c.bf16 %v6223, %v6221
      %v6324 = vpack.c.bf16 %v6226, %v6224
      %v6325 = vpack.c.bf16 %v6227, %v6225
      %v6326 = vpack.c.bf16 %v6230, %v6228
      %v6327 = vpack.c.bf16 %v6231, %v6229
      %v6328 = vpack.c.bf16 %v6234, %v6232
      %v6329 = vpack.c.bf16 %v6235, %v6233
      %v6330 = vpack.c.bf16 %v6238, %v6236
      %v6331 = vpack.c.bf16 %v6239, %v6237
      %v6332 = vpack.c.bf16 %v6242, %v6240
      %v6333 = vpack.c.bf16 %v6243, %v6241
      %v6334 = vpack.c.bf16 %v6246, %v6244
      %v6335 = vpack.c.bf16 %v6247, %v6245
      %v6336 = vpack.c.bf16 %v6250, %v6248
      %v6337 = vpack.c.bf16 %v6251, %v6249
      %v6338 = vpack.c.bf16 %v6254, %v6252
      %v6339 = vpack.c.bf16 %v6255, %v6253
      %v6340 = vpack.c.bf16 %v6258, %v6256
      %v6341 = vpack.c.bf16 %v6259, %v6257
      %v6342 = vpack.c.bf16 %v6262, %v6260
      %v6343 = vpack.c.bf16 %v6263, %v6261
      %v6344 = vpack.c.bf16 %v6266, %v6264
      %v6345 = vpack.c.bf16 %v6267, %v6265
      %v6346 = vpack.c.bf16 %v6270, %v6268
      %v6347 = vpack.c.bf16 %v6271, %v6269
      %v6348 = vpack.c.bf16 %v6274, %v6272
      %v6349 = vpack.c.bf16 %v6275, %v6273
      %v6350 = vpack.c.bf16 %v6278, %v6276
      %v6351 = vpack.c.bf16 %v6279, %v6277
      %v6352 = vpack.c.bf16 %v6282, %v6280
      %v6353 = vpack.c.bf16 %v6283, %v6281
      %v6354 = vpack.c.bf16 %v6286, %v6284
      %v6355 = vpack.c.bf16 %v6287, %v6285
      %v6356 = vpack.c.bf16 %v6290, %v6288
      %v6357 = vpack.c.bf16 %v6291, %v6289
      %v6358 = vpack.c.bf16 %v6294, %v6292
      %v6359 = vpack.c.bf16 %v6295, %v6293
      %s6360 = scalar_lea.vmem %s3, 1536
      %v6361 = vld [vmem:[%s6360] sm:$0xff]
      %v6362 = vld [vmem:[%s6360 + $0x8] sm:$0xff]
      %v6363 = vld [vmem:[%s6360 + $0x10] sm:$0xff]
      %v6364 = vld [vmem:[%s6360 + $0x18] sm:$0xff]
      %v6365 = vld [vmem:[%s6360 + $0x20] sm:$0xff]
      %v6366 = vld [vmem:[%s6360 + $0x28] sm:$0xff]
      %v6367 = vld [vmem:[%s6360 + $0x30] sm:$0xff]
      %v6368 = vld [vmem:[%s6360 + $0x38] sm:$0xff]
      %v6369 = vld [vmem:[%s6360 + $0x40] sm:$0xff]
      %v6370 = vld [vmem:[%s6360 + $0x48] sm:$0xff]
      %v6371 = vld [vmem:[%s6360 + $0x50] sm:$0xff]
      %v6372 = vld [vmem:[%s6360 + $0x58] sm:$0xff]
      %v6373 = vld [vmem:[%s6360 + $0x60] sm:$0xff]
      %v6374 = vld [vmem:[%s6360 + $0x68] sm:$0xff]
      %v6375 = vld [vmem:[%s6360 + $0x70] sm:$0xff]
      %v6376 = vld [vmem:[%s6360 + $0x78] sm:$0xff]
      %v6377 = vld [vmem:[%s6360 + $0x80] sm:$0xff]
      %v6378 = vld [vmem:[%s6360 + $0x88] sm:$0xff]
      %v6379 = vld [vmem:[%s6360 + $0x90] sm:$0xff]
      %v6380 = vld [vmem:[%s6360 + $0x98] sm:$0xff]
      %v6381 = vld [vmem:[%s6360 + $0xa0] sm:$0xff]
      %v6382 = vld [vmem:[%s6360 + $0xa8] sm:$0xff]
      %v6383 = vld [vmem:[%s6360 + $0xb0] sm:$0xff]
      %v6384 = vld [vmem:[%s6360 + $0xb8] sm:$0xff]
      %v6385 = vld [vmem:[%s6360 + $0xc0] sm:$0xff]
      %v6386 = vld [vmem:[%s6360 + $0xc8] sm:$0xff]
      %v6387 = vld [vmem:[%s6360 + $0xd0] sm:$0xff]
      %v6388 = vld [vmem:[%s6360 + $0xd8] sm:$0xff]
      %v6389 = vld [vmem:[%s6360 + $0xe0] sm:$0xff]
      %v6390 = vld [vmem:[%s6360 + $0xe8] sm:$0xff]
      %v6391 = vld [vmem:[%s6360 + $0xf0] sm:$0xff]
      %v6392 = vld [vmem:[%s6360 + $0xf8] sm:$0xff]
      %s6393 = scalar_lea.vmem %s4, 12
      %v6394 = vld [vmem:[%s6393] sm:$0x3]
      %v6396 = vlaneseq
      %v6397 = vshrl.u32 %v6396, 7
      %v6398 = vsub.s32 0, %v6397
      %v6399 = vrot.slane %v6394, %v6398
      %v6400 = vlaneseq
      %v6401 = vshrl.u32 %v6400, 7
      %v6402 = vsub.s32 1, %v6401
      %v6403 = vrot.slane %v6394, %v6402
      %v6438 = vunpack.c.l.b16 %v6361
      %v6439 = vunpack.c.h.b16 %v6361
      %v6440 = vunpack.c.l.b16 %v6362
      %v6441 = vunpack.c.h.b16 %v6362
      %v6442 = vunpack.c.l.b16 %v6363
      %v6443 = vunpack.c.h.b16 %v6363
      %v6444 = vunpack.c.l.b16 %v6364
      %v6445 = vunpack.c.h.b16 %v6364
      %v6446 = vunpack.c.l.b16 %v6365
      %v6447 = vunpack.c.h.b16 %v6365
      %v6448 = vunpack.c.l.b16 %v6366
      %v6449 = vunpack.c.h.b16 %v6366
      %v6450 = vunpack.c.l.b16 %v6367
      %v6451 = vunpack.c.h.b16 %v6367
      %v6452 = vunpack.c.l.b16 %v6368
      %v6453 = vunpack.c.h.b16 %v6368
      %v6454 = vunpack.c.l.b16 %v6369
      %v6455 = vunpack.c.h.b16 %v6369
      %v6456 = vunpack.c.l.b16 %v6370
      %v6457 = vunpack.c.h.b16 %v6370
      %v6458 = vunpack.c.l.b16 %v6371
      %v6459 = vunpack.c.h.b16 %v6371
      %v6460 = vunpack.c.l.b16 %v6372
      %v6461 = vunpack.c.h.b16 %v6372
      %v6462 = vunpack.c.l.b16 %v6373
      %v6463 = vunpack.c.h.b16 %v6373
      %v6464 = vunpack.c.l.b16 %v6374
      %v6465 = vunpack.c.h.b16 %v6374
      %v6466 = vunpack.c.l.b16 %v6375
      %v6467 = vunpack.c.h.b16 %v6375
      %v6468 = vunpack.c.l.b16 %v6376
      %v6469 = vunpack.c.h.b16 %v6376
      %v6470 = vunpack.c.l.b16 %v6377
      %v6471 = vunpack.c.h.b16 %v6377
      %v6472 = vunpack.c.l.b16 %v6378
      %v6473 = vunpack.c.h.b16 %v6378
      %v6474 = vunpack.c.l.b16 %v6379
      %v6475 = vunpack.c.h.b16 %v6379
      %v6476 = vunpack.c.l.b16 %v6380
      %v6477 = vunpack.c.h.b16 %v6380
      %v6478 = vunpack.c.l.b16 %v6381
      %v6479 = vunpack.c.h.b16 %v6381
      %v6480 = vunpack.c.l.b16 %v6382
      %v6481 = vunpack.c.h.b16 %v6382
      %v6482 = vunpack.c.l.b16 %v6383
      %v6483 = vunpack.c.h.b16 %v6383
      %v6484 = vunpack.c.l.b16 %v6384
      %v6485 = vunpack.c.h.b16 %v6384
      %v6486 = vunpack.c.l.b16 %v6385
      %v6487 = vunpack.c.h.b16 %v6385
      %v6488 = vunpack.c.l.b16 %v6386
      %v6489 = vunpack.c.h.b16 %v6386
      %v6490 = vunpack.c.l.b16 %v6387
      %v6491 = vunpack.c.h.b16 %v6387
      %v6492 = vunpack.c.l.b16 %v6388
      %v6493 = vunpack.c.h.b16 %v6388
      %v6494 = vunpack.c.l.b16 %v6389
      %v6495 = vunpack.c.h.b16 %v6389
      %v6496 = vunpack.c.l.b16 %v6390
      %v6497 = vunpack.c.h.b16 %v6390
      %v6498 = vunpack.c.l.b16 %v6391
      %v6499 = vunpack.c.h.b16 %v6391
      %v6500 = vunpack.c.l.b16 %v6392
      %v6501 = vunpack.c.h.b16 %v6392
      %v6502 = vpack.c.b16 %v6440, %v6438
      %v6503 = vpack.c.b16 %v6441, %v6439
      %v6504 = vpack.c.b16 %v6444, %v6442
      %v6505 = vpack.c.b16 %v6445, %v6443
      %v6506 = vpack.c.b16 %v6448, %v6446
      %v6507 = vpack.c.b16 %v6449, %v6447
      %v6508 = vpack.c.b16 %v6452, %v6450
      %v6509 = vpack.c.b16 %v6453, %v6451
      %v6510 = vpack.c.b16 %v6456, %v6454
      %v6511 = vpack.c.b16 %v6457, %v6455
      %v6512 = vpack.c.b16 %v6460, %v6458
      %v6513 = vpack.c.b16 %v6461, %v6459
      %v6514 = vpack.c.b16 %v6464, %v6462
      %v6515 = vpack.c.b16 %v6465, %v6463
      %v6516 = vpack.c.b16 %v6468, %v6466
      %v6517 = vpack.c.b16 %v6469, %v6467
      %v6518 = vpack.c.b16 %v6472, %v6470
      %v6519 = vpack.c.b16 %v6473, %v6471
      %v6520 = vpack.c.b16 %v6476, %v6474
      %v6521 = vpack.c.b16 %v6477, %v6475
      %v6522 = vpack.c.b16 %v6480, %v6478
      %v6523 = vpack.c.b16 %v6481, %v6479
      %v6524 = vpack.c.b16 %v6484, %v6482
      %v6525 = vpack.c.b16 %v6485, %v6483
      %v6526 = vpack.c.b16 %v6488, %v6486
      %v6527 = vpack.c.b16 %v6489, %v6487
      %v6528 = vpack.c.b16 %v6492, %v6490
      %v6529 = vpack.c.b16 %v6493, %v6491
      %v6530 = vpack.c.b16 %v6496, %v6494
      %v6531 = vpack.c.b16 %v6497, %v6495
      %v6532 = vpack.c.b16 %v6500, %v6498
      %v6533 = vpack.c.b16 %v6501, %v6499
      %6566 = vmatprep.subr.bf16.mxu0 %v6503
      %6567 = vmatpush1.bf16.msra.mxu0 %v6502
      %6568 = vmatprep.subr.bf16.mxu0 %v6505
      %6569 = vmatpush1.bf16.msra.mxu0 %v6504
      %6570 = vmatprep.subr.bf16.mxu0 %v6507
      %6571 = vmatpush1.bf16.msra.mxu0 %v6506
      %6572 = vmatprep.subr.bf16.mxu0 %v6509
      %6573 = vmatpush1.bf16.msra.mxu0 %v6508
      %6574 = vmatprep.subr.bf16.mxu0 %v6511
      %6575 = vmatpush1.bf16.msra.mxu0 %v6510
      %6576 = vmatprep.subr.bf16.mxu0 %v6513
      %6577 = vmatpush1.bf16.msra.mxu0 %v6512
      %6578 = vmatprep.subr.bf16.mxu0 %v6515
      %6579 = vmatpush1.bf16.msra.mxu0 %v6514
      %6580 = vmatprep.subr.bf16.mxu0 %v6517
      %6581 = vmatpush1.bf16.msra.mxu0 %v6516
      %6582 = vmatprep.subr.bf16.mxu0 %v6519
      %6583 = vmatpush1.bf16.msra.mxu0 %v6518
      %6584 = vmatprep.subr.bf16.mxu0 %v6521
      %6585 = vmatpush1.bf16.msra.mxu0 %v6520
      %6586 = vmatprep.subr.bf16.mxu0 %v6523
      %6587 = vmatpush1.bf16.msra.mxu0 %v6522
      %6588 = vmatprep.subr.bf16.mxu0 %v6525
      %6589 = vmatpush1.bf16.msra.mxu0 %v6524
      %6590 = vmatprep.subr.bf16.mxu0 %v6527
      %6591 = vmatpush1.bf16.msra.mxu0 %v6526
      %6592 = vmatprep.subr.bf16.mxu0 %v6529
      %6593 = vmatpush1.bf16.msra.mxu0 %v6528
      %6594 = vmatprep.subr.bf16.mxu0 %v6531
      %6595 = vmatpush1.bf16.msra.mxu0 %v6530
      %6596 = vmatprep.subr.bf16.mxu0 %v6533
      %6597 = vmatpush1.bf16.msra.mxu0 %v6532
      %6598 = vmatprep.mubr.bf16.mxu0 %v6297
      %6599 = vmatmul.mubr.bf16.gmra.mrb[0].mxu0 %v6296
      %v6600 = vpop.f32.mrb[0].mxu0
      %v6601 = vadd.f32 %v6399, %v6600
      %v6602 = vpop.f32.mrb[0].mxu0
      %v6603 = vadd.f32 %v6403, %v6602
      %v6604 = vpop.f32.mrb[0].mxu0
      %v6605 = vadd.f32 %v6399, %v6604
      %v6606 = vpop.f32.mrb[0].mxu0
      %v6607 = vadd.f32 %v6403, %v6606
      %6608 = vmatprep.mubr.bf16.mxu0 %v6299
      %6609 = vmatmul.mubr.bf16.gmra.mrb[0].mxu0 %v6298
      %v6610 = vpop.f32.mrb[0].mxu0
      %v6611 = vadd.f32 %v6399, %v6610
      %v6612 = vpop.f32.mrb[0].mxu0
      %v6613 = vadd.f32 %v6403, %v6612
      %v6614 = vpop.f32.mrb[0].mxu0
      %v6615 = vadd.f32 %v6399, %v6614
      %v6616 = vpop.f32.mrb[0].mxu0
      %v6617 = vadd.f32 %v6403, %v6616
      %6618 = vmatprep.mubr.bf16.mxu0 %v6301
      %6619 = vmatmul.mubr.bf16.gmra.mrb[0].mxu0 %v6300
      %v6620 = vpop.f32.mrb[0].mxu0
      %v6621 = vadd.f32 %v6399, %v6620
      %v6622 = vpop.f32.mrb[0].mxu0
      %v6623 = vadd.f32 %v6403, %v6622
      %v6624 = vpop.f32.mrb[0].mxu0
      %v6625 = vadd.f32 %v6399, %v6624
      %v6626 = vpop.f32.mrb[0].mxu0
      %v6627 = vadd.f32 %v6403, %v6626
      %6628 = vmatprep.mubr.bf16.mxu0 %v6303
      %6629 = vmatmul.mubr.bf16.gmra.mrb[0].mxu0 %v6302
      %v6630 = vpop.f32.mrb[0].mxu0
      %v6631 = vadd.f32 %v6399, %v6630
      %v6632 = vpop.f32.mrb[0].mxu0
      %v6633 = vadd.f32 %v6403, %v6632
      %v6634 = vpop.f32.mrb[0].mxu0
      %v6635 = vadd.f32 %v6399, %v6634
      %v6636 = vpop.f32.mrb[0].mxu0
      %v6637 = vadd.f32 %v6403, %v6636
      %6638 = vmatprep.mubr.bf16.mxu0 %v6305
      %6639 = vmatmul.mubr.bf16.gmra.mrb[0].mxu0 %v6304
      %v6640 = vpop.f32.mrb[0].mxu0
      %v6641 = vadd.f32 %v6399, %v6640
      %v6642 = vpop.f32.mrb[0].mxu0
      %v6643 = vadd.f32 %v6403, %v6642
      %v6644 = vpop.f32.mrb[0].mxu0
      %v6645 = vadd.f32 %v6399, %v6644
      %v6646 = vpop.f32.mrb[0].mxu0
      %v6647 = vadd.f32 %v6403, %v6646
      %6648 = vmatprep.mubr.bf16.mxu0 %v6307
      %6649 = vmatmul.mubr.bf16.gmra.mrb[0].mxu0 %v6306
      %v6650 = vpop.f32.mrb[0].mxu0
      %v6651 = vadd.f32 %v6399, %v6650
      %v6652 = vpop.f32.mrb[0].mxu0
      %v6653 = vadd.f32 %v6403, %v6652
      %v6654 = vpop.f32.mrb[0].mxu0
      %v6655 = vadd.f32 %v6399, %v6654
      %v6656 = vpop.f32.mrb[0].mxu0
      %v6657 = vadd.f32 %v6403, %v6656
      %6658 = vmatprep.mubr.bf16.mxu0 %v6309
      %6659 = vmatmul.mubr.bf16.gmra.mrb[0].mxu0 %v6308
      %v6660 = vpop.f32.mrb[0].mxu0
      %v6661 = vadd.f32 %v6399, %v6660
      %v6662 = vpop.f32.mrb[0].mxu0
      %v6663 = vadd.f32 %v6403, %v6662
      %v6664 = vpop.f32.mrb[0].mxu0
      %v6665 = vadd.f32 %v6399, %v6664
      %v6666 = vpop.f32.mrb[0].mxu0
      %v6667 = vadd.f32 %v6403, %v6666
      %6668 = vmatprep.mubr.bf16.mxu0 %v6311
      %6669 = vmatmul.mubr.bf16.gmra.mrb[0].mxu0 %v6310
      %v6670 = vpop.f32.mrb[0].mxu0
      %v6671 = vadd.f32 %v6399, %v6670
      %v6672 = vpop.f32.mrb[0].mxu0
      %v6673 = vadd.f32 %v6403, %v6672
      %v6674 = vpop.f32.mrb[0].mxu0
      %v6675 = vadd.f32 %v6399, %v6674
      %v6676 = vpop.f32.mrb[0].mxu0
      %v6677 = vadd.f32 %v6403, %v6676
      %6678 = vmatprep.mubr.bf16.mxu0 %v6313
      %6679 = vmatmul.mubr.bf16.gmra.mrb[0].mxu0 %v6312
      %v6680 = vpop.f32.mrb[0].mxu0
      %v6681 = vadd.f32 %v6399, %v6680
      %v6682 = vpop.f32.mrb[0].mxu0
      %v6683 = vadd.f32 %v6403, %v6682
      %v6684 = vpop.f32.mrb[0].mxu0
      %v6685 = vadd.f32 %v6399, %v6684
      %v6686 = vpop.f32.mrb[0].mxu0
      %v6687 = vadd.f32 %v6403, %v6686
      %6688 = vmatprep.mubr.bf16.mxu0 %v6315
      %6689 = vmatmul.mubr.bf16.gmra.mrb[0].mxu0 %v6314
      %v6690 = vpop.f32.mrb[0].mxu0
      %v6691 = vadd.f32 %v6399, %v6690
      %v6692 = vpop.f32.mrb[0].mxu0
      %v6693 = vadd.f32 %v6403, %v6692
      %v6694 = vpop.f32.mrb[0].mxu0
      %v6695 = vadd.f32 %v6399, %v6694
      %v6696 = vpop.f32.mrb[0].mxu0
      %v6697 = vadd.f32 %v6403, %v6696
      %6698 = vmatprep.mubr.bf16.mxu0 %v6317
      %6699 = vmatmul.mubr.bf16.gmra.mrb[0].mxu0 %v6316
      %v6700 = vpop.f32.mrb[0].mxu0
      %v6701 = vadd.f32 %v6399, %v6700
      %v6702 = vpop.f32.mrb[0].mxu0
      %v6703 = vadd.f32 %v6403, %v6702
      %v6704 = vpop.f32.mrb[0].mxu0
      %v6705 = vadd.f32 %v6399, %v6704
      %v6706 = vpop.f32.mrb[0].mxu0
      %v6707 = vadd.f32 %v6403, %v6706
      %6708 = vmatprep.mubr.bf16.mxu0 %v6319
      %6709 = vmatmul.mubr.bf16.gmra.mrb[0].mxu0 %v6318
      %v6710 = vpop.f32.mrb[0].mxu0
      %v6711 = vadd.f32 %v6399, %v6710
      %v6712 = vpop.f32.mrb[0].mxu0
      %v6713 = vadd.f32 %v6403, %v6712
      %v6714 = vpop.f32.mrb[0].mxu0
      %v6715 = vadd.f32 %v6399, %v6714
      %v6716 = vpop.f32.mrb[0].mxu0
      %v6717 = vadd.f32 %v6403, %v6716
      %6718 = vmatprep.mubr.bf16.mxu0 %v6321
      %6719 = vmatmul.mubr.bf16.gmra.mrb[0].mxu0 %v6320
      %v6720 = vpop.f32.mrb[0].mxu0
      %v6721 = vadd.f32 %v6399, %v6720
      %v6722 = vpop.f32.mrb[0].mxu0
      %v6723 = vadd.f32 %v6403, %v6722
      %v6724 = vpop.f32.mrb[0].mxu0
      %v6725 = vadd.f32 %v6399, %v6724
      %v6726 = vpop.f32.mrb[0].mxu0
      %v6727 = vadd.f32 %v6403, %v6726
      %6728 = vmatprep.mubr.bf16.mxu0 %v6323
      %6729 = vmatmul.mubr.bf16.gmra.mrb[0].mxu0 %v6322
      %v6730 = vpop.f32.mrb[0].mxu0
      %v6731 = vadd.f32 %v6399, %v6730
      %v6732 = vpop.f32.mrb[0].mxu0
      %v6733 = vadd.f32 %v6403, %v6732
      %v6734 = vpop.f32.mrb[0].mxu0
      %v6735 = vadd.f32 %v6399, %v6734
      %v6736 = vpop.f32.mrb[0].mxu0
      %v6737 = vadd.f32 %v6403, %v6736
      %6738 = vmatprep.mubr.bf16.mxu0 %v6325
      %6739 = vmatmul.mubr.bf16.gmra.mrb[0].mxu0 %v6324
      %v6740 = vpop.f32.mrb[0].mxu0
      %v6741 = vadd.f32 %v6399, %v6740
      %v6742 = vpop.f32.mrb[0].mxu0
      %v6743 = vadd.f32 %v6403, %v6742
      %v6744 = vpop.f32.mrb[0].mxu0
      %v6745 = vadd.f32 %v6399, %v6744
      %v6746 = vpop.f32.mrb[0].mxu0
      %v6747 = vadd.f32 %v6403, %v6746
      %6748 = vmatprep.mubr.bf16.mxu0 %v6327
      %6749 = vmatmul.mubr.bf16.gmra.mrb[0].mxu0 %v6326
      %v6750 = vpop.f32.mrb[0].mxu0
      %v6751 = vadd.f32 %v6399, %v6750
      %v6752 = vpop.f32.mrb[0].mxu0
      %v6753 = vadd.f32 %v6403, %v6752
      %v6754 = vpop.f32.mrb[0].mxu0
      %v6755 = vadd.f32 %v6399, %v6754
      %v6756 = vpop.f32.mrb[0].mxu0
      %v6757 = vadd.f32 %v6403, %v6756
      %6758 = vmatprep.mubr.bf16.mxu0 %v6329
      %6759 = vmatmul.mubr.bf16.gmra.mrb[0].mxu0 %v6328
      %v6760 = vpop.f32.mrb[0].mxu0
      %v6761 = vadd.f32 %v6399, %v6760
      %v6762 = vpop.f32.mrb[0].mxu0
      %v6763 = vadd.f32 %v6403, %v6762
      %v6764 = vpop.f32.mrb[0].mxu0
      %v6765 = vadd.f32 %v6399, %v6764
      %v6766 = vpop.f32.mrb[0].mxu0
      %v6767 = vadd.f32 %v6403, %v6766
      %6768 = vmatprep.mubr.bf16.mxu0 %v6331
      %6769 = vmatmul.mubr.bf16.gmra.mrb[0].mxu0 %v6330
      %v6770 = vpop.f32.mrb[0].mxu0
      %v6771 = vadd.f32 %v6399, %v6770
      %v6772 = vpop.f32.mrb[0].mxu0
      %v6773 = vadd.f32 %v6403, %v6772
      %v6774 = vpop.f32.mrb[0].mxu0
      %v6775 = vadd.f32 %v6399, %v6774
      %v6776 = vpop.f32.mrb[0].mxu0
      %v6777 = vadd.f32 %v6403, %v6776
      %6778 = vmatprep.mubr.bf16.mxu0 %v6333
      %6779 = vmatmul.mubr.bf16.gmra.mrb[0].mxu0 %v6332
      %v6780 = vpop.f32.mrb[0].mxu0
      %v6781 = vadd.f32 %v6399, %v6780
      %v6782 = vpop.f32.mrb[0].mxu0
      %v6783 = vadd.f32 %v6403, %v6782
      %v6784 = vpop.f32.mrb[0].mxu0
      %v6785 = vadd.f32 %v6399, %v6784
      %v6786 = vpop.f32.mrb[0].mxu0
      %v6787 = vadd.f32 %v6403, %v6786
      %6788 = vmatprep.mubr.bf16.mxu0 %v6335
      %6789 = vmatmul.mubr.bf16.gmra.mrb[0].mxu0 %v6334
      %v6790 = vpop.f32.mrb[0].mxu0
      %v6791 = vadd.f32 %v6399, %v6790
      %v6792 = vpop.f32.mrb[0].mxu0
      %v6793 = vadd.f32 %v6403, %v6792
      %v6794 = vpop.f32.mrb[0].mxu0
      %v6795 = vadd.f32 %v6399, %v6794
      %v6796 = vpop.f32.mrb[0].mxu0
      %v6797 = vadd.f32 %v6403, %v6796
      %6798 = vmatprep.mubr.bf16.mxu0 %v6337
      %6799 = vmatmul.mubr.bf16.gmra.mrb[0].mxu0 %v6336
      %v6800 = vpop.f32.mrb[0].mxu0
      %v6801 = vadd.f32 %v6399, %v6800
      %v6802 = vpop.f32.mrb[0].mxu0
      %v6803 = vadd.f32 %v6403, %v6802
      %v6804 = vpop.f32.mrb[0].mxu0
      %v6805 = vadd.f32 %v6399, %v6804
      %v6806 = vpop.f32.mrb[0].mxu0
      %v6807 = vadd.f32 %v6403, %v6806
      %6808 = vmatprep.mubr.bf16.mxu0 %v6339
      %6809 = vmatmul.mubr.bf16.gmra.mrb[0].mxu0 %v6338
      %v6810 = vpop.f32.mrb[0].mxu0
      %v6811 = vadd.f32 %v6399, %v6810
      %v6812 = vpop.f32.mrb[0].mxu0
      %v6813 = vadd.f32 %v6403, %v6812
      %v6814 = vpop.f32.mrb[0].mxu0
      %v6815 = vadd.f32 %v6399, %v6814
      %v6816 = vpop.f32.mrb[0].mxu0
      %v6817 = vadd.f32 %v6403, %v6816
      %6818 = vmatprep.mubr.bf16.mxu0 %v6341
      %6819 = vmatmul.mubr.bf16.gmra.mrb[0].mxu0 %v6340
      %v6820 = vpop.f32.mrb[0].mxu0
      %v6821 = vadd.f32 %v6399, %v6820
      %v6822 = vpop.f32.mrb[0].mxu0
      %v6823 = vadd.f32 %v6403, %v6822
      %v6824 = vpop.f32.mrb[0].mxu0
      %v6825 = vadd.f32 %v6399, %v6824
      %v6826 = vpop.f32.mrb[0].mxu0
      %v6827 = vadd.f32 %v6403, %v6826
      %6828 = vmatprep.mubr.bf16.mxu0 %v6343
      %6829 = vmatmul.mubr.bf16.gmra.mrb[0].mxu0 %v6342
      %v6830 = vpop.f32.mrb[0].mxu0
      %v6831 = vadd.f32 %v6399, %v6830
      %v6832 = vpop.f32.mrb[0].mxu0
      %v6833 = vadd.f32 %v6403, %v6832
      %v6834 = vpop.f32.mrb[0].mxu0
      %v6835 = vadd.f32 %v6399, %v6834
      %v6836 = vpop.f32.mrb[0].mxu0
      %v6837 = vadd.f32 %v6403, %v6836
      %6838 = vmatprep.mubr.bf16.mxu0 %v6345
      %6839 = vmatmul.mubr.bf16.gmra.mrb[0].mxu0 %v6344
      %v6840 = vpop.f32.mrb[0].mxu0
      %v6841 = vadd.f32 %v6399, %v6840
      %v6842 = vpop.f32.mrb[0].mxu0
      %v6843 = vadd.f32 %v6403, %v6842
      %v6844 = vpop.f32.mrb[0].mxu0
      %v6845 = vadd.f32 %v6399, %v6844
      %v6846 = vpop.f32.mrb[0].mxu0
      %v6847 = vadd.f32 %v6403, %v6846
      %6848 = vmatprep.mubr.bf16.mxu0 %v6347
      %6849 = vmatmul.mubr.bf16.gmra.mrb[0].mxu0 %v6346
      %v6850 = vpop.f32.mrb[0].mxu0
      %v6851 = vadd.f32 %v6399, %v6850
      %v6852 = vpop.f32.mrb[0].mxu0
      %v6853 = vadd.f32 %v6403, %v6852
      %v6854 = vpop.f32.mrb[0].mxu0
      %v6855 = vadd.f32 %v6399, %v6854
      %v6856 = vpop.f32.mrb[0].mxu0
      %v6857 = vadd.f32 %v6403, %v6856
      %6858 = vmatprep.mubr.bf16.mxu0 %v6349
      %6859 = vmatmul.mubr.bf16.gmra.mrb[0].mxu0 %v6348
      %v6860 = vpop.f32.mrb[0].mxu0
      %v6861 = vadd.f32 %v6399, %v6860
      %v6862 = vpop.f32.mrb[0].mxu0
      %v6863 = vadd.f32 %v6403, %v6862
      %v6864 = vpop.f32.mrb[0].mxu0
      %v6865 = vadd.f32 %v6399, %v6864
      %v6866 = vpop.f32.mrb[0].mxu0
      %v6867 = vadd.f32 %v6403, %v6866
      %6868 = vmatprep.mubr.bf16.mxu0 %v6351
      %6869 = vmatmul.mubr.bf16.gmra.mrb[0].mxu0 %v6350
      %v6870 = vpop.f32.mrb[0].mxu0
      %v6871 = vadd.f32 %v6399, %v6870
      %v6872 = vpop.f32.mrb[0].mxu0
      %v6873 = vadd.f32 %v6403, %v6872
      %v6874 = vpop.f32.mrb[0].mxu0
      %v6875 = vadd.f32 %v6399, %v6874
      %v6876 = vpop.f32.mrb[0].mxu0
      %v6877 = vadd.f32 %v6403, %v6876
      %6878 = vmatprep.mubr.bf16.mxu0 %v6353
      %6879 = vmatmul.mubr.bf16.gmra.mrb[0].mxu0 %v6352
      %v6880 = vpop.f32.mrb[0].mxu0
      %v6881 = vadd.f32 %v6399, %v6880
      %v6882 = vpop.f32.mrb[0].mxu0
      %v6883 = vadd.f32 %v6403, %v6882
      %v6884 = vpop.f32.mrb[0].mxu0
      %v6885 = vadd.f32 %v6399, %v6884
      %v6886 = vpop.f32.mrb[0].mxu0
      %v6887 = vadd.f32 %v6403, %v6886
      %6888 = vmatprep.mubr.bf16.mxu0 %v6355
      %6889 = vmatmul.mubr.bf16.gmra.mrb[0].mxu0 %v6354
      %v6890 = vpop.f32.mrb[0].mxu0
      %v6891 = vadd.f32 %v6399, %v6890
      %v6892 = vpop.f32.mrb[0].mxu0
      %v6893 = vadd.f32 %v6403, %v6892
      %v6894 = vpop.f32.mrb[0].mxu0
      %v6895 = vadd.f32 %v6399, %v6894
      %v6896 = vpop.f32.mrb[0].mxu0
      %v6897 = vadd.f32 %v6403, %v6896
      %6898 = vmatprep.mubr.bf16.mxu0 %v6357
      %6899 = vmatmul.mubr.bf16.gmra.mrb[0].mxu0 %v6356
      %v6900 = vpop.f32.mrb[0].mxu0
      %v6901 = vadd.f32 %v6399, %v6900
      %v6902 = vpop.f32.mrb[0].mxu0
      %v6903 = vadd.f32 %v6403, %v6902
      %v6904 = vpop.f32.mrb[0].mxu0
      %v6905 = vadd.f32 %v6399, %v6904
      %v6906 = vpop.f32.mrb[0].mxu0
      %v6907 = vadd.f32 %v6403, %v6906
      %6908 = vmatprep.mubr.bf16.mxu0 %v6359
      %6909 = vmatmul.mubr.bf16.gmra.mrb[0].mxu0 %v6358
      %v6910 = vpop.f32.mrb[0].mxu0
      %v6911 = vadd.f32 %v6399, %v6910
      %v6912 = vpop.f32.mrb[0].mxu0
      %v6913 = vadd.f32 %v6403, %v6912
      %v6914 = vpop.f32.mrb[0].mxu0
      %v6915 = vadd.f32 %v6399, %v6914
      %v6916 = vpop.f32.mrb[0].mxu0
      %v6917 = vadd.f32 %v6403, %v6916
      %6918 = vdwg.mxu0
      %v6919 = vmax.f32 %v6601, 0.0
      %v6920 = vmax.f32 %v6603, 0.0
      %v6921 = vmax.f32 %v6605, 0.0
      %v6922 = vmax.f32 %v6607, 0.0
      %v6923 = vmax.f32 %v6611, 0.0
      %v6924 = vmax.f32 %v6613, 0.0
      %v6925 = vmax.f32 %v6615, 0.0
      %v6926 = vmax.f32 %v6617, 0.0
      %v6927 = vmax.f32 %v6621, 0.0
      %v6928 = vmax.f32 %v6623, 0.0
      %v6929 = vmax.f32 %v6625, 0.0
      %v6930 = vmax.f32 %v6627, 0.0
      %v6931 = vmax.f32 %v6631, 0.0
      %v6932 = vmax.f32 %v6633, 0.0
      %v6933 = vmax.f32 %v6635, 0.0
      %v6934 = vmax.f32 %v6637, 0.0
      %v6935 = vmax.f32 %v6641, 0.0
      %v6936 = vmax.f32 %v6643, 0.0
      %v6937 = vmax.f32 %v6645, 0.0
      %v6938 = vmax.f32 %v6647, 0.0
      %v6939 = vmax.f32 %v6651, 0.0
      %v6940 = vmax.f32 %v6653, 0.0
      %v6941 = vmax.f32 %v6655, 0.0
      %v6942 = vmax.f32 %v6657, 0.0
      %v6943 = vmax.f32 %v6661, 0.0
      %v6944 = vmax.f32 %v6663, 0.0
      %v6945 = vmax.f32 %v6665, 0.0
      %v6946 = vmax.f32 %v6667, 0.0
      %v6947 = vmax.f32 %v6671, 0.0
      %v6948 = vmax.f32 %v6673, 0.0
      %v6949 = vmax.f32 %v6675, 0.0
      %v6950 = vmax.f32 %v6677, 0.0
      %v6951 = vmax.f32 %v6681, 0.0
      %v6952 = vmax.f32 %v6683, 0.0
      %v6953 = vmax.f32 %v6685, 0.0
      %v6954 = vmax.f32 %v6687, 0.0
      %v6955 = vmax.f32 %v6691, 0.0
      %v6956 = vmax.f32 %v6693, 0.0
      %v6957 = vmax.f32 %v6695, 0.0
      %v6958 = vmax.f32 %v6697, 0.0
      %v6959 = vmax.f32 %v6701, 0.0
      %v6960 = vmax.f32 %v6703, 0.0
      %v6961 = vmax.f32 %v6705, 0.0
      %v6962 = vmax.f32 %v6707, 0.0
      %v6963 = vmax.f32 %v6711, 0.0
      %v6964 = vmax.f32 %v6713, 0.0
      %v6965 = vmax.f32 %v6715, 0.0
      %v6966 = vmax.f32 %v6717, 0.0
      %v6967 = vmax.f32 %v6721, 0.0
      %v6968 = vmax.f32 %v6723, 0.0
      %v6969 = vmax.f32 %v6725, 0.0
      %v6970 = vmax.f32 %v6727, 0.0
      %v6971 = vmax.f32 %v6731, 0.0
      %v6972 = vmax.f32 %v6733, 0.0
      %v6973 = vmax.f32 %v6735, 0.0
      %v6974 = vmax.f32 %v6737, 0.0
      %v6975 = vmax.f32 %v6741, 0.0
      %v6976 = vmax.f32 %v6743, 0.0
      %v6977 = vmax.f32 %v6745, 0.0
      %v6978 = vmax.f32 %v6747, 0.0
      %v6979 = vmax.f32 %v6751, 0.0
      %v6980 = vmax.f32 %v6753, 0.0
      %v6981 = vmax.f32 %v6755, 0.0
      %v6982 = vmax.f32 %v6757, 0.0
      %v6983 = vmax.f32 %v6761, 0.0
      %v6984 = vmax.f32 %v6763, 0.0
      %v6985 = vmax.f32 %v6765, 0.0
      %v6986 = vmax.f32 %v6767, 0.0
      %v6987 = vmax.f32 %v6771, 0.0
      %v6988 = vmax.f32 %v6773, 0.0
      %v6989 = vmax.f32 %v6775, 0.0
      %v6990 = vmax.f32 %v6777, 0.0
      %v6991 = vmax.f32 %v6781, 0.0
      %v6992 = vmax.f32 %v6783, 0.0
      %v6993 = vmax.f32 %v6785, 0.0
      %v6994 = vmax.f32 %v6787, 0.0
      %v6995 = vmax.f32 %v6791, 0.0
      %v6996 = vmax.f32 %v6793, 0.0
      %v6997 = vmax.f32 %v6795, 0.0
      %v6998 = vmax.f32 %v6797, 0.0
      %v6999 = vmax.f32 %v6801, 0.0
      %v7000 = vmax.f32 %v6803, 0.0
      %v7001 = vmax.f32 %v6805, 0.0
      %v7002 = vmax.f32 %v6807, 0.0
      %v7003 = vmax.f32 %v6811, 0.0
      %v7004 = vmax.f32 %v6813, 0.0
      %v7005 = vmax.f32 %v6815, 0.0
      %v7006 = vmax.f32 %v6817, 0.0
      %v7007 = vmax.f32 %v6821, 0.0
      %v7008 = vmax.f32 %v6823, 0.0
      %v7009 = vmax.f32 %v6825, 0.0
      %v7010 = vmax.f32 %v6827, 0.0
      %v7011 = vmax.f32 %v6831, 0.0
      %v7012 = vmax.f32 %v6833, 0.0
      %v7013 = vmax.f32 %v6835, 0.0
      %v7014 = vmax.f32 %v6837, 0.0
      %v7015 = vmax.f32 %v6841, 0.0
      %v7016 = vmax.f32 %v6843, 0.0
      %v7017 = vmax.f32 %v6845, 0.0
      %v7018 = vmax.f32 %v6847, 0.0
      %v7019 = vmax.f32 %v6851, 0.0
      %v7020 = vmax.f32 %v6853, 0.0
      %v7021 = vmax.f32 %v6855, 0.0
      %v7022 = vmax.f32 %v6857, 0.0
      %v7023 = vmax.f32 %v6861, 0.0
      %v7024 = vmax.f32 %v6863, 0.0
      %v7025 = vmax.f32 %v6865, 0.0
      %v7026 = vmax.f32 %v6867, 0.0
      %v7027 = vmax.f32 %v6871, 0.0
      %v7028 = vmax.f32 %v6873, 0.0
      %v7029 = vmax.f32 %v6875, 0.0
      %v7030 = vmax.f32 %v6877, 0.0
      %v7031 = vmax.f32 %v6881, 0.0
      %v7032 = vmax.f32 %v6883, 0.0
      %v7033 = vmax.f32 %v6885, 0.0
      %v7034 = vmax.f32 %v6887, 0.0
      %v7035 = vmax.f32 %v6891, 0.0
      %v7036 = vmax.f32 %v6893, 0.0
      %v7037 = vmax.f32 %v6895, 0.0
      %v7038 = vmax.f32 %v6897, 0.0
      %v7039 = vmax.f32 %v6901, 0.0
      %v7040 = vmax.f32 %v6903, 0.0
      %v7041 = vmax.f32 %v6905, 0.0
      %v7042 = vmax.f32 %v6907, 0.0
      %v7043 = vmax.f32 %v6911, 0.0
      %v7044 = vmax.f32 %v6913, 0.0
      %v7045 = vmax.f32 %v6915, 0.0
      %v7046 = vmax.f32 %v6917, 0.0
      %v7047 = vpack.c.bf16 %v6921, %v6919
      %v7048 = vpack.c.bf16 %v6922, %v6920
      %v7049 = vpack.c.bf16 %v6925, %v6923
      %v7050 = vpack.c.bf16 %v6926, %v6924
      %v7051 = vpack.c.bf16 %v6929, %v6927
      %v7052 = vpack.c.bf16 %v6930, %v6928
      %v7053 = vpack.c.bf16 %v6933, %v6931
      %v7054 = vpack.c.bf16 %v6934, %v6932
      %v7055 = vpack.c.bf16 %v6937, %v6935
      %v7056 = vpack.c.bf16 %v6938, %v6936
      %v7057 = vpack.c.bf16 %v6941, %v6939
      %v7058 = vpack.c.bf16 %v6942, %v6940
      %v7059 = vpack.c.bf16 %v6945, %v6943
      %v7060 = vpack.c.bf16 %v6946, %v6944
      %v7061 = vpack.c.bf16 %v6949, %v6947
      %v7062 = vpack.c.bf16 %v6950, %v6948
      %v7063 = vpack.c.bf16 %v6953, %v6951
      %v7064 = vpack.c.bf16 %v6954, %v6952
      %v7065 = vpack.c.bf16 %v6957, %v6955
      %v7066 = vpack.c.bf16 %v6958, %v6956
      %v7067 = vpack.c.bf16 %v6961, %v6959
      %v7068 = vpack.c.bf16 %v6962, %v6960
      %v7069 = vpack.c.bf16 %v6965, %v6963
      %v7070 = vpack.c.bf16 %v6966, %v6964
      %v7071 = vpack.c.bf16 %v6969, %v6967
      %v7072 = vpack.c.bf16 %v6970, %v6968
      %v7073 = vpack.c.bf16 %v6973, %v6971
      %v7074 = vpack.c.bf16 %v6974, %v6972
      %v7075 = vpack.c.bf16 %v6977, %v6975
      %v7076 = vpack.c.bf16 %v6978, %v6976
      %v7077 = vpack.c.bf16 %v6981, %v6979
      %v7078 = vpack.c.bf16 %v6982, %v6980
      %v7079 = vpack.c.bf16 %v6985, %v6983
      %v7080 = vpack.c.bf16 %v6986, %v6984
      %v7081 = vpack.c.bf16 %v6989, %v6987
      %v7082 = vpack.c.bf16 %v6990, %v6988
      %v7083 = vpack.c.bf16 %v6993, %v6991
      %v7084 = vpack.c.bf16 %v6994, %v6992
      %v7085 = vpack.c.bf16 %v6997, %v6995
      %v7086 = vpack.c.bf16 %v6998, %v6996
      %v7087 = vpack.c.bf16 %v7001, %v6999
      %v7088 = vpack.c.bf16 %v7002, %v7000
      %v7089 = vpack.c.bf16 %v7005, %v7003
      %v7090 = vpack.c.bf16 %v7006, %v7004
      %v7091 = vpack.c.bf16 %v7009, %v7007
      %v7092 = vpack.c.bf16 %v7010, %v7008
      %v7093 = vpack.c.bf16 %v7013, %v7011
      %v7094 = vpack.c.bf16 %v7014, %v7012
      %v7095 = vpack.c.bf16 %v7017, %v7015
      %v7096 = vpack.c.bf16 %v7018, %v7016
      %v7097 = vpack.c.bf16 %v7021, %v7019
      %v7098 = vpack.c.bf16 %v7022, %v7020
      %v7099 = vpack.c.bf16 %v7025, %v7023
      %v7100 = vpack.c.bf16 %v7026, %v7024
      %v7101 = vpack.c.bf16 %v7029, %v7027
      %v7102 = vpack.c.bf16 %v7030, %v7028
      %v7103 = vpack.c.bf16 %v7033, %v7031
      %v7104 = vpack.c.bf16 %v7034, %v7032
      %v7105 = vpack.c.bf16 %v7037, %v7035
      %v7106 = vpack.c.bf16 %v7038, %v7036
      %v7107 = vpack.c.bf16 %v7041, %v7039
      %v7108 = vpack.c.bf16 %v7042, %v7040
      %v7109 = vpack.c.bf16 %v7045, %v7043
      %v7110 = vpack.c.bf16 %v7046, %v7044
      %v7111 = vld [vmem:[%s6] sm:$0x3]
      %v7113 = vlaneseq
      %v7114 = vshrl.u32 %v7113, 7
      %v7115 = vsub.s32 0, %v7114
      %v7116 = vrot.slane %v7111, %v7115
      %v7117 = vlaneseq
      %v7118 = vshrl.u32 %v7117, 7
      %v7119 = vsub.s32 1, %v7118
      %v7120 = vrot.slane %v7111, %v7119
      %v7123 = vmul.f32 %v6919, %v7116
      %v7124 = vmul.f32 %v6920, %v7120
      %v7125 = vmul.f32 %v6921, %v7116
      %v7126 = vmul.f32 %v6922, %v7120
      %v7127 = vmul.f32 %v6923, %v7116
      %v7128 = vmul.f32 %v6924, %v7120
      %v7129 = vmul.f32 %v6925, %v7116
      %v7130 = vmul.f32 %v6926, %v7120
      %v7131 = vmul.f32 %v6927, %v7116
      %v7132 = vmul.f32 %v6928, %v7120
      %v7133 = vmul.f32 %v6929, %v7116
      %v7134 = vmul.f32 %v6930, %v7120
      %v7135 = vmul.f32 %v6931, %v7116
      %v7136 = vmul.f32 %v6932, %v7120
      %v7137 = vmul.f32 %v6933, %v7116
      %v7138 = vmul.f32 %v6934, %v7120
      %v7139 = vmul.f32 %v6935, %v7116
      %v7140 = vmul.f32 %v6936, %v7120
      %v7141 = vmul.f32 %v6937, %v7116
      %v7142 = vmul.f32 %v6938, %v7120
      %v7143 = vmul.f32 %v6939, %v7116
      %v7144 = vmul.f32 %v6940, %v7120
      %v7145 = vmul.f32 %v6941, %v7116
      %v7146 = vmul.f32 %v6942, %v7120
      %v7147 = vmul.f32 %v6943, %v7116
      %v7148 = vmul.f32 %v6944, %v7120
      %v7149 = vmul.f32 %v6945, %v7116
      %v7150 = vmul.f32 %v6946, %v7120
      %v7151 = vmul.f32 %v6947, %v7116
      %v7152 = vmul.f32 %v6948, %v7120
      %v7153 = vmul.f32 %v6949, %v7116
      %v7154 = vmul.f32 %v6950, %v7120
      %v7155 = vmul.f32 %v6951, %v7116
      %v7156 = vmul.f32 %v6952, %v7120
      %v7157 = vmul.f32 %v6953, %v7116
      %v7158 = vmul.f32 %v6954, %v7120
      %v7159 = vmul.f32 %v6955, %v7116
      %v7160 = vmul.f32 %v6956, %v7120
      %v7161 = vmul.f32 %v6957, %v7116
      %v7162 = vmul.f32 %v6958, %v7120
      %v7163 = vmul.f32 %v6959, %v7116
      %v7164 = vmul.f32 %v6960, %v7120
      %v7165 = vmul.f32 %v6961, %v7116
      %v7166 = vmul.f32 %v6962, %v7120
      %v7167 = vmul.f32 %v6963, %v7116
      %v7168 = vmul.f32 %v6964, %v7120
      %v7169 = vmul.f32 %v6965, %v7116
      %v7170 = vmul.f32 %v6966, %v7120
      %v7171 = vmul.f32 %v6967, %v7116
      %v7172 = vmul.f32 %v6968, %v7120
      %v7173 = vmul.f32 %v6969, %v7116
      %v7174 = vmul.f32 %v6970, %v7120
      %v7175 = vmul.f32 %v6971, %v7116
      %v7176 = vmul.f32 %v6972, %v7120
      %v7177 = vmul.f32 %v6973, %v7116
      %v7178 = vmul.f32 %v6974, %v7120
      %v7179 = vmul.f32 %v6975, %v7116
      %v7180 = vmul.f32 %v6976, %v7120
      %v7181 = vmul.f32 %v6977, %v7116
      %v7182 = vmul.f32 %v6978, %v7120
      %v7183 = vmul.f32 %v6979, %v7116
      %v7184 = vmul.f32 %v6980, %v7120
      %v7185 = vmul.f32 %v6981, %v7116
      %v7186 = vmul.f32 %v6982, %v7120
      %v7187 = vmul.f32 %v6983, %v7116
      %v7188 = vmul.f32 %v6984, %v7120
      %v7189 = vmul.f32 %v6985, %v7116
      %v7190 = vmul.f32 %v6986, %v7120
      %v7191 = vmul.f32 %v6987, %v7116
      %v7192 = vmul.f32 %v6988, %v7120
      %v7193 = vmul.f32 %v6989, %v7116
      %v7194 = vmul.f32 %v6990, %v7120
      %v7195 = vmul.f32 %v6991, %v7116
      %v7196 = vmul.f32 %v6992, %v7120
      %v7197 = vmul.f32 %v6993, %v7116
      %v7198 = vmul.f32 %v6994, %v7120
      %v7199 = vmul.f32 %v6995, %v7116
      %v7200 = vmul.f32 %v6996, %v7120
      %v7201 = vmul.f32 %v6997, %v7116
      %v7202 = vmul.f32 %v6998, %v7120
      %v7203 = vmul.f32 %v6999, %v7116
      %v7204 = vmul.f32 %v7000, %v7120
      %v7205 = vmul.f32 %v7001, %v7116
      %v7206 = vmul.f32 %v7002, %v7120
      %v7207 = vmul.f32 %v7003, %v7116
      %v7208 = vmul.f32 %v7004, %v7120
      %v7209 = vmul.f32 %v7005, %v7116
      %v7210 = vmul.f32 %v7006, %v7120
      %v7211 = vmul.f32 %v7007, %v7116
      %v7212 = vmul.f32 %v7008, %v7120
      %v7213 = vmul.f32 %v7009, %v7116
      %v7214 = vmul.f32 %v7010, %v7120
      %v7215 = vmul.f32 %v7011, %v7116
      %v7216 = vmul.f32 %v7012, %v7120
      %v7217 = vmul.f32 %v7013, %v7116
      %v7218 = vmul.f32 %v7014, %v7120
      %v7219 = vmul.f32 %v7015, %v7116
      %v7220 = vmul.f32 %v7016, %v7120
      %v7221 = vmul.f32 %v7017, %v7116
      %v7222 = vmul.f32 %v7018, %v7120
      %v7223 = vmul.f32 %v7019, %v7116
      %v7224 = vmul.f32 %v7020, %v7120
      %v7225 = vmul.f32 %v7021, %v7116
      %v7226 = vmul.f32 %v7022, %v7120
      %v7227 = vmul.f32 %v7023, %v7116
      %v7228 = vmul.f32 %v7024, %v7120
      %v7229 = vmul.f32 %v7025, %v7116
      %v7230 = vmul.f32 %v7026, %v7120
      %v7231 = vmul.f32 %v7027, %v7116
      %v7232 = vmul.f32 %v7028, %v7120
      %v7233 = vmul.f32 %v7029, %v7116
      %v7234 = vmul.f32 %v7030, %v7120
      %v7235 = vmul.f32 %v7031, %v7116
      %v7236 = vmul.f32 %v7032, %v7120
      %v7237 = vmul.f32 %v7033, %v7116
      %v7238 = vmul.f32 %v7034, %v7120
      %v7239 = vmul.f32 %v7035, %v7116
      %v7240 = vmul.f32 %v7036, %v7120
      %v7241 = vmul.f32 %v7037, %v7116
      %v7242 = vmul.f32 %v7038, %v7120
      %v7243 = vmul.f32 %v7039, %v7116
      %v7244 = vmul.f32 %v7040, %v7120
      %v7245 = vmul.f32 %v7041, %v7116
      %v7246 = vmul.f32 %v7042, %v7120
      %v7247 = vmul.f32 %v7043, %v7116
      %v7248 = vmul.f32 %v7044, %v7120
      %v7249 = vmul.f32 %v7045, %v7116
      %v7250 = vmul.f32 %v7046, %v7120
      %v7251 = vadd.f32 %v7123, %v7124
      %7252 = vadd.xlane.f32.xlu0 %v7251
      %v7253 = vpop.xlane.xlu0 %7252
      %v7254 = vadd.f32 %v7125, %v7126
      %7255 = vadd.xlane.f32.xlu0 %v7254
      %v7256 = vpop.xlane.xlu0 %7255
      %v7257 = vadd.f32 %v7127, %v7128
      %7258 = vadd.xlane.f32.xlu0 %v7257
      %v7259 = vpop.xlane.xlu0 %7258
      %v7260 = vadd.f32 %v7129, %v7130
      %7261 = vadd.xlane.f32.xlu0 %v7260
      %v7262 = vpop.xlane.xlu0 %7261
      %v7263 = vadd.f32 %v7131, %v7132
      %7264 = vadd.xlane.f32.xlu0 %v7263
      %v7265 = vpop.xlane.xlu0 %7264
      %v7266 = vadd.f32 %v7133, %v7134
      %7267 = vadd.xlane.f32.xlu0 %v7266
      %v7268 = vpop.xlane.xlu0 %7267
      %v7269 = vadd.f32 %v7135, %v7136
      %7270 = vadd.xlane.f32.xlu0 %v7269
      %v7271 = vpop.xlane.xlu0 %7270
      %v7272 = vadd.f32 %v7137, %v7138
      %7273 = vadd.xlane.f32.xlu0 %v7272
      %v7274 = vpop.xlane.xlu0 %7273
      %v7275 = vadd.f32 %v7139, %v7140
      %7276 = vadd.xlane.f32.xlu0 %v7275
      %v7277 = vpop.xlane.xlu0 %7276
      %v7278 = vadd.f32 %v7141, %v7142
      %7279 = vadd.xlane.f32.xlu0 %v7278
      %v7280 = vpop.xlane.xlu0 %7279
      %v7281 = vadd.f32 %v7143, %v7144
      %7282 = vadd.xlane.f32.xlu0 %v7281
      %v7283 = vpop.xlane.xlu0 %7282
      %v7284 = vadd.f32 %v7145, %v7146
      %7285 = vadd.xlane.f32.xlu0 %v7284
      %v7286 = vpop.xlane.xlu0 %7285
      %v7287 = vadd.f32 %v7147, %v7148
      %7288 = vadd.xlane.f32.xlu0 %v7287
      %v7289 = vpop.xlane.xlu0 %7288
      %v7290 = vadd.f32 %v7149, %v7150
      %7291 = vadd.xlane.f32.xlu0 %v7290
      %v7292 = vpop.xlane.xlu0 %7291
      %v7293 = vadd.f32 %v7151, %v7152
      %7294 = vadd.xlane.f32.xlu0 %v7293
      %v7295 = vpop.xlane.xlu0 %7294
      %v7296 = vadd.f32 %v7153, %v7154
      %7297 = vadd.xlane.f32.xlu0 %v7296
      %v7298 = vpop.xlane.xlu0 %7297
      %v7299 = vadd.f32 %v7155, %v7156
      %7300 = vadd.xlane.f32.xlu0 %v7299
      %v7301 = vpop.xlane.xlu0 %7300
      %v7302 = vadd.f32 %v7157, %v7158
      %7303 = vadd.xlane.f32.xlu0 %v7302
      %v7304 = vpop.xlane.xlu0 %7303
      %v7305 = vadd.f32 %v7159, %v7160
      %7306 = vadd.xlane.f32.xlu0 %v7305
      %v7307 = vpop.xlane.xlu0 %7306
      %v7308 = vadd.f32 %v7161, %v7162
      %7309 = vadd.xlane.f32.xlu0 %v7308
      %v7310 = vpop.xlane.xlu0 %7309
      %v7311 = vadd.f32 %v7163, %v7164
      %7312 = vadd.xlane.f32.xlu0 %v7311
      %v7313 = vpop.xlane.xlu0 %7312
      %v7314 = vadd.f32 %v7165, %v7166
      %7315 = vadd.xlane.f32.xlu0 %v7314
      %v7316 = vpop.xlane.xlu0 %7315
      %v7317 = vadd.f32 %v7167, %v7168
      %7318 = vadd.xlane.f32.xlu0 %v7317
      %v7319 = vpop.xlane.xlu0 %7318
      %v7320 = vadd.f32 %v7169, %v7170
      %7321 = vadd.xlane.f32.xlu0 %v7320
      %v7322 = vpop.xlane.xlu0 %7321
      %v7323 = vadd.f32 %v7171, %v7172
      %7324 = vadd.xlane.f32.xlu0 %v7323
      %v7325 = vpop.xlane.xlu0 %7324
      %v7326 = vadd.f32 %v7173, %v7174
      %7327 = vadd.xlane.f32.xlu0 %v7326
      %v7328 = vpop.xlane.xlu0 %7327
      %v7329 = vadd.f32 %v7175, %v7176
      %7330 = vadd.xlane.f32.xlu0 %v7329
      %v7331 = vpop.xlane.xlu0 %7330
      %v7332 = vadd.f32 %v7177, %v7178
      %7333 = vadd.xlane.f32.xlu0 %v7332
      %v7334 = vpop.xlane.xlu0 %7333
      %v7335 = vadd.f32 %v7179, %v7180
      %7336 = vadd.xlane.f32.xlu0 %v7335
      %v7337 = vpop.xlane.xlu0 %7336
      %v7338 = vadd.f32 %v7181, %v7182
      %7339 = vadd.xlane.f32.xlu0 %v7338
      %v7340 = vpop.xlane.xlu0 %7339
      %v7341 = vadd.f32 %v7183, %v7184
      %7342 = vadd.xlane.f32.xlu0 %v7341
      %v7343 = vpop.xlane.xlu0 %7342
      %v7344 = vadd.f32 %v7185, %v7186
      %7345 = vadd.xlane.f32.xlu0 %v7344
      %v7346 = vpop.xlane.xlu0 %7345
      %v7347 = vadd.f32 %v7187, %v7188
      %7348 = vadd.xlane.f32.xlu0 %v7347
      %v7349 = vpop.xlane.xlu0 %7348
      %v7350 = vadd.f32 %v7189, %v7190
      %7351 = vadd.xlane.f32.xlu0 %v7350
      %v7352 = vpop.xlane.xlu0 %7351
      %v7353 = vadd.f32 %v7191, %v7192
      %7354 = vadd.xlane.f32.xlu0 %v7353
      %v7355 = vpop.xlane.xlu0 %7354
      %v7356 = vadd.f32 %v7193, %v7194
      %7357 = vadd.xlane.f32.xlu0 %v7356
      %v7358 = vpop.xlane.xlu0 %7357
      %v7359 = vadd.f32 %v7195, %v7196
      %7360 = vadd.xlane.f32.xlu0 %v7359
      %v7361 = vpop.xlane.xlu0 %7360
      %v7362 = vadd.f32 %v7197, %v7198
      %7363 = vadd.xlane.f32.xlu0 %v7362
      %v7364 = vpop.xlane.xlu0 %7363
      %v7365 = vadd.f32 %v7199, %v7200
      %7366 = vadd.xlane.f32.xlu0 %v7365
      %v7367 = vpop.xlane.xlu0 %7366
      %v7368 = vadd.f32 %v7201, %v7202
      %7369 = vadd.xlane.f32.xlu0 %v7368
      %v7370 = vpop.xlane.xlu0 %7369
      %v7371 = vadd.f32 %v7203, %v7204
      %7372 = vadd.xlane.f32.xlu0 %v7371
      %v7373 = vpop.xlane.xlu0 %7372
      %v7374 = vadd.f32 %v7205, %v7206
      %7375 = vadd.xlane.f32.xlu0 %v7374
      %v7376 = vpop.xlane.xlu0 %7375
      %v7377 = vadd.f32 %v7207, %v7208
      %7378 = vadd.xlane.f32.xlu0 %v7377
      %v7379 = vpop.xlane.xlu0 %7378
      %v7380 = vadd.f32 %v7209, %v7210
      %7381 = vadd.xlane.f32.xlu0 %v7380
      %v7382 = vpop.xlane.xlu0 %7381
      %v7383 = vadd.f32 %v7211, %v7212
      %7384 = vadd.xlane.f32.xlu0 %v7383
      %v7385 = vpop.xlane.xlu0 %7384
      %v7386 = vadd.f32 %v7213, %v7214
      %7387 = vadd.xlane.f32.xlu0 %v7386
      %v7388 = vpop.xlane.xlu0 %7387
      %v7389 = vadd.f32 %v7215, %v7216
      %7390 = vadd.xlane.f32.xlu0 %v7389
      %v7391 = vpop.xlane.xlu0 %7390
      %v7392 = vadd.f32 %v7217, %v7218
      %7393 = vadd.xlane.f32.xlu0 %v7392
      %v7394 = vpop.xlane.xlu0 %7393
      %v7395 = vadd.f32 %v7219, %v7220
      %7396 = vadd.xlane.f32.xlu0 %v7395
      %v7397 = vpop.xlane.xlu0 %7396
      %v7398 = vadd.f32 %v7221, %v7222
      %7399 = vadd.xlane.f32.xlu0 %v7398
      %v7400 = vpop.xlane.xlu0 %7399
      %v7401 = vadd.f32 %v7223, %v7224
      %7402 = vadd.xlane.f32.xlu0 %v7401
      %v7403 = vpop.xlane.xlu0 %7402
      %v7404 = vadd.f32 %v7225, %v7226
      %7405 = vadd.xlane.f32.xlu0 %v7404
      %v7406 = vpop.xlane.xlu0 %7405
      %v7407 = vadd.f32 %v7227, %v7228
      %7408 = vadd.xlane.f32.xlu0 %v7407
      %v7409 = vpop.xlane.xlu0 %7408
      %v7410 = vadd.f32 %v7229, %v7230
      %7411 = vadd.xlane.f32.xlu0 %v7410
      %v7412 = vpop.xlane.xlu0 %7411
      %v7413 = vadd.f32 %v7231, %v7232
      %7414 = vadd.xlane.f32.xlu0 %v7413
      %v7415 = vpop.xlane.xlu0 %7414
      %v7416 = vadd.f32 %v7233, %v7234
      %7417 = vadd.xlane.f32.xlu0 %v7416
      %v7418 = vpop.xlane.xlu0 %7417
      %v7419 = vadd.f32 %v7235, %v7236
      %7420 = vadd.xlane.f32.xlu0 %v7419
      %v7421 = vpop.xlane.xlu0 %7420
      %v7422 = vadd.f32 %v7237, %v7238
      %7423 = vadd.xlane.f32.xlu0 %v7422
      %v7424 = vpop.xlane.xlu0 %7423
      %v7425 = vadd.f32 %v7239, %v7240
      %7426 = vadd.xlane.f32.xlu0 %v7425
      %v7427 = vpop.xlane.xlu0 %7426
      %v7428 = vadd.f32 %v7241, %v7242
      %7429 = vadd.xlane.f32.xlu0 %v7428
      %v7430 = vpop.xlane.xlu0 %7429
      %v7431 = vadd.f32 %v7243, %v7244
      %7432 = vadd.xlane.f32.xlu0 %v7431
      %v7433 = vpop.xlane.xlu0 %7432
      %v7434 = vadd.f32 %v7245, %v7246
      %7435 = vadd.xlane.f32.xlu0 %v7434
      %v7436 = vpop.xlane.xlu0 %7435
      %v7437 = vadd.f32 %v7247, %v7248
      %7438 = vadd.xlane.f32.xlu0 %v7437
      %v7439 = vpop.xlane.xlu0 %7438
      %v7440 = vadd.f32 %v7249, %v7250
      %7441 = vadd.xlane.f32.xlu0 %v7440
      %v7442 = vpop.xlane.xlu0 %7441
      %v7443 = vld [vmem:[%s7] sm:$0xff]
      %v7444 = vld [vmem:[%s7 + $0x8] sm:$0xff]
      %v7445 = vld [vmem:[%s7 + $0x10] sm:$0xff]
      %v7446 = vld [vmem:[%s7 + $0x18] sm:$0xff]
      %v7447 = vld [vmem:[%s7 + $0x20] sm:$0xff]
      %v7448 = vld [vmem:[%s7 + $0x28] sm:$0xff]
      %v7449 = vld [vmem:[%s7 + $0x30] sm:$0xff]
      %v7450 = vld [vmem:[%s7 + $0x38] sm:$0xff]
      %v7451 = vld [vmem:[%s7 + $0x40] sm:$0xff]
      %v7452 = vld [vmem:[%s7 + $0x48] sm:$0xff]
      %v7453 = vld [vmem:[%s7 + $0x50] sm:$0xff]
      %v7454 = vld [vmem:[%s7 + $0x58] sm:$0xff]
      %v7455 = vld [vmem:[%s7 + $0x60] sm:$0xff]
      %v7456 = vld [vmem:[%s7 + $0x68] sm:$0xff]
      %v7457 = vld [vmem:[%s7 + $0x70] sm:$0xff]
      %v7458 = vld [vmem:[%s7 + $0x78] sm:$0xff]
      %v7459 = vld [vmem:[%s7 + $0x80] sm:$0xff]
      %v7460 = vld [vmem:[%s7 + $0x88] sm:$0xff]
      %v7461 = vld [vmem:[%s7 + $0x90] sm:$0xff]
      %v7462 = vld [vmem:[%s7 + $0x98] sm:$0xff]
      %v7463 = vld [vmem:[%s7 + $0xa0] sm:$0xff]
      %v7464 = vld [vmem:[%s7 + $0xa8] sm:$0xff]
      %v7465 = vld [vmem:[%s7 + $0xb0] sm:$0xff]
      %v7466 = vld [vmem:[%s7 + $0xb8] sm:$0xff]
      %v7467 = vld [vmem:[%s7 + $0xc0] sm:$0xff]
      %v7468 = vld [vmem:[%s7 + $0xc8] sm:$0xff]
      %v7469 = vld [vmem:[%s7 + $0xd0] sm:$0xff]
      %v7470 = vld [vmem:[%s7 + $0xd8] sm:$0xff]
      %v7471 = vld [vmem:[%s7 + $0xe0] sm:$0xff]
      %v7472 = vld [vmem:[%s7 + $0xe8] sm:$0xff]
      %v7473 = vld [vmem:[%s7 + $0xf0] sm:$0xff]
      %v7474 = vld [vmem:[%s7 + $0xf8] sm:$0xff]
      %v7475 = vld [vmem:[%s8] sm:$0x3]
      %v7477 = vlaneseq
      %v7478 = vshrl.u32 %v7477, 7
      %v7479 = vsub.s32 0, %v7478
      %v7480 = vrot.slane %v7475, %v7479
      %v7481 = vlaneseq
      %v7482 = vshrl.u32 %v7481, 7
      %v7483 = vsub.s32 1, %v7482
      %v7484 = vrot.slane %v7475, %v7483
      %v7519 = vunpack.c.l.b16 %v7443
      %v7520 = vunpack.c.h.b16 %v7443
      %v7521 = vunpack.c.l.b16 %v7444
      %v7522 = vunpack.c.h.b16 %v7444
      %v7523 = vunpack.c.l.b16 %v7445
      %v7524 = vunpack.c.h.b16 %v7445
      %v7525 = vunpack.c.l.b16 %v7446
      %v7526 = vunpack.c.h.b16 %v7446
      %v7527 = vunpack.c.l.b16 %v7447
      %v7528 = vunpack.c.h.b16 %v7447
      %v7529 = vunpack.c.l.b16 %v7448
      %v7530 = vunpack.c.h.b16 %v7448
      %v7531 = vunpack.c.l.b16 %v7449
      %v7532 = vunpack.c.h.b16 %v7449
      %v7533 = vunpack.c.l.b16 %v7450
      %v7534 = vunpack.c.h.b16 %v7450
      %v7535 = vunpack.c.l.b16 %v7451
      %v7536 = vunpack.c.h.b16 %v7451
      %v7537 = vunpack.c.l.b16 %v7452
      %v7538 = vunpack.c.h.b16 %v7452
      %v7539 = vunpack.c.l.b16 %v7453
      %v7540 = vunpack.c.h.b16 %v7453
      %v7541 = vunpack.c.l.b16 %v7454
      %v7542 = vunpack.c.h.b16 %v7454
      %v7543 = vunpack.c.l.b16 %v7455
      %v7544 = vunpack.c.h.b16 %v7455
      %v7545 = vunpack.c.l.b16 %v7456
      %v7546 = vunpack.c.h.b16 %v7456
      %v7547 = vunpack.c.l.b16 %v7457
      %v7548 = vunpack.c.h.b16 %v7457
      %v7549 = vunpack.c.l.b16 %v7458
      %v7550 = vunpack.c.h.b16 %v7458
      %v7551 = vunpack.c.l.b16 %v7459
      %v7552 = vunpack.c.h.b16 %v7459
      %v7553 = vunpack.c.l.b16 %v7460
      %v7554 = vunpack.c.h.b16 %v7460
      %v7555 = vunpack.c.l.b16 %v7461
      %v7556 = vunpack.c.h.b16 %v7461
      %v7557 = vunpack.c.l.b16 %v7462
      %v7558 = vunpack.c.h.b16 %v7462
      %v7559 = vunpack.c.l.b16 %v7463
      %v7560 = vunpack.c.h.b16 %v7463
      %v7561 = vunpack.c.l.b16 %v7464
      %v7562 = vunpack.c.h.b16 %v7464
      %v7563 = vunpack.c.l.b16 %v7465
      %v7564 = vunpack.c.h.b16 %v7465
      %v7565 = vunpack.c.l.b16 %v7466
      %v7566 = vunpack.c.h.b16 %v7466
      %v7567 = vunpack.c.l.b16 %v7467
      %v7568 = vunpack.c.h.b16 %v7467
      %v7569 = vunpack.c.l.b16 %v7468
      %v7570 = vunpack.c.h.b16 %v7468
      %v7571 = vunpack.c.l.b16 %v7469
      %v7572 = vunpack.c.h.b16 %v7469
      %v7573 = vunpack.c.l.b16 %v7470
      %v7574 = vunpack.c.h.b16 %v7470
      %v7575 = vunpack.c.l.b16 %v7471
      %v7576 = vunpack.c.h.b16 %v7471
      %v7577 = vunpack.c.l.b16 %v7472
      %v7578 = vunpack.c.h.b16 %v7472
      %v7579 = vunpack.c.l.b16 %v7473
      %v7580 = vunpack.c.h.b16 %v7473
      %v7581 = vunpack.c.l.b16 %v7474
      %v7582 = vunpack.c.h.b16 %v7474
      %v7583 = vpack.c.b16 %v7521, %v7519
      %v7584 = vpack.c.b16 %v7522, %v7520
      %v7585 = vpack.c.b16 %v7525, %v7523
      %v7586 = vpack.c.b16 %v7526, %v7524
      %v7587 = vpack.c.b16 %v7529, %v7527
      %v7588 = vpack.c.b16 %v7530, %v7528
      %v7589 = vpack.c.b16 %v7533, %v7531
      %v7590 = vpack.c.b16 %v7534, %v7532
      %v7591 = vpack.c.b16 %v7537, %v7535
      %v7592 = vpack.c.b16 %v7538, %v7536
      %v7593 = vpack.c.b16 %v7541, %v7539
      %v7594 = vpack.c.b16 %v7542, %v7540
      %v7595 = vpack.c.b16 %v7545, %v7543
      %v7596 = vpack.c.b16 %v7546, %v7544
      %v7597 = vpack.c.b16 %v7549, %v7547
      %v7598 = vpack.c.b16 %v7550, %v7548
      %v7599 = vpack.c.b16 %v7553, %v7551
      %v7600 = vpack.c.b16 %v7554, %v7552
      %v7601 = vpack.c.b16 %v7557, %v7555
      %v7602 = vpack.c.b16 %v7558, %v7556
      %v7603 = vpack.c.b16 %v7561, %v7559
      %v7604 = vpack.c.b16 %v7562, %v7560
      %v7605 = vpack.c.b16 %v7565, %v7563
      %v7606 = vpack.c.b16 %v7566, %v7564
      %v7607 = vpack.c.b16 %v7569, %v7567
      %v7608 = vpack.c.b16 %v7570, %v7568
      %v7609 = vpack.c.b16 %v7573, %v7571
      %v7610 = vpack.c.b16 %v7574, %v7572
      %v7611 = vpack.c.b16 %v7577, %v7575
      %v7612 = vpack.c.b16 %v7578, %v7576
      %v7613 = vpack.c.b16 %v7581, %v7579
      %v7614 = vpack.c.b16 %v7582, %v7580
      %7647 = vmatprep.subr.bf16.mxu0 %v7584
      %7648 = vmatpush1.bf16.msra.mxu0 %v7583
      %7649 = vmatprep.subr.bf16.mxu0 %v7586
      %7650 = vmatpush1.bf16.msra.mxu0 %v7585
      %7651 = vmatprep.subr.bf16.mxu0 %v7588
      %7652 = vmatpush1.bf16.msra.mxu0 %v7587
      %7653 = vmatprep.subr.bf16.mxu0 %v7590
      %7654 = vmatpush1.bf16.msra.mxu0 %v7589
      %7655 = vmatprep.subr.bf16.mxu0 %v7592
      %7656 = vmatpush1.bf16.msra.mxu0 %v7591
      %7657 = vmatprep.subr.bf16.mxu0 %v7594
      %7658 = vmatpush1.bf16.msra.mxu0 %v7593
      %7659 = vmatprep.subr.bf16.mxu0 %v7596
      %7660 = vmatpush1.bf16.msra.mxu0 %v7595
      %7661 = vmatprep.subr.bf16.mxu0 %v7598
      %7662 = vmatpush1.bf16.msra.mxu0 %v7597
      %7663 = vmatprep.subr.bf16.mxu0 %v7600
      %7664 = vmatpush1.bf16.msra.mxu0 %v7599
      %7665 = vmatprep.subr.bf16.mxu0 %v7602
      %7666 = vmatpush1.bf16.msra.mxu0 %v7601
      %7667 = vmatprep.subr.bf16.mxu0 %v7604
      %7668 = vmatpush1.bf16.msra.mxu0 %v7603
      %7669 = vmatprep.subr.bf16.mxu0 %v7606
      %7670 = vmatpush1.bf16.msra.mxu0 %v7605
      %7671 = vmatprep.subr.bf16.mxu0 %v7608
      %7672 = vmatpush1.bf16.msra.mxu0 %v7607
      %7673 = vmatprep.subr.bf16.mxu0 %v7610
      %7674 = vmatpush1.bf16.msra.mxu0 %v7609
      %7675 = vmatprep.subr.bf16.mxu0 %v7612
      %7676 = vmatpush1.bf16.msra.mxu0 %v7611
      %7677 = vmatprep.subr.bf16.mxu0 %v7614
      %7678 = vmatpush1.bf16.msra.mxu0 %v7613
      %7679 = vmatprep.mubr.bf16.mxu0 %v7048
      %7680 = vmatmul.mubr.bf16.gmra.mrb[0].mxu0 %v7047
      %v7681 = vpop.f32.mrb[0].mxu0
      %v7682 = vadd.f32 %v7480, %v7681
      %v7683 = vpop.f32.mrb[0].mxu0
      %v7684 = vadd.f32 %v7484, %v7683
      %v7685 = vpop.f32.mrb[0].mxu0
      %v7686 = vadd.f32 %v7480, %v7685
      %v7687 = vpop.f32.mrb[0].mxu0
      %v7688 = vadd.f32 %v7484, %v7687
      %7689 = vmatprep.mubr.bf16.mxu0 %v7050
      %7690 = vmatmul.mubr.bf16.gmra.mrb[0].mxu0 %v7049
      %v7691 = vpop.f32.mrb[0].mxu0
      %v7692 = vadd.f32 %v7480, %v7691
      %v7693 = vpop.f32.mrb[0].mxu0
      %v7694 = vadd.f32 %v7484, %v7693
      %v7695 = vpop.f32.mrb[0].mxu0
      %v7696 = vadd.f32 %v7480, %v7695
      %v7697 = vpop.f32.mrb[0].mxu0
      %v7698 = vadd.f32 %v7484, %v7697
      %7699 = vmatprep.mubr.bf16.mxu0 %v7052
      %7700 = vmatmul.mubr.bf16.gmra.mrb[0].mxu0 %v7051
      %v7701 = vpop.f32.mrb[0].mxu0
      %v7702 = vadd.f32 %v7480, %v7701
      %v7703 = vpop.f32.mrb[0].mxu0
      %v7704 = vadd.f32 %v7484, %v7703
      %v7705 = vpop.f32.mrb[0].mxu0
      %v7706 = vadd.f32 %v7480, %v7705
      %v7707 = vpop.f32.mrb[0].mxu0
      %v7708 = vadd.f32 %v7484, %v7707
      %7709 = vmatprep.mubr.bf16.mxu0 %v7054
      %7710 = vmatmul.mubr.bf16.gmra.mrb[0].mxu0 %v7053
      %v7711 = vpop.f32.mrb[0].mxu0
      %v7712 = vadd.f32 %v7480, %v7711
      %v7713 = vpop.f32.mrb[0].mxu0
      %v7714 = vadd.f32 %v7484, %v7713
      %v7715 = vpop.f32.mrb[0].mxu0
      %v7716 = vadd.f32 %v7480, %v7715
      %v7717 = vpop.f32.mrb[0].mxu0
      %v7718 = vadd.f32 %v7484, %v7717
      %7719 = vmatprep.mubr.bf16.mxu0 %v7056
      %7720 = vmatmul.mubr.bf16.gmra.mrb[0].mxu0 %v7055
      %v7721 = vpop.f32.mrb[0].mxu0
      %v7722 = vadd.f32 %v7480, %v7721
      %v7723 = vpop.f32.mrb[0].mxu0
      %v7724 = vadd.f32 %v7484, %v7723
      %v7725 = vpop.f32.mrb[0].mxu0
      %v7726 = vadd.f32 %v7480, %v7725
      %v7727 = vpop.f32.mrb[0].mxu0
      %v7728 = vadd.f32 %v7484, %v7727
      %7729 = vmatprep.mubr.bf16.mxu0 %v7058
      %7730 = vmatmul.mubr.bf16.gmra.mrb[0].mxu0 %v7057
      %v7731 = vpop.f32.mrb[0].mxu0
      %v7732 = vadd.f32 %v7480, %v7731
      %v7733 = vpop.f32.mrb[0].mxu0
      %v7734 = vadd.f32 %v7484, %v7733
      %v7735 = vpop.f32.mrb[0].mxu0
      %v7736 = vadd.f32 %v7480, %v7735
      %v7737 = vpop.f32.mrb[0].mxu0
      %v7738 = vadd.f32 %v7484, %v7737
      %7739 = vmatprep.mubr.bf16.mxu0 %v7060
      %7740 = vmatmul.mubr.bf16.gmra.mrb[0].mxu0 %v7059
      %v7741 = vpop.f32.mrb[0].mxu0
      %v7742 = vadd.f32 %v7480, %v7741
      %v7743 = vpop.f32.mrb[0].mxu0
      %v7744 = vadd.f32 %v7484, %v7743
      %v7745 = vpop.f32.mrb[0].mxu0
      %v7746 = vadd.f32 %v7480, %v7745
      %v7747 = vpop.f32.mrb[0].mxu0
      %v7748 = vadd.f32 %v7484, %v7747
      %7749 = vmatprep.mubr.bf16.mxu0 %v7062
      %7750 = vmatmul.mubr.bf16.gmra.mrb[0].mxu0 %v7061
      %v7751 = vpop.f32.mrb[0].mxu0
      %v7752 = vadd.f32 %v7480, %v7751
      %v7753 = vpop.f32.mrb[0].mxu0
      %v7754 = vadd.f32 %v7484, %v7753
      %v7755 = vpop.f32.mrb[0].mxu0
      %v7756 = vadd.f32 %v7480, %v7755
      %v7757 = vpop.f32.mrb[0].mxu0
      %v7758 = vadd.f32 %v7484, %v7757
      %7759 = vmatprep.mubr.bf16.mxu0 %v7064
      %7760 = vmatmul.mubr.bf16.gmra.mrb[0].mxu0 %v7063
      %v7761 = vpop.f32.mrb[0].mxu0
      %v7762 = vadd.f32 %v7480, %v7761
      %v7763 = vpop.f32.mrb[0].mxu0
      %v7764 = vadd.f32 %v7484, %v7763
      %v7765 = vpop.f32.mrb[0].mxu0
      %v7766 = vadd.f32 %v7480, %v7765
      %v7767 = vpop.f32.mrb[0].mxu0
      %v7768 = vadd.f32 %v7484, %v7767
      %7769 = vmatprep.mubr.bf16.mxu0 %v7066
      %7770 = vmatmul.mubr.bf16.gmra.mrb[0].mxu0 %v7065
      %v7771 = vpop.f32.mrb[0].mxu0
      %v7772 = vadd.f32 %v7480, %v7771
      %v7773 = vpop.f32.mrb[0].mxu0
      %v7774 = vadd.f32 %v7484, %v7773
      %v7775 = vpop.f32.mrb[0].mxu0
      %v7776 = vadd.f32 %v7480, %v7775
      %v7777 = vpop.f32.mrb[0].mxu0
      %v7778 = vadd.f32 %v7484, %v7777
      %7779 = vmatprep.mubr.bf16.mxu0 %v7068
      %7780 = vmatmul.mubr.bf16.gmra.mrb[0].mxu0 %v7067
      %v7781 = vpop.f32.mrb[0].mxu0
      %v7782 = vadd.f32 %v7480, %v7781
      %v7783 = vpop.f32.mrb[0].mxu0
      %v7784 = vadd.f32 %v7484, %v7783
      %v7785 = vpop.f32.mrb[0].mxu0
      %v7786 = vadd.f32 %v7480, %v7785
      %v7787 = vpop.f32.mrb[0].mxu0
      %v7788 = vadd.f32 %v7484, %v7787
      %7789 = vmatprep.mubr.bf16.mxu0 %v7070
      %7790 = vmatmul.mubr.bf16.gmra.mrb[0].mxu0 %v7069
      %v7791 = vpop.f32.mrb[0].mxu0
      %v7792 = vadd.f32 %v7480, %v7791
      %v7793 = vpop.f32.mrb[0].mxu0
      %v7794 = vadd.f32 %v7484, %v7793
      %v7795 = vpop.f32.mrb[0].mxu0
      %v7796 = vadd.f32 %v7480, %v7795
      %v7797 = vpop.f32.mrb[0].mxu0
      %v7798 = vadd.f32 %v7484, %v7797
      %7799 = vmatprep.mubr.bf16.mxu0 %v7072
      %7800 = vmatmul.mubr.bf16.gmra.mrb[0].mxu0 %v7071
      %v7801 = vpop.f32.mrb[0].mxu0
      %v7802 = vadd.f32 %v7480, %v7801
      %v7803 = vpop.f32.mrb[0].mxu0
      %v7804 = vadd.f32 %v7484, %v7803
      %v7805 = vpop.f32.mrb[0].mxu0
      %v7806 = vadd.f32 %v7480, %v7805
      %v7807 = vpop.f32.mrb[0].mxu0
      %v7808 = vadd.f32 %v7484, %v7807
      %7809 = vmatprep.mubr.bf16.mxu0 %v7074
      %7810 = vmatmul.mubr.bf16.gmra.mrb[0].mxu0 %v7073
      %v7811 = vpop.f32.mrb[0].mxu0
      %v7812 = vadd.f32 %v7480, %v7811
      %v7813 = vpop.f32.mrb[0].mxu0
      %v7814 = vadd.f32 %v7484, %v7813
      %v7815 = vpop.f32.mrb[0].mxu0
      %v7816 = vadd.f32 %v7480, %v7815
      %v7817 = vpop.f32.mrb[0].mxu0
      %v7818 = vadd.f32 %v7484, %v7817
      %7819 = vmatprep.mubr.bf16.mxu0 %v7076
      %7820 = vmatmul.mubr.bf16.gmra.mrb[0].mxu0 %v7075
      %v7821 = vpop.f32.mrb[0].mxu0
      %v7822 = vadd.f32 %v7480, %v7821
      %v7823 = vpop.f32.mrb[0].mxu0
      %v7824 = vadd.f32 %v7484, %v7823
      %v7825 = vpop.f32.mrb[0].mxu0
      %v7826 = vadd.f32 %v7480, %v7825
      %v7827 = vpop.f32.mrb[0].mxu0
      %v7828 = vadd.f32 %v7484, %v7827
      %7829 = vmatprep.mubr.bf16.mxu0 %v7078
      %7830 = vmatmul.mubr.bf16.gmra.mrb[0].mxu0 %v7077
      %v7831 = vpop.f32.mrb[0].mxu0
      %v7832 = vadd.f32 %v7480, %v7831
      %v7833 = vpop.f32.mrb[0].mxu0
      %v7834 = vadd.f32 %v7484, %v7833
      %v7835 = vpop.f32.mrb[0].mxu0
      %v7836 = vadd.f32 %v7480, %v7835
      %v7837 = vpop.f32.mrb[0].mxu0
      %v7838 = vadd.f32 %v7484, %v7837
      %7839 = vmatprep.mubr.bf16.mxu0 %v7080
      %7840 = vmatmul.mubr.bf16.gmra.mrb[0].mxu0 %v7079
      %v7841 = vpop.f32.mrb[0].mxu0
      %v7842 = vadd.f32 %v7480, %v7841
      %v7843 = vpop.f32.mrb[0].mxu0
      %v7844 = vadd.f32 %v7484, %v7843
      %v7845 = vpop.f32.mrb[0].mxu0
      %v7846 = vadd.f32 %v7480, %v7845
      %v7847 = vpop.f32.mrb[0].mxu0
      %v7848 = vadd.f32 %v7484, %v7847
      %7849 = vmatprep.mubr.bf16.mxu0 %v7082
      %7850 = vmatmul.mubr.bf16.gmra.mrb[0].mxu0 %v7081
      %v7851 = vpop.f32.mrb[0].mxu0
      %v7852 = vadd.f32 %v7480, %v7851
      %v7853 = vpop.f32.mrb[0].mxu0
      %v7854 = vadd.f32 %v7484, %v7853
      %v7855 = vpop.f32.mrb[0].mxu0
      %v7856 = vadd.f32 %v7480, %v7855
      %v7857 = vpop.f32.mrb[0].mxu0
      %v7858 = vadd.f32 %v7484, %v7857
      %7859 = vmatprep.mubr.bf16.mxu0 %v7084
      %7860 = vmatmul.mubr.bf16.gmra.mrb[0].mxu0 %v7083
      %v7861 = vpop.f32.mrb[0].mxu0
      %v7862 = vadd.f32 %v7480, %v7861
      %v7863 = vpop.f32.mrb[0].mxu0
      %v7864 = vadd.f32 %v7484, %v7863
      %v7865 = vpop.f32.mrb[0].mxu0
      %v7866 = vadd.f32 %v7480, %v7865
      %v7867 = vpop.f32.mrb[0].mxu0
      %v7868 = vadd.f32 %v7484, %v7867
      %7869 = vmatprep.mubr.bf16.mxu0 %v7086
      %7870 = vmatmul.mubr.bf16.gmra.mrb[0].mxu0 %v7085
      %v7871 = vpop.f32.mrb[0].mxu0
      %v7872 = vadd.f32 %v7480, %v7871
      %v7873 = vpop.f32.mrb[0].mxu0
      %v7874 = vadd.f32 %v7484, %v7873
      %v7875 = vpop.f32.mrb[0].mxu0
      %v7876 = vadd.f32 %v7480, %v7875
      %v7877 = vpop.f32.mrb[0].mxu0
      %v7878 = vadd.f32 %v7484, %v7877
      %7879 = vmatprep.mubr.bf16.mxu0 %v7088
      %7880 = vmatmul.mubr.bf16.gmra.mrb[0].mxu0 %v7087
      %v7881 = vpop.f32.mrb[0].mxu0
      %v7882 = vadd.f32 %v7480, %v7881
      %v7883 = vpop.f32.mrb[0].mxu0
      %v7884 = vadd.f32 %v7484, %v7883
      %v7885 = vpop.f32.mrb[0].mxu0
      %v7886 = vadd.f32 %v7480, %v7885
      %v7887 = vpop.f32.mrb[0].mxu0
      %v7888 = vadd.f32 %v7484, %v7887
      %7889 = vmatprep.mubr.bf16.mxu0 %v7090
      %7890 = vmatmul.mubr.bf16.gmra.mrb[0].mxu0 %v7089
      %v7891 = vpop.f32.mrb[0].mxu0
      %v7892 = vadd.f32 %v7480, %v7891
      %v7893 = vpop.f32.mrb[0].mxu0
      %v7894 = vadd.f32 %v7484, %v7893
      %v7895 = vpop.f32.mrb[0].mxu0
      %v7896 = vadd.f32 %v7480, %v7895
      %v7897 = vpop.f32.mrb[0].mxu0
      %v7898 = vadd.f32 %v7484, %v7897
      %7899 = vmatprep.mubr.bf16.mxu0 %v7092
      %7900 = vmatmul.mubr.bf16.gmra.mrb[0].mxu0 %v7091
      %v7901 = vpop.f32.mrb[0].mxu0
      %v7902 = vadd.f32 %v7480, %v7901
      %v7903 = vpop.f32.mrb[0].mxu0
      %v7904 = vadd.f32 %v7484, %v7903
      %v7905 = vpop.f32.mrb[0].mxu0
      %v7906 = vadd.f32 %v7480, %v7905
      %v7907 = vpop.f32.mrb[0].mxu0
      %v7908 = vadd.f32 %v7484, %v7907
      %7909 = vmatprep.mubr.bf16.mxu0 %v7094
      %7910 = vmatmul.mubr.bf16.gmra.mrb[0].mxu0 %v7093
      %v7911 = vpop.f32.mrb[0].mxu0
      %v7912 = vadd.f32 %v7480, %v7911
      %v7913 = vpop.f32.mrb[0].mxu0
      %v7914 = vadd.f32 %v7484, %v7913
      %v7915 = vpop.f32.mrb[0].mxu0
      %v7916 = vadd.f32 %v7480, %v7915
      %v7917 = vpop.f32.mrb[0].mxu0
      %v7918 = vadd.f32 %v7484, %v7917
      %7919 = vmatprep.mubr.bf16.mxu0 %v7096
      %7920 = vmatmul.mubr.bf16.gmra.mrb[0].mxu0 %v7095
      %v7921 = vpop.f32.mrb[0].mxu0
      %v7922 = vadd.f32 %v7480, %v7921
      %v7923 = vpop.f32.mrb[0].mxu0
      %v7924 = vadd.f32 %v7484, %v7923
      %v7925 = vpop.f32.mrb[0].mxu0
      %v7926 = vadd.f32 %v7480, %v7925
      %v7927 = vpop.f32.mrb[0].mxu0
      %v7928 = vadd.f32 %v7484, %v7927
      %7929 = vmatprep.mubr.bf16.mxu0 %v7098
      %7930 = vmatmul.mubr.bf16.gmra.mrb[0].mxu0 %v7097
      %v7931 = vpop.f32.mrb[0].mxu0
      %v7932 = vadd.f32 %v7480, %v7931
      %v7933 = vpop.f32.mrb[0].mxu0
      %v7934 = vadd.f32 %v7484, %v7933
      %v7935 = vpop.f32.mrb[0].mxu0
      %v7936 = vadd.f32 %v7480, %v7935
      %v7937 = vpop.f32.mrb[0].mxu0
      %v7938 = vadd.f32 %v7484, %v7937
      %7939 = vmatprep.mubr.bf16.mxu0 %v7100
      %7940 = vmatmul.mubr.bf16.gmra.mrb[0].mxu0 %v7099
      %v7941 = vpop.f32.mrb[0].mxu0
      %v7942 = vadd.f32 %v7480, %v7941
      %v7943 = vpop.f32.mrb[0].mxu0
      %v7944 = vadd.f32 %v7484, %v7943
      %v7945 = vpop.f32.mrb[0].mxu0
      %v7946 = vadd.f32 %v7480, %v7945
      %v7947 = vpop.f32.mrb[0].mxu0
      %v7948 = vadd.f32 %v7484, %v7947
      %7949 = vmatprep.mubr.bf16.mxu0 %v7102
      %7950 = vmatmul.mubr.bf16.gmra.mrb[0].mxu0 %v7101
      %v7951 = vpop.f32.mrb[0].mxu0
      %v7952 = vadd.f32 %v7480, %v7951
      %v7953 = vpop.f32.mrb[0].mxu0
      %v7954 = vadd.f32 %v7484, %v7953
      %v7955 = vpop.f32.mrb[0].mxu0
      %v7956 = vadd.f32 %v7480, %v7955
      %v7957 = vpop.f32.mrb[0].mxu0
      %v7958 = vadd.f32 %v7484, %v7957
      %7959 = vmatprep.mubr.bf16.mxu0 %v7104
      %7960 = vmatmul.mubr.bf16.gmra.mrb[0].mxu0 %v7103
      %v7961 = vpop.f32.mrb[0].mxu0
      %v7962 = vadd.f32 %v7480, %v7961
      %v7963 = vpop.f32.mrb[0].mxu0
      %v7964 = vadd.f32 %v7484, %v7963
      %v7965 = vpop.f32.mrb[0].mxu0
      %v7966 = vadd.f32 %v7480, %v7965
      %v7967 = vpop.f32.mrb[0].mxu0
      %v7968 = vadd.f32 %v7484, %v7967
      %7969 = vmatprep.mubr.bf16.mxu0 %v7106
      %7970 = vmatmul.mubr.bf16.gmra.mrb[0].mxu0 %v7105
      %v7971 = vpop.f32.mrb[0].mxu0
      %v7972 = vadd.f32 %v7480, %v7971
      %v7973 = vpop.f32.mrb[0].mxu0
      %v7974 = vadd.f32 %v7484, %v7973
      %v7975 = vpop.f32.mrb[0].mxu0
      %v7976 = vadd.f32 %v7480, %v7975
      %v7977 = vpop.f32.mrb[0].mxu0
      %v7978 = vadd.f32 %v7484, %v7977
      %7979 = vmatprep.mubr.bf16.mxu0 %v7108
      %7980 = vmatmul.mubr.bf16.gmra.mrb[0].mxu0 %v7107
      %v7981 = vpop.f32.mrb[0].mxu0
      %v7982 = vadd.f32 %v7480, %v7981
      %v7983 = vpop.f32.mrb[0].mxu0
      %v7984 = vadd.f32 %v7484, %v7983
      %v7985 = vpop.f32.mrb[0].mxu0
      %v7986 = vadd.f32 %v7480, %v7985
      %v7987 = vpop.f32.mrb[0].mxu0
      %v7988 = vadd.f32 %v7484, %v7987
      %7989 = vmatprep.mubr.bf16.mxu0 %v7110
      %7990 = vmatmul.mubr.bf16.gmra.mrb[0].mxu0 %v7109
      %v7991 = vpop.f32.mrb[0].mxu0
      %v7992 = vadd.f32 %v7480, %v7991
      %v7993 = vpop.f32.mrb[0].mxu0
      %v7994 = vadd.f32 %v7484, %v7993
      %v7995 = vpop.f32.mrb[0].mxu0
      %v7996 = vadd.f32 %v7480, %v7995
      %v7997 = vpop.f32.mrb[0].mxu0
      %v7998 = vadd.f32 %v7484, %v7997
      %7999 = vdwg.mxu0
      %v8000 = vpack.c.bf16 %v7686, %v7682
      %v8001 = vpack.c.bf16 %v7688, %v7684
      %v8002 = vpack.c.bf16 %v7696, %v7692
      %v8003 = vpack.c.bf16 %v7698, %v7694
      %v8004 = vpack.c.bf16 %v7706, %v7702
      %v8005 = vpack.c.bf16 %v7708, %v7704
      %v8006 = vpack.c.bf16 %v7716, %v7712
      %v8007 = vpack.c.bf16 %v7718, %v7714
      %v8008 = vpack.c.bf16 %v7726, %v7722
      %v8009 = vpack.c.bf16 %v7728, %v7724
      %v8010 = vpack.c.bf16 %v7736, %v7732
      %v8011 = vpack.c.bf16 %v7738, %v7734
      %v8012 = vpack.c.bf16 %v7746, %v7742
      %v8013 = vpack.c.bf16 %v7748, %v7744
      %v8014 = vpack.c.bf16 %v7756, %v7752
      %v8015 = vpack.c.bf16 %v7758, %v7754
      %v8016 = vpack.c.bf16 %v7766, %v7762
      %v8017 = vpack.c.bf16 %v7768, %v7764
      %v8018 = vpack.c.bf16 %v7776, %v7772
      %v8019 = vpack.c.bf16 %v7778, %v7774
      %v8020 = vpack.c.bf16 %v7786, %v7782
      %v8021 = vpack.c.bf16 %v7788, %v7784
      %v8022 = vpack.c.bf16 %v7796, %v7792
      %v8023 = vpack.c.bf16 %v7798, %v7794
      %v8024 = vpack.c.bf16 %v7806, %v7802
      %v8025 = vpack.c.bf16 %v7808, %v7804
      %v8026 = vpack.c.bf16 %v7816, %v7812
      %v8027 = vpack.c.bf16 %v7818, %v7814
      %v8028 = vpack.c.bf16 %v7826, %v7822
      %v8029 = vpack.c.bf16 %v7828, %v7824
      %v8030 = vpack.c.bf16 %v7836, %v7832
      %v8031 = vpack.c.bf16 %v7838, %v7834
      %v8032 = vpack.c.bf16 %v7846, %v7842
      %v8033 = vpack.c.bf16 %v7848, %v7844
      %v8034 = vpack.c.bf16 %v7856, %v7852
      %v8035 = vpack.c.bf16 %v7858, %v7854
      %v8036 = vpack.c.bf16 %v7866, %v7862
      %v8037 = vpack.c.bf16 %v7868, %v7864
      %v8038 = vpack.c.bf16 %v7876, %v7872
      %v8039 = vpack.c.bf16 %v7878, %v7874
      %v8040 = vpack.c.bf16 %v7886, %v7882
      %v8041 = vpack.c.bf16 %v7888, %v7884
      %v8042 = vpack.c.bf16 %v7896, %v7892
      %v8043 = vpack.c.bf16 %v7898, %v7894
      %v8044 = vpack.c.bf16 %v7906, %v7902
      %v8045 = vpack.c.bf16 %v7908, %v7904
      %v8046 = vpack.c.bf16 %v7916, %v7912
      %v8047 = vpack.c.bf16 %v7918, %v7914
      %v8048 = vpack.c.bf16 %v7926, %v7922
      %v8049 = vpack.c.bf16 %v7928, %v7924
      %v8050 = vpack.c.bf16 %v7936, %v7932
      %v8051 = vpack.c.bf16 %v7938, %v7934
      %v8052 = vpack.c.bf16 %v7946, %v7942
      %v8053 = vpack.c.bf16 %v7948, %v7944
      %v8054 = vpack.c.bf16 %v7956, %v7952
      %v8055 = vpack.c.bf16 %v7958, %v7954
      %v8056 = vpack.c.bf16 %v7966, %v7962
      %v8057 = vpack.c.bf16 %v7968, %v7964
      %v8058 = vpack.c.bf16 %v7976, %v7972
      %v8059 = vpack.c.bf16 %v7978, %v7974
      %v8060 = vpack.c.bf16 %v7986, %v7982
      %v8061 = vpack.c.bf16 %v7988, %v7984
      %v8062 = vpack.c.bf16 %v7996, %v7992
      %v8063 = vpack.c.bf16 %v7998, %v7994
      %v8064 = vld [vmem:[%s9] sm:$0xf]
      %v8065 = vld [vmem:[%s9 + $0x4] sm:$0xf]
      %v8066 = vld [vmem:[%s9 + $0x8] sm:$0xf]
      %v8067 = vld [vmem:[%s9 + $0xc] sm:$0xf]
      %v8068 = vld [vmem:[%s9 + $0x10] sm:$0xf]
      %v8069 = vld [vmem:[%s9 + $0x14] sm:$0xf]
      %v8070 = vld [vmem:[%s9 + $0x18] sm:$0xf]
      %v8071 = vld [vmem:[%s9 + $0x1c] sm:$0xf]
      %v8072 = vld [vmem:[%s9 + $0x20] sm:$0xf]
      %v8073 = vld [vmem:[%s9 + $0x24] sm:$0xf]
      %v8074 = vld [vmem:[%s9 + $0x28] sm:$0xf]
      %v8075 = vld [vmem:[%s9 + $0x2c] sm:$0xf]
      %v8076 = vld [vmem:[%s9 + $0x30] sm:$0xf]
      %v8077 = vld [vmem:[%s9 + $0x34] sm:$0xf]
      %v8078 = vld [vmem:[%s9 + $0x38] sm:$0xf]
      %v8079 = vld [vmem:[%s9 + $0x3c] sm:$0xf]
      %v8080 = vld [vmem:[%s9 + $0x40] sm:$0xf]
      %v8081 = vld [vmem:[%s9 + $0x44] sm:$0xf]
      %v8082 = vld [vmem:[%s9 + $0x48] sm:$0xf]
      %v8083 = vld [vmem:[%s9 + $0x4c] sm:$0xf]
      %v8084 = vld [vmem:[%s9 + $0x50] sm:$0xf]
      %v8085 = vld [vmem:[%s9 + $0x54] sm:$0xf]
      %v8086 = vld [vmem:[%s9 + $0x58] sm:$0xf]
      %v8087 = vld [vmem:[%s9 + $0x5c] sm:$0xf]
      %v8088 = vld [vmem:[%s9 + $0x60] sm:$0xf]
      %v8089 = vld [vmem:[%s9 + $0x64] sm:$0xf]
      %v8090 = vld [vmem:[%s9 + $0x68] sm:$0xf]
      %v8091 = vld [vmem:[%s9 + $0x6c] sm:$0xf]
      %v8092 = vld [vmem:[%s9 + $0x70] sm:$0xf]
      %v8093 = vld [vmem:[%s9 + $0x74] sm:$0xf]
      %v8094 = vld [vmem:[%s9 + $0x78] sm:$0xf]
      %v8095 = vld [vmem:[%s9 + $0x7c] sm:$0xf]
      %v8096 = vld [vmem:[%s10] sm:$0xf]
      %v8098 = vsel %vm811, %v8096, 0
      %8100 = vmatprep.subr.bf16.mxu0 0
      %8101 = vmatpush1.bf16.msra.mxu0 %v8098
      %8102 = vmatprep.subr.bf16.mxu0 0
      %8103 = vmatpush1.bf16.msra.mxu0 0
      %8104 = vmatprep.subr.bf16.mxu0 0
      %8105 = vmatpush1.bf16.msra.mxu0 0
      %8106 = vmatprep.subr.bf16.mxu0 0
      %8107 = vmatpush1.bf16.msra.mxu0 0
      %8108 = vmatprep.subr.bf16.mxu0 0
      %8109 = vmatpush1.bf16.msra.mxu0 0
      %8110 = vmatprep.subr.bf16.mxu0 0
      %8111 = vmatpush1.bf16.msra.mxu0 0
      %8112 = vmatprep.subr.bf16.mxu0 0
      %8113 = vmatpush1.bf16.msra.mxu0 0
      %8114 = vmatprep.subr.bf16.mxu0 0
      %8115 = vmatpush1.bf16.msra.mxu0 0
      %8116 = vmatprep.subr.bf16.mxu0 0
      %8117 = vmatpush1.bf16.msra.mxu0 0
      %8118 = vmatprep.subr.bf16.mxu0 0
      %8119 = vmatpush1.bf16.msra.mxu0 0
      %8120 = vmatprep.subr.bf16.mxu0 0
      %8121 = vmatpush1.bf16.msra.mxu0 0
      %8122 = vmatprep.subr.bf16.mxu0 0
      %8123 = vmatpush1.bf16.msra.mxu0 0
      %8124 = vmatprep.subr.bf16.mxu0 0
      %8125 = vmatpush1.bf16.msra.mxu0 0
      %8126 = vmatprep.subr.bf16.mxu0 0
      %8127 = vmatpush1.bf16.msra.mxu0 0
      %8128 = vmatprep.subr.bf16.mxu0 0
      %8129 = vmatpush1.bf16.msra.mxu0 0
      %8130 = vmatprep.subr.bf16.mxu0 0
      %8131 = vmatpush1.bf16.msra.mxu0 0
      %8132 = vmatprep.mubr.bf16.mxu0 0
      %8133 = vmatmul.mubr.bf16.gmra.mrb[0].mxu0 %v716
      %v8134 = vpop.f32.mrb[0].mxu0
      %v8135 = vadd.f32 0.0, %v8134
      %v8136 = vpop.f32.mrb[0].mxu0
      %v8137 = vpop.f32.mrb[0].mxu0
      %v8138 = vadd.f32 0.0, %v8137
      %v8139 = vpop.f32.mrb[0].mxu0
      %8140 = vmatprep.mubr.bf16.mxu0 0
      %8141 = vmatmul.mubr.bf16.gmra.mrb[0].mxu0 %v719
      %v8142 = vpop.f32.mrb[0].mxu0
      %v8143 = vadd.f32 0.0, %v8142
      %v8144 = vpop.f32.mrb[0].mxu0
      %v8145 = vpop.f32.mrb[0].mxu0
      %v8146 = vadd.f32 0.0, %v8145
      %v8147 = vpop.f32.mrb[0].mxu0
      %8148 = vmatprep.mubr.bf16.mxu0 0
      %8149 = vmatmul.mubr.bf16.gmra.mrb[0].mxu0 %v722
      %v8150 = vpop.f32.mrb[0].mxu0
      %v8151 = vadd.f32 0.0, %v8150
      %v8152 = vpop.f32.mrb[0].mxu0
      %v8153 = vpop.f32.mrb[0].mxu0
      %v8154 = vadd.f32 0.0, %v8153
      %v8155 = vpop.f32.mrb[0].mxu0
      %8156 = vmatprep.mubr.bf16.mxu0 0
      %8157 = vmatmul.mubr.bf16.gmra.mrb[0].mxu0 %v725
      %v8158 = vpop.f32.mrb[0].mxu0
      %v8159 = vadd.f32 0.0, %v8158
      %v8160 = vpop.f32.mrb[0].mxu0
      %v8161 = vpop.f32.mrb[0].mxu0
      %v8162 = vadd.f32 0.0, %v8161
      %v8163 = vpop.f32.mrb[0].mxu0
      %8164 = vmatprep.mubr.bf16.mxu0 0
      %8165 = vmatmul.mubr.bf16.gmra.mrb[0].mxu0 %v728
      %v8166 = vpop.f32.mrb[0].mxu0
      %v8167 = vadd.f32 0.0, %v8166
      %v8168 = vpop.f32.mrb[0].mxu0
      %v8169 = vpop.f32.mrb[0].mxu0
      %v8170 = vadd.f32 0.0, %v8169
      %v8171 = vpop.f32.mrb[0].mxu0
      %8172 = vmatprep.mubr.bf16.mxu0 0
      %8173 = vmatmul.mubr.bf16.gmra.mrb[0].mxu0 %v731
      %v8174 = vpop.f32.mrb[0].mxu0
      %v8175 = vadd.f32 0.0, %v8174
      %v8176 = vpop.f32.mrb[0].mxu0
      %v8177 = vpop.f32.mrb[0].mxu0
      %v8178 = vadd.f32 0.0, %v8177
      %v8179 = vpop.f32.mrb[0].mxu0
      %8180 = vmatprep.mubr.bf16.mxu0 0
      %8181 = vmatmul.mubr.bf16.gmra.mrb[0].mxu0 %v734
      %v8182 = vpop.f32.mrb[0].mxu0
      %v8183 = vadd.f32 0.0, %v8182
      %v8184 = vpop.f32.mrb[0].mxu0
      %v8185 = vpop.f32.mrb[0].mxu0
      %v8186 = vadd.f32 0.0, %v8185
      %v8187 = vpop.f32.mrb[0].mxu0
      %8188 = vmatprep.mubr.bf16.mxu0 0
      %8189 = vmatmul.mubr.bf16.gmra.mrb[0].mxu0 %v737
      %v8190 = vpop.f32.mrb[0].mxu0
      %v8191 = vadd.f32 0.0, %v8190
      %v8192 = vpop.f32.mrb[0].mxu0
      %v8193 = vpop.f32.mrb[0].mxu0
      %v8194 = vadd.f32 0.0, %v8193
      %v8195 = vpop.f32.mrb[0].mxu0
      %8196 = vmatprep.mubr.bf16.mxu0 0
      %8197 = vmatmul.mubr.bf16.gmra.mrb[0].mxu0 %v740
      %v8198 = vpop.f32.mrb[0].mxu0
      %v8199 = vadd.f32 0.0, %v8198
      %v8200 = vpop.f32.mrb[0].mxu0
      %v8201 = vpop.f32.mrb[0].mxu0
      %v8202 = vadd.f32 0.0, %v8201
      %v8203 = vpop.f32.mrb[0].mxu0
      %8204 = vmatprep.mubr.bf16.mxu0 0
      %8205 = vmatmul.mubr.bf16.gmra.mrb[0].mxu0 %v743
      %v8206 = vpop.f32.mrb[0].mxu0
      %v8207 = vadd.f32 0.0, %v8206
      %v8208 = vpop.f32.mrb[0].mxu0
      %v8209 = vpop.f32.mrb[0].mxu0
      %v8210 = vadd.f32 0.0, %v8209
      %v8211 = vpop.f32.mrb[0].mxu0
      %8212 = vmatprep.mubr.bf16.mxu0 0
      %8213 = vmatmul.mubr.bf16.gmra.mrb[0].mxu0 %v746
      %v8214 = vpop.f32.mrb[0].mxu0
      %v8215 = vadd.f32 0.0, %v8214
      %v8216 = vpop.f32.mrb[0].mxu0
      %v8217 = vpop.f32.mrb[0].mxu0
      %v8218 = vadd.f32 0.0, %v8217
      %v8219 = vpop.f32.mrb[0].mxu0
      %8220 = vmatprep.mubr.bf16.mxu0 0
      %8221 = vmatmul.mubr.bf16.gmra.mrb[0].mxu0 %v749
      %v8222 = vpop.f32.mrb[0].mxu0
      %v8223 = vadd.f32 0.0, %v8222
      %v8224 = vpop.f32.mrb[0].mxu0
      %v8225 = vpop.f32.mrb[0].mxu0
      %v8226 = vadd.f32 0.0, %v8225
      %v8227 = vpop.f32.mrb[0].mxu0
      %8228 = vmatprep.mubr.bf16.mxu0 0
      %8229 = vmatmul.mubr.bf16.gmra.mrb[0].mxu0 %v752
      %v8230 = vpop.f32.mrb[0].mxu0
      %v8231 = vadd.f32 0.0, %v8230
      %v8232 = vpop.f32.mrb[0].mxu0
      %v8233 = vpop.f32.mrb[0].mxu0
      %v8234 = vadd.f32 0.0, %v8233
      %v8235 = vpop.f32.mrb[0].mxu0
      %8236 = vmatprep.mubr.bf16.mxu0 0
      %8237 = vmatmul.mubr.bf16.gmra.mrb[0].mxu0 %v755
      %v8238 = vpop.f32.mrb[0].mxu0
      %v8239 = vadd.f32 0.0, %v8238
      %v8240 = vpop.f32.mrb[0].mxu0
      %v8241 = vpop.f32.mrb[0].mxu0
      %v8242 = vadd.f32 0.0, %v8241
      %v8243 = vpop.f32.mrb[0].mxu0
      %8244 = vmatprep.mubr.bf16.mxu0 0
      %8245 = vmatmul.mubr.bf16.gmra.mrb[0].mxu0 %v758
      %v8246 = vpop.f32.mrb[0].mxu0
      %v8247 = vadd.f32 0.0, %v8246
      %v8248 = vpop.f32.mrb[0].mxu0
      %v8249 = vpop.f32.mrb[0].mxu0
      %v8250 = vadd.f32 0.0, %v8249
      %v8251 = vpop.f32.mrb[0].mxu0
      %8252 = vmatprep.mubr.bf16.mxu0 0
      %8253 = vmatmul.mubr.bf16.gmra.mrb[0].mxu0 %v761
      %v8254 = vpop.f32.mrb[0].mxu0
      %v8255 = vadd.f32 0.0, %v8254
      %v8256 = vpop.f32.mrb[0].mxu0
      %v8257 = vpop.f32.mrb[0].mxu0
      %v8258 = vadd.f32 0.0, %v8257
      %v8259 = vpop.f32.mrb[0].mxu0
      %8260 = vmatprep.mubr.bf16.mxu0 0
      %8261 = vmatmul.mubr.bf16.gmra.mrb[0].mxu0 %v764
      %v8262 = vpop.f32.mrb[0].mxu0
      %v8263 = vadd.f32 0.0, %v8262
      %v8264 = vpop.f32.mrb[0].mxu0
      %v8265 = vpop.f32.mrb[0].mxu0
      %v8266 = vadd.f32 0.0, %v8265
      %v8267 = vpop.f32.mrb[0].mxu0
      %8268 = vmatprep.mubr.bf16.mxu0 0
      %8269 = vmatmul.mubr.bf16.gmra.mrb[0].mxu0 %v767
      %v8270 = vpop.f32.mrb[0].mxu0
      %v8271 = vadd.f32 0.0, %v8270
      %v8272 = vpop.f32.mrb[0].mxu0
      %v8273 = vpop.f32.mrb[0].mxu0
      %v8274 = vadd.f32 0.0, %v8273
      %v8275 = vpop.f32.mrb[0].mxu0
      %8276 = vmatprep.mubr.bf16.mxu0 0
      %8277 = vmatmul.mubr.bf16.gmra.mrb[0].mxu0 %v770
      %v8278 = vpop.f32.mrb[0].mxu0
      %v8279 = vadd.f32 0.0, %v8278
      %v8280 = vpop.f32.mrb[0].mxu0
      %v8281 = vpop.f32.mrb[0].mxu0
      %v8282 = vadd.f32 0.0, %v8281
      %v8283 = vpop.f32.mrb[0].mxu0
      %8284 = vmatprep.mubr.bf16.mxu0 0
      %8285 = vmatmul.mubr.bf16.gmra.mrb[0].mxu0 %v773
      %v8286 = vpop.f32.mrb[0].mxu0
      %v8287 = vadd.f32 0.0, %v8286
      %v8288 = vpop.f32.mrb[0].mxu0
      %v8289 = vpop.f32.mrb[0].mxu0
      %v8290 = vadd.f32 0.0, %v8289
      %v8291 = vpop.f32.mrb[0].mxu0
      %8292 = vmatprep.mubr.bf16.mxu0 0
      %8293 = vmatmul.mubr.bf16.gmra.mrb[0].mxu0 %v776
      %v8294 = vpop.f32.mrb[0].mxu0
      %v8295 = vadd.f32 0.0, %v8294
      %v8296 = vpop.f32.mrb[0].mxu0
      %v8297 = vpop.f32.mrb[0].mxu0
      %v8298 = vadd.f32 0.0, %v8297
      %v8299 = vpop.f32.mrb[0].mxu0
      %8300 = vmatprep.mubr.bf16.mxu0 0
      %8301 = vmatmul.mubr.bf16.gmra.mrb[0].mxu0 %v779
      %v8302 = vpop.f32.mrb[0].mxu0
      %v8303 = vadd.f32 0.0, %v8302
      %v8304 = vpop.f32.mrb[0].mxu0
      %v8305 = vpop.f32.mrb[0].mxu0
      %v8306 = vadd.f32 0.0, %v8305
      %v8307 = vpop.f32.mrb[0].mxu0
      %8308 = vmatprep.mubr.bf16.mxu0 0
      %8309 = vmatmul.mubr.bf16.gmra.mrb[0].mxu0 %v782
      %v8310 = vpop.f32.mrb[0].mxu0
      %v8311 = vadd.f32 0.0, %v8310
      %v8312 = vpop.f32.mrb[0].mxu0
      %v8313 = vpop.f32.mrb[0].mxu0
      %v8314 = vadd.f32 0.0, %v8313
      %v8315 = vpop.f32.mrb[0].mxu0
      %8316 = vmatprep.mubr.bf16.mxu0 0
      %8317 = vmatmul.mubr.bf16.gmra.mrb[0].mxu0 %v785
      %v8318 = vpop.f32.mrb[0].mxu0
      %v8319 = vadd.f32 0.0, %v8318
      %v8320 = vpop.f32.mrb[0].mxu0
      %v8321 = vpop.f32.mrb[0].mxu0
      %v8322 = vadd.f32 0.0, %v8321
      %v8323 = vpop.f32.mrb[0].mxu0
      %8324 = vmatprep.mubr.bf16.mxu0 0
      %8325 = vmatmul.mubr.bf16.gmra.mrb[0].mxu0 %v788
      %v8326 = vpop.f32.mrb[0].mxu0
      %v8327 = vadd.f32 0.0, %v8326
      %v8328 = vpop.f32.mrb[0].mxu0
      %v8329 = vpop.f32.mrb[0].mxu0
      %v8330 = vadd.f32 0.0, %v8329
      %v8331 = vpop.f32.mrb[0].mxu0
      %8332 = vmatprep.mubr.bf16.mxu0 0
      %8333 = vmatmul.mubr.bf16.gmra.mrb[0].mxu0 %v791
      %v8334 = vpop.f32.mrb[0].mxu0
      %v8335 = vadd.f32 0.0, %v8334
      %v8336 = vpop.f32.mrb[0].mxu0
      %v8337 = vpop.f32.mrb[0].mxu0
      %v8338 = vadd.f32 0.0, %v8337
      %v8339 = vpop.f32.mrb[0].mxu0
      %8340 = vmatprep.mubr.bf16.mxu0 0
      %8341 = vmatmul.mubr.bf16.gmra.mrb[0].mxu0 %v794
      %v8342 = vpop.f32.mrb[0].mxu0
      %v8343 = vadd.f32 0.0, %v8342
      %v8344 = vpop.f32.mrb[0].mxu0
      %v8345 = vpop.f32.mrb[0].mxu0
      %v8346 = vadd.f32 0.0, %v8345
      %v8347 = vpop.f32.mrb[0].mxu0
      %8348 = vmatprep.mubr.bf16.mxu0 0
      %8349 = vmatmul.mubr.bf16.gmra.mrb[0].mxu0 %v797
      %v8350 = vpop.f32.mrb[0].mxu0
      %v8351 = vadd.f32 0.0, %v8350
      %v8352 = vpop.f32.mrb[0].mxu0
      %v8353 = vpop.f32.mrb[0].mxu0
      %v8354 = vadd.f32 0.0, %v8353
      %v8355 = vpop.f32.mrb[0].mxu0
      %8356 = vmatprep.mubr.bf16.mxu0 0
      %8357 = vmatmul.mubr.bf16.gmra.mrb[0].mxu0 %v800
      %v8358 = vpop.f32.mrb[0].mxu0
      %v8359 = vadd.f32 0.0, %v8358
      %v8360 = vpop.f32.mrb[0].mxu0
      %v8361 = vpop.f32.mrb[0].mxu0
      %v8362 = vadd.f32 0.0, %v8361
      %v8363 = vpop.f32.mrb[0].mxu0
      %8364 = vmatprep.mubr.bf16.mxu0 0
      %8365 = vmatmul.mubr.bf16.gmra.mrb[0].mxu0 %v803
      %v8366 = vpop.f32.mrb[0].mxu0
      %v8367 = vadd.f32 0.0, %v8366
      %v8368 = vpop.f32.mrb[0].mxu0
      %v8369 = vpop.f32.mrb[0].mxu0
      %v8370 = vadd.f32 0.0, %v8369
      %v8371 = vpop.f32.mrb[0].mxu0
      %8372 = vmatprep.mubr.bf16.mxu0 0
      %8373 = vmatmul.mubr.bf16.gmra.mrb[0].mxu0 %v806
      %v8374 = vpop.f32.mrb[0].mxu0
      %v8375 = vadd.f32 0.0, %v8374
      %v8376 = vpop.f32.mrb[0].mxu0
      %v8377 = vpop.f32.mrb[0].mxu0
      %v8378 = vadd.f32 0.0, %v8377
      %v8379 = vpop.f32.mrb[0].mxu0
      %8380 = vmatprep.mubr.bf16.mxu0 0
      %8381 = vmatmul.mubr.bf16.gmra.mrb[0].mxu0 %v809
      %v8382 = vpop.f32.mrb[0].mxu0
      %v8383 = vadd.f32 0.0, %v8382
      %v8384 = vpop.f32.mrb[0].mxu0
      %v8385 = vpop.f32.mrb[0].mxu0
      %v8386 = vadd.f32 0.0, %v8385
      %v8387 = vpop.f32.mrb[0].mxu0
      %8388 = vdwg.mxu0
      %v8421 = vunpack.c.l.b16 %v8064
      %v8422 = vunpack.c.l.b16 %v8065
      %v8423 = vunpack.c.l.b16 %v8066
      %v8424 = vunpack.c.l.b16 %v8067
      %v8425 = vunpack.c.l.b16 %v8068
      %v8426 = vunpack.c.l.b16 %v8069
      %v8427 = vunpack.c.l.b16 %v8070
      %v8428 = vunpack.c.l.b16 %v8071
      %v8429 = vunpack.c.l.b16 %v8072
      %v8430 = vunpack.c.l.b16 %v8073
      %v8431 = vunpack.c.l.b16 %v8074
      %v8432 = vunpack.c.l.b16 %v8075
      %v8433 = vunpack.c.l.b16 %v8076
      %v8434 = vunpack.c.l.b16 %v8077
      %v8435 = vunpack.c.l.b16 %v8078
      %v8436 = vunpack.c.l.b16 %v8079
      %v8437 = vunpack.c.l.b16 %v8080
      %v8438 = vunpack.c.l.b16 %v8081
      %v8439 = vunpack.c.l.b16 %v8082
      %v8440 = vunpack.c.l.b16 %v8083
      %v8441 = vunpack.c.l.b16 %v8084
      %v8442 = vunpack.c.l.b16 %v8085
      %v8443 = vunpack.c.l.b16 %v8086
      %v8444 = vunpack.c.l.b16 %v8087
      %v8445 = vunpack.c.l.b16 %v8088
      %v8446 = vunpack.c.l.b16 %v8089
      %v8447 = vunpack.c.l.b16 %v8090
      %v8448 = vunpack.c.l.b16 %v8091
      %v8449 = vunpack.c.l.b16 %v8092
      %v8450 = vunpack.c.l.b16 %v8093
      %v8451 = vunpack.c.l.b16 %v8094
      %v8452 = vunpack.c.l.b16 %v8095
      %v8453 = vpack.c.b16 %v8422, %v8421
      %v8454 = vpack.c.b16 %v8424, %v8423
      %v8455 = vpack.c.b16 %v8426, %v8425
      %v8456 = vpack.c.b16 %v8428, %v8427
      %v8457 = vpack.c.b16 %v8430, %v8429
      %v8458 = vpack.c.b16 %v8432, %v8431
      %v8459 = vpack.c.b16 %v8434, %v8433
      %v8460 = vpack.c.b16 %v8436, %v8435
      %v8461 = vpack.c.b16 %v8438, %v8437
      %v8462 = vpack.c.b16 %v8440, %v8439
      %v8463 = vpack.c.b16 %v8442, %v8441
      %v8464 = vpack.c.b16 %v8444, %v8443
      %v8465 = vpack.c.b16 %v8446, %v8445
      %v8466 = vpack.c.b16 %v8448, %v8447
      %v8467 = vpack.c.b16 %v8450, %v8449
      %v8468 = vpack.c.b16 %v8452, %v8451
      %8485 = vmatprep.subr.bf16.mxu0 0
      %8486 = vmatpush1.bf16.msra.mxu0 %v8453
      %8487 = vmatprep.subr.bf16.mxu0 0
      %8488 = vmatpush1.bf16.msra.mxu0 %v8454
      %8489 = vmatprep.subr.bf16.mxu0 0
      %8490 = vmatpush1.bf16.msra.mxu0 %v8455
      %8491 = vmatprep.subr.bf16.mxu0 0
      %8492 = vmatpush1.bf16.msra.mxu0 %v8456
      %8493 = vmatprep.subr.bf16.mxu0 0
      %8494 = vmatpush1.bf16.msra.mxu0 %v8457
      %8495 = vmatprep.subr.bf16.mxu0 0
      %8496 = vmatpush1.bf16.msra.mxu0 %v8458
      %8497 = vmatprep.subr.bf16.mxu0 0
      %8498 = vmatpush1.bf16.msra.mxu0 %v8459
      %8499 = vmatprep.subr.bf16.mxu0 0
      %8500 = vmatpush1.bf16.msra.mxu0 %v8460
      %8501 = vmatprep.subr.bf16.mxu0 0
      %8502 = vmatpush1.bf16.msra.mxu0 %v8461
      %8503 = vmatprep.subr.bf16.mxu0 0
      %8504 = vmatpush1.bf16.msra.mxu0 %v8462
      %8505 = vmatprep.subr.bf16.mxu0 0
      %8506 = vmatpush1.bf16.msra.mxu0 %v8463
      %8507 = vmatprep.subr.bf16.mxu0 0
      %8508 = vmatpush1.bf16.msra.mxu0 %v8464
      %8509 = vmatprep.subr.bf16.mxu0 0
      %8510 = vmatpush1.bf16.msra.mxu0 %v8465
      %8511 = vmatprep.subr.bf16.mxu0 0
      %8512 = vmatpush1.bf16.msra.mxu0 %v8466
      %8513 = vmatprep.subr.bf16.mxu0 0
      %8514 = vmatpush1.bf16.msra.mxu0 %v8467
      %8515 = vmatprep.subr.bf16.mxu0 0
      %8516 = vmatpush1.bf16.msra.mxu0 %v8468
      %8517 = vmatprep.mubr.bf16.mxu0 %v8001
      %8518 = vmatmul.mubr.bf16.gmra.mrb[0].mxu0 %v8000
      %v8519 = vpop.f32.mrb[0].mxu0
      %v8520 = vadd.f32 %v8135, %v8519
      %v8521 = vpop.f32.mrb[0].mxu0
      %v8522 = vpop.f32.mrb[0].mxu0
      %v8523 = vadd.f32 %v8138, %v8522
      %v8524 = vpop.f32.mrb[0].mxu0
      %8525 = vmatprep.mubr.bf16.mxu0 %v8003
      %8526 = vmatmul.mubr.bf16.gmra.mrb[0].mxu0 %v8002
      %v8527 = vpop.f32.mrb[0].mxu0
      %v8528 = vadd.f32 %v8143, %v8527
      %v8529 = vpop.f32.mrb[0].mxu0
      %v8530 = vpop.f32.mrb[0].mxu0
      %v8531 = vadd.f32 %v8146, %v8530
      %v8532 = vpop.f32.mrb[0].mxu0
      %8533 = vmatprep.mubr.bf16.mxu0 %v8005
      %8534 = vmatmul.mubr.bf16.gmra.mrb[0].mxu0 %v8004
      %v8535 = vpop.f32.mrb[0].mxu0
      %v8536 = vadd.f32 %v8151, %v8535
      %v8537 = vpop.f32.mrb[0].mxu0
      %v8538 = vpop.f32.mrb[0].mxu0
      %v8539 = vadd.f32 %v8154, %v8538
      %v8540 = vpop.f32.mrb[0].mxu0
      %8541 = vmatprep.mubr.bf16.mxu0 %v8007
      %8542 = vmatmul.mubr.bf16.gmra.mrb[0].mxu0 %v8006
      %v8543 = vpop.f32.mrb[0].mxu0
      %v8544 = vadd.f32 %v8159, %v8543
      %v8545 = vpop.f32.mrb[0].mxu0
      %v8546 = vpop.f32.mrb[0].mxu0
      %v8547 = vadd.f32 %v8162, %v8546
      %v8548 = vpop.f32.mrb[0].mxu0
      %8549 = vmatprep.mubr.bf16.mxu0 %v8009
      %8550 = vmatmul.mubr.bf16.gmra.mrb[0].mxu0 %v8008
      %v8551 = vpop.f32.mrb[0].mxu0
      %v8552 = vadd.f32 %v8167, %v8551
      %v8553 = vpop.f32.mrb[0].mxu0
      %v8554 = vpop.f32.mrb[0].mxu0
      %v8555 = vadd.f32 %v8170, %v8554
      %v8556 = vpop.f32.mrb[0].mxu0
      %8557 = vmatprep.mubr.bf16.mxu0 %v8011
      %8558 = vmatmul.mubr.bf16.gmra.mrb[0].mxu0 %v8010
      %v8559 = vpop.f32.mrb[0].mxu0
      %v8560 = vadd.f32 %v8175, %v8559
      %v8561 = vpop.f32.mrb[0].mxu0
      %v8562 = vpop.f32.mrb[0].mxu0
      %v8563 = vadd.f32 %v8178, %v8562
      %v8564 = vpop.f32.mrb[0].mxu0
      %8565 = vmatprep.mubr.bf16.mxu0 %v8013
      %8566 = vmatmul.mubr.bf16.gmra.mrb[0].mxu0 %v8012
      %v8567 = vpop.f32.mrb[0].mxu0
      %v8568 = vadd.f32 %v8183, %v8567
      %v8569 = vpop.f32.mrb[0].mxu0
      %v8570 = vpop.f32.mrb[0].mxu0
      %v8571 = vadd.f32 %v8186, %v8570
      %v8572 = vpop.f32.mrb[0].mxu0
      %8573 = vmatprep.mubr.bf16.mxu0 %v8015
      %8574 = vmatmul.mubr.bf16.gmra.mrb[0].mxu0 %v8014
      %v8575 = vpop.f32.mrb[0].mxu0
      %v8576 = vadd.f32 %v8191, %v8575
      %v8577 = vpop.f32.mrb[0].mxu0
      %v8578 = vpop.f32.mrb[0].mxu0
      %v8579 = vadd.f32 %v8194, %v8578
      %v8580 = vpop.f32.mrb[0].mxu0
      %8581 = vmatprep.mubr.bf16.mxu0 %v8017
      %8582 = vmatmul.mubr.bf16.gmra.mrb[0].mxu0 %v8016
      %v8583 = vpop.f32.mrb[0].mxu0
      %v8584 = vadd.f32 %v8199, %v8583
      %v8585 = vpop.f32.mrb[0].mxu0
      %v8586 = vpop.f32.mrb[0].mxu0
      %v8587 = vadd.f32 %v8202, %v8586
      %v8588 = vpop.f32.mrb[0].mxu0
      %8589 = vmatprep.mubr.bf16.mxu0 %v8019
      %8590 = vmatmul.mubr.bf16.gmra.mrb[0].mxu0 %v8018
      %v8591 = vpop.f32.mrb[0].mxu0
      %v8592 = vadd.f32 %v8207, %v8591
      %v8593 = vpop.f32.mrb[0].mxu0
      %v8594 = vpop.f32.mrb[0].mxu0
      %v8595 = vadd.f32 %v8210, %v8594
      %v8596 = vpop.f32.mrb[0].mxu0
      %8597 = vmatprep.mubr.bf16.mxu0 %v8021
      %8598 = vmatmul.mubr.bf16.gmra.mrb[0].mxu0 %v8020
      %v8599 = vpop.f32.mrb[0].mxu0
      %v8600 = vadd.f32 %v8215, %v8599
      %v8601 = vpop.f32.mrb[0].mxu0
      %v8602 = vpop.f32.mrb[0].mxu0
      %v8603 = vadd.f32 %v8218, %v8602
      %v8604 = vpop.f32.mrb[0].mxu0
      %8605 = vmatprep.mubr.bf16.mxu0 %v8023
      %8606 = vmatmul.mubr.bf16.gmra.mrb[0].mxu0 %v8022
      %v8607 = vpop.f32.mrb[0].mxu0
      %v8608 = vadd.f32 %v8223, %v8607
      %v8609 = vpop.f32.mrb[0].mxu0
      %v8610 = vpop.f32.mrb[0].mxu0
      %v8611 = vadd.f32 %v8226, %v8610
      %v8612 = vpop.f32.mrb[0].mxu0
      %8613 = vmatprep.mubr.bf16.mxu0 %v8025
      %8614 = vmatmul.mubr.bf16.gmra.mrb[0].mxu0 %v8024
      %v8615 = vpop.f32.mrb[0].mxu0
      %v8616 = vadd.f32 %v8231, %v8615
      %v8617 = vpop.f32.mrb[0].mxu0
      %v8618 = vpop.f32.mrb[0].mxu0
      %v8619 = vadd.f32 %v8234, %v8618
      %v8620 = vpop.f32.mrb[0].mxu0
      %8621 = vmatprep.mubr.bf16.mxu0 %v8027
      %8622 = vmatmul.mubr.bf16.gmra.mrb[0].mxu0 %v8026
      %v8623 = vpop.f32.mrb[0].mxu0
      %v8624 = vadd.f32 %v8239, %v8623
      %v8625 = vpop.f32.mrb[0].mxu0
      %v8626 = vpop.f32.mrb[0].mxu0
      %v8627 = vadd.f32 %v8242, %v8626
      %v8628 = vpop.f32.mrb[0].mxu0
      %8629 = vmatprep.mubr.bf16.mxu0 %v8029
      %8630 = vmatmul.mubr.bf16.gmra.mrb[0].mxu0 %v8028
      %v8631 = vpop.f32.mrb[0].mxu0
      %v8632 = vadd.f32 %v8247, %v8631
      %v8633 = vpop.f32.mrb[0].mxu0
      %v8634 = vpop.f32.mrb[0].mxu0
      %v8635 = vadd.f32 %v8250, %v8634
      %v8636 = vpop.f32.mrb[0].mxu0
      %8637 = vmatprep.mubr.bf16.mxu0 %v8031
      %8638 = vmatmul.mubr.bf16.gmra.mrb[0].mxu0 %v8030
      %v8639 = vpop.f32.mrb[0].mxu0
      %v8640 = vadd.f32 %v8255, %v8639
      %v8641 = vpop.f32.mrb[0].mxu0
      %v8642 = vpop.f32.mrb[0].mxu0
      %v8643 = vadd.f32 %v8258, %v8642
      %v8644 = vpop.f32.mrb[0].mxu0
      %8645 = vmatprep.mubr.bf16.mxu0 %v8033
      %8646 = vmatmul.mubr.bf16.gmra.mrb[0].mxu0 %v8032
      %v8647 = vpop.f32.mrb[0].mxu0
      %v8648 = vadd.f32 %v8263, %v8647
      %v8649 = vpop.f32.mrb[0].mxu0
      %v8650 = vpop.f32.mrb[0].mxu0
      %v8651 = vadd.f32 %v8266, %v8650
      %v8652 = vpop.f32.mrb[0].mxu0
      %8653 = vmatprep.mubr.bf16.mxu0 %v8035
      %8654 = vmatmul.mubr.bf16.gmra.mrb[0].mxu0 %v8034
      %v8655 = vpop.f32.mrb[0].mxu0
      %v8656 = vadd.f32 %v8271, %v8655
      %v8657 = vpop.f32.mrb[0].mxu0
      %v8658 = vpop.f32.mrb[0].mxu0
      %v8659 = vadd.f32 %v8274, %v8658
      %v8660 = vpop.f32.mrb[0].mxu0
      %8661 = vmatprep.mubr.bf16.mxu0 %v8037
      %8662 = vmatmul.mubr.bf16.gmra.mrb[0].mxu0 %v8036
      %v8663 = vpop.f32.mrb[0].mxu0
      %v8664 = vadd.f32 %v8279, %v8663
      %v8665 = vpop.f32.mrb[0].mxu0
      %v8666 = vpop.f32.mrb[0].mxu0
      %v8667 = vadd.f32 %v8282, %v8666
      %v8668 = vpop.f32.mrb[0].mxu0
      %8669 = vmatprep.mubr.bf16.mxu0 %v8039
      %8670 = vmatmul.mubr.bf16.gmra.mrb[0].mxu0 %v8038
      %v8671 = vpop.f32.mrb[0].mxu0
      %v8672 = vadd.f32 %v8287, %v8671
      %v8673 = vpop.f32.mrb[0].mxu0
      %v8674 = vpop.f32.mrb[0].mxu0
      %v8675 = vadd.f32 %v8290, %v8674
      %v8676 = vpop.f32.mrb[0].mxu0
      %8677 = vmatprep.mubr.bf16.mxu0 %v8041
      %8678 = vmatmul.mubr.bf16.gmra.mrb[0].mxu0 %v8040
      %v8679 = vpop.f32.mrb[0].mxu0
      %v8680 = vadd.f32 %v8295, %v8679
      %v8681 = vpop.f32.mrb[0].mxu0
      %v8682 = vpop.f32.mrb[0].mxu0
      %v8683 = vadd.f32 %v8298, %v8682
      %v8684 = vpop.f32.mrb[0].mxu0
      %8685 = vmatprep.mubr.bf16.mxu0 %v8043
      %8686 = vmatmul.mubr.bf16.gmra.mrb[0].mxu0 %v8042
      %v8687 = vpop.f32.mrb[0].mxu0
      %v8688 = vadd.f32 %v8303, %v8687
      %v8689 = vpop.f32.mrb[0].mxu0
      %v8690 = vpop.f32.mrb[0].mxu0
      %v8691 = vadd.f32 %v8306, %v8690
      %v8692 = vpop.f32.mrb[0].mxu0
      %8693 = vmatprep.mubr.bf16.mxu0 %v8045
      %8694 = vmatmul.mubr.bf16.gmra.mrb[0].mxu0 %v8044
      %v8695 = vpop.f32.mrb[0].mxu0
      %v8696 = vadd.f32 %v8311, %v8695
      %v8697 = vpop.f32.mrb[0].mxu0
      %v8698 = vpop.f32.mrb[0].mxu0
      %v8699 = vadd.f32 %v8314, %v8698
      %v8700 = vpop.f32.mrb[0].mxu0
      %8701 = vmatprep.mubr.bf16.mxu0 %v8047
      %8702 = vmatmul.mubr.bf16.gmra.mrb[0].mxu0 %v8046
      %v8703 = vpop.f32.mrb[0].mxu0
      %v8704 = vadd.f32 %v8319, %v8703
      %v8705 = vpop.f32.mrb[0].mxu0
      %v8706 = vpop.f32.mrb[0].mxu0
      %v8707 = vadd.f32 %v8322, %v8706
      %v8708 = vpop.f32.mrb[0].mxu0
      %8709 = vmatprep.mubr.bf16.mxu0 %v8049
      %8710 = vmatmul.mubr.bf16.gmra.mrb[0].mxu0 %v8048
      %v8711 = vpop.f32.mrb[0].mxu0
      %v8712 = vadd.f32 %v8327, %v8711
      %v8713 = vpop.f32.mrb[0].mxu0
      %v8714 = vpop.f32.mrb[0].mxu0
      %v8715 = vadd.f32 %v8330, %v8714
      %v8716 = vpop.f32.mrb[0].mxu0
      %8717 = vmatprep.mubr.bf16.mxu0 %v8051
      %8718 = vmatmul.mubr.bf16.gmra.mrb[0].mxu0 %v8050
      %v8719 = vpop.f32.mrb[0].mxu0
      %v8720 = vadd.f32 %v8335, %v8719
      %v8721 = vpop.f32.mrb[0].mxu0
      %v8722 = vpop.f32.mrb[0].mxu0
      %v8723 = vadd.f32 %v8338, %v8722
      %v8724 = vpop.f32.mrb[0].mxu0
      %8725 = vmatprep.mubr.bf16.mxu0 %v8053
      %8726 = vmatmul.mubr.bf16.gmra.mrb[0].mxu0 %v8052
      %v8727 = vpop.f32.mrb[0].mxu0
      %v8728 = vadd.f32 %v8343, %v8727
      %v8729 = vpop.f32.mrb[0].mxu0
      %v8730 = vpop.f32.mrb[0].mxu0
      %v8731 = vadd.f32 %v8346, %v8730
      %v8732 = vpop.f32.mrb[0].mxu0
      %8733 = vmatprep.mubr.bf16.mxu0 %v8055
      %8734 = vmatmul.mubr.bf16.gmra.mrb[0].mxu0 %v8054
      %v8735 = vpop.f32.mrb[0].mxu0
      %v8736 = vadd.f32 %v8351, %v8735
      %v8737 = vpop.f32.mrb[0].mxu0
      %v8738 = vpop.f32.mrb[0].mxu0
      %v8739 = vadd.f32 %v8354, %v8738
      %v8740 = vpop.f32.mrb[0].mxu0
      %8741 = vmatprep.mubr.bf16.mxu0 %v8057
      %8742 = vmatmul.mubr.bf16.gmra.mrb[0].mxu0 %v8056
      %v8743 = vpop.f32.mrb[0].mxu0
      %v8744 = vadd.f32 %v8359, %v8743
      %v8745 = vpop.f32.mrb[0].mxu0
      %v8746 = vpop.f32.mrb[0].mxu0
      %v8747 = vadd.f32 %v8362, %v8746
      %v8748 = vpop.f32.mrb[0].mxu0
      %8749 = vmatprep.mubr.bf16.mxu0 %v8059
      %8750 = vmatmul.mubr.bf16.gmra.mrb[0].mxu0 %v8058
      %v8751 = vpop.f32.mrb[0].mxu0
      %v8752 = vadd.f32 %v8367, %v8751
      %v8753 = vpop.f32.mrb[0].mxu0
      %v8754 = vpop.f32.mrb[0].mxu0
      %v8755 = vadd.f32 %v8370, %v8754
      %v8756 = vpop.f32.mrb[0].mxu0
      %8757 = vmatprep.mubr.bf16.mxu0 %v8061
      %8758 = vmatmul.mubr.bf16.gmra.mrb[0].mxu0 %v8060
      %v8759 = vpop.f32.mrb[0].mxu0
      %v8760 = vadd.f32 %v8375, %v8759
      %v8761 = vpop.f32.mrb[0].mxu0
      %v8762 = vpop.f32.mrb[0].mxu0
      %v8763 = vadd.f32 %v8378, %v8762
      %v8764 = vpop.f32.mrb[0].mxu0
      %8765 = vmatprep.mubr.bf16.mxu0 %v8063
      %8766 = vmatmul.mubr.bf16.gmra.mrb[0].mxu0 %v8062
      %v8767 = vpop.f32.mrb[0].mxu0
      %v8768 = vadd.f32 %v8383, %v8767
      %v8769 = vpop.f32.mrb[0].mxu0
      %v8770 = vpop.f32.mrb[0].mxu0
      %v8771 = vadd.f32 %v8386, %v8770
      %v8772 = vpop.f32.mrb[0].mxu0
      %8773 = vdwg.mxu0
      %v8774 = vld [vmem:[%s11] sm:$0x1]
      %v8776 = vlaneseq
      %v8777 = vshrl.u32 %v8776, 7
      %v8778 = vsub.s32 0, %v8777
      %v8779 = vrot.slane %v8774, %v8778
      %v8781 = vadd.f32 %v8520, %v8779
      %v8782 = vadd.f32 %v8523, %v8779
      %v8783 = vadd.f32 %v8528, %v8779
      %v8784 = vadd.f32 %v8531, %v8779
      %v8785 = vadd.f32 %v8536, %v8779
      %v8786 = vadd.f32 %v8539, %v8779
      %v8787 = vadd.f32 %v8544, %v8779
      %v8788 = vadd.f32 %v8547, %v8779
      %v8789 = vadd.f32 %v8552, %v8779
      %v8790 = vadd.f32 %v8555, %v8779
      %v8791 = vadd.f32 %v8560, %v8779
      %v8792 = vadd.f32 %v8563, %v8779
      %v8793 = vadd.f32 %v8568, %v8779
      %v8794 = vadd.f32 %v8571, %v8779
      %v8795 = vadd.f32 %v8576, %v8779
      %v8796 = vadd.f32 %v8579, %v8779
      %v8797 = vadd.f32 %v8584, %v8779
      %v8798 = vadd.f32 %v8587, %v8779
      %v8799 = vadd.f32 %v8592, %v8779
      %v8800 = vadd.f32 %v8595, %v8779
      %v8801 = vadd.f32 %v8600, %v8779
      %v8802 = vadd.f32 %v8603, %v8779
      %v8803 = vadd.f32 %v8608, %v8779
      %v8804 = vadd.f32 %v8611, %v8779
      %v8805 = vadd.f32 %v8616, %v8779
      %v8806 = vadd.f32 %v8619, %v8779
      %v8807 = vadd.f32 %v8624, %v8779
      %v8808 = vadd.f32 %v8627, %v8779
      %v8809 = vadd.f32 %v8632, %v8779
      %v8810 = vadd.f32 %v8635, %v8779
      %v8811 = vadd.f32 %v8640, %v8779
      %v8812 = vadd.f32 %v8643, %v8779
      %v8813 = vadd.f32 %v8648, %v8779
      %v8814 = vadd.f32 %v8651, %v8779
      %v8815 = vadd.f32 %v8656, %v8779
      %v8816 = vadd.f32 %v8659, %v8779
      %v8817 = vadd.f32 %v8664, %v8779
      %v8818 = vadd.f32 %v8667, %v8779
      %v8819 = vadd.f32 %v8672, %v8779
      %v8820 = vadd.f32 %v8675, %v8779
      %v8821 = vadd.f32 %v8680, %v8779
      %v8822 = vadd.f32 %v8683, %v8779
      %v8823 = vadd.f32 %v8688, %v8779
      %v8824 = vadd.f32 %v8691, %v8779
      %v8825 = vadd.f32 %v8696, %v8779
      %v8826 = vadd.f32 %v8699, %v8779
      %v8827 = vadd.f32 %v8704, %v8779
      %v8828 = vadd.f32 %v8707, %v8779
      %v8829 = vadd.f32 %v8712, %v8779
      %v8830 = vadd.f32 %v8715, %v8779
      %v8831 = vadd.f32 %v8720, %v8779
      %v8832 = vadd.f32 %v8723, %v8779
      %v8833 = vadd.f32 %v8728, %v8779
      %v8834 = vadd.f32 %v8731, %v8779
      %v8835 = vadd.f32 %v8736, %v8779
      %v8836 = vadd.f32 %v8739, %v8779
      %v8837 = vadd.f32 %v8744, %v8779
      %v8838 = vadd.f32 %v8747, %v8779
      %v8839 = vadd.f32 %v8752, %v8779
      %v8840 = vadd.f32 %v8755, %v8779
      %v8841 = vadd.f32 %v8760, %v8779
      %v8842 = vadd.f32 %v8763, %v8779
      %v8843 = vadd.f32 %v8768, %v8779
      %v8844 = vadd.f32 %v8771, %v8779
      %v8845 = vmax.f32 %v8781, 0.0
      %v8846 = vmax.f32 %v8782, 0.0
      %v8847 = vmax.f32 %v8783, 0.0
      %v8848 = vmax.f32 %v8784, 0.0
      %v8849 = vmax.f32 %v8785, 0.0
      %v8850 = vmax.f32 %v8786, 0.0
      %v8851 = vmax.f32 %v8787, 0.0
      %v8852 = vmax.f32 %v8788, 0.0
      %v8853 = vmax.f32 %v8789, 0.0
      %v8854 = vmax.f32 %v8790, 0.0
      %v8855 = vmax.f32 %v8791, 0.0
      %v8856 = vmax.f32 %v8792, 0.0
      %v8857 = vmax.f32 %v8793, 0.0
      %v8858 = vmax.f32 %v8794, 0.0
      %v8859 = vmax.f32 %v8795, 0.0
      %v8860 = vmax.f32 %v8796, 0.0
      %v8861 = vmax.f32 %v8797, 0.0
      %v8862 = vmax.f32 %v8798, 0.0
      %v8863 = vmax.f32 %v8799, 0.0
      %v8864 = vmax.f32 %v8800, 0.0
      %v8865 = vmax.f32 %v8801, 0.0
      %v8866 = vmax.f32 %v8802, 0.0
      %v8867 = vmax.f32 %v8803, 0.0
      %v8868 = vmax.f32 %v8804, 0.0
      %v8869 = vmax.f32 %v8805, 0.0
      %v8870 = vmax.f32 %v8806, 0.0
      %v8871 = vmax.f32 %v8807, 0.0
      %v8872 = vmax.f32 %v8808, 0.0
      %v8873 = vmax.f32 %v8809, 0.0
      %v8874 = vmax.f32 %v8810, 0.0
      %v8875 = vmax.f32 %v8811, 0.0
      %v8876 = vmax.f32 %v8812, 0.0
      %v8877 = vmax.f32 %v8813, 0.0
      %v8878 = vmax.f32 %v8814, 0.0
      %v8879 = vmax.f32 %v8815, 0.0
      %v8880 = vmax.f32 %v8816, 0.0
      %v8881 = vmax.f32 %v8817, 0.0
      %v8882 = vmax.f32 %v8818, 0.0
      %v8883 = vmax.f32 %v8819, 0.0
      %v8884 = vmax.f32 %v8820, 0.0
      %v8885 = vmax.f32 %v8821, 0.0
      %v8886 = vmax.f32 %v8822, 0.0
      %v8887 = vmax.f32 %v8823, 0.0
      %v8888 = vmax.f32 %v8824, 0.0
      %v8889 = vmax.f32 %v8825, 0.0
      %v8890 = vmax.f32 %v8826, 0.0
      %v8891 = vmax.f32 %v8827, 0.0
      %v8892 = vmax.f32 %v8828, 0.0
      %v8893 = vmax.f32 %v8829, 0.0
      %v8894 = vmax.f32 %v8830, 0.0
      %v8895 = vmax.f32 %v8831, 0.0
      %v8896 = vmax.f32 %v8832, 0.0
      %v8897 = vmax.f32 %v8833, 0.0
      %v8898 = vmax.f32 %v8834, 0.0
      %v8899 = vmax.f32 %v8835, 0.0
      %v8900 = vmax.f32 %v8836, 0.0
      %v8901 = vmax.f32 %v8837, 0.0
      %v8902 = vmax.f32 %v8838, 0.0
      %v8903 = vmax.f32 %v8839, 0.0
      %v8904 = vmax.f32 %v8840, 0.0
      %v8905 = vmax.f32 %v8841, 0.0
      %v8906 = vmax.f32 %v8842, 0.0
      %v8907 = vmax.f32 %v8843, 0.0
      %v8908 = vmax.f32 %v8844, 0.0
      %v8909 = vpack.c.bf16 %v8846, %v8845
      %v8910 = vpack.c.bf16 %v8848, %v8847
      %v8911 = vpack.c.bf16 %v8850, %v8849
      %v8912 = vpack.c.bf16 %v8852, %v8851
      %v8913 = vpack.c.bf16 %v8854, %v8853
      %v8914 = vpack.c.bf16 %v8856, %v8855
      %v8915 = vpack.c.bf16 %v8858, %v8857
      %v8916 = vpack.c.bf16 %v8860, %v8859
      %v8917 = vpack.c.bf16 %v8862, %v8861
      %v8918 = vpack.c.bf16 %v8864, %v8863
      %v8919 = vpack.c.bf16 %v8866, %v8865
      %v8920 = vpack.c.bf16 %v8868, %v8867
      %v8921 = vpack.c.bf16 %v8870, %v8869
      %v8922 = vpack.c.bf16 %v8872, %v8871
      %v8923 = vpack.c.bf16 %v8874, %v8873
      %v8924 = vpack.c.bf16 %v8876, %v8875
      %v8925 = vpack.c.bf16 %v8878, %v8877
      %v8926 = vpack.c.bf16 %v8880, %v8879
      %v8927 = vpack.c.bf16 %v8882, %v8881
      %v8928 = vpack.c.bf16 %v8884, %v8883
      %v8929 = vpack.c.bf16 %v8886, %v8885
      %v8930 = vpack.c.bf16 %v8888, %v8887
      %v8931 = vpack.c.bf16 %v8890, %v8889
      %v8932 = vpack.c.bf16 %v8892, %v8891
      %v8933 = vpack.c.bf16 %v8894, %v8893
      %v8934 = vpack.c.bf16 %v8896, %v8895
      %v8935 = vpack.c.bf16 %v8898, %v8897
      %v8936 = vpack.c.bf16 %v8900, %v8899
      %v8937 = vpack.c.bf16 %v8902, %v8901
      %v8938 = vpack.c.bf16 %v8904, %v8903
      %v8939 = vpack.c.bf16 %v8906, %v8905
      %v8940 = vpack.c.bf16 %v8908, %v8907
      %v8941 = vld [vmem:[%s12] sm:$0xf]
      %v8942 = vld [vmem:[%s12 + $0x4] sm:$0xf]
      %v8943 = vld [vmem:[%s12 + $0x8] sm:$0xf]
      %v8944 = vld [vmem:[%s12 + $0xc] sm:$0xf]
      %v8945 = vld [vmem:[%s12 + $0x10] sm:$0xf]
      %v8946 = vld [vmem:[%s12 + $0x14] sm:$0xf]
      %v8947 = vld [vmem:[%s12 + $0x18] sm:$0xf]
      %v8948 = vld [vmem:[%s12 + $0x1c] sm:$0xf]
      %v8949 = vld [vmem:[%s12 + $0x20] sm:$0xf]
      %v8950 = vld [vmem:[%s12 + $0x24] sm:$0xf]
      %v8951 = vld [vmem:[%s12 + $0x28] sm:$0xf]
      %v8952 = vld [vmem:[%s12 + $0x2c] sm:$0xf]
      %v8953 = vld [vmem:[%s12 + $0x30] sm:$0xf]
      %v8954 = vld [vmem:[%s12 + $0x34] sm:$0xf]
      %v8955 = vld [vmem:[%s12 + $0x38] sm:$0xf]
      %v8956 = vld [vmem:[%s12 + $0x3c] sm:$0xf]
      %v8957 = vld [vmem:[%s13] sm:$0x1]
      %v8959 = vlaneseq
      %v8960 = vshrl.u32 %v8959, 7
      %v8961 = vsub.s32 0, %v8960
      %v8962 = vrot.slane %v8957, %v8961
      %v8980 = vunpack.c.l.b16 %v8941
      %v8981 = vunpack.c.l.b16 %v8942
      %v8982 = vunpack.c.l.b16 %v8943
      %v8983 = vunpack.c.l.b16 %v8944
      %v8984 = vunpack.c.l.b16 %v8945
      %v8985 = vunpack.c.l.b16 %v8946
      %v8986 = vunpack.c.l.b16 %v8947
      %v8987 = vunpack.c.l.b16 %v8948
      %v8988 = vunpack.c.l.b16 %v8949
      %v8989 = vunpack.c.l.b16 %v8950
      %v8990 = vunpack.c.l.b16 %v8951
      %v8991 = vunpack.c.l.b16 %v8952
      %v8992 = vunpack.c.l.b16 %v8953
      %v8993 = vunpack.c.l.b16 %v8954
      %v8994 = vunpack.c.l.b16 %v8955
      %v8995 = vunpack.c.l.b16 %v8956
      %v8996 = vpack.c.b16 %v8981, %v8980
      %v8997 = vpack.c.b16 %v8983, %v8982
      %v8998 = vpack.c.b16 %v8985, %v8984
      %v8999 = vpack.c.b16 %v8987, %v8986
      %v9000 = vpack.c.b16 %v8989, %v8988
      %v9001 = vpack.c.b16 %v8991, %v8990
      %v9002 = vpack.c.b16 %v8993, %v8992
      %v9003 = vpack.c.b16 %v8995, %v8994
      %9012 = vmatprep.subr.bf16.mxu0 0
      %9013 = vmatpush1.bf16.msra.mxu0 %v8996
      %9014 = vmatprep.subr.bf16.mxu0 0
      %9015 = vmatpush1.bf16.msra.mxu0 %v8997
      %9016 = vmatprep.subr.bf16.mxu0 0
      %9017 = vmatpush1.bf16.msra.mxu0 %v8998
      %9018 = vmatprep.subr.bf16.mxu0 0
      %9019 = vmatpush1.bf16.msra.mxu0 %v8999
      %9020 = vmatprep.subr.bf16.mxu0 0
      %9021 = vmatpush1.bf16.msra.mxu0 %v9000
      %9022 = vmatprep.subr.bf16.mxu0 0
      %9023 = vmatpush1.bf16.msra.mxu0 %v9001
      %9024 = vmatprep.subr.bf16.mxu0 0
      %9025 = vmatpush1.bf16.msra.mxu0 %v9002
      %9026 = vmatprep.subr.bf16.mxu0 0
      %9027 = vmatpush1.bf16.msra.mxu0 %v9003
      %9028 = vmatprep.subr.bf16.mxu0 0
      %9029 = vmatpush1.bf16.msra.mxu0 0
      %9030 = vmatprep.subr.bf16.mxu0 0
      %9031 = vmatpush1.bf16.msra.mxu0 0
      %9032 = vmatprep.subr.bf16.mxu0 0
      %9033 = vmatpush1.bf16.msra.mxu0 0
      %9034 = vmatprep.subr.bf16.mxu0 0
      %9035 = vmatpush1.bf16.msra.mxu0 0
      %9036 = vmatprep.subr.bf16.mxu0 0
      %9037 = vmatpush1.bf16.msra.mxu0 0
      %9038 = vmatprep.subr.bf16.mxu0 0
      %9039 = vmatpush1.bf16.msra.mxu0 0
      %9040 = vmatprep.subr.bf16.mxu0 0
      %9041 = vmatpush1.bf16.msra.mxu0 0
      %9042 = vmatprep.subr.bf16.mxu0 0
      %9043 = vmatpush1.bf16.msra.mxu0 0
      %9044 = vmatprep.mubr.bf16.mxu0 0
      %9045 = vmatmul.mubr.bf16.gmra.mrb[0].mxu0 %v8909
      %v9046 = vpop.f32.mrb[0].mxu0
      %v9047 = vadd.f32 %v8962, %v9046
      %v9048 = vpop.f32.mrb[0].mxu0
      %v9049 = vpop.f32.mrb[0].mxu0
      %v9050 = vadd.f32 %v8962, %v9049
      %v9051 = vpop.f32.mrb[0].mxu0
      %9052 = vmatprep.mubr.bf16.mxu0 0
      %9053 = vmatmul.mubr.bf16.gmra.mrb[0].mxu0 %v8910
      %v9054 = vpop.f32.mrb[0].mxu0
      %v9055 = vadd.f32 %v8962, %v9054
      %v9056 = vpop.f32.mrb[0].mxu0
      %v9057 = vpop.f32.mrb[0].mxu0
      %v9058 = vadd.f32 %v8962, %v9057
      %v9059 = vpop.f32.mrb[0].mxu0
      %9060 = vmatprep.mubr.bf16.mxu0 0
      %9061 = vmatmul.mubr.bf16.gmra.mrb[0].mxu0 %v8911
      %v9062 = vpop.f32.mrb[0].mxu0
      %v9063 = vadd.f32 %v8962, %v9062
      %v9064 = vpop.f32.mrb[0].mxu0
      %v9065 = vpop.f32.mrb[0].mxu0
      %v9066 = vadd.f32 %v8962, %v9065
      %v9067 = vpop.f32.mrb[0].mxu0
      %9068 = vmatprep.mubr.bf16.mxu0 0
      %9069 = vmatmul.mubr.bf16.gmra.mrb[0].mxu0 %v8912
      %v9070 = vpop.f32.mrb[0].mxu0
      %v9071 = vadd.f32 %v8962, %v9070
      %v9072 = vpop.f32.mrb[0].mxu0
      %v9073 = vpop.f32.mrb[0].mxu0
      %v9074 = vadd.f32 %v8962, %v9073
      %v9075 = vpop.f32.mrb[0].mxu0
      %9076 = vmatprep.mubr.bf16.mxu0 0
      %9077 = vmatmul.mubr.bf16.gmra.mrb[0].mxu0 %v8913
      %v9078 = vpop.f32.mrb[0].mxu0
      %v9079 = vadd.f32 %v8962, %v9078
      %v9080 = vpop.f32.mrb[0].mxu0
      %v9081 = vpop.f32.mrb[0].mxu0
      %v9082 = vadd.f32 %v8962, %v9081
      %v9083 = vpop.f32.mrb[0].mxu0
      %9084 = vmatprep.mubr.bf16.mxu0 0
      %9085 = vmatmul.mubr.bf16.gmra.mrb[0].mxu0 %v8914
      %v9086 = vpop.f32.mrb[0].mxu0
      %v9087 = vadd.f32 %v8962, %v9086
      %v9088 = vpop.f32.mrb[0].mxu0
      %v9089 = vpop.f32.mrb[0].mxu0
      %v9090 = vadd.f32 %v8962, %v9089
      %v9091 = vpop.f32.mrb[0].mxu0
      %9092 = vmatprep.mubr.bf16.mxu0 0
      %9093 = vmatmul.mubr.bf16.gmra.mrb[0].mxu0 %v8915
      %v9094 = vpop.f32.mrb[0].mxu0
      %v9095 = vadd.f32 %v8962, %v9094
      %v9096 = vpop.f32.mrb[0].mxu0
      %v9097 = vpop.f32.mrb[0].mxu0
      %v9098 = vadd.f32 %v8962, %v9097
      %v9099 = vpop.f32.mrb[0].mxu0
      %9100 = vmatprep.mubr.bf16.mxu0 0
      %9101 = vmatmul.mubr.bf16.gmra.mrb[0].mxu0 %v8916
      %v9102 = vpop.f32.mrb[0].mxu0
      %v9103 = vadd.f32 %v8962, %v9102
      %v9104 = vpop.f32.mrb[0].mxu0
      %v9105 = vpop.f32.mrb[0].mxu0
      %v9106 = vadd.f32 %v8962, %v9105
      %v9107 = vpop.f32.mrb[0].mxu0
      %9108 = vmatprep.mubr.bf16.mxu0 0
      %9109 = vmatmul.mubr.bf16.gmra.mrb[0].mxu0 %v8917
      %v9110 = vpop.f32.mrb[0].mxu0
      %v9111 = vadd.f32 %v8962, %v9110
      %v9112 = vpop.f32.mrb[0].mxu0
      %v9113 = vpop.f32.mrb[0].mxu0
      %v9114 = vadd.f32 %v8962, %v9113
      %v9115 = vpop.f32.mrb[0].mxu0
      %9116 = vmatprep.mubr.bf16.mxu0 0
      %9117 = vmatmul.mubr.bf16.gmra.mrb[0].mxu0 %v8918
      %v9118 = vpop.f32.mrb[0].mxu0
      %v9119 = vadd.f32 %v8962, %v9118
      %v9120 = vpop.f32.mrb[0].mxu0
      %v9121 = vpop.f32.mrb[0].mxu0
      %v9122 = vadd.f32 %v8962, %v9121
      %v9123 = vpop.f32.mrb[0].mxu0
      %9124 = vmatprep.mubr.bf16.mxu0 0
      %9125 = vmatmul.mubr.bf16.gmra.mrb[0].mxu0 %v8919
      %v9126 = vpop.f32.mrb[0].mxu0
      %v9127 = vadd.f32 %v8962, %v9126
      %v9128 = vpop.f32.mrb[0].mxu0
      %v9129 = vpop.f32.mrb[0].mxu0
      %v9130 = vadd.f32 %v8962, %v9129
      %v9131 = vpop.f32.mrb[0].mxu0
      %9132 = vmatprep.mubr.bf16.mxu0 0
      %9133 = vmatmul.mubr.bf16.gmra.mrb[0].mxu0 %v8920
      %v9134 = vpop.f32.mrb[0].mxu0
      %v9135 = vadd.f32 %v8962, %v9134
      %v9136 = vpop.f32.mrb[0].mxu0
      %v9137 = vpop.f32.mrb[0].mxu0
      %v9138 = vadd.f32 %v8962, %v9137
      %v9139 = vpop.f32.mrb[0].mxu0
      %9140 = vmatprep.mubr.bf16.mxu0 0
      %9141 = vmatmul.mubr.bf16.gmra.mrb[0].mxu0 %v8921
      %v9142 = vpop.f32.mrb[0].mxu0
      %v9143 = vadd.f32 %v8962, %v9142
      %v9144 = vpop.f32.mrb[0].mxu0
      %v9145 = vpop.f32.mrb[0].mxu0
      %v9146 = vadd.f32 %v8962, %v9145
      %v9147 = vpop.f32.mrb[0].mxu0
      %9148 = vmatprep.mubr.bf16.mxu0 0
      %9149 = vmatmul.mubr.bf16.gmra.mrb[0].mxu0 %v8922
      %v9150 = vpop.f32.mrb[0].mxu0
      %v9151 = vadd.f32 %v8962, %v9150
      %v9152 = vpop.f32.mrb[0].mxu0
      %v9153 = vpop.f32.mrb[0].mxu0
      %v9154 = vadd.f32 %v8962, %v9153
      %v9155 = vpop.f32.mrb[0].mxu0
      %9156 = vmatprep.mubr.bf16.mxu0 0
      %9157 = vmatmul.mubr.bf16.gmra.mrb[0].mxu0 %v8923
      %v9158 = vpop.f32.mrb[0].mxu0
      %v9159 = vadd.f32 %v8962, %v9158
      %v9160 = vpop.f32.mrb[0].mxu0
      %v9161 = vpop.f32.mrb[0].mxu0
      %v9162 = vadd.f32 %v8962, %v9161
      %v9163 = vpop.f32.mrb[0].mxu0
      %9164 = vmatprep.mubr.bf16.mxu0 0
      %9165 = vmatmul.mubr.bf16.gmra.mrb[0].mxu0 %v8924
      %v9166 = vpop.f32.mrb[0].mxu0
      %v9167 = vadd.f32 %v8962, %v9166
      %v9168 = vpop.f32.mrb[0].mxu0
      %v9169 = vpop.f32.mrb[0].mxu0
      %v9170 = vadd.f32 %v8962, %v9169
      %v9171 = vpop.f32.mrb[0].mxu0
      %9172 = vmatprep.mubr.bf16.mxu0 0
      %9173 = vmatmul.mubr.bf16.gmra.mrb[0].mxu0 %v8925
      %v9174 = vpop.f32.mrb[0].mxu0
      %v9175 = vadd.f32 %v8962, %v9174
      %v9176 = vpop.f32.mrb[0].mxu0
      %v9177 = vpop.f32.mrb[0].mxu0
      %v9178 = vadd.f32 %v8962, %v9177
      %v9179 = vpop.f32.mrb[0].mxu0
      %9180 = vmatprep.mubr.bf16.mxu0 0
      %9181 = vmatmul.mubr.bf16.gmra.mrb[0].mxu0 %v8926
      %v9182 = vpop.f32.mrb[0].mxu0
      %v9183 = vadd.f32 %v8962, %v9182
      %v9184 = vpop.f32.mrb[0].mxu0
      %v9185 = vpop.f32.mrb[0].mxu0
      %v9186 = vadd.f32 %v8962, %v9185
      %v9187 = vpop.f32.mrb[0].mxu0
      %9188 = vmatprep.mubr.bf16.mxu0 0
      %9189 = vmatmul.mubr.bf16.gmra.mrb[0].mxu0 %v8927
      %v9190 = vpop.f32.mrb[0].mxu0
      %v9191 = vadd.f32 %v8962, %v9190
      %v9192 = vpop.f32.mrb[0].mxu0
      %v9193 = vpop.f32.mrb[0].mxu0
      %v9194 = vadd.f32 %v8962, %v9193
      %v9195 = vpop.f32.mrb[0].mxu0
      %9196 = vmatprep.mubr.bf16.mxu0 0
      %9197 = vmatmul.mubr.bf16.gmra.mrb[0].mxu0 %v8928
      %v9198 = vpop.f32.mrb[0].mxu0
      %v9199 = vadd.f32 %v8962, %v9198
      %v9200 = vpop.f32.mrb[0].mxu0
      %v9201 = vpop.f32.mrb[0].mxu0
      %v9202 = vadd.f32 %v8962, %v9201
      %v9203 = vpop.f32.mrb[0].mxu0
      %9204 = vmatprep.mubr.bf16.mxu0 0
      %9205 = vmatmul.mubr.bf16.gmra.mrb[0].mxu0 %v8929
      %v9206 = vpop.f32.mrb[0].mxu0
      %v9207 = vadd.f32 %v8962, %v9206
      %v9208 = vpop.f32.mrb[0].mxu0
      %v9209 = vpop.f32.mrb[0].mxu0
      %v9210 = vadd.f32 %v8962, %v9209
      %v9211 = vpop.f32.mrb[0].mxu0
      %9212 = vmatprep.mubr.bf16.mxu0 0
      %9213 = vmatmul.mubr.bf16.gmra.mrb[0].mxu0 %v8930
      %v9214 = vpop.f32.mrb[0].mxu0
      %v9215 = vadd.f32 %v8962, %v9214
      %v9216 = vpop.f32.mrb[0].mxu0
      %v9217 = vpop.f32.mrb[0].mxu0
      %v9218 = vadd.f32 %v8962, %v9217
      %v9219 = vpop.f32.mrb[0].mxu0
      %9220 = vmatprep.mubr.bf16.mxu0 0
      %9221 = vmatmul.mubr.bf16.gmra.mrb[0].mxu0 %v8931
      %v9222 = vpop.f32.mrb[0].mxu0
      %v9223 = vadd.f32 %v8962, %v9222
      %v9224 = vpop.f32.mrb[0].mxu0
      %v9225 = vpop.f32.mrb[0].mxu0
      %v9226 = vadd.f32 %v8962, %v9225
      %v9227 = vpop.f32.mrb[0].mxu0
      %9228 = vmatprep.mubr.bf16.mxu0 0
      %9229 = vmatmul.mubr.bf16.gmra.mrb[0].mxu0 %v8932
      %v9230 = vpop.f32.mrb[0].mxu0
      %v9231 = vadd.f32 %v8962, %v9230
      %v9232 = vpop.f32.mrb[0].mxu0
      %v9233 = vpop.f32.mrb[0].mxu0
      %v9234 = vadd.f32 %v8962, %v9233
      %v9235 = vpop.f32.mrb[0].mxu0
      %9236 = vmatprep.mubr.bf16.mxu0 0
      %9237 = vmatmul.mubr.bf16.gmra.mrb[0].mxu0 %v8933
      %v9238 = vpop.f32.mrb[0].mxu0
      %v9239 = vadd.f32 %v8962, %v9238
      %v9240 = vpop.f32.mrb[0].mxu0
      %v9241 = vpop.f32.mrb[0].mxu0
      %v9242 = vadd.f32 %v8962, %v9241
      %v9243 = vpop.f32.mrb[0].mxu0
      %9244 = vmatprep.mubr.bf16.mxu0 0
      %9245 = vmatmul.mubr.bf16.gmra.mrb[0].mxu0 %v8934
      %v9246 = vpop.f32.mrb[0].mxu0
      %v9247 = vadd.f32 %v8962, %v9246
      %v9248 = vpop.f32.mrb[0].mxu0
      %v9249 = vpop.f32.mrb[0].mxu0
      %v9250 = vadd.f32 %v8962, %v9249
      %v9251 = vpop.f32.mrb[0].mxu0
      %9252 = vmatprep.mubr.bf16.mxu0 0
      %9253 = vmatmul.mubr.bf16.gmra.mrb[0].mxu0 %v8935
      %v9254 = vpop.f32.mrb[0].mxu0
      %v9255 = vadd.f32 %v8962, %v9254
      %v9256 = vpop.f32.mrb[0].mxu0
      %v9257 = vpop.f32.mrb[0].mxu0
      %v9258 = vadd.f32 %v8962, %v9257
      %v9259 = vpop.f32.mrb[0].mxu0
      %9260 = vmatprep.mubr.bf16.mxu0 0
      %9261 = vmatmul.mubr.bf16.gmra.mrb[0].mxu0 %v8936
      %v9262 = vpop.f32.mrb[0].mxu0
      %v9263 = vadd.f32 %v8962, %v9262
      %v9264 = vpop.f32.mrb[0].mxu0
      %v9265 = vpop.f32.mrb[0].mxu0
      %v9266 = vadd.f32 %v8962, %v9265
      %v9267 = vpop.f32.mrb[0].mxu0
      %9268 = vmatprep.mubr.bf16.mxu0 0
      %9269 = vmatmul.mubr.bf16.gmra.mrb[0].mxu0 %v8937
      %v9270 = vpop.f32.mrb[0].mxu0
      %v9271 = vadd.f32 %v8962, %v9270
      %v9272 = vpop.f32.mrb[0].mxu0
      %v9273 = vpop.f32.mrb[0].mxu0
      %v9274 = vadd.f32 %v8962, %v9273
      %v9275 = vpop.f32.mrb[0].mxu0
      %9276 = vmatprep.mubr.bf16.mxu0 0
      %9277 = vmatmul.mubr.bf16.gmra.mrb[0].mxu0 %v8938
      %v9278 = vpop.f32.mrb[0].mxu0
      %v9279 = vadd.f32 %v8962, %v9278
      %v9280 = vpop.f32.mrb[0].mxu0
      %v9281 = vpop.f32.mrb[0].mxu0
      %v9282 = vadd.f32 %v8962, %v9281
      %v9283 = vpop.f32.mrb[0].mxu0
      %9284 = vmatprep.mubr.bf16.mxu0 0
      %9285 = vmatmul.mubr.bf16.gmra.mrb[0].mxu0 %v8939
      %v9286 = vpop.f32.mrb[0].mxu0
      %v9287 = vadd.f32 %v8962, %v9286
      %v9288 = vpop.f32.mrb[0].mxu0
      %v9289 = vpop.f32.mrb[0].mxu0
      %v9290 = vadd.f32 %v8962, %v9289
      %v9291 = vpop.f32.mrb[0].mxu0
      %9292 = vmatprep.mubr.bf16.mxu0 0
      %9293 = vmatmul.mubr.bf16.gmra.mrb[0].mxu0 %v8940
      %v9294 = vpop.f32.mrb[0].mxu0
      %v9295 = vadd.f32 %v8962, %v9294
      %v9296 = vpop.f32.mrb[0].mxu0
      %v9297 = vpop.f32.mrb[0].mxu0
      %v9298 = vadd.f32 %v8962, %v9297
      %v9299 = vpop.f32.mrb[0].mxu0
      %9300 = vdwg.mxu0
      %v9301 = vlaneseq
      %v9302 = vand.u32 %v9301, 127
      %vm9303 = vcmp.eq.s32.totalorder %v9302, 3
      %v9304 = vsel %vm9303, %v7253, 0.0
      %v9305 = vsel %vm9303, %v7256, 0.0
      %v9306 = vsel %vm9303, %v7259, 0.0
      %v9307 = vsel %vm9303, %v7262, 0.0
      %v9308 = vsel %vm9303, %v7265, 0.0
      %v9309 = vsel %vm9303, %v7268, 0.0
      %v9310 = vsel %vm9303, %v7271, 0.0
      %v9311 = vsel %vm9303, %v7274, 0.0
      %v9312 = vsel %vm9303, %v7277, 0.0
      %v9313 = vsel %vm9303, %v7280, 0.0
      %v9314 = vsel %vm9303, %v7283, 0.0
      %v9315 = vsel %vm9303, %v7286, 0.0
      %v9316 = vsel %vm9303, %v7289, 0.0
      %v9317 = vsel %vm9303, %v7292, 0.0
      %v9318 = vsel %vm9303, %v7295, 0.0
      %v9319 = vsel %vm9303, %v7298, 0.0
      %v9320 = vsel %vm9303, %v7301, 0.0
      %v9321 = vsel %vm9303, %v7304, 0.0
      %v9322 = vsel %vm9303, %v7307, 0.0
      %v9323 = vsel %vm9303, %v7310, 0.0
      %v9324 = vsel %vm9303, %v7313, 0.0
      %v9325 = vsel %vm9303, %v7316, 0.0
      %v9326 = vsel %vm9303, %v7319, 0.0
      %v9327 = vsel %vm9303, %v7322, 0.0
      %v9328 = vsel %vm9303, %v7325, 0.0
      %v9329 = vsel %vm9303, %v7328, 0.0
      %v9330 = vsel %vm9303, %v7331, 0.0
      %v9331 = vsel %vm9303, %v7334, 0.0
      %v9332 = vsel %vm9303, %v7337, 0.0
      %v9333 = vsel %vm9303, %v7340, 0.0
      %v9334 = vsel %vm9303, %v7343, 0.0
      %v9335 = vsel %vm9303, %v7346, 0.0
      %v9336 = vsel %vm9303, %v7349, 0.0
      %v9337 = vsel %vm9303, %v7352, 0.0
      %v9338 = vsel %vm9303, %v7355, 0.0
      %v9339 = vsel %vm9303, %v7358, 0.0
      %v9340 = vsel %vm9303, %v7361, 0.0
      %v9341 = vsel %vm9303, %v7364, 0.0
      %v9342 = vsel %vm9303, %v7367, 0.0
      %v9343 = vsel %vm9303, %v7370, 0.0
      %v9344 = vsel %vm9303, %v7373, 0.0
      %v9345 = vsel %vm9303, %v7376, 0.0
      %v9346 = vsel %vm9303, %v7379, 0.0
      %v9347 = vsel %vm9303, %v7382, 0.0
      %v9348 = vsel %vm9303, %v7385, 0.0
      %v9349 = vsel %vm9303, %v7388, 0.0
      %v9350 = vsel %vm9303, %v7391, 0.0
      %v9351 = vsel %vm9303, %v7394, 0.0
      %v9352 = vsel %vm9303, %v7397, 0.0
      %v9353 = vsel %vm9303, %v7400, 0.0
      %v9354 = vsel %vm9303, %v7403, 0.0
      %v9355 = vsel %vm9303, %v7406, 0.0
      %v9356 = vsel %vm9303, %v7409, 0.0
      %v9357 = vsel %vm9303, %v7412, 0.0
      %v9358 = vsel %vm9303, %v7415, 0.0
      %v9359 = vsel %vm9303, %v7418, 0.0
      %v9360 = vsel %vm9303, %v7421, 0.0
      %v9361 = vsel %vm9303, %v7424, 0.0
      %v9362 = vsel %vm9303, %v7427, 0.0
      %v9363 = vsel %vm9303, %v7430, 0.0
      %v9364 = vsel %vm9303, %v7433, 0.0
      %v9365 = vsel %vm9303, %v7436, 0.0
      %v9366 = vsel %vm9303, %v7439, 0.0
      %v9367 = vsel %vm9303, %v7442, 0.0
      %v9368 = vadd.f32 %v9047, %v9304
      %v9369 = vadd.f32 %v9050, %v9305
      %v9370 = vadd.f32 %v9055, %v9306
      %v9371 = vadd.f32 %v9058, %v9307
      %v9372 = vadd.f32 %v9063, %v9308
      %v9373 = vadd.f32 %v9066, %v9309
      %v9374 = vadd.f32 %v9071, %v9310
      %v9375 = vadd.f32 %v9074, %v9311
      %v9376 = vadd.f32 %v9079, %v9312
      %v9377 = vadd.f32 %v9082, %v9313
      %v9378 = vadd.f32 %v9087, %v9314
      %v9379 = vadd.f32 %v9090, %v9315
      %v9380 = vadd.f32 %v9095, %v9316
      %v9381 = vadd.f32 %v9098, %v9317
      %v9382 = vadd.f32 %v9103, %v9318
      %v9383 = vadd.f32 %v9106, %v9319
      %v9384 = vadd.f32 %v9111, %v9320
      %v9385 = vadd.f32 %v9114, %v9321
      %v9386 = vadd.f32 %v9119, %v9322
      %v9387 = vadd.f32 %v9122, %v9323
      %v9388 = vadd.f32 %v9127, %v9324
      %v9389 = vadd.f32 %v9130, %v9325
      %v9390 = vadd.f32 %v9135, %v9326
      %v9391 = vadd.f32 %v9138, %v9327
      %v9392 = vadd.f32 %v9143, %v9328
      %v9393 = vadd.f32 %v9146, %v9329
      %v9394 = vadd.f32 %v9151, %v9330
      %v9395 = vadd.f32 %v9154, %v9331
      %v9396 = vadd.f32 %v9159, %v9332
      %v9397 = vadd.f32 %v9162, %v9333
      %v9398 = vadd.f32 %v9167, %v9334
      %v9399 = vadd.f32 %v9170, %v9335
      %v9400 = vadd.f32 %v9175, %v9336
      %v9401 = vadd.f32 %v9178, %v9337
      %v9402 = vadd.f32 %v9183, %v9338
      %v9403 = vadd.f32 %v9186, %v9339
      %v9404 = vadd.f32 %v9191, %v9340
      %v9405 = vadd.f32 %v9194, %v9341
      %v9406 = vadd.f32 %v9199, %v9342
      %v9407 = vadd.f32 %v9202, %v9343
      %v9408 = vadd.f32 %v9207, %v9344
      %v9409 = vadd.f32 %v9210, %v9345
      %v9410 = vadd.f32 %v9215, %v9346
      %v9411 = vadd.f32 %v9218, %v9347
      %v9412 = vadd.f32 %v9223, %v9348
      %v9413 = vadd.f32 %v9226, %v9349
      %v9414 = vadd.f32 %v9231, %v9350
      %v9415 = vadd.f32 %v9234, %v9351
      %v9416 = vadd.f32 %v9239, %v9352
      %v9417 = vadd.f32 %v9242, %v9353
      %v9418 = vadd.f32 %v9247, %v9354
      %v9419 = vadd.f32 %v9250, %v9355
      %v9420 = vadd.f32 %v9255, %v9356
      %v9421 = vadd.f32 %v9258, %v9357
      %v9422 = vadd.f32 %v9263, %v9358
      %v9423 = vadd.f32 %v9266, %v9359
      %v9424 = vadd.f32 %v9271, %v9360
      %v9425 = vadd.f32 %v9274, %v9361
      %v9426 = vadd.f32 %v9279, %v9362
      %v9427 = vadd.f32 %v9282, %v9363
      %v9428 = vadd.f32 %v9287, %v9364
      %v9429 = vadd.f32 %v9290, %v9365
      %v9430 = vadd.f32 %v9295, %v9366
      %v9431 = vadd.f32 %v9298, %v9367
      %v9432 = vpack.c.bf16 %v9369, %v9368
      %v9433 = vpack.c.bf16 %v9371, %v9370
      %v9434 = vpack.c.bf16 %v9373, %v9372
      %v9435 = vpack.c.bf16 %v9375, %v9374
      %v9436 = vpack.c.bf16 %v9377, %v9376
      %v9437 = vpack.c.bf16 %v9379, %v9378
      %v9438 = vpack.c.bf16 %v9381, %v9380
      %v9439 = vpack.c.bf16 %v9383, %v9382
      %v9440 = vpack.c.bf16 %v9385, %v9384
      %v9441 = vpack.c.bf16 %v9387, %v9386
      %v9442 = vpack.c.bf16 %v9389, %v9388
      %v9443 = vpack.c.bf16 %v9391, %v9390
      %v9444 = vpack.c.bf16 %v9393, %v9392
      %v9445 = vpack.c.bf16 %v9395, %v9394
      %v9446 = vpack.c.bf16 %v9397, %v9396
      %v9447 = vpack.c.bf16 %v9399, %v9398
      %v9448 = vpack.c.bf16 %v9401, %v9400
      %v9449 = vpack.c.bf16 %v9403, %v9402
      %v9450 = vpack.c.bf16 %v9405, %v9404
      %v9451 = vpack.c.bf16 %v9407, %v9406
      %v9452 = vpack.c.bf16 %v9409, %v9408
      %v9453 = vpack.c.bf16 %v9411, %v9410
      %v9454 = vpack.c.bf16 %v9413, %v9412
      %v9455 = vpack.c.bf16 %v9415, %v9414
      %v9456 = vpack.c.bf16 %v9417, %v9416
      %v9457 = vpack.c.bf16 %v9419, %v9418
      %v9458 = vpack.c.bf16 %v9421, %v9420
      %v9459 = vpack.c.bf16 %v9423, %v9422
      %v9460 = vpack.c.bf16 %v9425, %v9424
      %v9461 = vpack.c.bf16 %v9427, %v9426
      %v9462 = vpack.c.bf16 %v9429, %v9428
      %v9463 = vpack.c.bf16 %v9431, %v9430
      %v9496 = vunpack.c.l.b16 %v9432
      %v9497 = vunpack.c.h.b16 %v9432
      %v9498 = vunpack.c.l.b16 %v9433
      %v9499 = vunpack.c.h.b16 %v9433
      %v9500 = vunpack.c.l.b16 %v9434
      %v9501 = vunpack.c.h.b16 %v9434
      %v9502 = vunpack.c.l.b16 %v9435
      %v9503 = vunpack.c.h.b16 %v9435
      %v9504 = vunpack.c.l.b16 %v9436
      %v9505 = vunpack.c.h.b16 %v9436
      %v9506 = vunpack.c.l.b16 %v9437
      %v9507 = vunpack.c.h.b16 %v9437
      %v9508 = vunpack.c.l.b16 %v9438
      %v9509 = vunpack.c.h.b16 %v9438
      %v9510 = vunpack.c.l.b16 %v9439
      %v9511 = vunpack.c.h.b16 %v9439
      %v9512 = vunpack.c.l.b16 %v9440
      %v9513 = vunpack.c.h.b16 %v9440
      %v9514 = vunpack.c.l.b16 %v9441
      %v9515 = vunpack.c.h.b16 %v9441
      %v9516 = vunpack.c.l.b16 %v9442
      %v9517 = vunpack.c.h.b16 %v9442
      %v9518 = vunpack.c.l.b16 %v9443
      %v9519 = vunpack.c.h.b16 %v9443
      %v9520 = vunpack.c.l.b16 %v9444
      %v9521 = vunpack.c.h.b16 %v9444
      %v9522 = vunpack.c.l.b16 %v9445
      %v9523 = vunpack.c.h.b16 %v9445
      %v9524 = vunpack.c.l.b16 %v9446
      %v9525 = vunpack.c.h.b16 %v9446
      %v9526 = vunpack.c.l.b16 %v9447
      %v9527 = vunpack.c.h.b16 %v9447
      %v9528 = vunpack.c.l.b16 %v9448
      %v9529 = vunpack.c.h.b16 %v9448
      %v9530 = vunpack.c.l.b16 %v9449
      %v9531 = vunpack.c.h.b16 %v9449
      %v9532 = vunpack.c.l.b16 %v9450
      %v9533 = vunpack.c.h.b16 %v9450
      %v9534 = vunpack.c.l.b16 %v9451
      %v9535 = vunpack.c.h.b16 %v9451
      %v9536 = vunpack.c.l.b16 %v9452
      %v9537 = vunpack.c.h.b16 %v9452
      %v9538 = vunpack.c.l.b16 %v9453
      %v9539 = vunpack.c.h.b16 %v9453
      %v9540 = vunpack.c.l.b16 %v9454
      %v9541 = vunpack.c.h.b16 %v9454
      %v9542 = vunpack.c.l.b16 %v9455
      %v9543 = vunpack.c.h.b16 %v9455
      %v9544 = vunpack.c.l.b16 %v9456
      %v9545 = vunpack.c.h.b16 %v9456
      %v9546 = vunpack.c.l.b16 %v9457
      %v9547 = vunpack.c.h.b16 %v9457
      %v9548 = vunpack.c.l.b16 %v9458
      %v9549 = vunpack.c.h.b16 %v9458
      %v9550 = vunpack.c.l.b16 %v9459
      %v9551 = vunpack.c.h.b16 %v9459
      %v9552 = vunpack.c.l.b16 %v9460
      %v9553 = vunpack.c.h.b16 %v9460
      %v9554 = vunpack.c.l.b16 %v9461
      %v9555 = vunpack.c.h.b16 %v9461
      %v9556 = vunpack.c.l.b16 %v9462
      %v9557 = vunpack.c.h.b16 %v9462
      %v9558 = vunpack.c.l.b16 %v9463
      %v9559 = vunpack.c.h.b16 %v9463
      %v9560 = vpack.c.b16 %v9496, %v9496
      %v9561 = vpack.c.b16 %v9497, %v9497
      %v9562 = vpack.c.b16 %v9498, %v9498
      %v9563 = vpack.c.b16 %v9499, %v9499
      %v9564 = vpack.c.b16 %v9500, %v9500
      %v9565 = vpack.c.b16 %v9501, %v9501
      %v9566 = vpack.c.b16 %v9502, %v9502
      %v9567 = vpack.c.b16 %v9503, %v9503
      %v9568 = vpack.c.b16 %v9504, %v9504
      %v9569 = vpack.c.b16 %v9505, %v9505
      %v9570 = vpack.c.b16 %v9506, %v9506
      %v9571 = vpack.c.b16 %v9507, %v9507
      %v9572 = vpack.c.b16 %v9508, %v9508
      %v9573 = vpack.c.b16 %v9509, %v9509
      %v9574 = vpack.c.b16 %v9510, %v9510
      %v9575 = vpack.c.b16 %v9511, %v9511
      %v9576 = vpack.c.b16 %v9512, %v9512
      %v9577 = vpack.c.b16 %v9513, %v9513
      %v9578 = vpack.c.b16 %v9514, %v9514
      %v9579 = vpack.c.b16 %v9515, %v9515
      %v9580 = vpack.c.b16 %v9516, %v9516
      %v9581 = vpack.c.b16 %v9517, %v9517
      %v9582 = vpack.c.b16 %v9518, %v9518
      %v9583 = vpack.c.b16 %v9519, %v9519
      %v9584 = vpack.c.b16 %v9520, %v9520
      %v9585 = vpack.c.b16 %v9521, %v9521
      %v9586 = vpack.c.b16 %v9522, %v9522
      %v9587 = vpack.c.b16 %v9523, %v9523
      %v9588 = vpack.c.b16 %v9524, %v9524
      %v9589 = vpack.c.b16 %v9525, %v9525
      %v9590 = vpack.c.b16 %v9526, %v9526
      %v9591 = vpack.c.b16 %v9527, %v9527
      %v9592 = vpack.c.b16 %v9528, %v9528
      %v9593 = vpack.c.b16 %v9529, %v9529
      %v9594 = vpack.c.b16 %v9530, %v9530
      %v9595 = vpack.c.b16 %v9531, %v9531
      %v9596 = vpack.c.b16 %v9532, %v9532
      %v9597 = vpack.c.b16 %v9533, %v9533
      %v9598 = vpack.c.b16 %v9534, %v9534
      %v9599 = vpack.c.b16 %v9535, %v9535
      %v9600 = vpack.c.b16 %v9536, %v9536
      %v9601 = vpack.c.b16 %v9537, %v9537
      %v9602 = vpack.c.b16 %v9538, %v9538
      %v9603 = vpack.c.b16 %v9539, %v9539
      %v9604 = vpack.c.b16 %v9540, %v9540
      %v9605 = vpack.c.b16 %v9541, %v9541
      %v9606 = vpack.c.b16 %v9542, %v9542
      %v9607 = vpack.c.b16 %v9543, %v9543
      %v9608 = vpack.c.b16 %v9544, %v9544
      %v9609 = vpack.c.b16 %v9545, %v9545
      %v9610 = vpack.c.b16 %v9546, %v9546
      %v9611 = vpack.c.b16 %v9547, %v9547
      %v9612 = vpack.c.b16 %v9548, %v9548
      %v9613 = vpack.c.b16 %v9549, %v9549
      %v9614 = vpack.c.b16 %v9550, %v9550
      %v9615 = vpack.c.b16 %v9551, %v9551
      %v9616 = vpack.c.b16 %v9552, %v9552
      %v9617 = vpack.c.b16 %v9553, %v9553
      %v9618 = vpack.c.b16 %v9554, %v9554
      %v9619 = vpack.c.b16 %v9555, %v9555
      %v9620 = vpack.c.b16 %v9556, %v9556
      %v9621 = vpack.c.b16 %v9557, %v9557
      %v9622 = vpack.c.b16 %v9558, %v9558
      %v9623 = vpack.c.b16 %v9559, %v9559
      %9688 = vst [vmem:[%s469] sm:$0xf] %v9560
      %9689 = vst [vmem:[%s469 + $0x4] sm:$0xf] %v9561
      %9690 = vst [vmem:[%s469 + $0x8] sm:$0xf] %v9562
      %9691 = vst [vmem:[%s469 + $0xc] sm:$0xf] %v9563
      %9692 = vst [vmem:[%s469 + $0x10] sm:$0xf] %v9564
      %9693 = vst [vmem:[%s469 + $0x14] sm:$0xf] %v9565
      %9694 = vst [vmem:[%s469 + $0x18] sm:$0xf] %v9566
      %9695 = vst [vmem:[%s469 + $0x1c] sm:$0xf] %v9567
      %9696 = vst [vmem:[%s469 + $0x20] sm:$0xf] %v9568
      %9697 = vst [vmem:[%s469 + $0x24] sm:$0xf] %v9569
      %9698 = vst [vmem:[%s469 + $0x28] sm:$0xf] %v9570
      %9699 = vst [vmem:[%s469 + $0x2c] sm:$0xf] %v9571
      %9700 = vst [vmem:[%s469 + $0x30] sm:$0xf] %v9572
      %9701 = vst [vmem:[%s469 + $0x34] sm:$0xf] %v9573
      %9702 = vst [vmem:[%s469 + $0x38] sm:$0xf] %v9574
      %9703 = vst [vmem:[%s469 + $0x3c] sm:$0xf] %v9575
      %9704 = vst [vmem:[%s469 + $0x40] sm:$0xf] %v9576
      %9705 = vst [vmem:[%s469 + $0x44] sm:$0xf] %v9577
      %9706 = vst [vmem:[%s469 + $0x48] sm:$0xf] %v9578
      %9707 = vst [vmem:[%s469 + $0x4c] sm:$0xf] %v9579
      %9708 = vst [vmem:[%s469 + $0x50] sm:$0xf] %v9580
      %9709 = vst [vmem:[%s469 + $0x54] sm:$0xf] %v9581
      %9710 = vst [vmem:[%s469 + $0x58] sm:$0xf] %v9582
      %9711 = vst [vmem:[%s469 + $0x5c] sm:$0xf] %v9583
      %9712 = vst [vmem:[%s469 + $0x60] sm:$0xf] %v9584
      %9713 = vst [vmem:[%s469 + $0x64] sm:$0xf] %v9585
      %9714 = vst [vmem:[%s469 + $0x68] sm:$0xf] %v9586
      %9715 = vst [vmem:[%s469 + $0x6c] sm:$0xf] %v9587
      %9716 = vst [vmem:[%s469 + $0x70] sm:$0xf] %v9588
      %9717 = vst [vmem:[%s469 + $0x74] sm:$0xf] %v9589
      %9718 = vst [vmem:[%s469 + $0x78] sm:$0xf] %v9590
      %9719 = vst [vmem:[%s469 + $0x7c] sm:$0xf] %v9591
      %9720 = vst [vmem:[%s469 + $0x80] sm:$0xf] %v9592
      %9721 = vst [vmem:[%s469 + $0x84] sm:$0xf] %v9593
      %9722 = vst [vmem:[%s469 + $0x88] sm:$0xf] %v9594
      %9723 = vst [vmem:[%s469 + $0x8c] sm:$0xf] %v9595
      %9724 = vst [vmem:[%s469 + $0x90] sm:$0xf] %v9596
      %9725 = vst [vmem:[%s469 + $0x94] sm:$0xf] %v9597
      %9726 = vst [vmem:[%s469 + $0x98] sm:$0xf] %v9598
      %9727 = vst [vmem:[%s469 + $0x9c] sm:$0xf] %v9599
      %9728 = vst [vmem:[%s469 + $0xa0] sm:$0xf] %v9600
      %9729 = vst [vmem:[%s469 + $0xa4] sm:$0xf] %v9601
      %9730 = vst [vmem:[%s469 + $0xa8] sm:$0xf] %v9602
      %9731 = vst [vmem:[%s469 + $0xac] sm:$0xf] %v9603
      %9732 = vst [vmem:[%s469 + $0xb0] sm:$0xf] %v9604
      %9733 = vst [vmem:[%s469 + $0xb4] sm:$0xf] %v9605
      %9734 = vst [vmem:[%s469 + $0xb8] sm:$0xf] %v9606
      %9735 = vst [vmem:[%s469 + $0xbc] sm:$0xf] %v9607
      %9736 = vst [vmem:[%s469 + $0xc0] sm:$0xf] %v9608
      %9737 = vst [vmem:[%s469 + $0xc4] sm:$0xf] %v9609
      %9738 = vst [vmem:[%s469 + $0xc8] sm:$0xf] %v9610
      %9739 = vst [vmem:[%s469 + $0xcc] sm:$0xf] %v9611
      %9740 = vst [vmem:[%s469 + $0xd0] sm:$0xf] %v9612
      %9741 = vst [vmem:[%s469 + $0xd4] sm:$0xf] %v9613
      %9742 = vst [vmem:[%s469 + $0xd8] sm:$0xf] %v9614
      %9743 = vst [vmem:[%s469 + $0xdc] sm:$0xf] %v9615
      %9744 = vst [vmem:[%s469 + $0xe0] sm:$0xf] %v9616
      %9745 = vst [vmem:[%s469 + $0xe4] sm:$0xf] %v9617
      %9746 = vst [vmem:[%s469 + $0xe8] sm:$0xf] %v9618
      %9747 = vst [vmem:[%s469 + $0xec] sm:$0xf] %v9619
      %9748 = vst [vmem:[%s469 + $0xf0] sm:$0xf] %v9620
      %9749 = vst [vmem:[%s469 + $0xf4] sm:$0xf] %v9621
      %9750 = vst [vmem:[%s469 + $0xf8] sm:$0xf] %v9622
      %9751 = vst [vmem:[%s469 + $0xfc] sm:$0xf] %v9623
      %s9752 = smul.u32 64, %s25
      %p9753 = scmp.lt.s32.totalorder %s9752, 127
      %s9754 = scalar_select %p9753, %s9752, 127
      %s9755 = smul.addr %s9754, 4
      %s9756 = scalar_lea.vmem %s14, %s9755
      // Predicated region
      $region77: #{nerf_mlp_forward.1} parent=75 // pred_check
        %p9757 = pneg %p342
      $region78: #{nerf_mlp_forward.1} parent=75 // pred_check_branch
        %9759 = sbr.rel (%p9757) target = $region80
      $region79: #{nerf_mlp_forward.1} parent=75 // pred_region
        %s9760 = smul.u32 64, %s25
      $region80: #{nerf_mlp_forward.1} parent=75 // pred_fallthru
        _
    $region76: #{nerf_mlp_forward.1} parent=5 // pred_fallthru
      _
    %p9761 = scmp.le.s32.totalorder 2, %s20
    // Predicated region
    $region81: #{nerf_mlp_forward.1} parent=5 // pred_check
      %p9762 = pneg %p9761
    $region82: #{nerf_mlp_forward.1} parent=5 // pred_check_branch
      %9764 = sbr.rel (%p9762) target = $region84
    $region83: #{nerf_mlp_forward.1} parent=5 // pred_region
      %s9765 = ssub.s32 %s20, 2
      // Predicated region
      $region85: #{nerf_mlp_forward.1} parent=83 // pred_check
        %p9766 = pneg %p348
      $region86: #{nerf_mlp_forward.1} parent=83 // pred_check_branch
        %9768 = sbr.rel (%p9766) target = $region88
      $region87: #{nerf_mlp_forward.1} parent=83 // pred_region
        %s9769 = smul.u32 64, %s26
        %p9770 = scmp.lt.s32.totalorder %s9769, 127
        %s9771 = scalar_select %p9770, %s9769, 127
        %s9772 = smul.addr %s9771, 4
        %s9773 = scalar_lea.vmem %s14, %s9772
      $region88: #{nerf_mlp_forward.1} parent=83 // pred_fallthru
        _
    $region84: #{nerf_mlp_forward.1} parent=5 // pred_fallthru
      _
  $region6: #{nerf_mlp_forward.1} parent=0 // loop_footer
    %s24 = sadd.s32 1, %s20
  $region7: #{nerf_mlp_forward.1} parent=0 // loop_footer_branch
    %19 = sbr.rel target = $region3
  $region8: #{nerf_mlp_forward.1} parent=0 // loop_exit
    _

</llo_original>
